<compile_context>
chip_gen: v7x
topology: tpu7x:2x2x1
jax: 0.10.0
libtpu: 0.0.40
codegen_flags: <defaults>
</compile_context>

<pallas_src>
import functools

import jax
import jax.numpy as jnp
from jax import lax
from jax.experimental import pallas as pl
from jax.experimental.pallas import tpu as pltpu

EPS = 1e-5
LANE = 128


def _ceil_to(x, m):
    return (x + m - 1) // m * m


def _vmem_limit_bytes():
    # ~3/4 of physical VMEM, capped at 64 MiB: ~64 MiB on v5e/v6e (128 MiB
    # physical), ~48 MiB on v7x (64 MiB physical).  Fallback: 32 MiB.
    try:
        cap = pltpu.get_tpu_info().vmem_capacity_bytes
        return int(min(cap * 3 // 4, 64 * 1024 * 1024))
    except Exception:
        return 32 * 1024 * 1024


def _bottleneck_kernel(x_ref, w1_ref, b1_ref, w2_ref, b2_ref, w3_ref, b3_ref,
                       o_ref, hbuf_ref, *, H, W, dilation):
    """One batch element per grid step; NHWC flattened to (H*W, C), C lane-padded.

    x_ref : (1, H*W, Cp)       bf16
    w1_ref: (Cp, Pp)           bf16    b1_ref: (1, Pp) f32
    w2_ref: (3, 3*Pp, Pp)      bf16    b2_ref: (1, Pp) f32   (rows = kw*Pp + cin)
    w3_ref: (Pp, Cp)           bf16    b3_ref: (1, Cp) f32
    o_ref : (1, H*W, Cp)       out dtype
    hbuf  : ((H+2d)*W, 3*Pp)   bf16 scratch (zero-row-padded, 3 column shifts)
    Eval-mode BN scales are folded into the conv weights; BN shifts are b1/b2/b3.
    """
    d = dilation
    HW = H * W
    Pp = w1_ref.shape[-1]

    # ---- conv1 (1x1) + bias + relu -----------------------------------------
    h = jnp.dot(x_ref[0], w1_ref[...], preferred_element_type=jnp.float32)
    h = jnp.maximum(h + b1_ref[...], 0.0)                        # (HW, Pp) f32
    hb = h.astype(jnp.bfloat16)                                  # hoisted cast

    # ---- conv2 (3x3, stride 1, dilation d, zero padding d) -------------------
    # Build the three column-shifted copies (kw = -d, 0, +d) once, store them in
    # a zero-row-padded scratch; each row tap (kh) is then a row-offset slice
    # feeding one MXU matmul with K = 3*Pp.  Circular-wrap artefacts of the flat
    # rolls land exactly on the columns the mask zeroes.
    col = lax.broadcasted_iota(jnp.int32, (HW, 1), 0) % W
    left = jnp.where(col >= d, pltpu.roll(h, shift=d, axis=0),
                     0.0).astype(jnp.bfloat16)                   # reads x-d (kw=0)
    right = jnp.where(col < W - d, pltpu.roll(h, shift=HW - d, axis=0),
                      0.0).astype(jnp.bfloat16)                  # reads x+d (kw=2)

    zero_halo = jnp.zeros((d * W, 3 * Pp), jnp.bfloat16)
    hbuf_ref[pl.ds(0, d * W), :] = zero_halo                     # top halo rows
    hbuf_ref[pl.ds((d + H) * W, d * W), :] = zero_halo           # bottom halo rows
    hbuf_ref[pl.ds(d * W, HW), pl.ds(0, Pp)] = left
    hbuf_ref[pl.ds(d * W, HW), pl.ds(Pp, Pp)] = hb
    hbuf_ref[pl.ds(d * W, HW), pl.ds(2 * Pp, Pp)] = right

    acc = jnp.dot(hbuf_ref[pl.ds(0, HW), :], w2_ref[0],
                  preferred_element_type=jnp.float32)            # kh = 0
    acc = acc + jnp.dot(hbuf_ref[pl.ds(d * W, HW), :], w2_ref[1],
                        preferred_element_type=jnp.float32)      # kh = 1
    acc = acc + jnp.dot(hbuf_ref[pl.ds(2 * d * W, HW), :], w2_ref[2],
                        preferred_element_type=jnp.float32)      # kh = 2
    h2 = jnp.maximum(acc + b2_ref[...], 0.0).astype(jnp.bfloat16)

    # ---- conv3 (1x1) + bias, residual add (re-read x), relu ------------------
    h3 = jnp.dot(h2, w3_ref[...], preferred_element_type=jnp.float32)
    # NOTE: the residual is the bf16-quantized x (one HBM read).  Pass an extra
    # f32 copy of x if a bit-tighter skip connection is ever required.
    res = x_ref[0].astype(jnp.float32)                           # short live range
    out = jnp.maximum(h3 + b3_ref[...] + res, 0.0)
    o_ref[0] = out.astype(o_ref.dtype)


def bottleneck_v1b_forward(x_nchw, params, *, dilation=1,
                           out_dtype=jnp.float32, weight_buffers=1):
    """x_nchw: (N, Cin, H, W) float32. Returns (N, Cin, H, W) in out_dtype."""
    N, Cin, H, W = x_nchw.shape
    (w1, g1, be1, m1, v1,
     w2, g2, be2, m2, v2,
     w3, g3, be3, m3, v3) = params
    P = w1.shape[0]
    Cout = w3.shape[0]
    d = dilation
    assert Cout == Cin, "downsample=None requires inplanes == planes*4"

    # Fold eval-mode BatchNorm: scale into the conv weights (per output
    # channel); bias stays a per-channel add in the kernel.
    def fold(gamma, beta, mean, var):
        scale = gamma / jnp.sqrt(var + EPS)
        return scale, beta - mean * scale

    s1, b1 = fold(g1, be1, m1, v1)
    s2, b2 = fold(g2, be2, m2, v2)
    s3, b3 = fold(g3, be3, m3, v3)

    # PyTorch OIHW -> matmul layouts, BN scale folded in.
    w1_m = w1[:, :, 0, 0].T * s1[None, :]                               # (Cin, P)
    w2_m = jnp.transpose(w2, (2, 3, 1, 0)) * s2[None, None, None, :]    # (kh,kw,cin,cout)
    w3_m = w3[:, :, 0, 0].T * s3[None, :]                               # (P, Cout)

    # Lane-dense padding of every channel dim to a multiple of 128.
    Cp = _ceil_to(Cin, LANE)
    Pp = _ceil_to(P, LANE)

    def pad2(a, r, c):
        return jnp.pad(a, ((0, r - a.shape[0]), (0, c - a.shape[1])))

    w1_p = pad2(w1_m, Cp, Pp).astype(jnp.bfloat16)
    w3_p = pad2(w3_m, Pp, Cp).astype(jnp.bfloat16)
    # (3,3,P,P) -> pad -> (3, 3*Pp, Pp): contraction rows ordered kw*Pp + cin,
    # matching the [left | centre | right] lane groups of the conv2 scratch.
    w2_p = jnp.pad(w2_m, ((0, 0), (0, 0), (0, Pp - P), (0, Pp - P)))
    w2_p = w2_p.reshape(3, 3 * Pp, Pp).astype(jnp.bfloat16)
    b1_p = jnp.pad(b1, (0, Pp - P)).reshape(1, Pp).astype(jnp.float32)
    b2_p = jnp.pad(b2, (0, Pp - P)).reshape(1, Pp).astype(jnp.float32)
    b3_p = jnp.pad(b3, (0, Cp - Cout)).reshape(1, Cp).astype(jnp.float32)

    # NOTE: in a fully-NHWC bf16 model these boundary transpose/pad/cast passes
    # (an extra HBM round trip of the activation) would be elided by keeping
    # activations in padded (N, H*W, Cp) bf16 between blocks.
    x_nhwc = jnp.transpose(x_nchw, (0, 2, 3, 1))                 # NCHW -> NHWC
    if Cp > Cin:
        x_nhwc = jnp.pad(x_nhwc, ((0, 0), (0, 0), (0, 0), (0, Cp - Cin)))
    x_flat = x_nhwc.reshape(N, H * W, Cp).astype(jnp.bfloat16)

    kernel = functools.partial(_bottleneck_kernel, H=H, W=W, dilation=d)

    def const_spec(shape):
        idx = lambda n: (0,) * len(shape)
        if weight_buffers == 1:
            # Constant-index inputs gain nothing from double buffering.
            return pl.BlockSpec(shape, idx, pipeline_mode=pl.Buffered(1))
        return pl.BlockSpec(shape, idx)

    out_flat = pl.pallas_call(
        kernel,
        out_shape=jax.ShapeDtypeStruct((N, H * W, Cp), out_dtype),
        grid_spec=pltpu.PrefetchScalarGridSpec(
            num_scalar_prefetch=0,
            grid=(N,),
            in_specs=[
                pl.BlockSpec((1, H * W, Cp), lambda n: (n, 0, 0)),
                const_spec((Cp, Pp)),
                const_spec((1, Pp)),
                const_spec((3, 3 * Pp, Pp)),
                const_spec((1, Pp)),
                const_spec((Pp, Cp)),
                const_spec((1, Cp)),
            ],
            out_specs=pl.BlockSpec((1, H * W, Cp), lambda n: (n, 0, 0)),
            scratch_shapes=[
                pltpu.VMEM(((H + 2 * d) * W, 3 * Pp), jnp.bfloat16)],
        ),
        compiler_params=pltpu.CompilerParams(
            dimension_semantics=("parallel",),
            vmem_limit_bytes=_vmem_limit_bytes()),
    )(x_flat, w1_p, b1_p, w2_p, b2_p, w3_p, b3_p)

    out_nhwc = out_flat.reshape(N, H, W, Cp)
    if Cp > Cout:
        out_nhwc = out_nhwc[..., :Cout]
    return jnp.transpose(out_nhwc, (0, 3, 1, 2))                 # NHWC -> NCHW


# ---------------------------------------------------------------------------
# Pure-JAX f32 reference (NCHW), used to verify the kernel numerically.
# ---------------------------------------------------------------------------
def _reference(x, params, *, dilation=1):
    (w1, g1, be1, m1, v1,
     w2, g2, be2, m2, v2,
     w3, g3, be3, m3, v3) = params

    def conv(x, w, padding=0, dilation=1):
        return lax.conv_general_dilated(
            x, w, window_strides=(1, 1),
            padding=[(padding, padding), (padding, padding)],
            rhs_dilation=(dilation, dilation),
            dimension_numbers=("NCHW", "OIHW", "NCHW"))

    def bn(x, g, b, m, v):
        sh = (1, -1, 1, 1)
        return (x - m.reshape(sh)) / jnp.sqrt(v.reshape(sh) + EPS) * \
            g.reshape(sh) + b.reshape(sh)

    out = jax.nn.relu(bn(conv(x, w1), g1, be1, m1, v1))
    out = jax.nn.relu(bn(conv(out, w2, padding=dilation, dilation=dilation),
                         g2, be2, m2, v2))
    out = bn(conv(out, w3), g3, be3, m3, v3)
    return jax.nn.relu(out + x)


def _init_params(key, inplanes, planes):
    expansion = 4
    ks = jax.random.split(key, 6)
    f32 = jnp.float32
    w1 = 0.2 * jax.random.normal(ks[0], (planes, inplanes, 1, 1), f32)
    w2 = 0.2 * jax.random.normal(ks[1], (planes, planes, 3, 3), f32)
    w3 = 0.2 * jax.random.normal(ks[2], (planes * expansion, planes, 1, 1), f32)

    def bn_params(k, c):
        k1, k2, k3, k4 = jax.random.split(k, 4)
        gamma = 1.0 + 0.1 * jax.random.normal(k1, (c,), f32)
        beta = 0.1 * jax.random.normal(k2, (c,), f32)
        mean = 0.1 * jax.random.normal(k3, (c,), f32)
        var = jnp.abs(1.0 + 0.1 * jax.random.normal(k4, (c,), f32))
        return gamma, beta, mean, var

    g1, be1, m1, v1 = bn_params(ks[3], planes)
    g2, be2, m2, v2 = bn_params(ks[4], planes)
    g3, be3, m3, v3 = bn_params(ks[5], planes * expansion)
    return (w1, g1, be1, m1, v1,
            w2, g2, be2, m2, v2,
            w3, g3, be3, m3, v3)


if __name__ == "__main__":
    key = jax.random.PRNGKey(0)
    k_x, k_p = jax.random.split(key)

    # BottleNeckV1b(inplanes=16, planes=4, stride=1, downsample=None)
    N, inplanes, H, W = 2, 16, 16, 16
    planes = 4

    x = jax.random.normal(k_x, (N, inplanes, H, W), jnp.float32)
    params = _init_params(k_p, inplanes, planes)

    def run(dil, wb):
        fwd = jax.jit(functools.partial(bottleneck_v1b_forward,
                                        dilation=dil, weight_buffers=wb))
        return jax.block_until_ready(fwd(x, params))

    weight_buffers = 1
    for dil in (1, 2):
        try:
            out = run(dil, weight_buffers)
        except Exception:
            # jax without BlockSpec(pipeline_mode=pl.Buffered(1)) support:
            # fall back to default double-buffered weight specs.
            weight_buffers = 2
            out = run(dil, weight_buffers)
        ref = jax.block_until_ready(_reference(x, params, dilation=dil))
        assert out.shape == ref.shape == (N, inplanes, H, W)
        err = jnp.abs(out - ref)
        # bf16 matmul inputs (f32 accumulation) vs. pure-f32 reference: tight on
        # the mean, loose on the max.  A structural bug would give errors O(1).
        assert float(jnp.mean(err)) < 2e-2, float(jnp.mean(err))
        assert jnp.allclose(out, ref, atol=1e-1, rtol=1e-1), float(jnp.max(err))

    print("KERNEL_OK")
</pallas_src>

<mosaic_0001>
module attributes {stable_mosaic.version = 11 : i64} {
  func.func @_bottleneck_kernel(%arg0: i32, %arg1: memref<1x256x128xbf16, #tpu.memory_space<vmem>>, %arg2: memref<128x128xbf16, #tpu.memory_space<vmem>>, %arg3: memref<1x128xf32, #tpu.memory_space<vmem>>, %arg4: memref<3x384x128xbf16, #tpu.memory_space<vmem>>, %arg5: memref<1x128xf32, #tpu.memory_space<vmem>>, %arg6: memref<128x128xbf16, #tpu.memory_space<vmem>>, %arg7: memref<1x128xf32, #tpu.memory_space<vmem>>, %arg8: memref<1x256x128xf32, #tpu.memory_space<vmem>>, %arg9: memref<288x384xbf16, #tpu.memory_space<vmem>>) attributes {dimension_semantics = [#tpu.dimension_semantics<parallel>], iteration_bounds = array<i64: 2>, scalar_prefetch = 0 : i64, scratch_operands = 1 : i64, tpu.core_type = #tpu.core_type<tc>, window_params = [{transform_indices = @transform_0, window_bounds = array<i64: 1, 256, 128>}, {pipeline_mode = #tpu.pipeline_mode<synchronous>, transform_indices = @transform_1, window_bounds = array<i64: 128, 128>}, {pipeline_mode = #tpu.pipeline_mode<synchronous>, transform_indices = @transform_2, window_bounds = array<i64: 1, 128>}, {pipeline_mode = #tpu.pipeline_mode<synchronous>, transform_indices = @transform_3, window_bounds = array<i64: 3, 384, 128>}, {pipeline_mode = #tpu.pipeline_mode<synchronous>, transform_indices = @transform_4, window_bounds = array<i64: 1, 128>}, {pipeline_mode = #tpu.pipeline_mode<synchronous>, transform_indices = @transform_5, window_bounds = array<i64: 128, 128>}, {pipeline_mode = #tpu.pipeline_mode<synchronous>, transform_indices = @transform_6, window_bounds = array<i64: 1, 128>}, {transform_indices = @transform_7, window_bounds = array<i64: 1, 256, 128>}]} {
    %c0 = arith.constant 0 : index
    %c0_0 = arith.constant 0 : index
    %c0_1 = arith.constant 0 : index
    %0 = vector.load %arg1[%c0, %c0_0, %c0_1] : memref<1x256x128xbf16, #tpu.memory_space<vmem>>, vector<1x256x128xbf16>
    %1 = vector.shape_cast %0 : vector<1x256x128xbf16> to vector<256x128xbf16>
    %c0_2 = arith.constant 0 : index
    %c0_3 = arith.constant 0 : index
    %2 = vector.load %arg2[%c0_2, %c0_3] : memref<128x128xbf16, #tpu.memory_space<vmem>>, vector<128x128xbf16>
    %cst = arith.constant dense<0.000000e+00> : vector<256x128xf32>
    %3 = tpu.matmul %1, %2, %cst {dimension_numbers = #tpu.dot_dimension_numbers<[1], [0], [0], [1], [0, 0, 1, 1], [], []>} : vector<256x128xbf16>, vector<128x128xbf16>, vector<256x128xf32> -> vector<256x128xf32>
    %c0_4 = arith.constant 0 : index
    %c0_5 = arith.constant 0 : index
    %4 = vector.load %arg3[%c0_4, %c0_5] : memref<1x128xf32, #tpu.memory_space<vmem>>, vector<1x128xf32>
    %5 = vector.broadcast %4 : vector<1x128xf32> to vector<256x128xf32>
    %6 = arith.addf %3, %5 : vector<256x128xf32>
    %cst_6 = arith.constant 0.000000e+00 : f32
    %7 = vector.broadcast %cst_6 : f32 to vector<256x128xf32>
    %8 = arith.maximumf %6, %7 : vector<256x128xf32>
    %9 = arith.truncf %8 : vector<256x128xf32> to vector<256x128xbf16>
    %10 = tpu.iota {dimensions = array<i32: 0>} : vector<256x1xi32>
    %c16_i32 = arith.constant 16 : i32
    %c0_i32 = arith.constant 0 : i32
    %11 = arith.cmpi eq, %c16_i32, %c0_i32 : i32
    %c1_i32 = arith.constant 1 : i32
    %12 = arith.select %11, %c1_i32, %c16_i32 : i32
    %13 = vector.broadcast %12 : i32 to vector<256x1xi32>
    %14 = arith.remsi %10, %13 : vector<256x1xi32>
    %c0_i32_7 = arith.constant 0 : i32
    %15 = vector.broadcast %c0_i32_7 : i32 to vector<256x1xi32>
    %16 = arith.cmpi ne, %14, %15 : vector<256x1xi32>
    %c0_i32_8 = arith.constant 0 : i32
    %17 = vector.broadcast %c0_i32_8 : i32 to vector<256x1xi32>
    %18 = arith.cmpi slt, %14, %17 : vector<256x1xi32>
    %c0_i32_9 = arith.constant 0 : i32
    %19 = arith.cmpi slt, %12, %c0_i32_9 : i32
    %20 = vector.broadcast %19 : i1 to vector<256x1xi1>
    %21 = vector.broadcast %20 : vector<256x1xi1> to vector<256x1xi1>
    %22 = arith.xori %18, %21 : vector<256x1xi1>
    %23 = arith.andi %22, %16 : vector<256x1xi1>
    %24 = vector.broadcast %12 : i32 to vector<256x1xi32>
    %25 = arith.addi %14, %24 : vector<256x1xi32>
    %26 = arith.select %23, %25, %14 : vector<256x1xi1>, vector<256x1xi32>
    %c1_i32_10 = arith.constant 1 : i32
    %27 = vector.broadcast %c1_i32_10 : i32 to vector<256x1xi32>
    %28 = arith.cmpi sge, %26, %27 : vector<256x1xi32>
    %c1_i32_11 = arith.constant 1 : i32
    %29 = tpu.dynamic_rotate %8 by %c1_i32_11 dim 0 : vector<256x128xf32>, i32 -> vector<256x128xf32>
    %cst_12 = arith.constant 0.000000e+00 : f32
    %30 = vector.shape_cast %28 : vector<256x1xi1> to vector<256x1xi1>
    %31 = vector.broadcast %30 : vector<256x1xi1> to vector<256x128xi1>
    %32 = vector.broadcast %cst_12 : f32 to vector<256x128xf32>
    %33 = arith.select %31, %29, %32 : vector<256x128xi1>, vector<256x128xf32>
    %34 = arith.truncf %33 : vector<256x128xf32> to vector<256x128xbf16>
    %c15_i32 = arith.constant 15 : i32
    %35 = vector.broadcast %c15_i32 : i32 to vector<256x1xi32>
    %36 = arith.cmpi slt, %26, %35 : vector<256x1xi32>
    %c255_i32 = arith.constant 255 : i32
    %37 = tpu.dynamic_rotate %8 by %c255_i32 dim 0 : vector<256x128xf32>, i32 -> vector<256x128xf32>
    %cst_13 = arith.constant 0.000000e+00 : f32
    %38 = vector.shape_cast %36 : vector<256x1xi1> to vector<256x1xi1>
    %39 = vector.broadcast %38 : vector<256x1xi1> to vector<256x128xi1>
    %40 = vector.broadcast %cst_13 : f32 to vector<256x128xf32>
    %41 = arith.select %39, %37, %40 : vector<256x128xi1>, vector<256x128xf32>
    %42 = arith.truncf %41 : vector<256x128xf32> to vector<256x128xbf16>
    %cst_14 = arith.constant 0.000000e+00 : bf16
    %43 = vector.broadcast %cst_14 : bf16 to vector<16x384xbf16>
    %c0_15 = arith.constant 0 : index
    %c0_16 = arith.constant 0 : index
    %44 = vector.load %arg9[%c0_15, %c0_16] : memref<288x384xbf16, #tpu.memory_space<vmem>>, vector<16x384xbf16>
    tpu.vector_store %arg9[%c0_15, %c0_16], %43 {strides = array<i32>} : memref<288x384xbf16, #tpu.memory_space<vmem>>, vector<16x384xbf16>,
    %c272 = arith.constant 272 : index
    %c0_17 = arith.constant 0 : index
    %45 = vector.load %arg9[%c272, %c0_17] : memref<288x384xbf16, #tpu.memory_space<vmem>>, vector<16x384xbf16>
    tpu.vector_store %arg9[%c272, %c0_17], %43 {strides = array<i32>} : memref<288x384xbf16, #tpu.memory_space<vmem>>, vector<16x384xbf16>,
    %c16 = arith.constant 16 : index
    %c0_18 = arith.constant 0 : index
    %46 = vector.load %arg9[%c16, %c0_18] : memref<288x384xbf16, #tpu.memory_space<vmem>>, vector<256x128xbf16>
    tpu.vector_store %arg9[%c16, %c0_18], %34 {strides = array<i32>} : memref<288x384xbf16, #tpu.memory_space<vmem>>, vector<256x128xbf16>,
    %c16_19 = arith.constant 16 : index
    %c128 = arith.constant 128 : index
    %47 = vector.load %arg9[%c16_19, %c128] : memref<288x384xbf16, #tpu.memory_space<vmem>>, vector<256x128xbf16>
    tpu.vector_store %arg9[%c16_19, %c128], %9 {strides = array<i32>} : memref<288x384xbf16, #tpu.memory_space<vmem>>, vector<256x128xbf16>,
    %c16_20 = arith.constant 16 : index
    %c256 = arith.constant 256 : index
    %48 = vector.load %arg9[%c16_20, %c256] : memref<288x384xbf16, #tpu.memory_space<vmem>>, vector<256x128xbf16>
    tpu.vector_store %arg9[%c16_20, %c256], %42 {strides = array<i32>} : memref<288x384xbf16, #tpu.memory_space<vmem>>, vector<256x128xbf16>,
    %c0_21 = arith.constant 0 : index
    %c0_22 = arith.constant 0 : index
    %49 = vector.load %arg9[%c0_21, %c0_22] : memref<288x384xbf16, #tpu.memory_space<vmem>>, vector<256x384xbf16>
    %c0_23 = arith.constant 0 : index
    %c0_24 = arith.constant 0 : index
    %c0_25 = arith.constant 0 : index
    %50 = vector.load %arg4[%c0_23, %c0_24, %c0_25] : memref<3x384x128xbf16, #tpu.memory_space<vmem>>, vector<1x384x128xbf16>
    %51 = vector.shape_cast %50 : vector<1x384x128xbf16> to vector<384x128xbf16>
    %cst_26 = arith.constant dense<0.000000e+00> : vector<256x128xf32>
    %52 = tpu.matmul %49, %51, %cst_26 {dimension_numbers = #tpu.dot_dimension_numbers<[1], [0], [0], [1], [0, 0, 1, 1], [], []>} : vector<256x384xbf16>, vector<384x128xbf16>, vector<256x128xf32> -> vector<256x128xf32>
    %c16_27 = arith.constant 16 : index
    %c0_28 = arith.constant 0 : index
    %53 = vector.load %arg9[%c16_27, %c0_28] : memref<288x384xbf16, #tpu.memory_space<vmem>>, vector<256x384xbf16>
    %c1 = arith.constant 1 : index
    %c0_29 = arith.constant 0 : index
    %c0_30 = arith.constant 0 : index
    %54 = vector.load %arg4[%c1, %c0_29, %c0_30] : memref<3x384x128xbf16, #tpu.memory_space<vmem>>, vector<1x384x128xbf16>
    %55 = vector.shape_cast %54 : vector<1x384x128xbf16> to vector<384x128xbf16>
    %cst_31 = arith.constant dense<0.000000e+00> : vector<256x128xf32>
    %56 = tpu.matmul %53, %55, %cst_31 {dimension_numbers = #tpu.dot_dimension_numbers<[1], [0], [0], [1], [0, 0, 1, 1], [], []>} : vector<256x384xbf16>, vector<384x128xbf16>, vector<256x128xf32> -> vector<256x128xf32>
    %57 = arith.addf %52, %56 : vector<256x128xf32>
    %c32 = arith.constant 32 : index
    %c0_32 = arith.constant 0 : index
    %58 = vector.load %arg9[%c32, %c0_32] : memref<288x384xbf16, #tpu.memory_space<vmem>>, vector<256x384xbf16>
    %c2 = arith.constant 2 : index
    %c0_33 = arith.constant 0 : index
    %c0_34 = arith.constant 0 : index
    %59 = vector.load %arg4[%c2, %c0_33, %c0_34] : memref<3x384x128xbf16, #tpu.memory_space<vmem>>, vector<1x384x128xbf16>
    %60 = vector.shape_cast %59 : vector<1x384x128xbf16> to vector<384x128xbf16>
    %cst_35 = arith.constant dense<0.000000e+00> : vector<256x128xf32>
    %61 = tpu.matmul %58, %60, %cst_35 {dimension_numbers = #tpu.dot_dimension_numbers<[1], [0], [0], [1], [0, 0, 1, 1], [], []>} : vector<256x384xbf16>, vector<384x128xbf16>, vector<256x128xf32> -> vector<256x128xf32>
    %62 = arith.addf %57, %61 : vector<256x128xf32>
    %c0_36 = arith.constant 0 : index
    %c0_37 = arith.constant 0 : index
    %63 = vector.load %arg5[%c0_36, %c0_37] : memref<1x128xf32, #tpu.memory_space<vmem>>, vector<1x128xf32>
    %64 = vector.broadcast %63 : vector<1x128xf32> to vector<256x128xf32>
    %65 = arith.addf %62, %64 : vector<256x128xf32>
    %cst_38 = arith.constant 0.000000e+00 : f32
    %66 = vector.broadcast %cst_38 : f32 to vector<256x128xf32>
    %67 = arith.maximumf %65, %66 : vector<256x128xf32>
    %68 = arith.truncf %67 : vector<256x128xf32> to vector<256x128xbf16>
    %c0_39 = arith.constant 0 : index
    %c0_40 = arith.constant 0 : index
    %69 = vector.load %arg6[%c0_39, %c0_40] : memref<128x128xbf16, #tpu.memory_space<vmem>>, vector<128x128xbf16>
    %cst_41 = arith.constant dense<0.000000e+00> : vector<256x128xf32>
    %70 = tpu.matmul %68, %69, %cst_41 {dimension_numbers = #tpu.dot_dimension_numbers<[1], [0], [0], [1], [0, 0, 1, 1], [], []>} : vector<256x128xbf16>, vector<128x128xbf16>, vector<256x128xf32> -> vector<256x128xf32>
    %c0_42 = arith.constant 0 : index
    %c0_43 = arith.constant 0 : index
    %c0_44 = arith.constant 0 : index
    %71 = vector.load %arg1[%c0_42, %c0_43, %c0_44] : memref<1x256x128xbf16, #tpu.memory_space<vmem>>, vector<1x256x128xbf16>
    %72 = vector.shape_cast %71 : vector<1x256x128xbf16> to vector<256x128xbf16>
    %73 = arith.extf %72 : vector<256x128xbf16> to vector<256x128xf32>
    %c0_45 = arith.constant 0 : index
    %c0_46 = arith.constant 0 : index
    %74 = vector.load %arg7[%c0_45, %c0_46] : memref<1x128xf32, #tpu.memory_space<vmem>>, vector<1x128xf32>
    %75 = vector.broadcast %74 : vector<1x128xf32> to vector<256x128xf32>
    %76 = arith.addf %70, %75 : vector<256x128xf32>
    %77 = arith.addf %76, %73 : vector<256x128xf32>
    %cst_47 = arith.constant 0.000000e+00 : f32
    %78 = vector.broadcast %cst_47 : f32 to vector<256x128xf32>
    %79 = arith.maximumf %77, %78 : vector<256x128xf32>
    %c0_48 = arith.constant 0 : index
    %c0_49 = arith.constant 0 : index
    %c0_50 = arith.constant 0 : index
    %80 = vector.load %arg8[%c0_48, %c0_49, %c0_50] : memref<1x256x128xf32, #tpu.memory_space<vmem>>, vector<1x256x128xf32>
    %81 = vector.shape_cast %80 : vector<1x256x128xf32> to vector<256x128xf32>
    %82 = vector.shape_cast %79 : vector<256x128xf32> to vector<1x256x128xf32>
    tpu.vector_store %arg8[%c0_48, %c0_49, %c0_50], %82 {strides = array<i32>} : memref<1x256x128xf32, #tpu.memory_space<vmem>>, vector<1x256x128xf32>,
    return
  }
  func.func @transform_0(%arg0: i32) -> (i32, i32, i32) {
    %c0_i32 = arith.constant 0 : i32
    %c0_i32_0 = arith.constant 0 : i32
    %c0_i32_1 = arith.constant 0 : i32
    return %arg0, %c0_i32, %c0_i32_0 : i32, i32, i32
  }
  func.func @transform_1(%arg0: i32) -> (i32, i32) {
    %c0_i32 = arith.constant 0 : i32
    %c0_i32_0 = arith.constant 0 : i32
    %c0_i32_1 = arith.constant 0 : i32
    return %c0_i32, %c0_i32_0 : i32, i32
  }
  func.func @transform_2(%arg0: i32) -> (i32, i32) {
    %c0_i32 = arith.constant 0 : i32
    %c0_i32_0 = arith.constant 0 : i32
    %c0_i32_1 = arith.constant 0 : i32
    return %c0_i32, %c0_i32_0 : i32, i32
  }
  func.func @transform_3(%arg0: i32) -> (i32, i32, i32) {
    %c0_i32 = arith.constant 0 : i32
    %c0_i32_0 = arith.constant 0 : i32
    %c0_i32_1 = arith.constant 0 : i32
    %c0_i32_2 = arith.constant 0 : i32
    return %c0_i32, %c0_i32_0, %c0_i32_1 : i32, i32, i32
  }
  func.func @transform_4(%arg0: i32) -> (i32, i32) {
    %c0_i32 = arith.constant 0 : i32
    %c0_i32_0 = arith.constant 0 : i32
    %c0_i32_1 = arith.constant 0 : i32
    return %c0_i32, %c0_i32_0 : i32, i32
  }
  func.func @transform_5(%arg0: i32) -> (i32, i32) {
    %c0_i32 = arith.constant 0 : i32
    %c0_i32_0 = arith.constant 0 : i32
    %c0_i32_1 = arith.constant 0 : i32
    return %c0_i32, %c0_i32_0 : i32, i32
  }
  func.func @transform_6(%arg0: i32) -> (i32, i32) {
    %c0_i32 = arith.constant 0 : i32
    %c0_i32_0 = arith.constant 0 : i32
    %c0_i32_1 = arith.constant 0 : i32
    return %c0_i32, %c0_i32_0 : i32, i32
  }
  func.func @transform_7(%arg0: i32) -> (i32, i32, i32) {
    %c0_i32 = arith.constant 0 : i32
    %c0_i32_0 = arith.constant 0 : i32
    %c0_i32_1 = arith.constant 0 : i32
    return %arg0, %c0_i32, %c0_i32_0 : i32, i32, i32
  }
}

module attributes {stable_mosaic.version = 11 : i64} {
  func.func @_bottleneck_kernel(%arg0: i32, %arg1: memref<1x256x128xbf16, #tpu.memory_space<vmem>>, %arg2: memref<128x128xbf16, #tpu.memory_space<vmem>>, %arg3: memref<1x128xf32, #tpu.memory_space<vmem>>, %arg4: memref<3x384x128xbf16, #tpu.memory_space<vmem>>, %arg5: memref<1x128xf32, #tpu.memory_space<vmem>>, %arg6: memref<128x128xbf16, #tpu.memory_space<vmem>>, %arg7: memref<1x128xf32, #tpu.memory_space<vmem>>, %arg8: memref<1x256x128xf32, #tpu.memory_space<vmem>>, %arg9: memref<288x384xbf16, #tpu.memory_space<vmem>>) attributes {dimension_semantics = [#tpu.dimension_semantics<parallel>], iteration_bounds = array<i64: 2>, scalar_prefetch = 0 : i64, scratch_operands = 1 : i64, tpu.core_type = #tpu.core_type<tc>, window_params = [{transform_indices = @transform_0, window_bounds = array<i64: 1, 256, 128>}, {pipeline_mode = #tpu.pipeline_mode<synchronous>, transform_indices = @transform_1, window_bounds = array<i64: 128, 128>}, {pipeline_mode = #tpu.pipeline_mode<synchronous>, transform_indices = @transform_2, window_bounds = array<i64: 1, 128>}, {pipeline_mode = #tpu.pipeline_mode<synchronous>, transform_indices = @transform_3, window_bounds = array<i64: 3, 384, 128>}, {pipeline_mode = #tpu.pipeline_mode<synchronous>, transform_indices = @transform_4, window_bounds = array<i64: 1, 128>}, {pipeline_mode = #tpu.pipeline_mode<synchronous>, transform_indices = @transform_5, window_bounds = array<i64: 128, 128>}, {pipeline_mode = #tpu.pipeline_mode<synchronous>, transform_indices = @transform_6, window_bounds = array<i64: 1, 128>}, {transform_indices = @transform_7, window_bounds = array<i64: 1, 256, 128>}]} {
    %c0 = arith.constant 0 : index
    %c0_0 = arith.constant 0 : index
    %c0_1 = arith.constant 0 : index
    %0 = vector.load %arg1[%c0, %c0_0, %c0_1] : memref<1x256x128xbf16, #tpu.memory_space<vmem>>, vector<1x256x128xbf16>
    %1 = vector.shape_cast %0 : vector<1x256x128xbf16> to vector<256x128xbf16>
    %c0_2 = arith.constant 0 : index
    %c0_3 = arith.constant 0 : index
    %2 = vector.load %arg2[%c0_2, %c0_3] : memref<128x128xbf16, #tpu.memory_space<vmem>>, vector<128x128xbf16>
    %cst = arith.constant dense<0.000000e+00> : vector<256x128xf32>
    %3 = tpu.matmul %1, %2, %cst {dimension_numbers = #tpu.dot_dimension_numbers<[1], [0], [0], [1], [0, 0, 1, 1], [], []>} : vector<256x128xbf16>, vector<128x128xbf16>, vector<256x128xf32> -> vector<256x128xf32>
    %c0_4 = arith.constant 0 : index
    %c0_5 = arith.constant 0 : index
    %4 = vector.load %arg3[%c0_4, %c0_5] : memref<1x128xf32, #tpu.memory_space<vmem>>, vector<1x128xf32>
    %5 = vector.broadcast %4 : vector<1x128xf32> to vector<256x128xf32>
    %6 = arith.addf %3, %5 : vector<256x128xf32>
    %cst_6 = arith.constant 0.000000e+00 : f32
    %7 = vector.broadcast %cst_6 : f32 to vector<256x128xf32>
    %8 = arith.maximumf %6, %7 : vector<256x128xf32>
    %9 = arith.truncf %8 : vector<256x128xf32> to vector<256x128xbf16>
    %10 = tpu.iota {dimensions = array<i32: 0>} : vector<256x1xi32>
    %c16_i32 = arith.constant 16 : i32
    %c0_i32 = arith.constant 0 : i32
    %11 = arith.cmpi eq, %c16_i32, %c0_i32 : i32
    %c1_i32 = arith.constant 1 : i32
    %12 = arith.select %11, %c1_i32, %c16_i32 : i32
    %13 = vector.broadcast %12 : i32 to vector<256x1xi32>
    %14 = arith.remsi %10, %13 : vector<256x1xi32>
    %c0_i32_7 = arith.constant 0 : i32
    %15 = vector.broadcast %c0_i32_7 : i32 to vector<256x1xi32>
    %16 = arith.cmpi ne, %14, %15 : vector<256x1xi32>
    %c0_i32_8 = arith.constant 0 : i32
    %17 = vector.broadcast %c0_i32_8 : i32 to vector<256x1xi32>
    %18 = arith.cmpi slt, %14, %17 : vector<256x1xi32>
    %c0_i32_9 = arith.constant 0 : i32
    %19 = arith.cmpi slt, %12, %c0_i32_9 : i32
    %20 = vector.broadcast %19 : i1 to vector<256x1xi1>
    %21 = vector.broadcast %20 : vector<256x1xi1> to vector<256x1xi1>
    %22 = arith.xori %18, %21 : vector<256x1xi1>
    %23 = arith.andi %22, %16 : vector<256x1xi1>
    %24 = vector.broadcast %12 : i32 to vector<256x1xi32>
    %25 = arith.addi %14, %24 : vector<256x1xi32>
    %26 = arith.select %23, %25, %14 : vector<256x1xi1>, vector<256x1xi32>
    %c1_i32_10 = arith.constant 1 : i32
    %27 = vector.broadcast %c1_i32_10 : i32 to vector<256x1xi32>
    %28 = arith.cmpi sge, %26, %27 : vector<256x1xi32>
    %c1_i32_11 = arith.constant 1 : i32
    %29 = tpu.dynamic_rotate %8 by %c1_i32_11 dim 0 : vector<256x128xf32>, i32 -> vector<256x128xf32>
    %cst_12 = arith.constant 0.000000e+00 : f32
    %30 = vector.shape_cast %28 : vector<256x1xi1> to vector<256x1xi1>
    %31 = vector.broadcast %30 : vector<256x1xi1> to vector<256x128xi1>
    %32 = vector.broadcast %cst_12 : f32 to vector<256x128xf32>
    %33 = arith.select %31, %29, %32 : vector<256x128xi1>, vector<256x128xf32>
    %34 = arith.truncf %33 : vector<256x128xf32> to vector<256x128xbf16>
    %c15_i32 = arith.constant 15 : i32
    %35 = vector.broadcast %c15_i32 : i32 to vector<256x1xi32>
    %36 = arith.cmpi slt, %26, %35 : vector<256x1xi32>
    %c255_i32 = arith.constant 255 : i32
    %37 = tpu.dynamic_rotate %8 by %c255_i32 dim 0 : vector<256x128xf32>, i32 -> vector<256x128xf32>
    %cst_13 = arith.constant 0.000000e+00 : f32
    %38 = vector.shape_cast %36 : vector<256x1xi1> to vector<256x1xi1>
    %39 = vector.broadcast %38 : vector<256x1xi1> to vector<256x128xi1>
    %40 = vector.broadcast %cst_13 : f32 to vector<256x128xf32>
    %41 = arith.select %39, %37, %40 : vector<256x128xi1>, vector<256x128xf32>
    %42 = arith.truncf %41 : vector<256x128xf32> to vector<256x128xbf16>
    %cst_14 = arith.constant 0.000000e+00 : bf16
    %43 = vector.broadcast %cst_14 : bf16 to vector<16x384xbf16>
    %c0_15 = arith.constant 0 : index
    %c0_16 = arith.constant 0 : index
    %44 = vector.load %arg9[%c0_15, %c0_16] : memref<288x384xbf16, #tpu.memory_space<vmem>>, vector<16x384xbf16>
    tpu.vector_store %arg9[%c0_15, %c0_16], %43 {strides = array<i32>} : memref<288x384xbf16, #tpu.memory_space<vmem>>, vector<16x384xbf16>,
    %c272 = arith.constant 272 : index
    %c0_17 = arith.constant 0 : index
    %45 = vector.load %arg9[%c272, %c0_17] : memref<288x384xbf16, #tpu.memory_space<vmem>>, vector<16x384xbf16>
    tpu.vector_store %arg9[%c272, %c0_17], %43 {strides = array<i32>} : memref<288x384xbf16, #tpu.memory_space<vmem>>, vector<16x384xbf16>,
    %c16 = arith.constant 16 : index
    %c0_18 = arith.constant 0 : index
    %46 = vector.load %arg9[%c16, %c0_18] : memref<288x384xbf16, #tpu.memory_space<vmem>>, vector<256x128xbf16>
    tpu.vector_store %arg9[%c16, %c0_18], %34 {strides = array<i32>} : memref<288x384xbf16, #tpu.memory_space<vmem>>, vector<256x128xbf16>,
    %c16_19 = arith.constant 16 : index
    %c128 = arith.constant 128 : index
    %47 = vector.load %arg9[%c16_19, %c128] : memref<288x384xbf16, #tpu.memory_space<vmem>>, vector<256x128xbf16>
    tpu.vector_store %arg9[%c16_19, %c128], %9 {strides = array<i32>} : memref<288x384xbf16, #tpu.memory_space<vmem>>, vector<256x128xbf16>,
    %c16_20 = arith.constant 16 : index
    %c256 = arith.constant 256 : index
    %48 = vector.load %arg9[%c16_20, %c256] : memref<288x384xbf16, #tpu.memory_space<vmem>>, vector<256x128xbf16>
    tpu.vector_store %arg9[%c16_20, %c256], %42 {strides = array<i32>} : memref<288x384xbf16, #tpu.memory_space<vmem>>, vector<256x128xbf16>,
    %c0_21 = arith.constant 0 : index
    %c0_22 = arith.constant 0 : index
    %49 = vector.load %arg9[%c0_21, %c0_22] : memref<288x384xbf16, #tpu.memory_space<vmem>>, vector<256x384xbf16>
    %c0_23 = arith.constant 0 : index
    %c0_24 = arith.constant 0 : index
    %c0_25 = arith.constant 0 : index
    %50 = vector.load %arg4[%c0_23, %c0_24, %c0_25] : memref<3x384x128xbf16, #tpu.memory_space<vmem>>, vector<1x384x128xbf16>
    %51 = vector.shape_cast %50 : vector<1x384x128xbf16> to vector<384x128xbf16>
    %cst_26 = arith.constant dense<0.000000e+00> : vector<256x128xf32>
    %52 = tpu.matmul %49, %51, %cst_26 {dimension_numbers = #tpu.dot_dimension_numbers<[1], [0], [0], [1], [0, 0, 1, 1], [], []>} : vector<256x384xbf16>, vector<384x128xbf16>, vector<256x128xf32> -> vector<256x128xf32>
    %c16_27 = arith.constant 16 : index
    %c0_28 = arith.constant 0 : index
    %53 = vector.load %arg9[%c16_27, %c0_28] : memref<288x384xbf16, #tpu.memory_space<vmem>>, vector<256x384xbf16>
    %c1 = arith.constant 1 : index
    %c0_29 = arith.constant 0 : index
    %c0_30 = arith.constant 0 : index
    %54 = vector.load %arg4[%c1, %c0_29, %c0_30] : memref<3x384x128xbf16, #tpu.memory_space<vmem>>, vector<1x384x128xbf16>
    %55 = vector.shape_cast %54 : vector<1x384x128xbf16> to vector<384x128xbf16>
    %cst_31 = arith.constant dense<0.000000e+00> : vector<256x128xf32>
    %56 = tpu.matmul %53, %55, %cst_31 {dimension_numbers = #tpu.dot_dimension_numbers<[1], [0], [0], [1], [0, 0, 1, 1], [], []>} : vector<256x384xbf16>, vector<384x128xbf16>, vector<256x128xf32> -> vector<256x128xf32>
    %57 = arith.addf %52, %56 : vector<256x128xf32>
    %c32 = arith.constant 32 : index
    %c0_32 = arith.constant 0 : index
    %58 = vector.load %arg9[%c32, %c0_32] : memref<288x384xbf16, #tpu.memory_space<vmem>>, vector<256x384xbf16>
    %c2 = arith.constant 2 : index
    %c0_33 = arith.constant 0 : index
    %c0_34 = arith.constant 0 : index
    %59 = vector.load %arg4[%c2, %c0_33, %c0_34] : memref<3x384x128xbf16, #tpu.memory_space<vmem>>, vector<1x384x128xbf16>
    %60 = vector.shape_cast %59 : vector<1x384x128xbf16> to vector<384x128xbf16>
    %cst_35 = arith.constant dense<0.000000e+00> : vector<256x128xf32>
    %61 = tpu.matmul %58, %60, %cst_35 {dimension_numbers = #tpu.dot_dimension_numbers<[1], [0], [0], [1], [0, 0, 1, 1], [], []>} : vector<256x384xbf16>, vector<384x128xbf16>, vector<256x128xf32> -> vector<256x128xf32>
    %62 = arith.addf %57, %61 : vector<256x128xf32>
    %c0_36 = arith.constant 0 : index
    %c0_37 = arith.constant 0 : index
    %63 = vector.load %arg5[%c0_36, %c0_37] : memref<1x128xf32, #tpu.memory_space<vmem>>, vector<1x128xf32>
    %64 = vector.broadcast %63 : vector<1x128xf32> to vector<256x128xf32>
    %65 = arith.addf %62, %64 : vector<256x128xf32>
    %cst_38 = arith.constant 0.000000e+00 : f32
    %66 = vector.broadcast %cst_38 : f32 to vector<256x128xf32>
    %67 = arith.maximumf %65, %66 : vector<256x128xf32>
    %68 = arith.truncf %67 : vector<256x128xf32> to vector<256x128xbf16>
    %c0_39 = arith.constant 0 : index
    %c0_40 = arith.constant 0 : index
    %69 = vector.load %arg6[%c0_39, %c0_40] : memref<128x128xbf16, #tpu.memory_space<vmem>>, vector<128x128xbf16>
    %cst_41 = arith.constant dense<0.000000e+00> : vector<256x128xf32>
    %70 = tpu.matmul %68, %69, %cst_41 {dimension_numbers = #tpu.dot_dimension_numbers<[1], [0], [0], [1], [0, 0, 1, 1], [], []>} : vector<256x128xbf16>, vector<128x128xbf16>, vector<256x128xf32> -> vector<256x128xf32>
    %c0_42 = arith.constant 0 : index
    %c0_43 = arith.constant 0 : index
    %c0_44 = arith.constant 0 : index
    %71 = vector.load %arg1[%c0_42, %c0_43, %c0_44] : memref<1x256x128xbf16, #tpu.memory_space<vmem>>, vector<1x256x128xbf16>
    %72 = vector.shape_cast %71 : vector<1x256x128xbf16> to vector<256x128xbf16>
    %73 = arith.extf %72 : vector<256x128xbf16> to vector<256x128xf32>
    %c0_45 = arith.constant 0 : index
    %c0_46 = arith.constant 0 : index
    %74 = vector.load %arg7[%c0_45, %c0_46] : memref<1x128xf32, #tpu.memory_space<vmem>>, vector<1x128xf32>
    %75 = vector.broadcast %74 : vector<1x128xf32> to vector<256x128xf32>
    %76 = arith.addf %70, %75 : vector<256x128xf32>
    %77 = arith.addf %76, %73 : vector<256x128xf32>
    %cst_47 = arith.constant 0.000000e+00 : f32
    %78 = vector.broadcast %cst_47 : f32 to vector<256x128xf32>
    %79 = arith.maximumf %77, %78 : vector<256x128xf32>
    %c0_48 = arith.constant 0 : index
    %c0_49 = arith.constant 0 : index
    %c0_50 = arith.constant 0 : index
    %80 = vector.load %arg8[%c0_48, %c0_49, %c0_50] : memref<1x256x128xf32, #tpu.memory_space<vmem>>, vector<1x256x128xf32>
    %81 = vector.shape_cast %80 : vector<1x256x128xf32> to vector<256x128xf32>
    %82 = vector.shape_cast %79 : vector<256x128xf32> to vector<1x256x128xf32>
    tpu.vector_store %arg8[%c0_48, %c0_49, %c0_50], %82 {strides = array<i32>} : memref<1x256x128xf32, #tpu.memory_space<vmem>>, vector<1x256x128xf32>,
    return
  }
  func.func @transform_0(%arg0: i32) -> (i32, i32, i32) {
    %c0_i32 = arith.constant 0 : i32
    %c0_i32_0 = arith.constant 0 : i32
    %c0_i32_1 = arith.constant 0 : i32
    return %arg0, %c0_i32, %c0_i32_0 : i32, i32, i32
  }
  func.func @transform_1(%arg0: i32) -> (i32, i32) {
    %c0_i32 = arith.constant 0 : i32
    %c0_i32_0 = arith.constant 0 : i32
    %c0_i32_1 = arith.constant 0 : i32
    return %c0_i32, %c0_i32_0 : i32, i32
  }
  func.func @transform_2(%arg0: i32) -> (i32, i32) {
    %c0_i32 = arith.constant 0 : i32
    %c0_i32_0 = arith.constant 0 : i32
    %c0_i32_1 = arith.constant 0 : i32
    return %c0_i32, %c0_i32_0 : i32, i32
  }
  func.func @transform_3(%arg0: i32) -> (i32, i32, i32) {
    %c0_i32 = arith.constant 0 : i32
    %c0_i32_0 = arith.constant 0 : i32
    %c0_i32_1 = arith.constant 0 : i32
    %c0_i32_2 = arith.constant 0 : i32
    return %c0_i32, %c0_i32_0, %c0_i32_1 : i32, i32, i32
  }
  func.func @transform_4(%arg0: i32) -> (i32, i32) {
    %c0_i32 = arith.constant 0 : i32
    %c0_i32_0 = arith.constant 0 : i32
    %c0_i32_1 = arith.constant 0 : i32
    return %c0_i32, %c0_i32_0 : i32, i32
  }
  func.func @transform_5(%arg0: i32) -> (i32, i32) {
    %c0_i32 = arith.constant 0 : i32
    %c0_i32_0 = arith.constant 0 : i32
    %c0_i32_1 = arith.constant 0 : i32
    return %c0_i32, %c0_i32_0 : i32, i32
  }
  func.func @transform_6(%arg0: i32) -> (i32, i32) {
    %c0_i32 = arith.constant 0 : i32
    %c0_i32_0 = arith.constant 0 : i32
    %c0_i32_1 = arith.constant 0 : i32
    return %c0_i32, %c0_i32_0 : i32, i32
  }
  func.func @transform_7(%arg0: i32) -> (i32, i32, i32) {
    %c0_i32 = arith.constant 0 : i32
    %c0_i32_0 = arith.constant 0 : i32
    %c0_i32_1 = arith.constant 0 : i32
    return %arg0, %c0_i32, %c0_i32_0 : i32, i32, i32
  }
}

</mosaic_0001>

<llo_original>
// kernel: bottleneck_v1b_forward.1
$region0: #{bottleneck_v1b_forward.1}
  #allocation0 [shape = 'u32[]', space=smem, size = 0x4, offset = 0x4, fixed_abs, tag = 'smem constant byte address 0x4 - core index']
  #allocation1 [shape = 'u32[144,128]{1,0:T(1,128)}', space=vmem, size = 0x12000, scoped, tag = 'internal scratch']
  #allocation2 [shape = 'bf16[288,384]{1,0:T(16,128)(2,1)}', space=vmem, size = 0x36000, scoped, tag = 'scratch operand']
  %s0 = inlined_call_operand.vmem [shape: bf16[2,256,128], index: 0, kind: input, shape index: {}]
  %s1 = inlined_call_operand.vmem [shape: bf16[128,128], index: 1, kind: input, shape index: {}]
  %s2 = inlined_call_operand.vmem [shape: f32[1,128], index: 2, kind: input, shape index: {}]
  %s3 = inlined_call_operand.vmem [shape: bf16[3,384,128], index: 3, kind: input, shape index: {}]
  %s4 = inlined_call_operand.vmem [shape: f32[1,128], index: 4, kind: input, shape index: {}]
  %s5 = inlined_call_operand.vmem [shape: bf16[128,128], index: 5, kind: input, shape index: {}]
  %s6 = inlined_call_operand.vmem [shape: f32[1,128], index: 6, kind: input, shape index: {}]
  %s7 = inlined_call_operand.vmem [shape: f32[2,256,128], index: 7, kind: output, shape index: {}]
  %s8 = sld [smem:[#allocation0]]
  $region61: #{bottleneck_v1b_forward.1} parent=0
    _
  %s10 = ssub.s32 1, %s8
  %s11 = scalar_select 0, %s10, %s8
  loop: start=0, step=1, limit=4
  $region2: #{bottleneck_v1b_forward.1} parent=0 // loop_pre_header
    _
  $region3: #{bottleneck_v1b_forward.1} parent=0 // loop_header
    %s13 = sphi 0, %s17
    %p14 = scmp.ge.s32.totalorder %s13, 4
    %s23 = sphi 0, %s25
    %s26 = sphi 0, %s23
    %s27 = sphi 0, %s26
    %s43 = sphi 0, %s27
    %s47 = sphi 0, %s47
    %s49 = sphi 0, %s47
    %s50 = sphi 0, %s49
    %s64 = sphi 0, %s50
    %s68 = sphi 0, %s68
    %s70 = sphi 0, %s68
    %s71 = sphi 0, %s70
    %s85 = sphi 0, %s71
    %s89 = sphi 0, %s89
    %s91 = sphi 0, %s89
    %s92 = sphi 0, %s91
    %s106 = sphi 0, %s92
    %s110 = sphi 0, %s110
    %s112 = sphi 0, %s110
    %s113 = sphi 0, %s112
    %s127 = sphi 0, %s113
    %s131 = sphi 0, %s131
    %s133 = sphi 0, %s131
    %s134 = sphi 0, %s133
    %s148 = sphi 0, %s134
    %s152 = sphi 0, %s152
    %s154 = sphi 0, %s152
    %s155 = sphi 0, %s154
    %s169 = sphi 0, %s155
    %s175 = sphi 0, %s177
    %s178 = sphi 0, %s175
    %s179 = sphi 0, %s178
    %s195 = sphi 0, %s179
  $region4: #{bottleneck_v1b_forward.1} parent=0 // loop_header_branch
    %16 = sbr.rel (%p14) target = $region8
  $region5: #{bottleneck_v1b_forward.1} parent=0 // loop_body
    %s18 = ssub.s32 %s13, 1
    %s19 = ssub.s32 %s13, 2
    %s20 = sadd.s32 %s13, 1
    %s21 = ssub.s32 %s13, %s20
    %p22 = scmp.eq.s32.totalorder %s21, 0
    %s24 = sadd.s32 %s23, 1
    %s25 = scalar_select %p22, %s23, %s24
    %p28 = pneg %p22
    %p29 = scmp.eq.s32.totalorder %s13, 1
    %p30 = por %p28, %p29
    %p31 = scmp.ne.s32.totalorder %s23, %s26
    %p32 = scmp.eq.s32.totalorder %s13, 0
    %p33 = por %p31, %p32
    %p34 = scmp.ne.s32.totalorder %s23, %s26
    %p35 = scmp.eq.s32.totalorder %s18, 1
    %p36 = por %p34, %p35
    %p37 = scmp.ne.s32.totalorder %s26, %s27
    %p38 = scmp.eq.s32.totalorder %s18, 0
    %p39 = por %p37, %p38
    %p40 = scmp.ne.s32.totalorder %s26, %s27
    %p41 = scmp.eq.s32.totalorder %s19, 1
    %p42 = por %p40, %p41
    %p44 = scmp.ne.s32.totalorder %s27, %s43
    %p45 = scmp.eq.s32.totalorder %s19, 0
    %p46 = por %p44, %p45
    %s48 = sadd.s32 %s47, 1
    %p51 = scmp.eq.s32.totalorder %s13, 1
    %p52 = scmp.ne.s32.totalorder %s47, %s49
    %p53 = scmp.eq.s32.totalorder %s13, 0
    %p54 = por %p52, %p53
    %p55 = scmp.ne.s32.totalorder %s47, %s49
    %p56 = scmp.eq.s32.totalorder %s18, 1
    %p57 = por %p55, %p56
    %p58 = scmp.ne.s32.totalorder %s49, %s50
    %p59 = scmp.eq.s32.totalorder %s18, 0
    %p60 = por %p58, %p59
    %p61 = scmp.ne.s32.totalorder %s49, %s50
    %p62 = scmp.eq.s32.totalorder %s19, 1
    %p63 = por %p61, %p62
    %p65 = scmp.ne.s32.totalorder %s50, %s64
    %p66 = scmp.eq.s32.totalorder %s19, 0
    %p67 = por %p65, %p66
    %s69 = sadd.s32 %s68, 1
    %p72 = scmp.eq.s32.totalorder %s13, 1
    %p73 = scmp.ne.s32.totalorder %s68, %s70
    %p74 = scmp.eq.s32.totalorder %s13, 0
    %p75 = por %p73, %p74
    %p76 = scmp.ne.s32.totalorder %s68, %s70
    %p77 = scmp.eq.s32.totalorder %s18, 1
    %p78 = por %p76, %p77
    %p79 = scmp.ne.s32.totalorder %s70, %s71
    %p80 = scmp.eq.s32.totalorder %s18, 0
    %p81 = por %p79, %p80
    %p82 = scmp.ne.s32.totalorder %s70, %s71
    %p83 = scmp.eq.s32.totalorder %s19, 1
    %p84 = por %p82, %p83
    %p86 = scmp.ne.s32.totalorder %s71, %s85
    %p87 = scmp.eq.s32.totalorder %s19, 0
    %p88 = por %p86, %p87
    %s90 = sadd.s32 %s89, 1
    %p93 = scmp.eq.s32.totalorder %s13, 1
    %p94 = scmp.ne.s32.totalorder %s89, %s91
    %p95 = scmp.eq.s32.totalorder %s13, 0
    %p96 = por %p94, %p95
    %p97 = scmp.ne.s32.totalorder %s89, %s91
    %p98 = scmp.eq.s32.totalorder %s18, 1
    %p99 = por %p97, %p98
    %p100 = scmp.ne.s32.totalorder %s91, %s92
    %p101 = scmp.eq.s32.totalorder %s18, 0
    %p102 = por %p100, %p101
    %p103 = scmp.ne.s32.totalorder %s91, %s92
    %p104 = scmp.eq.s32.totalorder %s19, 1
    %p105 = por %p103, %p104
    %p107 = scmp.ne.s32.totalorder %s92, %s106
    %p108 = scmp.eq.s32.totalorder %s19, 0
    %p109 = por %p107, %p108
    %s111 = sadd.s32 %s110, 1
    %p114 = scmp.eq.s32.totalorder %s13, 1
    %p115 = scmp.ne.s32.totalorder %s110, %s112
    %p116 = scmp.eq.s32.totalorder %s13, 0
    %p117 = por %p115, %p116
    %p118 = scmp.ne.s32.totalorder %s110, %s112
    %p119 = scmp.eq.s32.totalorder %s18, 1
    %p120 = por %p118, %p119
    %p121 = scmp.ne.s32.totalorder %s112, %s113
    %p122 = scmp.eq.s32.totalorder %s18, 0
    %p123 = por %p121, %p122
    %p124 = scmp.ne.s32.totalorder %s112, %s113
    %p125 = scmp.eq.s32.totalorder %s19, 1
    %p126 = por %p124, %p125
    %p128 = scmp.ne.s32.totalorder %s113, %s127
    %p129 = scmp.eq.s32.totalorder %s19, 0
    %p130 = por %p128, %p129
    %s132 = sadd.s32 %s131, 1
    %p135 = scmp.eq.s32.totalorder %s13, 1
    %p136 = scmp.ne.s32.totalorder %s131, %s133
    %p137 = scmp.eq.s32.totalorder %s13, 0
    %p138 = por %p136, %p137
    %p139 = scmp.ne.s32.totalorder %s131, %s133
    %p140 = scmp.eq.s32.totalorder %s18, 1
    %p141 = por %p139, %p140
    %p142 = scmp.ne.s32.totalorder %s133, %s134
    %p143 = scmp.eq.s32.totalorder %s18, 0
    %p144 = por %p142, %p143
    %p145 = scmp.ne.s32.totalorder %s133, %s134
    %p146 = scmp.eq.s32.totalorder %s19, 1
    %p147 = por %p145, %p146
    %p149 = scmp.ne.s32.totalorder %s134, %s148
    %p150 = scmp.eq.s32.totalorder %s19, 0
    %p151 = por %p149, %p150
    %s153 = sadd.s32 %s152, 1
    %p156 = scmp.eq.s32.totalorder %s13, 1
    %p157 = scmp.ne.s32.totalorder %s152, %s154
    %p158 = scmp.eq.s32.totalorder %s13, 0
    %p159 = por %p157, %p158
    %p160 = scmp.ne.s32.totalorder %s152, %s154
    %p161 = scmp.eq.s32.totalorder %s18, 1
    %p162 = por %p160, %p161
    %p163 = scmp.ne.s32.totalorder %s154, %s155
    %p164 = scmp.eq.s32.totalorder %s18, 0
    %p165 = por %p163, %p164
    %p166 = scmp.ne.s32.totalorder %s154, %s155
    %p167 = scmp.eq.s32.totalorder %s19, 1
    %p168 = por %p166, %p167
    %p170 = scmp.ne.s32.totalorder %s155, %s169
    %p171 = scmp.eq.s32.totalorder %s19, 0
    %p172 = por %p170, %p171
    %s173 = ssub.s32 %s13, %s20
    %p174 = scmp.eq.s32.totalorder %s173, 0
    %s176 = sadd.s32 %s175, 1
    %s177 = scalar_select %p174, %s175, %s176
    %p180 = pneg %p174
    %p181 = scmp.eq.s32.totalorder %s13, 1
    %p182 = por %p180, %p181
    %p183 = scmp.ne.s32.totalorder %s175, %s178
    %p184 = scmp.eq.s32.totalorder %s13, 0
    %p185 = por %p183, %p184
    %p186 = scmp.ne.s32.totalorder %s175, %s178
    %p187 = scmp.eq.s32.totalorder %s18, 1
    %p188 = por %p186, %p187
    %p189 = scmp.ne.s32.totalorder %s178, %s179
    %p190 = scmp.eq.s32.totalorder %s18, 0
    %p191 = por %p189, %p190
    %p192 = scmp.ne.s32.totalorder %s178, %s179
    %p193 = scmp.eq.s32.totalorder %s19, 1
    %p194 = por %p192, %p193
    %p196 = scmp.ne.s32.totalorder %s179, %s195
    %p197 = scmp.eq.s32.totalorder %s19, 0
    %p198 = por %p196, %p197
    %p199 = scmp.le.s32.totalorder 1, %s13
    %p200 = scmp.lt.s32.totalorder %s13, 3
    %p201 = pnand %p199, %p200
    %p202 = pneg %p201
    // Predicated region
    $region9: #{bottleneck_v1b_forward.1} parent=5 // pred_check
      _
    $region10: #{bottleneck_v1b_forward.1} parent=5 // pred_check_branch
      %204 = sbr.rel (%p201) target = $region12
    $region11: #{bottleneck_v1b_forward.1} parent=5 // pred_region
      %s205 = ssub.s32 %s13, 1
      // Predicated region
      $region13: #{bottleneck_v1b_forward.1} parent=11 // pred_check
        %p206 = pneg %p60
      $region14: #{bottleneck_v1b_forward.1} parent=11 // pred_check_branch
        %208 = sbr.rel (%p206) target = $region16
      $region15: #{bottleneck_v1b_forward.1} parent=11 // pred_region
        _
      $region16: #{bottleneck_v1b_forward.1} parent=11 // pred_fallthru
        _
      // Predicated region
      $region17: #{bottleneck_v1b_forward.1} parent=11 // pred_check
        %p209 = pneg %p81
      $region18: #{bottleneck_v1b_forward.1} parent=11 // pred_check_branch
        %211 = sbr.rel (%p209) target = $region20
      $region19: #{bottleneck_v1b_forward.1} parent=11 // pred_region
        _
      $region20: #{bottleneck_v1b_forward.1} parent=11 // pred_fallthru
        _
      // Predicated region
      $region21: #{bottleneck_v1b_forward.1} parent=11 // pred_check
        %p212 = pneg %p102
      $region22: #{bottleneck_v1b_forward.1} parent=11 // pred_check_branch
        %214 = sbr.rel (%p212) target = $region24
      $region23: #{bottleneck_v1b_forward.1} parent=11 // pred_region
        _
      $region24: #{bottleneck_v1b_forward.1} parent=11 // pred_fallthru
        _
      // Predicated region
      $region25: #{bottleneck_v1b_forward.1} parent=11 // pred_check
        %p215 = pneg %p123
      $region26: #{bottleneck_v1b_forward.1} parent=11 // pred_check_branch
        %217 = sbr.rel (%p215) target = $region28
      $region27: #{bottleneck_v1b_forward.1} parent=11 // pred_region
        _
      $region28: #{bottleneck_v1b_forward.1} parent=11 // pred_fallthru
        _
      // Predicated region
      $region29: #{bottleneck_v1b_forward.1} parent=11 // pred_check
        %p218 = pneg %p144
      $region30: #{bottleneck_v1b_forward.1} parent=11 // pred_check_branch
        %220 = sbr.rel (%p218) target = $region32
      $region31: #{bottleneck_v1b_forward.1} parent=11 // pred_region
        _
      $region32: #{bottleneck_v1b_forward.1} parent=11 // pred_fallthru
        _
      // Predicated region
      $region33: #{bottleneck_v1b_forward.1} parent=11 // pred_check
        %p221 = pneg %p165
      $region34: #{bottleneck_v1b_forward.1} parent=11 // pred_check_branch
        %223 = sbr.rel (%p221) target = $region36
      $region35: #{bottleneck_v1b_forward.1} parent=11 // pred_region
        _
      $region36: #{bottleneck_v1b_forward.1} parent=11 // pred_fallthru
        _
    $region12: #{bottleneck_v1b_forward.1} parent=5 // pred_fallthru
      _
    %p224 = scmp.lt.s32.totalorder %s13, 2
    // Predicated region
    $region37: #{bottleneck_v1b_forward.1} parent=5 // pred_check
      %p225 = pneg %p224
    $region38: #{bottleneck_v1b_forward.1} parent=5 // pred_check_branch
      %227 = sbr.rel (%p225) target = $region40
    $region39: #{bottleneck_v1b_forward.1} parent=5 // pred_region
      // Predicated region
      $region41: #{bottleneck_v1b_forward.1} parent=39 // pred_check
        %p228 = pneg %p33
      $region42: #{bottleneck_v1b_forward.1} parent=39 // pred_check_branch
        %230 = sbr.rel (%p228) target = $region44
      $region43: #{bottleneck_v1b_forward.1} parent=39 // pred_region
        %p231 = scmp.lt.s32.totalorder %s13, 1
        %s232 = scalar_select %p231, %s13, 1
        %s233 = smul.addr %s232, 32
        %s234 = smul.addr %s233, 4
        %s235 = scalar_lea.vmem %s0, %s234
      $region44: #{bottleneck_v1b_forward.1} parent=39 // pred_fallthru
        _
    $region40: #{bottleneck_v1b_forward.1} parent=5 // pred_fallthru
      _
    %p236 = scmp.le.s32.totalorder 1, %s13
    %p237 = scmp.lt.s32.totalorder %s13, 3
    %p238 = pnand %p236, %p237
    %p239 = pneg %p238
    // Predicated region
    $region45: #{bottleneck_v1b_forward.1} parent=5 // pred_check
      _
    $region46: #{bottleneck_v1b_forward.1} parent=5 // pred_check_branch
      %241 = sbr.rel (%p238) target = $region48
    $region47: #{bottleneck_v1b_forward.1} parent=5 // pred_region
      %s242 = ssub.s32 %s13, 1
      %p243 = scmp.lt.s32.totalorder %s18, 1
      %s244 = scalar_select %p243, %s18, 1
      %s245 = smul.addr %s244, 32
      %s246 = smul.addr %s245, 4
      %s247 = scalar_lea.vmem %s0, %s246
      %p248 = pneg %p39
      %p249 = pneg %p36
      %p250 = pneg %p60
      %p251 = pneg %p57
      %p252 = pneg %p81
      %p253 = pneg %p78
      %p254 = pneg %p102
      %p255 = pneg %p99
      %p256 = pneg %p123
      %p257 = pneg %p120
      %p258 = pneg %p144
      %p259 = pneg %p141
      %p260 = pneg %p165
      %p261 = pneg %p162
      %p262 = pneg %p191
      %p263 = pneg %p188
      %p264 = scmp.lt.s32.totalorder %s18, 1
      %s265 = scalar_select %p264, %s18, 1
      %s266 = smul.addr %s265, 32
      %s267 = smul.addr %s266, 8
      %s268 = scalar_lea.vmem %s7, %s267
      %p269 = scmp.lt.s32.totalorder %s18, 1
      %s270 = scalar_select %p269, %s18, 1
      %s271 = smul.addr %s270, 32
      %s272 = smul.addr %s271, 4
      %s273 = scalar_lea.vmem %s0, %s272
      %p274 = scmp.lt.s32.totalorder %s18, 1
      %s275 = scalar_select %p274, %s18, 1
      %s276 = smul.addr %s275, 32
      %s277 = smul.addr %s276, 8
      %s278 = scalar_lea.vmem %s7, %s277
      %v280 = vld [vmem:[%s273] sm:$0xf]
      %v281 = vld [vmem:[%s273 + $0x4] sm:$0xf]
      %v282 = vld [vmem:[%s273 + $0x8] sm:$0xf]
      %v283 = vld [vmem:[%s273 + $0xc] sm:$0xf]
      %v284 = vld [vmem:[%s273 + $0x10] sm:$0xf]
      %v285 = vld [vmem:[%s273 + $0x14] sm:$0xf]
      %v286 = vld [vmem:[%s273 + $0x18] sm:$0xf]
      %v287 = vld [vmem:[%s273 + $0x1c] sm:$0xf]
      %v288 = vld [vmem:[%s273 + $0x20] sm:$0xf]
      %v289 = vld [vmem:[%s273 + $0x24] sm:$0xf]
      %v290 = vld [vmem:[%s273 + $0x28] sm:$0xf]
      %v291 = vld [vmem:[%s273 + $0x2c] sm:$0xf]
      %v292 = vld [vmem:[%s273 + $0x30] sm:$0xf]
      %v293 = vld [vmem:[%s273 + $0x34] sm:$0xf]
      %v294 = vld [vmem:[%s273 + $0x38] sm:$0xf]
      %v295 = vld [vmem:[%s273 + $0x3c] sm:$0xf]
      %v296 = vld [vmem:[%s273 + $0x40] sm:$0xf]
      %v297 = vld [vmem:[%s273 + $0x44] sm:$0xf]
      %v298 = vld [vmem:[%s273 + $0x48] sm:$0xf]
      %v299 = vld [vmem:[%s273 + $0x4c] sm:$0xf]
      %v300 = vld [vmem:[%s273 + $0x50] sm:$0xf]
      %v301 = vld [vmem:[%s273 + $0x54] sm:$0xf]
      %v302 = vld [vmem:[%s273 + $0x58] sm:$0xf]
      %v303 = vld [vmem:[%s273 + $0x5c] sm:$0xf]
      %v304 = vld [vmem:[%s273 + $0x60] sm:$0xf]
      %v305 = vld [vmem:[%s273 + $0x64] sm:$0xf]
      %v306 = vld [vmem:[%s273 + $0x68] sm:$0xf]
      %v307 = vld [vmem:[%s273 + $0x6c] sm:$0xf]
      %v308 = vld [vmem:[%s273 + $0x70] sm:$0xf]
      %v309 = vld [vmem:[%s273 + $0x74] sm:$0xf]
      %v310 = vld [vmem:[%s273 + $0x78] sm:$0xf]
      %v311 = vld [vmem:[%s273 + $0x7c] sm:$0xf]
      %v312 = vld [vmem:[%s1] sm:$0xf]
      %v313 = vld [vmem:[%s1 + $0x4] sm:$0xf]
      %v314 = vld [vmem:[%s1 + $0x8] sm:$0xf]
      %v315 = vld [vmem:[%s1 + $0xc] sm:$0xf]
      %v316 = vld [vmem:[%s1 + $0x10] sm:$0xf]
      %v317 = vld [vmem:[%s1 + $0x14] sm:$0xf]
      %v318 = vld [vmem:[%s1 + $0x18] sm:$0xf]
      %v319 = vld [vmem:[%s1 + $0x1c] sm:$0xf]
      %v320 = vld [vmem:[%s1 + $0x20] sm:$0xf]
      %v321 = vld [vmem:[%s1 + $0x24] sm:$0xf]
      %v322 = vld [vmem:[%s1 + $0x28] sm:$0xf]
      %v323 = vld [vmem:[%s1 + $0x2c] sm:$0xf]
      %v324 = vld [vmem:[%s1 + $0x30] sm:$0xf]
      %v325 = vld [vmem:[%s1 + $0x34] sm:$0xf]
      %v326 = vld [vmem:[%s1 + $0x38] sm:$0xf]
      %v327 = vld [vmem:[%s1 + $0x3c] sm:$0xf]
      %v328 = vld [vmem:[%s2] sm:$0x1]
      %v330 = vlaneseq
      %v331 = vshrl.u32 %v330, 7
      %v332 = vsub.s32 0, %v331
      %v333 = vrot.slane %v328, %v332
      %v367 = vunpack.c.l.b16 %v280
      %v368 = vunpack.c.l.b16 %v281
      %v369 = vunpack.c.l.b16 %v282
      %v370 = vunpack.c.l.b16 %v283
      %v371 = vunpack.c.l.b16 %v284
      %v372 = vunpack.c.l.b16 %v285
      %v373 = vunpack.c.l.b16 %v286
      %v374 = vunpack.c.l.b16 %v287
      %v375 = vunpack.c.l.b16 %v288
      %v376 = vunpack.c.l.b16 %v289
      %v377 = vunpack.c.l.b16 %v290
      %v378 = vunpack.c.l.b16 %v291
      %v379 = vunpack.c.l.b16 %v292
      %v380 = vunpack.c.l.b16 %v293
      %v381 = vunpack.c.l.b16 %v294
      %v382 = vunpack.c.l.b16 %v295
      %v383 = vunpack.c.l.b16 %v296
      %v384 = vunpack.c.l.b16 %v297
      %v385 = vunpack.c.l.b16 %v298
      %v386 = vunpack.c.l.b16 %v299
      %v387 = vunpack.c.l.b16 %v300
      %v388 = vunpack.c.l.b16 %v301
      %v389 = vunpack.c.l.b16 %v302
      %v390 = vunpack.c.l.b16 %v303
      %v391 = vunpack.c.l.b16 %v304
      %v392 = vunpack.c.l.b16 %v305
      %v393 = vunpack.c.l.b16 %v306
      %v394 = vunpack.c.l.b16 %v307
      %v395 = vunpack.c.l.b16 %v308
      %v396 = vunpack.c.l.b16 %v309
      %v397 = vunpack.c.l.b16 %v310
      %v398 = vunpack.c.l.b16 %v311
      %v399 = vpack.c.b16 %v368, %v367
      %v400 = vpack.c.b16 %v370, %v369
      %v401 = vpack.c.b16 %v372, %v371
      %v402 = vpack.c.b16 %v374, %v373
      %v403 = vpack.c.b16 %v376, %v375
      %v404 = vpack.c.b16 %v378, %v377
      %v405 = vpack.c.b16 %v380, %v379
      %v406 = vpack.c.b16 %v382, %v381
      %v407 = vpack.c.b16 %v384, %v383
      %v408 = vpack.c.b16 %v386, %v385
      %v409 = vpack.c.b16 %v388, %v387
      %v410 = vpack.c.b16 %v390, %v389
      %v411 = vpack.c.b16 %v392, %v391
      %v412 = vpack.c.b16 %v394, %v393
      %v413 = vpack.c.b16 %v396, %v395
      %v414 = vpack.c.b16 %v398, %v397
      %v447 = vunpack.c.l.b16 %v312
      %v448 = vunpack.c.l.b16 %v313
      %v449 = vunpack.c.l.b16 %v314
      %v450 = vunpack.c.l.b16 %v315
      %v451 = vunpack.c.l.b16 %v316
      %v452 = vunpack.c.l.b16 %v317
      %v453 = vunpack.c.l.b16 %v318
      %v454 = vunpack.c.l.b16 %v319
      %v455 = vunpack.c.l.b16 %v320
      %v456 = vunpack.c.l.b16 %v321
      %v457 = vunpack.c.l.b16 %v322
      %v458 = vunpack.c.l.b16 %v323
      %v459 = vunpack.c.l.b16 %v324
      %v460 = vunpack.c.l.b16 %v325
      %v461 = vunpack.c.l.b16 %v326
      %v462 = vunpack.c.l.b16 %v327
      %v463 = vpack.c.b16 %v448, %v447
      %v464 = vpack.c.b16 %v450, %v449
      %v465 = vpack.c.b16 %v452, %v451
      %v466 = vpack.c.b16 %v454, %v453
      %v467 = vpack.c.b16 %v456, %v455
      %v468 = vpack.c.b16 %v458, %v457
      %v469 = vpack.c.b16 %v460, %v459
      %v470 = vpack.c.b16 %v462, %v461
      %479 = vmatprep.subr.bf16.mxu0 0
      %480 = vmatpush1.bf16.msra.mxu0 %v463
      %481 = vmatprep.subr.bf16.mxu0 0
      %482 = vmatpush1.bf16.msra.mxu0 %v464
      %483 = vmatprep.subr.bf16.mxu0 0
      %484 = vmatpush1.bf16.msra.mxu0 %v465
      %485 = vmatprep.subr.bf16.mxu0 0
      %486 = vmatpush1.bf16.msra.mxu0 %v466
      %487 = vmatprep.subr.bf16.mxu0 0
      %488 = vmatpush1.bf16.msra.mxu0 %v467
      %489 = vmatprep.subr.bf16.mxu0 0
      %490 = vmatpush1.bf16.msra.mxu0 %v468
      %491 = vmatprep.subr.bf16.mxu0 0
      %492 = vmatpush1.bf16.msra.mxu0 %v469
      %493 = vmatprep.subr.bf16.mxu0 0
      %494 = vmatpush1.bf16.msra.mxu0 %v470
      %495 = vmatprep.subr.bf16.mxu0 0
      %496 = vmatpush1.bf16.msra.mxu0 0
      %497 = vmatprep.subr.bf16.mxu0 0
      %498 = vmatpush1.bf16.msra.mxu0 0
      %499 = vmatprep.subr.bf16.mxu0 0
      %500 = vmatpush1.bf16.msra.mxu0 0
      %501 = vmatprep.subr.bf16.mxu0 0
      %502 = vmatpush1.bf16.msra.mxu0 0
      %503 = vmatprep.subr.bf16.mxu0 0
      %504 = vmatpush1.bf16.msra.mxu0 0
      %505 = vmatprep.subr.bf16.mxu0 0
      %506 = vmatpush1.bf16.msra.mxu0 0
      %507 = vmatprep.subr.bf16.mxu0 0
      %508 = vmatpush1.bf16.msra.mxu0 0
      %509 = vmatprep.subr.bf16.mxu0 0
      %510 = vmatpush1.bf16.msra.mxu0 0
      %511 = vmatprep.mubr.bf16.mxu0 0
      %512 = vmatmul.mubr.bf16.gmra.mrb[0].mxu0 %v399
      %v513 = vpop.f32.mrb[0].mxu0
      %v514 = vadd.f32 %v333, %v513
      %v515 = vpop.f32.mrb[0].mxu0
      %v516 = vpop.f32.mrb[0].mxu0
      %v517 = vadd.f32 %v333, %v516
      %v518 = vpop.f32.mrb[0].mxu0
      %519 = vmatprep.mubr.bf16.mxu0 0
      %520 = vmatmul.mubr.bf16.gmra.mrb[0].mxu0 %v400
      %v521 = vpop.f32.mrb[0].mxu0
      %v522 = vadd.f32 %v333, %v521
      %v523 = vpop.f32.mrb[0].mxu0
      %v524 = vpop.f32.mrb[0].mxu0
      %v525 = vadd.f32 %v333, %v524
      %v526 = vpop.f32.mrb[0].mxu0
      %527 = vmatprep.mubr.bf16.mxu0 0
      %528 = vmatmul.mubr.bf16.gmra.mrb[0].mxu0 %v401
      %v529 = vpop.f32.mrb[0].mxu0
      %v530 = vadd.f32 %v333, %v529
      %v531 = vpop.f32.mrb[0].mxu0
      %v532 = vpop.f32.mrb[0].mxu0
      %v533 = vadd.f32 %v333, %v532
      %v534 = vpop.f32.mrb[0].mxu0
      %535 = vmatprep.mubr.bf16.mxu0 0
      %536 = vmatmul.mubr.bf16.gmra.mrb[0].mxu0 %v402
      %v537 = vpop.f32.mrb[0].mxu0
      %v538 = vadd.f32 %v333, %v537
      %v539 = vpop.f32.mrb[0].mxu0
      %v540 = vpop.f32.mrb[0].mxu0
      %v541 = vadd.f32 %v333, %v540
      %v542 = vpop.f32.mrb[0].mxu0
      %543 = vmatprep.mubr.bf16.mxu0 0
      %544 = vmatmul.mubr.bf16.gmra.mrb[0].mxu0 %v403
      %v545 = vpop.f32.mrb[0].mxu0
      %v546 = vadd.f32 %v333, %v545
      %v547 = vpop.f32.mrb[0].mxu0
      %v548 = vpop.f32.mrb[0].mxu0
      %v549 = vadd.f32 %v333, %v548
      %v550 = vpop.f32.mrb[0].mxu0
      %551 = vmatprep.mubr.bf16.mxu0 0
      %552 = vmatmul.mubr.bf16.gmra.mrb[0].mxu0 %v404
      %v553 = vpop.f32.mrb[0].mxu0
      %v554 = vadd.f32 %v333, %v553
      %v555 = vpop.f32.mrb[0].mxu0
      %v556 = vpop.f32.mrb[0].mxu0
      %v557 = vadd.f32 %v333, %v556
      %v558 = vpop.f32.mrb[0].mxu0
      %559 = vmatprep.mubr.bf16.mxu0 0
      %560 = vmatmul.mubr.bf16.gmra.mrb[0].mxu0 %v405
      %v561 = vpop.f32.mrb[0].mxu0
      %v562 = vadd.f32 %v333, %v561
      %v563 = vpop.f32.mrb[0].mxu0
      %v564 = vpop.f32.mrb[0].mxu0
      %v565 = vadd.f32 %v333, %v564
      %v566 = vpop.f32.mrb[0].mxu0
      %567 = vmatprep.mubr.bf16.mxu0 0
      %568 = vmatmul.mubr.bf16.gmra.mrb[0].mxu0 %v406
      %v569 = vpop.f32.mrb[0].mxu0
      %v570 = vadd.f32 %v333, %v569
      %v571 = vpop.f32.mrb[0].mxu0
      %v572 = vpop.f32.mrb[0].mxu0
      %v573 = vadd.f32 %v333, %v572
      %v574 = vpop.f32.mrb[0].mxu0
      %575 = vmatprep.mubr.bf16.mxu0 0
      %576 = vmatmul.mubr.bf16.gmra.mrb[0].mxu0 %v407
      %v577 = vpop.f32.mrb[0].mxu0
      %v578 = vadd.f32 %v333, %v577
      %v579 = vpop.f32.mrb[0].mxu0
      %v580 = vpop.f32.mrb[0].mxu0
      %v581 = vadd.f32 %v333, %v580
      %v582 = vpop.f32.mrb[0].mxu0
      %583 = vmatprep.mubr.bf16.mxu0 0
      %584 = vmatmul.mubr.bf16.gmra.mrb[0].mxu0 %v408
      %v585 = vpop.f32.mrb[0].mxu0
      %v586 = vadd.f32 %v333, %v585
      %v587 = vpop.f32.mrb[0].mxu0
      %v588 = vpop.f32.mrb[0].mxu0
      %v589 = vadd.f32 %v333, %v588
      %v590 = vpop.f32.mrb[0].mxu0
      %591 = vmatprep.mubr.bf16.mxu0 0
      %592 = vmatmul.mubr.bf16.gmra.mrb[0].mxu0 %v409
      %v593 = vpop.f32.mrb[0].mxu0
      %v594 = vadd.f32 %v333, %v593
      %v595 = vpop.f32.mrb[0].mxu0
      %v596 = vpop.f32.mrb[0].mxu0
      %v597 = vadd.f32 %v333, %v596
      %v598 = vpop.f32.mrb[0].mxu0
      %599 = vmatprep.mubr.bf16.mxu0 0
      %600 = vmatmul.mubr.bf16.gmra.mrb[0].mxu0 %v410
      %v601 = vpop.f32.mrb[0].mxu0
      %v602 = vadd.f32 %v333, %v601
      %v603 = vpop.f32.mrb[0].mxu0
      %v604 = vpop.f32.mrb[0].mxu0
      %v605 = vadd.f32 %v333, %v604
      %v606 = vpop.f32.mrb[0].mxu0
      %607 = vmatprep.mubr.bf16.mxu0 0
      %608 = vmatmul.mubr.bf16.gmra.mrb[0].mxu0 %v411
      %v609 = vpop.f32.mrb[0].mxu0
      %v610 = vadd.f32 %v333, %v609
      %v611 = vpop.f32.mrb[0].mxu0
      %v612 = vpop.f32.mrb[0].mxu0
      %v613 = vadd.f32 %v333, %v612
      %v614 = vpop.f32.mrb[0].mxu0
      %615 = vmatprep.mubr.bf16.mxu0 0
      %616 = vmatmul.mubr.bf16.gmra.mrb[0].mxu0 %v412
      %v617 = vpop.f32.mrb[0].mxu0
      %v618 = vadd.f32 %v333, %v617
      %v619 = vpop.f32.mrb[0].mxu0
      %v620 = vpop.f32.mrb[0].mxu0
      %v621 = vadd.f32 %v333, %v620
      %v622 = vpop.f32.mrb[0].mxu0
      %623 = vmatprep.mubr.bf16.mxu0 0
      %624 = vmatmul.mubr.bf16.gmra.mrb[0].mxu0 %v413
      %v625 = vpop.f32.mrb[0].mxu0
      %v626 = vadd.f32 %v333, %v625
      %v627 = vpop.f32.mrb[0].mxu0
      %v628 = vpop.f32.mrb[0].mxu0
      %v629 = vadd.f32 %v333, %v628
      %v630 = vpop.f32.mrb[0].mxu0
      %631 = vmatprep.mubr.bf16.mxu0 0
      %632 = vmatmul.mubr.bf16.gmra.mrb[0].mxu0 %v414
      %v633 = vpop.f32.mrb[0].mxu0
      %v634 = vadd.f32 %v333, %v633
      %v635 = vpop.f32.mrb[0].mxu0
      %v636 = vpop.f32.mrb[0].mxu0
      %v637 = vadd.f32 %v333, %v636
      %v638 = vpop.f32.mrb[0].mxu0
      %639 = vdwg.mxu0
      %v640 = vmax.f32 %v514, 0.0
      %v641 = vmax.f32 %v517, 0.0
      %v642 = vmax.f32 %v522, 0.0
      %v643 = vmax.f32 %v525, 0.0
      %v644 = vmax.f32 %v530, 0.0
      %v645 = vmax.f32 %v533, 0.0
      %v646 = vmax.f32 %v538, 0.0
      %v647 = vmax.f32 %v541, 0.0
      %v648 = vmax.f32 %v546, 0.0
      %v649 = vmax.f32 %v549, 0.0
      %v650 = vmax.f32 %v554, 0.0
      %v651 = vmax.f32 %v557, 0.0
      %v652 = vmax.f32 %v562, 0.0
      %v653 = vmax.f32 %v565, 0.0
      %v654 = vmax.f32 %v570, 0.0
      %v655 = vmax.f32 %v573, 0.0
      %v656 = vmax.f32 %v578, 0.0
      %v657 = vmax.f32 %v581, 0.0
      %v658 = vmax.f32 %v586, 0.0
      %v659 = vmax.f32 %v589, 0.0
      %v660 = vmax.f32 %v594, 0.0
      %v661 = vmax.f32 %v597, 0.0
      %v662 = vmax.f32 %v602, 0.0
      %v663 = vmax.f32 %v605, 0.0
      %v664 = vmax.f32 %v610, 0.0
      %v665 = vmax.f32 %v613, 0.0
      %v666 = vmax.f32 %v618, 0.0
      %v667 = vmax.f32 %v621, 0.0
      %v668 = vmax.f32 %v626, 0.0
      %v669 = vmax.f32 %v629, 0.0
      %v670 = vmax.f32 %v634, 0.0
      %v671 = vmax.f32 %v637, 0.0
      %v672 = vpack.c.bf16 %v641, %v640
      %v673 = vpack.c.bf16 %v643, %v642
      %v674 = vpack.c.bf16 %v645, %v644
      %v675 = vpack.c.bf16 %v647, %v646
      %v676 = vpack.c.bf16 %v649, %v648
      %v677 = vpack.c.bf16 %v651, %v650
      %v678 = vpack.c.bf16 %v653, %v652
      %v679 = vpack.c.bf16 %v655, %v654
      %v680 = vpack.c.bf16 %v657, %v656
      %v681 = vpack.c.bf16 %v659, %v658
      %v682 = vpack.c.bf16 %v661, %v660
      %v683 = vpack.c.bf16 %v663, %v662
      %v684 = vpack.c.bf16 %v665, %v664
      %v685 = vpack.c.bf16 %v667, %v666
      %v686 = vpack.c.bf16 %v669, %v668
      %v687 = vpack.c.bf16 %v671, %v670
      %v688 = vlaneseq
      %v689 = vshrl.u32 %v688, 7
      %v690 = vadd.s32 %v689, 8
      %v691 = vadd.s32 %v689, 16
      %v692 = vadd.s32 %v689, 24
      %v693 = vadd.s32 %v689, 32
      %v694 = vadd.s32 %v689, 40
      %v695 = vadd.s32 %v689, 48
      %v696 = vadd.s32 %v689, 56
      %v697 = vadd.s32 %v689, 64
      %v698 = vadd.s32 %v689, 72
      %v699 = vadd.s32 %v689, 80
      %v700 = vadd.s32 %v689, 88
      %v701 = vadd.s32 %v689, 96
      %v702 = vadd.s32 %v689, 104
      %v703 = vadd.s32 %v689, 112
      %v704 = vadd.s32 %v689, 120
      %v705 = vadd.s32 %v689, 128
      %v706 = vadd.s32 %v689, 136
      %v707 = vadd.s32 %v689, 144
      %v708 = vadd.s32 %v689, 152
      %v709 = vadd.s32 %v689, 160
      %v710 = vadd.s32 %v689, 168
      %v711 = vadd.s32 %v689, 176
      %v712 = vadd.s32 %v689, 184
      %v713 = vadd.s32 %v689, 192
      %v714 = vadd.s32 %v689, 200
      %v715 = vadd.s32 %v689, 208
      %v716 = vadd.s32 %v689, 216
      %v717 = vadd.s32 %v689, 224
      %v718 = vadd.s32 %v689, 232
      %v719 = vadd.s32 %v689, 240
      %v720 = vadd.s32 %v689, 248
      %vm721 = vcmp.lt.s32.totalorder %v689, 0
      %v722 = vsub.s32 0, %v689
      %v723 = vsel %vm721, %v722, %v689
      %v724 = vshrl.u32 %v723, 4
      %v725 = vand.u32 %v723, 15
      %v726 = vsub.s32 0, %v725
      %v727 = vsel %vm721, %v726, %v725
      %vm728 = vcmp.lt.s32.totalorder %v690, 0
      %v729 = vsub.s32 0, %v690
      %v730 = vsel %vm728, %v729, %v690
      %v731 = vshrl.u32 %v730, 4
      %v732 = vand.u32 %v730, 15
      %v733 = vsub.s32 0, %v732
      %v734 = vsel %vm728, %v733, %v732
      %vm735 = vcmp.lt.s32.totalorder %v691, 0
      %v736 = vsub.s32 0, %v691
      %v737 = vsel %vm735, %v736, %v691
      %v738 = vshrl.u32 %v737, 4
      %v739 = vand.u32 %v737, 15
      %v740 = vsub.s32 0, %v739
      %v741 = vsel %vm735, %v740, %v739
      %vm742 = vcmp.lt.s32.totalorder %v692, 0
      %v743 = vsub.s32 0, %v692
      %v744 = vsel %vm742, %v743, %v692
      %v745 = vshrl.u32 %v744, 4
      %v746 = vand.u32 %v744, 15
      %v747 = vsub.s32 0, %v746
      %v748 = vsel %vm742, %v747, %v746
      %vm749 = vcmp.lt.s32.totalorder %v693, 0
      %v750 = vsub.s32 0, %v693
      %v751 = vsel %vm749, %v750, %v693
      %v752 = vshrl.u32 %v751, 4
      %v753 = vand.u32 %v751, 15
      %v754 = vsub.s32 0, %v753
      %v755 = vsel %vm749, %v754, %v753
      %vm756 = vcmp.lt.s32.totalorder %v694, 0
      %v757 = vsub.s32 0, %v694
      %v758 = vsel %vm756, %v757, %v694
      %v759 = vshrl.u32 %v758, 4
      %v760 = vand.u32 %v758, 15
      %v761 = vsub.s32 0, %v760
      %v762 = vsel %vm756, %v761, %v760
      %vm763 = vcmp.lt.s32.totalorder %v695, 0
      %v764 = vsub.s32 0, %v695
      %v765 = vsel %vm763, %v764, %v695
      %v766 = vshrl.u32 %v765, 4
      %v767 = vand.u32 %v765, 15
      %v768 = vsub.s32 0, %v767
      %v769 = vsel %vm763, %v768, %v767
      %vm770 = vcmp.lt.s32.totalorder %v696, 0
      %v771 = vsub.s32 0, %v696
      %v772 = vsel %vm770, %v771, %v696
      %v773 = vshrl.u32 %v772, 4
      %v774 = vand.u32 %v772, 15
      %v775 = vsub.s32 0, %v774
      %v776 = vsel %vm770, %v775, %v774
      %vm777 = vcmp.lt.s32.totalorder %v697, 0
      %v778 = vsub.s32 0, %v697
      %v779 = vsel %vm777, %v778, %v697
      %v780 = vshrl.u32 %v779, 4
      %v781 = vand.u32 %v779, 15
      %v782 = vsub.s32 0, %v781
      %v783 = vsel %vm777, %v782, %v781
      %vm784 = vcmp.lt.s32.totalorder %v698, 0
      %v785 = vsub.s32 0, %v698
      %v786 = vsel %vm784, %v785, %v698
      %v787 = vshrl.u32 %v786, 4
      %v788 = vand.u32 %v786, 15
      %v789 = vsub.s32 0, %v788
      %v790 = vsel %vm784, %v789, %v788
      %vm791 = vcmp.lt.s32.totalorder %v699, 0
      %v792 = vsub.s32 0, %v699
      %v793 = vsel %vm791, %v792, %v699
      %v794 = vshrl.u32 %v793, 4
      %v795 = vand.u32 %v793, 15
      %v796 = vsub.s32 0, %v795
      %v797 = vsel %vm791, %v796, %v795
      %vm798 = vcmp.lt.s32.totalorder %v700, 0
      %v799 = vsub.s32 0, %v700
      %v800 = vsel %vm798, %v799, %v700
      %v801 = vshrl.u32 %v800, 4
      %v802 = vand.u32 %v800, 15
      %v803 = vsub.s32 0, %v802
      %v804 = vsel %vm798, %v803, %v802
      %vm805 = vcmp.lt.s32.totalorder %v701, 0
      %v806 = vsub.s32 0, %v701
      %v807 = vsel %vm805, %v806, %v701
      %v808 = vshrl.u32 %v807, 4
      %v809 = vand.u32 %v807, 15
      %v810 = vsub.s32 0, %v809
      %v811 = vsel %vm805, %v810, %v809
      %vm812 = vcmp.lt.s32.totalorder %v702, 0
      %v813 = vsub.s32 0, %v702
      %v814 = vsel %vm812, %v813, %v702
      %v815 = vshrl.u32 %v814, 4
      %v816 = vand.u32 %v814, 15
      %v817 = vsub.s32 0, %v816
      %v818 = vsel %vm812, %v817, %v816
      %vm819 = vcmp.lt.s32.totalorder %v703, 0
      %v820 = vsub.s32 0, %v703
      %v821 = vsel %vm819, %v820, %v703
      %v822 = vshrl.u32 %v821, 4
      %v823 = vand.u32 %v821, 15
      %v824 = vsub.s32 0, %v823
      %v825 = vsel %vm819, %v824, %v823
      %vm826 = vcmp.lt.s32.totalorder %v704, 0
      %v827 = vsub.s32 0, %v704
      %v828 = vsel %vm826, %v827, %v704
      %v829 = vshrl.u32 %v828, 4
      %v830 = vand.u32 %v828, 15
      %v831 = vsub.s32 0, %v830
      %v832 = vsel %vm826, %v831, %v830
      %vm833 = vcmp.lt.s32.totalorder %v705, 0
      %v834 = vsub.s32 0, %v705
      %v835 = vsel %vm833, %v834, %v705
      %v836 = vshrl.u32 %v835, 4
      %v837 = vand.u32 %v835, 15
      %v838 = vsub.s32 0, %v837
      %v839 = vsel %vm833, %v838, %v837
      %vm840 = vcmp.lt.s32.totalorder %v706, 0
      %v841 = vsub.s32 0, %v706
      %v842 = vsel %vm840, %v841, %v706
      %v843 = vshrl.u32 %v842, 4
      %v844 = vand.u32 %v842, 15
      %v845 = vsub.s32 0, %v844
      %v846 = vsel %vm840, %v845, %v844
      %vm847 = vcmp.lt.s32.totalorder %v707, 0
      %v848 = vsub.s32 0, %v707
      %v849 = vsel %vm847, %v848, %v707
      %v850 = vshrl.u32 %v849, 4
      %v851 = vand.u32 %v849, 15
      %v852 = vsub.s32 0, %v851
      %v853 = vsel %vm847, %v852, %v851
      %vm854 = vcmp.lt.s32.totalorder %v708, 0
      %v855 = vsub.s32 0, %v708
      %v856 = vsel %vm854, %v855, %v708
      %v857 = vshrl.u32 %v856, 4
      %v858 = vand.u32 %v856, 15
      %v859 = vsub.s32 0, %v858
      %v860 = vsel %vm854, %v859, %v858
      %vm861 = vcmp.lt.s32.totalorder %v709, 0
      %v862 = vsub.s32 0, %v709
      %v863 = vsel %vm861, %v862, %v709
      %v864 = vshrl.u32 %v863, 4
      %v865 = vand.u32 %v863, 15
      %v866 = vsub.s32 0, %v865
      %v867 = vsel %vm861, %v866, %v865
      %vm868 = vcmp.lt.s32.totalorder %v710, 0
      %v869 = vsub.s32 0, %v710
      %v870 = vsel %vm868, %v869, %v710
      %v871 = vshrl.u32 %v870, 4
      %v872 = vand.u32 %v870, 15
      %v873 = vsub.s32 0, %v872
      %v874 = vsel %vm868, %v873, %v872
      %vm875 = vcmp.lt.s32.totalorder %v711, 0
      %v876 = vsub.s32 0, %v711
      %v877 = vsel %vm875, %v876, %v711
      %v878 = vshrl.u32 %v877, 4
      %v879 = vand.u32 %v877, 15
      %v880 = vsub.s32 0, %v879
      %v881 = vsel %vm875, %v880, %v879
      %vm882 = vcmp.lt.s32.totalorder %v712, 0
      %v883 = vsub.s32 0, %v712
      %v884 = vsel %vm882, %v883, %v712
      %v885 = vshrl.u32 %v884, 4
      %v886 = vand.u32 %v884, 15
      %v887 = vsub.s32 0, %v886
      %v888 = vsel %vm882, %v887, %v886
      %vm889 = vcmp.lt.s32.totalorder %v713, 0
      %v890 = vsub.s32 0, %v713
      %v891 = vsel %vm889, %v890, %v713
      %v892 = vshrl.u32 %v891, 4
      %v893 = vand.u32 %v891, 15
      %v894 = vsub.s32 0, %v893
      %v895 = vsel %vm889, %v894, %v893
      %vm896 = vcmp.lt.s32.totalorder %v714, 0
      %v897 = vsub.s32 0, %v714
      %v898 = vsel %vm896, %v897, %v714
      %v899 = vshrl.u32 %v898, 4
      %v900 = vand.u32 %v898, 15
      %v901 = vsub.s32 0, %v900
      %v902 = vsel %vm896, %v901, %v900
      %vm903 = vcmp.lt.s32.totalorder %v715, 0
      %v904 = vsub.s32 0, %v715
      %v905 = vsel %vm903, %v904, %v715
      %v906 = vshrl.u32 %v905, 4
      %v907 = vand.u32 %v905, 15
      %v908 = vsub.s32 0, %v907
      %v909 = vsel %vm903, %v908, %v907
      %vm910 = vcmp.lt.s32.totalorder %v716, 0
      %v911 = vsub.s32 0, %v716
      %v912 = vsel %vm910, %v911, %v716
      %v913 = vshrl.u32 %v912, 4
      %v914 = vand.u32 %v912, 15
      %v915 = vsub.s32 0, %v914
      %v916 = vsel %vm910, %v915, %v914
      %vm917 = vcmp.lt.s32.totalorder %v717, 0
      %v918 = vsub.s32 0, %v717
      %v919 = vsel %vm917, %v918, %v717
      %v920 = vshrl.u32 %v919, 4
      %v921 = vand.u32 %v919, 15
      %v922 = vsub.s32 0, %v921
      %v923 = vsel %vm917, %v922, %v921
      %vm924 = vcmp.lt.s32.totalorder %v718, 0
      %v925 = vsub.s32 0, %v718
      %v926 = vsel %vm924, %v925, %v718
      %v927 = vshrl.u32 %v926, 4
      %v928 = vand.u32 %v926, 15
      %v929 = vsub.s32 0, %v928
      %v930 = vsel %vm924, %v929, %v928
      %vm931 = vcmp.lt.s32.totalorder %v719, 0
      %v932 = vsub.s32 0, %v719
      %v933 = vsel %vm931, %v932, %v719
      %v934 = vshrl.u32 %v933, 4
      %v935 = vand.u32 %v933, 15
      %v936 = vsub.s32 0, %v935
      %v937 = vsel %vm931, %v936, %v935
      %vm938 = vcmp.lt.s32.totalorder %v720, 0
      %v939 = vsub.s32 0, %v720
      %v940 = vsel %vm938, %v939, %v720
      %v941 = vshrl.u32 %v940, 4
      %v942 = vand.u32 %v940, 15
      %v943 = vsub.s32 0, %v942
      %v944 = vsel %vm938, %v943, %v942
      %vm945 = vcmp.ne.s32.totalorder %v727, 0
      %vm946 = vcmp.ne.s32.totalorder %v734, 0
      %vm947 = vcmp.ne.s32.totalorder %v741, 0
      %vm948 = vcmp.ne.s32.totalorder %v748, 0
      %vm949 = vcmp.ne.s32.totalorder %v755, 0
      %vm950 = vcmp.ne.s32.totalorder %v762, 0
      %vm951 = vcmp.ne.s32.totalorder %v769, 0
      %vm952 = vcmp.ne.s32.totalorder %v776, 0
      %vm953 = vcmp.ne.s32.totalorder %v783, 0
      %vm954 = vcmp.ne.s32.totalorder %v790, 0
      %vm955 = vcmp.ne.s32.totalorder %v797, 0
      %vm956 = vcmp.ne.s32.totalorder %v804, 0
      %vm957 = vcmp.ne.s32.totalorder %v811, 0
      %vm958 = vcmp.ne.s32.totalorder %v818, 0
      %vm959 = vcmp.ne.s32.totalorder %v825, 0
      %vm960 = vcmp.ne.s32.totalorder %v832, 0
      %vm961 = vcmp.ne.s32.totalorder %v839, 0
      %vm962 = vcmp.ne.s32.totalorder %v846, 0
      %vm963 = vcmp.ne.s32.totalorder %v853, 0
      %vm964 = vcmp.ne.s32.totalorder %v860, 0
      %vm965 = vcmp.ne.s32.totalorder %v867, 0
      %vm966 = vcmp.ne.s32.totalorder %v874, 0
      %vm967 = vcmp.ne.s32.totalorder %v881, 0
      %vm968 = vcmp.ne.s32.totalorder %v888, 0
      %vm969 = vcmp.ne.s32.totalorder %v895, 0
      %vm970 = vcmp.ne.s32.totalorder %v902, 0
      %vm971 = vcmp.ne.s32.totalorder %v909, 0
      %vm972 = vcmp.ne.s32.totalorder %v916, 0
      %vm973 = vcmp.ne.s32.totalorder %v923, 0
      %vm974 = vcmp.ne.s32.totalorder %v930, 0
      %vm975 = vcmp.ne.s32.totalorder %v937, 0
      %vm976 = vcmp.ne.s32.totalorder %v944, 0
      %vm977 = vcmp.lt.s32.totalorder %v727, 0
      %vm978 = vcmp.lt.s32.totalorder %v734, 0
      %vm979 = vcmp.lt.s32.totalorder %v741, 0
      %vm980 = vcmp.lt.s32.totalorder %v748, 0
      %vm981 = vcmp.lt.s32.totalorder %v755, 0
      %vm982 = vcmp.lt.s32.totalorder %v762, 0
      %vm983 = vcmp.lt.s32.totalorder %v769, 0
      %vm984 = vcmp.lt.s32.totalorder %v776, 0
      %vm985 = vcmp.lt.s32.totalorder %v783, 0
      %vm986 = vcmp.lt.s32.totalorder %v790, 0
      %vm987 = vcmp.lt.s32.totalorder %v797, 0
      %vm988 = vcmp.lt.s32.totalorder %v804, 0
      %vm989 = vcmp.lt.s32.totalorder %v811, 0
      %vm990 = vcmp.lt.s32.totalorder %v818, 0
      %vm991 = vcmp.lt.s32.totalorder %v825, 0
      %vm992 = vcmp.lt.s32.totalorder %v832, 0
      %vm993 = vcmp.lt.s32.totalorder %v839, 0
      %vm994 = vcmp.lt.s32.totalorder %v846, 0
      %vm995 = vcmp.lt.s32.totalorder %v853, 0
      %vm996 = vcmp.lt.s32.totalorder %v860, 0
      %vm997 = vcmp.lt.s32.totalorder %v867, 0
      %vm998 = vcmp.lt.s32.totalorder %v874, 0
      %vm999 = vcmp.lt.s32.totalorder %v881, 0
      %vm1000 = vcmp.lt.s32.totalorder %v888, 0
      %vm1001 = vcmp.lt.s32.totalorder %v895, 0
      %vm1002 = vcmp.lt.s32.totalorder %v902, 0
      %vm1003 = vcmp.lt.s32.totalorder %v909, 0
      %vm1004 = vcmp.lt.s32.totalorder %v916, 0
      %vm1005 = vcmp.lt.s32.totalorder %v923, 0
      %vm1006 = vcmp.lt.s32.totalorder %v930, 0
      %vm1007 = vcmp.lt.s32.totalorder %v937, 0
      %vm1008 = vcmp.lt.s32.totalorder %v944, 0
      %vm1009 = vmand %vm977, %vm945
      %vm1010 = vmand %vm978, %vm946
      %vm1011 = vmand %vm979, %vm947
      %vm1012 = vmand %vm980, %vm948
      %vm1013 = vmand %vm981, %vm949
      %vm1014 = vmand %vm982, %vm950
      %vm1015 = vmand %vm983, %vm951
      %vm1016 = vmand %vm984, %vm952
      %vm1017 = vmand %vm985, %vm953
      %vm1018 = vmand %vm986, %vm954
      %vm1019 = vmand %vm987, %vm955
      %vm1020 = vmand %vm988, %vm956
      %vm1021 = vmand %vm989, %vm957
      %vm1022 = vmand %vm990, %vm958
      %vm1023 = vmand %vm991, %vm959
      %vm1024 = vmand %vm992, %vm960
      %vm1025 = vmand %vm993, %vm961
      %vm1026 = vmand %vm994, %vm962
      %vm1027 = vmand %vm995, %vm963
      %vm1028 = vmand %vm996, %vm964
      %vm1029 = vmand %vm997, %vm965
      %vm1030 = vmand %vm998, %vm966
      %vm1031 = vmand %vm999, %vm967
      %vm1032 = vmand %vm1000, %vm968
      %vm1033 = vmand %vm1001, %vm969
      %vm1034 = vmand %vm1002, %vm970
      %vm1035 = vmand %vm1003, %vm971
      %vm1036 = vmand %vm1004, %vm972
      %vm1037 = vmand %vm1005, %vm973
      %vm1038 = vmand %vm1006, %vm974
      %vm1039 = vmand %vm1007, %vm975
      %vm1040 = vmand %vm1008, %vm976
      %v1041 = vadd.s32 %v727, 16
      %v1042 = vadd.s32 %v734, 16
      %v1043 = vadd.s32 %v741, 16
      %v1044 = vadd.s32 %v748, 16
      %v1045 = vadd.s32 %v755, 16
      %v1046 = vadd.s32 %v762, 16
      %v1047 = vadd.s32 %v769, 16
      %v1048 = vadd.s32 %v776, 16
      %v1049 = vadd.s32 %v783, 16
      %v1050 = vadd.s32 %v790, 16
      %v1051 = vadd.s32 %v797, 16
      %v1052 = vadd.s32 %v804, 16
      %v1053 = vadd.s32 %v811, 16
      %v1054 = vadd.s32 %v818, 16
      %v1055 = vadd.s32 %v825, 16
      %v1056 = vadd.s32 %v832, 16
      %v1057 = vadd.s32 %v839, 16
      %v1058 = vadd.s32 %v846, 16
      %v1059 = vadd.s32 %v853, 16
      %v1060 = vadd.s32 %v860, 16
      %v1061 = vadd.s32 %v867, 16
      %v1062 = vadd.s32 %v874, 16
      %v1063 = vadd.s32 %v881, 16
      %v1064 = vadd.s32 %v888, 16
      %v1065 = vadd.s32 %v895, 16
      %v1066 = vadd.s32 %v902, 16
      %v1067 = vadd.s32 %v909, 16
      %v1068 = vadd.s32 %v916, 16
      %v1069 = vadd.s32 %v923, 16
      %v1070 = vadd.s32 %v930, 16
      %v1071 = vadd.s32 %v937, 16
      %v1072 = vadd.s32 %v944, 16
      %v1073 = vsel %vm1009, %v1041, %v727
      %v1074 = vsel %vm1010, %v1042, %v734
      %v1075 = vsel %vm1011, %v1043, %v741
      %v1076 = vsel %vm1012, %v1044, %v748
      %v1077 = vsel %vm1013, %v1045, %v755
      %v1078 = vsel %vm1014, %v1046, %v762
      %v1079 = vsel %vm1015, %v1047, %v769
      %v1080 = vsel %vm1016, %v1048, %v776
      %v1081 = vsel %vm1017, %v1049, %v783
      %v1082 = vsel %vm1018, %v1050, %v790
      %v1083 = vsel %vm1019, %v1051, %v797
      %v1084 = vsel %vm1020, %v1052, %v804
      %v1085 = vsel %vm1021, %v1053, %v811
      %v1086 = vsel %vm1022, %v1054, %v818
      %v1087 = vsel %vm1023, %v1055, %v825
      %v1088 = vsel %vm1024, %v1056, %v832
      %v1089 = vsel %vm1025, %v1057, %v839
      %v1090 = vsel %vm1026, %v1058, %v846
      %v1091 = vsel %vm1027, %v1059, %v853
      %v1092 = vsel %vm1028, %v1060, %v860
      %v1093 = vsel %vm1029, %v1061, %v867
      %v1094 = vsel %vm1030, %v1062, %v874
      %v1095 = vsel %vm1031, %v1063, %v881
      %v1096 = vsel %vm1032, %v1064, %v888
      %v1097 = vsel %vm1033, %v1065, %v895
      %v1098 = vsel %vm1034, %v1066, %v902
      %v1099 = vsel %vm1035, %v1067, %v909
      %v1100 = vsel %vm1036, %v1068, %v916
      %v1101 = vsel %vm1037, %v1069, %v923
      %v1102 = vsel %vm1038, %v1070, %v930
      %v1103 = vsel %vm1039, %v1071, %v937
      %v1104 = vsel %vm1040, %v1072, %v944
      %vm1105 = vcmp.ge.s32.totalorder %v1073, 1
      %vm1106 = vcmp.ge.s32.totalorder %v1074, 1
      %vm1107 = vcmp.ge.s32.totalorder %v1075, 1
      %vm1108 = vcmp.ge.s32.totalorder %v1076, 1
      %vm1109 = vcmp.ge.s32.totalorder %v1077, 1
      %vm1110 = vcmp.ge.s32.totalorder %v1078, 1
      %vm1111 = vcmp.ge.s32.totalorder %v1079, 1
      %vm1112 = vcmp.ge.s32.totalorder %v1080, 1
      %vm1113 = vcmp.ge.s32.totalorder %v1081, 1
      %vm1114 = vcmp.ge.s32.totalorder %v1082, 1
      %vm1115 = vcmp.ge.s32.totalorder %v1083, 1
      %vm1116 = vcmp.ge.s32.totalorder %v1084, 1
      %vm1117 = vcmp.ge.s32.totalorder %v1085, 1
      %vm1118 = vcmp.ge.s32.totalorder %v1086, 1
      %vm1119 = vcmp.ge.s32.totalorder %v1087, 1
      %vm1120 = vcmp.ge.s32.totalorder %v1088, 1
      %vm1121 = vcmp.ge.s32.totalorder %v1089, 1
      %vm1122 = vcmp.ge.s32.totalorder %v1090, 1
      %vm1123 = vcmp.ge.s32.totalorder %v1091, 1
      %vm1124 = vcmp.ge.s32.totalorder %v1092, 1
      %vm1125 = vcmp.ge.s32.totalorder %v1093, 1
      %vm1126 = vcmp.ge.s32.totalorder %v1094, 1
      %vm1127 = vcmp.ge.s32.totalorder %v1095, 1
      %vm1128 = vcmp.ge.s32.totalorder %v1096, 1
      %vm1129 = vcmp.ge.s32.totalorder %v1097, 1
      %vm1130 = vcmp.ge.s32.totalorder %v1098, 1
      %vm1131 = vcmp.ge.s32.totalorder %v1099, 1
      %vm1132 = vcmp.ge.s32.totalorder %v1100, 1
      %vm1133 = vcmp.ge.s32.totalorder %v1101, 1
      %vm1134 = vcmp.ge.s32.totalorder %v1102, 1
      %vm1135 = vcmp.ge.s32.totalorder %v1103, 1
      %vm1136 = vcmp.ge.s32.totalorder %v1104, 1
      %v1137 = vrot.slane %v640, 7
      %v1138 = vrot.slane %v641, 7
      %v1139 = vrot.slane %v642, 7
      %v1140 = vrot.slane %v643, 7
      %v1141 = vrot.slane %v644, 7
      %v1142 = vrot.slane %v645, 7
      %v1143 = vrot.slane %v646, 7
      %v1144 = vrot.slane %v647, 7
      %v1145 = vrot.slane %v648, 7
      %v1146 = vrot.slane %v649, 7
      %v1147 = vrot.slane %v650, 7
      %v1148 = vrot.slane %v651, 7
      %v1149 = vrot.slane %v652, 7
      %v1150 = vrot.slane %v653, 7
      %v1151 = vrot.slane %v654, 7
      %v1152 = vrot.slane %v655, 7
      %v1153 = vrot.slane %v656, 7
      %v1154 = vrot.slane %v657, 7
      %v1155 = vrot.slane %v658, 7
      %v1156 = vrot.slane %v659, 7
      %v1157 = vrot.slane %v660, 7
      %v1158 = vrot.slane %v661, 7
      %v1159 = vrot.slane %v662, 7
      %v1160 = vrot.slane %v663, 7
      %v1161 = vrot.slane %v664, 7
      %v1162 = vrot.slane %v665, 7
      %v1163 = vrot.slane %v666, 7
      %v1164 = vrot.slane %v667, 7
      %v1165 = vrot.slane %v668, 7
      %v1166 = vrot.slane %v669, 7
      %v1167 = vrot.slane %v670, 7
      %v1168 = vrot.slane %v671, 7
      %vm1169 = vcmp.lt.s32.totalorder %v689, 1
      %v1170 = vsel %vm1169, %v1167, %v1168
      %v1171 = vsel %vm1169, %v1166, %v1167
      %v1172 = vsel %vm1169, %v1165, %v1166
      %v1173 = vsel %vm1169, %v1164, %v1165
      %v1174 = vsel %vm1169, %v1163, %v1164
      %v1175 = vsel %vm1169, %v1162, %v1163
      %v1176 = vsel %vm1169, %v1161, %v1162
      %v1177 = vsel %vm1169, %v1160, %v1161
      %v1178 = vsel %vm1169, %v1159, %v1160
      %v1179 = vsel %vm1169, %v1158, %v1159
      %v1180 = vsel %vm1169, %v1157, %v1158
      %v1181 = vsel %vm1169, %v1156, %v1157
      %v1182 = vsel %vm1169, %v1155, %v1156
      %v1183 = vsel %vm1169, %v1154, %v1155
      %v1184 = vsel %vm1169, %v1153, %v1154
      %v1185 = vsel %vm1169, %v1152, %v1153
      %v1186 = vsel %vm1169, %v1151, %v1152
      %v1187 = vsel %vm1169, %v1150, %v1151
      %v1188 = vsel %vm1169, %v1149, %v1150
      %v1189 = vsel %vm1169, %v1148, %v1149
      %v1190 = vsel %vm1169, %v1147, %v1148
      %v1191 = vsel %vm1169, %v1146, %v1147
      %v1192 = vsel %vm1169, %v1145, %v1146
      %v1193 = vsel %vm1169, %v1144, %v1145
      %v1194 = vsel %vm1169, %v1143, %v1144
      %v1195 = vsel %vm1169, %v1142, %v1143
      %v1196 = vsel %vm1169, %v1141, %v1142
      %v1197 = vsel %vm1169, %v1140, %v1141
      %v1198 = vsel %vm1169, %v1139, %v1140
      %v1199 = vsel %vm1169, %v1138, %v1139
      %v1200 = vsel %vm1169, %v1137, %v1138
      %v1201 = vsel %vm1169, %v1168, %v1137
      %v1202 = vsel %vm1105, 1, 0
      %v1203 = vsel %vm1106, 1, 0
      %v1204 = vsel %vm1107, 1, 0
      %v1205 = vsel %vm1108, 1, 0
      %v1206 = vsel %vm1109, 1, 0
      %v1207 = vsel %vm1110, 1, 0
      %v1208 = vsel %vm1111, 1, 0
      %v1209 = vsel %vm1112, 1, 0
      %v1210 = vsel %vm1113, 1, 0
      %v1211 = vsel %vm1114, 1, 0
      %v1212 = vsel %vm1115, 1, 0
      %v1213 = vsel %vm1116, 1, 0
      %v1214 = vsel %vm1117, 1, 0
      %v1215 = vsel %vm1118, 1, 0
      %v1216 = vsel %vm1119, 1, 0
      %v1217 = vsel %vm1120, 1, 0
      %v1218 = vsel %vm1121, 1, 0
      %v1219 = vsel %vm1122, 1, 0
      %v1220 = vsel %vm1123, 1, 0
      %v1221 = vsel %vm1124, 1, 0
      %v1222 = vsel %vm1125, 1, 0
      %v1223 = vsel %vm1126, 1, 0
      %v1224 = vsel %vm1127, 1, 0
      %v1225 = vsel %vm1128, 1, 0
      %v1226 = vsel %vm1129, 1, 0
      %v1227 = vsel %vm1130, 1, 0
      %v1228 = vsel %vm1131, 1, 0
      %v1229 = vsel %vm1132, 1, 0
      %v1230 = vsel %vm1133, 1, 0
      %v1231 = vsel %vm1134, 1, 0
      %v1232 = vsel %vm1135, 1, 0
      %v1233 = vsel %vm1136, 1, 0
      %vm1234 = vcmp.eq.s32.totalorder %v1202, 1
      %vm1235 = vcmp.eq.s32.totalorder %v1203, 1
      %vm1236 = vcmp.eq.s32.totalorder %v1204, 1
      %vm1237 = vcmp.eq.s32.totalorder %v1205, 1
      %vm1238 = vcmp.eq.s32.totalorder %v1206, 1
      %vm1239 = vcmp.eq.s32.totalorder %v1207, 1
      %vm1240 = vcmp.eq.s32.totalorder %v1208, 1
      %vm1241 = vcmp.eq.s32.totalorder %v1209, 1
      %vm1242 = vcmp.eq.s32.totalorder %v1210, 1
      %vm1243 = vcmp.eq.s32.totalorder %v1211, 1
      %vm1244 = vcmp.eq.s32.totalorder %v1212, 1
      %vm1245 = vcmp.eq.s32.totalorder %v1213, 1
      %vm1246 = vcmp.eq.s32.totalorder %v1214, 1
      %vm1247 = vcmp.eq.s32.totalorder %v1215, 1
      %vm1248 = vcmp.eq.s32.totalorder %v1216, 1
      %vm1249 = vcmp.eq.s32.totalorder %v1217, 1
      %vm1250 = vcmp.eq.s32.totalorder %v1218, 1
      %vm1251 = vcmp.eq.s32.totalorder %v1219, 1
      %vm1252 = vcmp.eq.s32.totalorder %v1220, 1
      %vm1253 = vcmp.eq.s32.totalorder %v1221, 1
      %vm1254 = vcmp.eq.s32.totalorder %v1222, 1
      %vm1255 = vcmp.eq.s32.totalorder %v1223, 1
      %vm1256 = vcmp.eq.s32.totalorder %v1224, 1
      %vm1257 = vcmp.eq.s32.totalorder %v1225, 1
      %vm1258 = vcmp.eq.s32.totalorder %v1226, 1
      %vm1259 = vcmp.eq.s32.totalorder %v1227, 1
      %vm1260 = vcmp.eq.s32.totalorder %v1228, 1
      %vm1261 = vcmp.eq.s32.totalorder %v1229, 1
      %vm1262 = vcmp.eq.s32.totalorder %v1230, 1
      %vm1263 = vcmp.eq.s32.totalorder %v1231, 1
      %vm1264 = vcmp.eq.s32.totalorder %v1232, 1
      %vm1265 = vcmp.eq.s32.totalorder %v1233, 1
      %v1266 = vsel %vm1234, %v1201, 0.0
      %v1267 = vsel %vm1235, %v1200, 0.0
      %v1268 = vsel %vm1236, %v1199, 0.0
      %v1269 = vsel %vm1237, %v1198, 0.0
      %v1270 = vsel %vm1238, %v1197, 0.0
      %v1271 = vsel %vm1239, %v1196, 0.0
      %v1272 = vsel %vm1240, %v1195, 0.0
      %v1273 = vsel %vm1241, %v1194, 0.0
      %v1274 = vsel %vm1242, %v1193, 0.0
      %v1275 = vsel %vm1243, %v1192, 0.0
      %v1276 = vsel %vm1244, %v1191, 0.0
      %v1277 = vsel %vm1245, %v1190, 0.0
      %v1278 = vsel %vm1246, %v1189, 0.0
      %v1279 = vsel %vm1247, %v1188, 0.0
      %v1280 = vsel %vm1248, %v1187, 0.0
      %v1281 = vsel %vm1249, %v1186, 0.0
      %v1282 = vsel %vm1250, %v1185, 0.0
      %v1283 = vsel %vm1251, %v1184, 0.0
      %v1284 = vsel %vm1252, %v1183, 0.0
      %v1285 = vsel %vm1253, %v1182, 0.0
      %v1286 = vsel %vm1254, %v1181, 0.0
      %v1287 = vsel %vm1255, %v1180, 0.0
      %v1288 = vsel %vm1256, %v1179, 0.0
      %v1289 = vsel %vm1257, %v1178, 0.0
      %v1290 = vsel %vm1258, %v1177, 0.0
      %v1291 = vsel %vm1259, %v1176, 0.0
      %v1292 = vsel %vm1260, %v1175, 0.0
      %v1293 = vsel %vm1261, %v1174, 0.0
      %v1294 = vsel %vm1262, %v1173, 0.0
      %v1295 = vsel %vm1263, %v1172, 0.0
      %v1296 = vsel %vm1264, %v1171, 0.0
      %v1297 = vsel %vm1265, %v1170, 0.0
      %v1298 = vpack.c.bf16 %v1267, %v1266
      %v1299 = vpack.c.bf16 %v1269, %v1268
      %v1300 = vpack.c.bf16 %v1271, %v1270
      %v1301 = vpack.c.bf16 %v1273, %v1272
      %v1302 = vpack.c.bf16 %v1275, %v1274
      %v1303 = vpack.c.bf16 %v1277, %v1276
      %v1304 = vpack.c.bf16 %v1279, %v1278
      %v1305 = vpack.c.bf16 %v1281, %v1280
      %v1306 = vpack.c.bf16 %v1283, %v1282
      %v1307 = vpack.c.bf16 %v1285, %v1284
      %v1308 = vpack.c.bf16 %v1287, %v1286
      %v1309 = vpack.c.bf16 %v1289, %v1288
      %v1310 = vpack.c.bf16 %v1291, %v1290
      %v1311 = vpack.c.bf16 %v1293, %v1292
      %v1312 = vpack.c.bf16 %v1295, %v1294
      %v1313 = vpack.c.bf16 %v1297, %v1296
      %vm1314 = vcmp.lt.s32.totalorder %v1073, 15
      %vm1315 = vcmp.lt.s32.totalorder %v1074, 15
      %vm1316 = vcmp.lt.s32.totalorder %v1075, 15
      %vm1317 = vcmp.lt.s32.totalorder %v1076, 15
      %vm1318 = vcmp.lt.s32.totalorder %v1077, 15
      %vm1319 = vcmp.lt.s32.totalorder %v1078, 15
      %vm1320 = vcmp.lt.s32.totalorder %v1079, 15
      %vm1321 = vcmp.lt.s32.totalorder %v1080, 15
      %vm1322 = vcmp.lt.s32.totalorder %v1081, 15
      %vm1323 = vcmp.lt.s32.totalorder %v1082, 15
      %vm1324 = vcmp.lt.s32.totalorder %v1083, 15
      %vm1325 = vcmp.lt.s32.totalorder %v1084, 15
      %vm1326 = vcmp.lt.s32.totalorder %v1085, 15
      %vm1327 = vcmp.lt.s32.totalorder %v1086, 15
      %vm1328 = vcmp.lt.s32.totalorder %v1087, 15
      %vm1329 = vcmp.lt.s32.totalorder %v1088, 15
      %vm1330 = vcmp.lt.s32.totalorder %v1089, 15
      %vm1331 = vcmp.lt.s32.totalorder %v1090, 15
      %vm1332 = vcmp.lt.s32.totalorder %v1091, 15
      %vm1333 = vcmp.lt.s32.totalorder %v1092, 15
      %vm1334 = vcmp.lt.s32.totalorder %v1093, 15
      %vm1335 = vcmp.lt.s32.totalorder %v1094, 15
      %vm1336 = vcmp.lt.s32.totalorder %v1095, 15
      %vm1337 = vcmp.lt.s32.totalorder %v1096, 15
      %vm1338 = vcmp.lt.s32.totalorder %v1097, 15
      %vm1339 = vcmp.lt.s32.totalorder %v1098, 15
      %vm1340 = vcmp.lt.s32.totalorder %v1099, 15
      %vm1341 = vcmp.lt.s32.totalorder %v1100, 15
      %vm1342 = vcmp.lt.s32.totalorder %v1101, 15
      %vm1343 = vcmp.lt.s32.totalorder %v1102, 15
      %vm1344 = vcmp.lt.s32.totalorder %v1103, 15
      %vm1345 = vcmp.lt.s32.totalorder %v1104, 15
      %v1346 = vrot.slane %v640, 1
      %v1347 = vrot.slane %v641, 1
      %v1348 = vrot.slane %v642, 1
      %v1349 = vrot.slane %v643, 1
      %v1350 = vrot.slane %v644, 1
      %v1351 = vrot.slane %v645, 1
      %v1352 = vrot.slane %v646, 1
      %v1353 = vrot.slane %v647, 1
      %v1354 = vrot.slane %v648, 1
      %v1355 = vrot.slane %v649, 1
      %v1356 = vrot.slane %v650, 1
      %v1357 = vrot.slane %v651, 1
      %v1358 = vrot.slane %v652, 1
      %v1359 = vrot.slane %v653, 1
      %v1360 = vrot.slane %v654, 1
      %v1361 = vrot.slane %v655, 1
      %v1362 = vrot.slane %v656, 1
      %v1363 = vrot.slane %v657, 1
      %v1364 = vrot.slane %v658, 1
      %v1365 = vrot.slane %v659, 1
      %v1366 = vrot.slane %v660, 1
      %v1367 = vrot.slane %v661, 1
      %v1368 = vrot.slane %v662, 1
      %v1369 = vrot.slane %v663, 1
      %v1370 = vrot.slane %v664, 1
      %v1371 = vrot.slane %v665, 1
      %v1372 = vrot.slane %v666, 1
      %v1373 = vrot.slane %v667, 1
      %v1374 = vrot.slane %v668, 1
      %v1375 = vrot.slane %v669, 1
      %v1376 = vrot.slane %v670, 1
      %v1377 = vrot.slane %v671, 1
      %vm1378 = vcmp.lt.s32.totalorder %v689, 7
      %v1379 = vsel %vm1378, %v1376, %v1377
      %v1380 = vsel %vm1378, %v1375, %v1376
      %v1381 = vsel %vm1378, %v1374, %v1375
      %v1382 = vsel %vm1378, %v1373, %v1374
      %v1383 = vsel %vm1378, %v1372, %v1373
      %v1384 = vsel %vm1378, %v1371, %v1372
      %v1385 = vsel %vm1378, %v1370, %v1371
      %v1386 = vsel %vm1378, %v1369, %v1370
      %v1387 = vsel %vm1378, %v1368, %v1369
      %v1388 = vsel %vm1378, %v1367, %v1368
      %v1389 = vsel %vm1378, %v1366, %v1367
      %v1390 = vsel %vm1378, %v1365, %v1366
      %v1391 = vsel %vm1378, %v1364, %v1365
      %v1392 = vsel %vm1378, %v1363, %v1364
      %v1393 = vsel %vm1378, %v1362, %v1363
      %v1394 = vsel %vm1378, %v1361, %v1362
      %v1395 = vsel %vm1378, %v1360, %v1361
      %v1396 = vsel %vm1378, %v1359, %v1360
      %v1397 = vsel %vm1378, %v1358, %v1359
      %v1398 = vsel %vm1378, %v1357, %v1358
      %v1399 = vsel %vm1378, %v1356, %v1357
      %v1400 = vsel %vm1378, %v1355, %v1356
      %v1401 = vsel %vm1378, %v1354, %v1355
      %v1402 = vsel %vm1378, %v1353, %v1354
      %v1403 = vsel %vm1378, %v1352, %v1353
      %v1404 = vsel %vm1378, %v1351, %v1352
      %v1405 = vsel %vm1378, %v1350, %v1351
      %v1406 = vsel %vm1378, %v1349, %v1350
      %v1407 = vsel %vm1378, %v1348, %v1349
      %v1408 = vsel %vm1378, %v1347, %v1348
      %v1409 = vsel %vm1378, %v1346, %v1347
      %v1410 = vsel %vm1378, %v1377, %v1346
      %v1411 = vsel %vm1314, 1, 0
      %v1412 = vsel %vm1315, 1, 0
      %v1413 = vsel %vm1316, 1, 0
      %v1414 = vsel %vm1317, 1, 0
      %v1415 = vsel %vm1318, 1, 0
      %v1416 = vsel %vm1319, 1, 0
      %v1417 = vsel %vm1320, 1, 0
      %v1418 = vsel %vm1321, 1, 0
      %v1419 = vsel %vm1322, 1, 0
      %v1420 = vsel %vm1323, 1, 0
      %v1421 = vsel %vm1324, 1, 0
      %v1422 = vsel %vm1325, 1, 0
      %v1423 = vsel %vm1326, 1, 0
      %v1424 = vsel %vm1327, 1, 0
      %v1425 = vsel %vm1328, 1, 0
      %v1426 = vsel %vm1329, 1, 0
      %v1427 = vsel %vm1330, 1, 0
      %v1428 = vsel %vm1331, 1, 0
      %v1429 = vsel %vm1332, 1, 0
      %v1430 = vsel %vm1333, 1, 0
      %v1431 = vsel %vm1334, 1, 0
      %v1432 = vsel %vm1335, 1, 0
      %v1433 = vsel %vm1336, 1, 0
      %v1434 = vsel %vm1337, 1, 0
      %v1435 = vsel %vm1338, 1, 0
      %v1436 = vsel %vm1339, 1, 0
      %v1437 = vsel %vm1340, 1, 0
      %v1438 = vsel %vm1341, 1, 0
      %v1439 = vsel %vm1342, 1, 0
      %v1440 = vsel %vm1343, 1, 0
      %v1441 = vsel %vm1344, 1, 0
      %v1442 = vsel %vm1345, 1, 0
      %vm1443 = vcmp.eq.s32.totalorder %v1411, 1
      %vm1444 = vcmp.eq.s32.totalorder %v1412, 1
      %vm1445 = vcmp.eq.s32.totalorder %v1413, 1
      %vm1446 = vcmp.eq.s32.totalorder %v1414, 1
      %vm1447 = vcmp.eq.s32.totalorder %v1415, 1
      %vm1448 = vcmp.eq.s32.totalorder %v1416, 1
      %vm1449 = vcmp.eq.s32.totalorder %v1417, 1
      %vm1450 = vcmp.eq.s32.totalorder %v1418, 1
      %vm1451 = vcmp.eq.s32.totalorder %v1419, 1
      %vm1452 = vcmp.eq.s32.totalorder %v1420, 1
      %vm1453 = vcmp.eq.s32.totalorder %v1421, 1
      %vm1454 = vcmp.eq.s32.totalorder %v1422, 1
      %vm1455 = vcmp.eq.s32.totalorder %v1423, 1
      %vm1456 = vcmp.eq.s32.totalorder %v1424, 1
      %vm1457 = vcmp.eq.s32.totalorder %v1425, 1
      %vm1458 = vcmp.eq.s32.totalorder %v1426, 1
      %vm1459 = vcmp.eq.s32.totalorder %v1427, 1
      %vm1460 = vcmp.eq.s32.totalorder %v1428, 1
      %vm1461 = vcmp.eq.s32.totalorder %v1429, 1
      %vm1462 = vcmp.eq.s32.totalorder %v1430, 1
      %vm1463 = vcmp.eq.s32.totalorder %v1431, 1
      %vm1464 = vcmp.eq.s32.totalorder %v1432, 1
      %vm1465 = vcmp.eq.s32.totalorder %v1433, 1
      %vm1466 = vcmp.eq.s32.totalorder %v1434, 1
      %vm1467 = vcmp.eq.s32.totalorder %v1435, 1
      %vm1468 = vcmp.eq.s32.totalorder %v1436, 1
      %vm1469 = vcmp.eq.s32.totalorder %v1437, 1
      %vm1470 = vcmp.eq.s32.totalorder %v1438, 1
      %vm1471 = vcmp.eq.s32.totalorder %v1439, 1
      %vm1472 = vcmp.eq.s32.totalorder %v1440, 1
      %vm1473 = vcmp.eq.s32.totalorder %v1441, 1
      %vm1474 = vcmp.eq.s32.totalorder %v1442, 1
      %v1475 = vsel %vm1443, %v1409, 0.0
      %v1476 = vsel %vm1444, %v1408, 0.0
      %v1477 = vsel %vm1445, %v1407, 0.0
      %v1478 = vsel %vm1446, %v1406, 0.0
      %v1479 = vsel %vm1447, %v1405, 0.0
      %v1480 = vsel %vm1448, %v1404, 0.0
      %v1481 = vsel %vm1449, %v1403, 0.0
      %v1482 = vsel %vm1450, %v1402, 0.0
      %v1483 = vsel %vm1451, %v1401, 0.0
      %v1484 = vsel %vm1452, %v1400, 0.0
      %v1485 = vsel %vm1453, %v1399, 0.0
      %v1486 = vsel %vm1454, %v1398, 0.0
      %v1487 = vsel %vm1455, %v1397, 0.0
      %v1488 = vsel %vm1456, %v1396, 0.0
      %v1489 = vsel %vm1457, %v1395, 0.0
      %v1490 = vsel %vm1458, %v1394, 0.0
      %v1491 = vsel %vm1459, %v1393, 0.0
      %v1492 = vsel %vm1460, %v1392, 0.0
      %v1493 = vsel %vm1461, %v1391, 0.0
      %v1494 = vsel %vm1462, %v1390, 0.0
      %v1495 = vsel %vm1463, %v1389, 0.0
      %v1496 = vsel %vm1464, %v1388, 0.0
      %v1497 = vsel %vm1465, %v1387, 0.0
      %v1498 = vsel %vm1466, %v1386, 0.0
      %v1499 = vsel %vm1467, %v1385, 0.0
      %v1500 = vsel %vm1468, %v1384, 0.0
      %v1501 = vsel %vm1469, %v1383, 0.0
      %v1502 = vsel %vm1470, %v1382, 0.0
      %v1503 = vsel %vm1471, %v1381, 0.0
      %v1504 = vsel %vm1472, %v1380, 0.0
      %v1505 = vsel %vm1473, %v1379, 0.0
      %v1506 = vsel %vm1474, %v1410, 0.0
      %v1507 = vpack.c.bf16 %v1476, %v1475
      %v1508 = vpack.c.bf16 %v1478, %v1477
      %v1509 = vpack.c.bf16 %v1480, %v1479
      %v1510 = vpack.c.bf16 %v1482, %v1481
      %v1511 = vpack.c.bf16 %v1484, %v1483
      %v1512 = vpack.c.bf16 %v1486, %v1485
      %v1513 = vpack.c.bf16 %v1488, %v1487
      %v1514 = vpack.c.bf16 %v1490, %v1489
      %v1515 = vpack.c.bf16 %v1492, %v1491
      %v1516 = vpack.c.bf16 %v1494, %v1493
      %v1517 = vpack.c.bf16 %v1496, %v1495
      %v1518 = vpack.c.bf16 %v1498, %v1497
      %v1519 = vpack.c.bf16 %v1500, %v1499
      %v1520 = vpack.c.bf16 %v1502, %v1501
      %v1521 = vpack.c.bf16 %v1504, %v1503
      %v1522 = vpack.c.bf16 %v1506, %v1505
      %1523 = vst [vmem:[#allocation2] sm:$0xff] 0
      %1524 = vst [vmem:[#allocation2 + $0x8] sm:$0xff] 0
      %1525 = vst [vmem:[#allocation2 + $0x10] sm:$0xff] 0
      %1526 = vst [vmem:[#allocation2 + $0x198] sm:$0xff] 0
      %1527 = vst [vmem:[#allocation2 + $0x1a0] sm:$0xff] 0
      %1528 = vst [vmem:[#allocation2 + $0x1a8] sm:$0xff] 0
      %1529 = vst [vmem:[#allocation2 + $0x18] sm:$0xff] %v1298
      %1530 = vst [vmem:[#allocation2 + $0x30] sm:$0xff] %v1299
      %1531 = vst [vmem:[#allocation2 + $0x48] sm:$0xff] %v1300
      %1532 = vst [vmem:[#allocation2 + $0x60] sm:$0xff] %v1301
      %1533 = vst [vmem:[#allocation2 + $0x78] sm:$0xff] %v1302
      %1534 = vst [vmem:[#allocation2 + $0x90] sm:$0xff] %v1303
      %1535 = vst [vmem:[#allocation2 + $0xa8] sm:$0xff] %v1304
      %1536 = vst [vmem:[#allocation2 + $0xc0] sm:$0xff] %v1305
      %1537 = vst [vmem:[#allocation2 + $0xd8] sm:$0xff] %v1306
      %1538 = vst [vmem:[#allocation2 + $0xf0] sm:$0xff] %v1307
      %1539 = vst [vmem:[#allocation2 + $0x108] sm:$0xff] %v1308
      %1540 = vst [vmem:[#allocation2 + $0x120] sm:$0xff] %v1309
      %1541 = vst [vmem:[#allocation2 + $0x138] sm:$0xff] %v1310
      %1542 = vst [vmem:[#allocation2 + $0x150] sm:$0xff] %v1311
      %1543 = vst [vmem:[#allocation2 + $0x168] sm:$0xff] %v1312
      %1544 = vst [vmem:[#allocation2 + $0x180] sm:$0xff] %v1313
      %1545 = vst [vmem:[#allocation2 + $0x20] sm:$0xff] %v672
      %1546 = vst [vmem:[#allocation2 + $0x38] sm:$0xff] %v673
      %1547 = vst [vmem:[#allocation2 + $0x50] sm:$0xff] %v674
      %1548 = vst [vmem:[#allocation2 + $0x68] sm:$0xff] %v675
      %1549 = vst [vmem:[#allocation2 + $0x80] sm:$0xff] %v676
      %1550 = vst [vmem:[#allocation2 + $0x98] sm:$0xff] %v677
      %1551 = vst [vmem:[#allocation2 + $0xb0] sm:$0xff] %v678
      %1552 = vst [vmem:[#allocation2 + $0xc8] sm:$0xff] %v679
      %1553 = vst [vmem:[#allocation2 + $0xe0] sm:$0xff] %v680
      %1554 = vst [vmem:[#allocation2 + $0xf8] sm:$0xff] %v681
      %1555 = vst [vmem:[#allocation2 + $0x110] sm:$0xff] %v682
      %1556 = vst [vmem:[#allocation2 + $0x128] sm:$0xff] %v683
      %1557 = vst [vmem:[#allocation2 + $0x140] sm:$0xff] %v684
      %1558 = vst [vmem:[#allocation2 + $0x158] sm:$0xff] %v685
      %1559 = vst [vmem:[#allocation2 + $0x170] sm:$0xff] %v686
      %1560 = vst [vmem:[#allocation2 + $0x188] sm:$0xff] %v687
      %1561 = vst [vmem:[#allocation2 + $0x28] sm:$0xff] %v1507
      %1562 = vst [vmem:[#allocation2 + $0x40] sm:$0xff] %v1508
      %1563 = vst [vmem:[#allocation2 + $0x58] sm:$0xff] %v1509
      %1564 = vst [vmem:[#allocation2 + $0x70] sm:$0xff] %v1510
      %1565 = vst [vmem:[#allocation2 + $0x88] sm:$0xff] %v1511
      %1566 = vst [vmem:[#allocation2 + $0xa0] sm:$0xff] %v1512
      %1567 = vst [vmem:[#allocation2 + $0xb8] sm:$0xff] %v1513
      %1568 = vst [vmem:[#allocation2 + $0xd0] sm:$0xff] %v1514
      %1569 = vst [vmem:[#allocation2 + $0xe8] sm:$0xff] %v1515
      %1570 = vst [vmem:[#allocation2 + $0x100] sm:$0xff] %v1516
      %1571 = vst [vmem:[#allocation2 + $0x118] sm:$0xff] %v1517
      %1572 = vst [vmem:[#allocation2 + $0x130] sm:$0xff] %v1518
      %1573 = vst [vmem:[#allocation2 + $0x148] sm:$0xff] %v1519
      %1574 = vst [vmem:[#allocation2 + $0x160] sm:$0xff] %v1520
      %1575 = vst [vmem:[#allocation2 + $0x178] sm:$0xff] %v1521
      %1576 = vst [vmem:[#allocation2 + $0x190] sm:$0xff] %v1522
      %v1577 = vld [vmem:[#allocation2] sm:$0xff]
      %v1578 = vld [vmem:[#allocation2 + $0x8] sm:$0xff]
      %v1579 = vld [vmem:[#allocation2 + $0x10] sm:$0xff]
      %v1580 = vld [vmem:[#allocation2 + $0x18] sm:$0xff]
      %v1581 = vld [vmem:[#allocation2 + $0x20] sm:$0xff]
      %v1582 = vld [vmem:[#allocation2 + $0x28] sm:$0xff]
      %v1583 = vld [vmem:[#allocation2 + $0x30] sm:$0xff]
      %v1584 = vld [vmem:[#allocation2 + $0x38] sm:$0xff]
      %v1585 = vld [vmem:[#allocation2 + $0x40] sm:$0xff]
      %v1586 = vld [vmem:[#allocation2 + $0x48] sm:$0xff]
      %v1587 = vld [vmem:[#allocation2 + $0x50] sm:$0xff]
      %v1588 = vld [vmem:[#allocation2 + $0x58] sm:$0xff]
      %v1589 = vld [vmem:[#allocation2 + $0x60] sm:$0xff]
      %v1590 = vld [vmem:[#allocation2 + $0x68] sm:$0xff]
      %v1591 = vld [vmem:[#allocation2 + $0x70] sm:$0xff]
      %v1592 = vld [vmem:[#allocation2 + $0x78] sm:$0xff]
      %v1593 = vld [vmem:[#allocation2 + $0x80] sm:$0xff]
      %v1594 = vld [vmem:[#allocation2 + $0x88] sm:$0xff]
      %v1595 = vld [vmem:[#allocation2 + $0x90] sm:$0xff]
      %v1596 = vld [vmem:[#allocation2 + $0x98] sm:$0xff]
      %v1597 = vld [vmem:[#allocation2 + $0xa0] sm:$0xff]
      %v1598 = vld [vmem:[#allocation2 + $0xa8] sm:$0xff]
      %v1599 = vld [vmem:[#allocation2 + $0xb0] sm:$0xff]
      %v1600 = vld [vmem:[#allocation2 + $0xb8] sm:$0xff]
      %v1601 = vld [vmem:[#allocation2 + $0xc0] sm:$0xff]
      %v1602 = vld [vmem:[#allocation2 + $0xc8] sm:$0xff]
      %v1603 = vld [vmem:[#allocation2 + $0xd0] sm:$0xff]
      %v1604 = vld [vmem:[#allocation2 + $0xd8] sm:$0xff]
      %v1605 = vld [vmem:[#allocation2 + $0xe0] sm:$0xff]
      %v1606 = vld [vmem:[#allocation2 + $0xe8] sm:$0xff]
      %v1607 = vld [vmem:[#allocation2 + $0xf0] sm:$0xff]
      %v1608 = vld [vmem:[#allocation2 + $0xf8] sm:$0xff]
      %v1609 = vld [vmem:[#allocation2 + $0x100] sm:$0xff]
      %v1610 = vld [vmem:[#allocation2 + $0x108] sm:$0xff]
      %v1611 = vld [vmem:[#allocation2 + $0x110] sm:$0xff]
      %v1612 = vld [vmem:[#allocation2 + $0x118] sm:$0xff]
      %v1613 = vld [vmem:[#allocation2 + $0x120] sm:$0xff]
      %v1614 = vld [vmem:[#allocation2 + $0x128] sm:$0xff]
      %v1615 = vld [vmem:[#allocation2 + $0x130] sm:$0xff]
      %v1616 = vld [vmem:[#allocation2 + $0x138] sm:$0xff]
      %v1617 = vld [vmem:[#allocation2 + $0x140] sm:$0xff]
      %v1618 = vld [vmem:[#allocation2 + $0x148] sm:$0xff]
      %v1619 = vld [vmem:[#allocation2 + $0x150] sm:$0xff]
      %v1620 = vld [vmem:[#allocation2 + $0x158] sm:$0xff]
      %v1621 = vld [vmem:[#allocation2 + $0x160] sm:$0xff]
      %v1622 = vld [vmem:[#allocation2 + $0x168] sm:$0xff]
      %v1623 = vld [vmem:[#allocation2 + $0x170] sm:$0xff]
      %v1624 = vld [vmem:[#allocation2 + $0x178] sm:$0xff]
      %v1625 = vld [vmem:[%s3] sm:$0xf]
      %v1626 = vld [vmem:[%s3 + $0x4] sm:$0xf]
      %v1627 = vld [vmem:[%s3 + $0x8] sm:$0xf]
      %v1628 = vld [vmem:[%s3 + $0xc] sm:$0xf]
      %v1629 = vld [vmem:[%s3 + $0x10] sm:$0xf]
      %v1630 = vld [vmem:[%s3 + $0x14] sm:$0xf]
      %v1631 = vld [vmem:[%s3 + $0x18] sm:$0xf]
      %v1632 = vld [vmem:[%s3 + $0x1c] sm:$0xf]
      %v1633 = vld [vmem:[%s3 + $0x20] sm:$0xf]
      %v1634 = vld [vmem:[%s3 + $0x24] sm:$0xf]
      %v1635 = vld [vmem:[%s3 + $0x28] sm:$0xf]
      %v1636 = vld [vmem:[%s3 + $0x2c] sm:$0xf]
      %v1637 = vld [vmem:[%s3 + $0x30] sm:$0xf]
      %v1638 = vld [vmem:[%s3 + $0x34] sm:$0xf]
      %v1639 = vld [vmem:[%s3 + $0x38] sm:$0xf]
      %v1640 = vld [vmem:[%s3 + $0x3c] sm:$0xf]
      %v1641 = vld [vmem:[%s3 + $0x40] sm:$0xf]
      %v1642 = vld [vmem:[%s3 + $0x44] sm:$0xf]
      %v1643 = vld [vmem:[%s3 + $0x48] sm:$0xf]
      %v1644 = vld [vmem:[%s3 + $0x4c] sm:$0xf]
      %v1645 = vld [vmem:[%s3 + $0x50] sm:$0xf]
      %v1646 = vld [vmem:[%s3 + $0x54] sm:$0xf]
      %v1647 = vld [vmem:[%s3 + $0x58] sm:$0xf]
      %v1648 = vld [vmem:[%s3 + $0x5c] sm:$0xf]
      %v1649 = vld [vmem:[%s3 + $0x60] sm:$0xf]
      %v1650 = vld [vmem:[%s3 + $0x64] sm:$0xf]
      %v1651 = vld [vmem:[%s3 + $0x68] sm:$0xf]
      %v1652 = vld [vmem:[%s3 + $0x6c] sm:$0xf]
      %v1653 = vld [vmem:[%s3 + $0x70] sm:$0xf]
      %v1654 = vld [vmem:[%s3 + $0x74] sm:$0xf]
      %v1655 = vld [vmem:[%s3 + $0x78] sm:$0xf]
      %v1656 = vld [vmem:[%s3 + $0x7c] sm:$0xf]
      %v1657 = vld [vmem:[%s3 + $0x80] sm:$0xf]
      %v1658 = vld [vmem:[%s3 + $0x84] sm:$0xf]
      %v1659 = vld [vmem:[%s3 + $0x88] sm:$0xf]
      %v1660 = vld [vmem:[%s3 + $0x8c] sm:$0xf]
      %v1661 = vld [vmem:[%s3 + $0x90] sm:$0xf]
      %v1662 = vld [vmem:[%s3 + $0x94] sm:$0xf]
      %v1663 = vld [vmem:[%s3 + $0x98] sm:$0xf]
      %v1664 = vld [vmem:[%s3 + $0x9c] sm:$0xf]
      %v1665 = vld [vmem:[%s3 + $0xa0] sm:$0xf]
      %v1666 = vld [vmem:[%s3 + $0xa4] sm:$0xf]
      %v1667 = vld [vmem:[%s3 + $0xa8] sm:$0xf]
      %v1668 = vld [vmem:[%s3 + $0xac] sm:$0xf]
      %v1669 = vld [vmem:[%s3 + $0xb0] sm:$0xf]
      %v1670 = vld [vmem:[%s3 + $0xb4] sm:$0xf]
      %v1671 = vld [vmem:[%s3 + $0xb8] sm:$0xf]
      %v1672 = vld [vmem:[%s3 + $0xbc] sm:$0xf]
      %v1673 = vld [vmem:[#allocation2 + $0x180] sm:$0xff]
      %v1674 = vld [vmem:[#allocation2 + $0x188] sm:$0xff]
      %v1675 = vld [vmem:[#allocation2 + $0x190] sm:$0xff]
      %s1676 = scalar_lea.vmem %s3, 192
      %v1677 = vld [vmem:[%s1676] sm:$0xf]
      %v1678 = vld [vmem:[%s1676 + $0x4] sm:$0xf]
      %v1679 = vld [vmem:[%s1676 + $0x8] sm:$0xf]
      %v1680 = vld [vmem:[%s1676 + $0xc] sm:$0xf]
      %v1681 = vld [vmem:[%s1676 + $0x10] sm:$0xf]
      %v1682 = vld [vmem:[%s1676 + $0x14] sm:$0xf]
      %v1683 = vld [vmem:[%s1676 + $0x18] sm:$0xf]
      %v1684 = vld [vmem:[%s1676 + $0x1c] sm:$0xf]
      %v1685 = vld [vmem:[%s1676 + $0x20] sm:$0xf]
      %v1686 = vld [vmem:[%s1676 + $0x24] sm:$0xf]
      %v1687 = vld [vmem:[%s1676 + $0x28] sm:$0xf]
      %v1688 = vld [vmem:[%s1676 + $0x2c] sm:$0xf]
      %v1689 = vld [vmem:[%s1676 + $0x30] sm:$0xf]
      %v1690 = vld [vmem:[%s1676 + $0x34] sm:$0xf]
      %v1691 = vld [vmem:[%s1676 + $0x38] sm:$0xf]
      %v1692 = vld [vmem:[%s1676 + $0x3c] sm:$0xf]
      %v1693 = vld [vmem:[%s1676 + $0x40] sm:$0xf]
      %v1694 = vld [vmem:[%s1676 + $0x44] sm:$0xf]
      %v1695 = vld [vmem:[%s1676 + $0x48] sm:$0xf]
      %v1696 = vld [vmem:[%s1676 + $0x4c] sm:$0xf]
      %v1697 = vld [vmem:[%s1676 + $0x50] sm:$0xf]
      %v1698 = vld [vmem:[%s1676 + $0x54] sm:$0xf]
      %v1699 = vld [vmem:[%s1676 + $0x58] sm:$0xf]
      %v1700 = vld [vmem:[%s1676 + $0x5c] sm:$0xf]
      %v1701 = vld [vmem:[%s1676 + $0x60] sm:$0xf]
      %v1702 = vld [vmem:[%s1676 + $0x64] sm:$0xf]
      %v1703 = vld [vmem:[%s1676 + $0x68] sm:$0xf]
      %v1704 = vld [vmem:[%s1676 + $0x6c] sm:$0xf]
      %v1705 = vld [vmem:[%s1676 + $0x70] sm:$0xf]
      %v1706 = vld [vmem:[%s1676 + $0x74] sm:$0xf]
      %v1707 = vld [vmem:[%s1676 + $0x78] sm:$0xf]
      %v1708 = vld [vmem:[%s1676 + $0x7c] sm:$0xf]
      %v1709 = vld [vmem:[%s1676 + $0x80] sm:$0xf]
      %v1710 = vld [vmem:[%s1676 + $0x84] sm:$0xf]
      %v1711 = vld [vmem:[%s1676 + $0x88] sm:$0xf]
      %v1712 = vld [vmem:[%s1676 + $0x8c] sm:$0xf]
      %v1713 = vld [vmem:[%s1676 + $0x90] sm:$0xf]
      %v1714 = vld [vmem:[%s1676 + $0x94] sm:$0xf]
      %v1715 = vld [vmem:[%s1676 + $0x98] sm:$0xf]
      %v1716 = vld [vmem:[%s1676 + $0x9c] sm:$0xf]
      %v1717 = vld [vmem:[%s1676 + $0xa0] sm:$0xf]
      %v1718 = vld [vmem:[%s1676 + $0xa4] sm:$0xf]
      %v1719 = vld [vmem:[%s1676 + $0xa8] sm:$0xf]
      %v1720 = vld [vmem:[%s1676 + $0xac] sm:$0xf]
      %v1721 = vld [vmem:[%s1676 + $0xb0] sm:$0xf]
      %v1722 = vld [vmem:[%s1676 + $0xb4] sm:$0xf]
      %v1723 = vld [vmem:[%s1676 + $0xb8] sm:$0xf]
      %v1724 = vld [vmem:[%s1676 + $0xbc] sm:$0xf]
      %v1773 = vunpack.c.l.b16 %v1677
      %v1774 = vunpack.c.l.b16 %v1678
      %v1775 = vunpack.c.l.b16 %v1679
      %v1776 = vunpack.c.l.b16 %v1680
      %v1777 = vunpack.c.l.b16 %v1681
      %v1778 = vunpack.c.l.b16 %v1682
      %v1779 = vunpack.c.l.b16 %v1683
      %v1780 = vunpack.c.l.b16 %v1684
      %v1781 = vunpack.c.l.b16 %v1685
      %v1782 = vunpack.c.l.b16 %v1686
      %v1783 = vunpack.c.l.b16 %v1687
      %v1784 = vunpack.c.l.b16 %v1688
      %v1785 = vunpack.c.l.b16 %v1689
      %v1786 = vunpack.c.l.b16 %v1690
      %v1787 = vunpack.c.l.b16 %v1691
      %v1788 = vunpack.c.l.b16 %v1692
      %v1789 = vunpack.c.l.b16 %v1693
      %v1790 = vunpack.c.l.b16 %v1694
      %v1791 = vunpack.c.l.b16 %v1695
      %v1792 = vunpack.c.l.b16 %v1696
      %v1793 = vunpack.c.l.b16 %v1697
      %v1794 = vunpack.c.l.b16 %v1698
      %v1795 = vunpack.c.l.b16 %v1699
      %v1796 = vunpack.c.l.b16 %v1700
      %v1797 = vunpack.c.l.b16 %v1701
      %v1798 = vunpack.c.l.b16 %v1702
      %v1799 = vunpack.c.l.b16 %v1703
      %v1800 = vunpack.c.l.b16 %v1704
      %v1801 = vunpack.c.l.b16 %v1705
      %v1802 = vunpack.c.l.b16 %v1706
      %v1803 = vunpack.c.l.b16 %v1707
      %v1804 = vunpack.c.l.b16 %v1708
      %v1805 = vunpack.c.l.b16 %v1709
      %v1806 = vunpack.c.l.b16 %v1710
      %v1807 = vunpack.c.l.b16 %v1711
      %v1808 = vunpack.c.l.b16 %v1712
      %v1809 = vunpack.c.l.b16 %v1713
      %v1810 = vunpack.c.l.b16 %v1714
      %v1811 = vunpack.c.l.b16 %v1715
      %v1812 = vunpack.c.l.b16 %v1716
      %v1813 = vunpack.c.l.b16 %v1717
      %v1814 = vunpack.c.l.b16 %v1718
      %v1815 = vunpack.c.l.b16 %v1719
      %v1816 = vunpack.c.l.b16 %v1720
      %v1817 = vunpack.c.l.b16 %v1721
      %v1818 = vunpack.c.l.b16 %v1722
      %v1819 = vunpack.c.l.b16 %v1723
      %v1820 = vunpack.c.l.b16 %v1724
      %v1821 = vpack.c.b16 %v1774, %v1773
      %v1822 = vpack.c.b16 %v1776, %v1775
      %v1823 = vpack.c.b16 %v1778, %v1777
      %v1824 = vpack.c.b16 %v1780, %v1779
      %v1825 = vpack.c.b16 %v1782, %v1781
      %v1826 = vpack.c.b16 %v1784, %v1783
      %v1827 = vpack.c.b16 %v1786, %v1785
      %v1828 = vpack.c.b16 %v1788, %v1787
      %v1829 = vpack.c.b16 %v1790, %v1789
      %v1830 = vpack.c.b16 %v1792, %v1791
      %v1831 = vpack.c.b16 %v1794, %v1793
      %v1832 = vpack.c.b16 %v1796, %v1795
      %v1833 = vpack.c.b16 %v1798, %v1797
      %v1834 = vpack.c.b16 %v1800, %v1799
      %v1835 = vpack.c.b16 %v1802, %v1801
      %v1836 = vpack.c.b16 %v1804, %v1803
      %v1837 = vpack.c.b16 %v1806, %v1805
      %v1838 = vpack.c.b16 %v1808, %v1807
      %v1839 = vpack.c.b16 %v1810, %v1809
      %v1840 = vpack.c.b16 %v1812, %v1811
      %v1841 = vpack.c.b16 %v1814, %v1813
      %v1842 = vpack.c.b16 %v1816, %v1815
      %v1843 = vpack.c.b16 %v1818, %v1817
      %v1844 = vpack.c.b16 %v1820, %v1819
      %1869 = vmatprep.subr.bf16.mxu0 0
      %1870 = vmatpush1.bf16.msra.mxu0 %v1821
      %1871 = vmatprep.subr.bf16.mxu0 0
      %1872 = vmatpush1.bf16.msra.mxu0 %v1822
      %1873 = vmatprep.subr.bf16.mxu0 0
      %1874 = vmatpush1.bf16.msra.mxu0 %v1823
      %1875 = vmatprep.subr.bf16.mxu0 0
      %1876 = vmatpush1.bf16.msra.mxu0 %v1824
      %1877 = vmatprep.subr.bf16.mxu0 0
      %1878 = vmatpush1.bf16.msra.mxu0 %v1825
      %1879 = vmatprep.subr.bf16.mxu0 0
      %1880 = vmatpush1.bf16.msra.mxu0 %v1826
      %1881 = vmatprep.subr.bf16.mxu0 0
      %1882 = vmatpush1.bf16.msra.mxu0 %v1827
      %1883 = vmatprep.subr.bf16.mxu0 0
      %1884 = vmatpush1.bf16.msra.mxu0 %v1828
      %1885 = vmatprep.subr.bf16.mxu0 0
      %1886 = vmatpush1.bf16.msra.mxu0 %v1829
      %1887 = vmatprep.subr.bf16.mxu0 0
      %1888 = vmatpush1.bf16.msra.mxu0 %v1830
      %1889 = vmatprep.subr.bf16.mxu0 0
      %1890 = vmatpush1.bf16.msra.mxu0 %v1831
      %1891 = vmatprep.subr.bf16.mxu0 0
      %1892 = vmatpush1.bf16.msra.mxu0 %v1832
      %1893 = vmatprep.subr.bf16.mxu0 0
      %1894 = vmatpush1.bf16.msra.mxu0 %v1833
      %1895 = vmatprep.subr.bf16.mxu0 0
      %1896 = vmatpush1.bf16.msra.mxu0 %v1834
      %1897 = vmatprep.subr.bf16.mxu0 0
      %1898 = vmatpush1.bf16.msra.mxu0 %v1835
      %1899 = vmatprep.subr.bf16.mxu0 0
      %1900 = vmatpush1.bf16.msra.mxu0 %v1836
      %1901 = vmatprep.mubr.bf16.mxu0 %v1581
      %1902 = vmatmul.mubr.bf16.gmra.mrb[0].mxu0 %v1580
      %v1903 = vpop.f32.mrb[0].mxu0
      %v1904 = vadd.f32 0.0, %v1903
      %v1905 = vpop.f32.mrb[0].mxu0
      %v1906 = vpop.f32.mrb[0].mxu0
      %v1907 = vadd.f32 0.0, %v1906
      %v1908 = vpop.f32.mrb[0].mxu0
      %1909 = vmatprep.mubr.bf16.mxu0 %v1584
      %1910 = vmatmul.mubr.bf16.gmra.mrb[0].mxu0 %v1583
      %v1911 = vpop.f32.mrb[0].mxu0
      %v1912 = vadd.f32 0.0, %v1911
      %v1913 = vpop.f32.mrb[0].mxu0
      %v1914 = vpop.f32.mrb[0].mxu0
      %v1915 = vadd.f32 0.0, %v1914
      %v1916 = vpop.f32.mrb[0].mxu0
      %1917 = vmatprep.mubr.bf16.mxu0 %v1587
      %1918 = vmatmul.mubr.bf16.gmra.mrb[0].mxu0 %v1586
      %v1919 = vpop.f32.mrb[0].mxu0
      %v1920 = vadd.f32 0.0, %v1919
      %v1921 = vpop.f32.mrb[0].mxu0
      %v1922 = vpop.f32.mrb[0].mxu0
      %v1923 = vadd.f32 0.0, %v1922
      %v1924 = vpop.f32.mrb[0].mxu0
      %1925 = vmatprep.mubr.bf16.mxu0 %v1590
      %1926 = vmatmul.mubr.bf16.gmra.mrb[0].mxu0 %v1589
      %v1927 = vpop.f32.mrb[0].mxu0
      %v1928 = vadd.f32 0.0, %v1927
      %v1929 = vpop.f32.mrb[0].mxu0
      %v1930 = vpop.f32.mrb[0].mxu0
      %v1931 = vadd.f32 0.0, %v1930
      %v1932 = vpop.f32.mrb[0].mxu0
      %1933 = vmatprep.mubr.bf16.mxu0 %v1593
      %1934 = vmatmul.mubr.bf16.gmra.mrb[0].mxu0 %v1592
      %v1935 = vpop.f32.mrb[0].mxu0
      %v1936 = vadd.f32 0.0, %v1935
      %v1937 = vpop.f32.mrb[0].mxu0
      %v1938 = vpop.f32.mrb[0].mxu0
      %v1939 = vadd.f32 0.0, %v1938
      %v1940 = vpop.f32.mrb[0].mxu0
      %1941 = vmatprep.mubr.bf16.mxu0 %v1596
      %1942 = vmatmul.mubr.bf16.gmra.mrb[0].mxu0 %v1595
      %v1943 = vpop.f32.mrb[0].mxu0
      %v1944 = vadd.f32 0.0, %v1943
      %v1945 = vpop.f32.mrb[0].mxu0
      %v1946 = vpop.f32.mrb[0].mxu0
      %v1947 = vadd.f32 0.0, %v1946
      %v1948 = vpop.f32.mrb[0].mxu0
      %1949 = vmatprep.mubr.bf16.mxu0 %v1599
      %1950 = vmatmul.mubr.bf16.gmra.mrb[0].mxu0 %v1598
      %v1951 = vpop.f32.mrb[0].mxu0
      %v1952 = vadd.f32 0.0, %v1951
      %v1953 = vpop.f32.mrb[0].mxu0
      %v1954 = vpop.f32.mrb[0].mxu0
      %v1955 = vadd.f32 0.0, %v1954
      %v1956 = vpop.f32.mrb[0].mxu0
      %1957 = vmatprep.mubr.bf16.mxu0 %v1602
      %1958 = vmatmul.mubr.bf16.gmra.mrb[0].mxu0 %v1601
      %v1959 = vpop.f32.mrb[0].mxu0
      %v1960 = vadd.f32 0.0, %v1959
      %v1961 = vpop.f32.mrb[0].mxu0
      %v1962 = vpop.f32.mrb[0].mxu0
      %v1963 = vadd.f32 0.0, %v1962
      %v1964 = vpop.f32.mrb[0].mxu0
      %1965 = vmatprep.mubr.bf16.mxu0 %v1605
      %1966 = vmatmul.mubr.bf16.gmra.mrb[0].mxu0 %v1604
      %v1967 = vpop.f32.mrb[0].mxu0
      %v1968 = vadd.f32 0.0, %v1967
      %v1969 = vpop.f32.mrb[0].mxu0
      %v1970 = vpop.f32.mrb[0].mxu0
      %v1971 = vadd.f32 0.0, %v1970
      %v1972 = vpop.f32.mrb[0].mxu0
      %1973 = vmatprep.mubr.bf16.mxu0 %v1608
      %1974 = vmatmul.mubr.bf16.gmra.mrb[0].mxu0 %v1607
      %v1975 = vpop.f32.mrb[0].mxu0
      %v1976 = vadd.f32 0.0, %v1975
      %v1977 = vpop.f32.mrb[0].mxu0
      %v1978 = vpop.f32.mrb[0].mxu0
      %v1979 = vadd.f32 0.0, %v1978
      %v1980 = vpop.f32.mrb[0].mxu0
      %1981 = vmatprep.mubr.bf16.mxu0 %v1611
      %1982 = vmatmul.mubr.bf16.gmra.mrb[0].mxu0 %v1610
      %v1983 = vpop.f32.mrb[0].mxu0
      %v1984 = vadd.f32 0.0, %v1983
      %v1985 = vpop.f32.mrb[0].mxu0
      %v1986 = vpop.f32.mrb[0].mxu0
      %v1987 = vadd.f32 0.0, %v1986
      %v1988 = vpop.f32.mrb[0].mxu0
      %1989 = vmatprep.mubr.bf16.mxu0 %v1614
      %1990 = vmatmul.mubr.bf16.gmra.mrb[0].mxu0 %v1613
      %v1991 = vpop.f32.mrb[0].mxu0
      %v1992 = vadd.f32 0.0, %v1991
      %v1993 = vpop.f32.mrb[0].mxu0
      %v1994 = vpop.f32.mrb[0].mxu0
      %v1995 = vadd.f32 0.0, %v1994
      %v1996 = vpop.f32.mrb[0].mxu0
      %1997 = vmatprep.mubr.bf16.mxu0 %v1617
      %1998 = vmatmul.mubr.bf16.gmra.mrb[0].mxu0 %v1616
      %v1999 = vpop.f32.mrb[0].mxu0
      %v2000 = vadd.f32 0.0, %v1999
      %v2001 = vpop.f32.mrb[0].mxu0
      %v2002 = vpop.f32.mrb[0].mxu0
      %v2003 = vadd.f32 0.0, %v2002
      %v2004 = vpop.f32.mrb[0].mxu0
      %2005 = vmatprep.mubr.bf16.mxu0 %v1620
      %2006 = vmatmul.mubr.bf16.gmra.mrb[0].mxu0 %v1619
      %v2007 = vpop.f32.mrb[0].mxu0
      %v2008 = vadd.f32 0.0, %v2007
      %v2009 = vpop.f32.mrb[0].mxu0
      %v2010 = vpop.f32.mrb[0].mxu0
      %v2011 = vadd.f32 0.0, %v2010
      %v2012 = vpop.f32.mrb[0].mxu0
      %2013 = vmatprep.mubr.bf16.mxu0 %v1623
      %2014 = vmatmul.mubr.bf16.gmra.mrb[0].mxu0 %v1622
      %v2015 = vpop.f32.mrb[0].mxu0
      %v2016 = vadd.f32 0.0, %v2015
      %v2017 = vpop.f32.mrb[0].mxu0
      %v2018 = vpop.f32.mrb[0].mxu0
      %v2019 = vadd.f32 0.0, %v2018
      %v2020 = vpop.f32.mrb[0].mxu0
      %2021 = vmatprep.mubr.bf16.mxu0 %v1674
      %2022 = vmatmul.mubr.bf16.gmra.mrb[0].mxu0 %v1673
      %v2023 = vpop.f32.mrb[0].mxu0
      %v2024 = vadd.f32 0.0, %v2023
      %v2025 = vpop.f32.mrb[0].mxu0
      %v2026 = vpop.f32.mrb[0].mxu0
      %v2027 = vadd.f32 0.0, %v2026
      %v2028 = vpop.f32.mrb[0].mxu0
      %2029 = vdwg.mxu0
      %2030 = vmatprep.subr.bf16.mxu0 0
      %2031 = vmatpush1.bf16.msra.mxu0 %v1837
      %2032 = vmatprep.subr.bf16.mxu0 0
      %2033 = vmatpush1.bf16.msra.mxu0 %v1838
      %2034 = vmatprep.subr.bf16.mxu0 0
      %2035 = vmatpush1.bf16.msra.mxu0 %v1839
      %2036 = vmatprep.subr.bf16.mxu0 0
      %2037 = vmatpush1.bf16.msra.mxu0 %v1840
      %2038 = vmatprep.subr.bf16.mxu0 0
      %2039 = vmatpush1.bf16.msra.mxu0 %v1841
      %2040 = vmatprep.subr.bf16.mxu0 0
      %2041 = vmatpush1.bf16.msra.mxu0 %v1842
      %2042 = vmatprep.subr.bf16.mxu0 0
      %2043 = vmatpush1.bf16.msra.mxu0 %v1843
      %2044 = vmatprep.subr.bf16.mxu0 0
      %2045 = vmatpush1.bf16.msra.mxu0 %v1844
      %2046 = vmatprep.subr.bf16.mxu0 0
      %2047 = vmatpush1.bf16.msra.mxu0 0
      %2048 = vmatprep.subr.bf16.mxu0 0
      %2049 = vmatpush1.bf16.msra.mxu0 0
      %2050 = vmatprep.subr.bf16.mxu0 0
      %2051 = vmatpush1.bf16.msra.mxu0 0
      %2052 = vmatprep.subr.bf16.mxu0 0
      %2053 = vmatpush1.bf16.msra.mxu0 0
      %2054 = vmatprep.subr.bf16.mxu0 0
      %2055 = vmatpush1.bf16.msra.mxu0 0
      %2056 = vmatprep.subr.bf16.mxu0 0
      %2057 = vmatpush1.bf16.msra.mxu0 0
      %2058 = vmatprep.subr.bf16.mxu0 0
      %2059 = vmatpush1.bf16.msra.mxu0 0
      %2060 = vmatprep.subr.bf16.mxu0 0
      %2061 = vmatpush1.bf16.msra.mxu0 0
      %2062 = vmatprep.mubr.bf16.mxu0 0
      %2063 = vmatmul.mubr.bf16.gmra.mrb[0].mxu0 %v1582
      %v2064 = vpop.f32.mrb[0].mxu0
      %v2065 = vadd.f32 %v1904, %v2064
      %v2066 = vpop.f32.mrb[0].mxu0
      %v2067 = vpop.f32.mrb[0].mxu0
      %v2068 = vadd.f32 %v1907, %v2067
      %v2069 = vpop.f32.mrb[0].mxu0
      %2070 = vmatprep.mubr.bf16.mxu0 0
      %2071 = vmatmul.mubr.bf16.gmra.mrb[0].mxu0 %v1585
      %v2072 = vpop.f32.mrb[0].mxu0
      %v2073 = vadd.f32 %v1912, %v2072
      %v2074 = vpop.f32.mrb[0].mxu0
      %v2075 = vpop.f32.mrb[0].mxu0
      %v2076 = vadd.f32 %v1915, %v2075
      %v2077 = vpop.f32.mrb[0].mxu0
      %2078 = vmatprep.mubr.bf16.mxu0 0
      %2079 = vmatmul.mubr.bf16.gmra.mrb[0].mxu0 %v1588
      %v2080 = vpop.f32.mrb[0].mxu0
      %v2081 = vadd.f32 %v1920, %v2080
      %v2082 = vpop.f32.mrb[0].mxu0
      %v2083 = vpop.f32.mrb[0].mxu0
      %v2084 = vadd.f32 %v1923, %v2083
      %v2085 = vpop.f32.mrb[0].mxu0
      %2086 = vmatprep.mubr.bf16.mxu0 0
      %2087 = vmatmul.mubr.bf16.gmra.mrb[0].mxu0 %v1591
      %v2088 = vpop.f32.mrb[0].mxu0
      %v2089 = vadd.f32 %v1928, %v2088
      %v2090 = vpop.f32.mrb[0].mxu0
      %v2091 = vpop.f32.mrb[0].mxu0
      %v2092 = vadd.f32 %v1931, %v2091
      %v2093 = vpop.f32.mrb[0].mxu0
      %2094 = vmatprep.mubr.bf16.mxu0 0
      %2095 = vmatmul.mubr.bf16.gmra.mrb[0].mxu0 %v1594
      %v2096 = vpop.f32.mrb[0].mxu0
      %v2097 = vadd.f32 %v1936, %v2096
      %v2098 = vpop.f32.mrb[0].mxu0
      %v2099 = vpop.f32.mrb[0].mxu0
      %v2100 = vadd.f32 %v1939, %v2099
      %v2101 = vpop.f32.mrb[0].mxu0
      %2102 = vmatprep.mubr.bf16.mxu0 0
      %2103 = vmatmul.mubr.bf16.gmra.mrb[0].mxu0 %v1597
      %v2104 = vpop.f32.mrb[0].mxu0
      %v2105 = vadd.f32 %v1944, %v2104
      %v2106 = vpop.f32.mrb[0].mxu0
      %v2107 = vpop.f32.mrb[0].mxu0
      %v2108 = vadd.f32 %v1947, %v2107
      %v2109 = vpop.f32.mrb[0].mxu0
      %2110 = vmatprep.mubr.bf16.mxu0 0
      %2111 = vmatmul.mubr.bf16.gmra.mrb[0].mxu0 %v1600
      %v2112 = vpop.f32.mrb[0].mxu0
      %v2113 = vadd.f32 %v1952, %v2112
      %v2114 = vpop.f32.mrb[0].mxu0
      %v2115 = vpop.f32.mrb[0].mxu0
      %v2116 = vadd.f32 %v1955, %v2115
      %v2117 = vpop.f32.mrb[0].mxu0
      %2118 = vmatprep.mubr.bf16.mxu0 0
      %2119 = vmatmul.mubr.bf16.gmra.mrb[0].mxu0 %v1603
      %v2120 = vpop.f32.mrb[0].mxu0
      %v2121 = vadd.f32 %v1960, %v2120
      %v2122 = vpop.f32.mrb[0].mxu0
      %v2123 = vpop.f32.mrb[0].mxu0
      %v2124 = vadd.f32 %v1963, %v2123
      %v2125 = vpop.f32.mrb[0].mxu0
      %2126 = vmatprep.mubr.bf16.mxu0 0
      %2127 = vmatmul.mubr.bf16.gmra.mrb[0].mxu0 %v1606
      %v2128 = vpop.f32.mrb[0].mxu0
      %v2129 = vadd.f32 %v1968, %v2128
      %v2130 = vpop.f32.mrb[0].mxu0
      %v2131 = vpop.f32.mrb[0].mxu0
      %v2132 = vadd.f32 %v1971, %v2131
      %v2133 = vpop.f32.mrb[0].mxu0
      %2134 = vmatprep.mubr.bf16.mxu0 0
      %2135 = vmatmul.mubr.bf16.gmra.mrb[0].mxu0 %v1609
      %v2136 = vpop.f32.mrb[0].mxu0
      %v2137 = vadd.f32 %v1976, %v2136
      %v2138 = vpop.f32.mrb[0].mxu0
      %v2139 = vpop.f32.mrb[0].mxu0
      %v2140 = vadd.f32 %v1979, %v2139
      %v2141 = vpop.f32.mrb[0].mxu0
      %2142 = vmatprep.mubr.bf16.mxu0 0
      %2143 = vmatmul.mubr.bf16.gmra.mrb[0].mxu0 %v1612
      %v2144 = vpop.f32.mrb[0].mxu0
      %v2145 = vadd.f32 %v1984, %v2144
      %v2146 = vpop.f32.mrb[0].mxu0
      %v2147 = vpop.f32.mrb[0].mxu0
      %v2148 = vadd.f32 %v1987, %v2147
      %v2149 = vpop.f32.mrb[0].mxu0
      %2150 = vmatprep.mubr.bf16.mxu0 0
      %2151 = vmatmul.mubr.bf16.gmra.mrb[0].mxu0 %v1615
      %v2152 = vpop.f32.mrb[0].mxu0
      %v2153 = vadd.f32 %v1992, %v2152
      %v2154 = vpop.f32.mrb[0].mxu0
      %v2155 = vpop.f32.mrb[0].mxu0
      %v2156 = vadd.f32 %v1995, %v2155
      %v2157 = vpop.f32.mrb[0].mxu0
      %2158 = vmatprep.mubr.bf16.mxu0 0
      %2159 = vmatmul.mubr.bf16.gmra.mrb[0].mxu0 %v1618
      %v2160 = vpop.f32.mrb[0].mxu0
      %v2161 = vadd.f32 %v2000, %v2160
      %v2162 = vpop.f32.mrb[0].mxu0
      %v2163 = vpop.f32.mrb[0].mxu0
      %v2164 = vadd.f32 %v2003, %v2163
      %v2165 = vpop.f32.mrb[0].mxu0
      %2166 = vmatprep.mubr.bf16.mxu0 0
      %2167 = vmatmul.mubr.bf16.gmra.mrb[0].mxu0 %v1621
      %v2168 = vpop.f32.mrb[0].mxu0
      %v2169 = vadd.f32 %v2008, %v2168
      %v2170 = vpop.f32.mrb[0].mxu0
      %v2171 = vpop.f32.mrb[0].mxu0
      %v2172 = vadd.f32 %v2011, %v2171
      %v2173 = vpop.f32.mrb[0].mxu0
      %2174 = vmatprep.mubr.bf16.mxu0 0
      %2175 = vmatmul.mubr.bf16.gmra.mrb[0].mxu0 %v1624
      %v2176 = vpop.f32.mrb[0].mxu0
      %v2177 = vadd.f32 %v2016, %v2176
      %v2178 = vpop.f32.mrb[0].mxu0
      %v2179 = vpop.f32.mrb[0].mxu0
      %v2180 = vadd.f32 %v2019, %v2179
      %v2181 = vpop.f32.mrb[0].mxu0
      %2182 = vmatprep.mubr.bf16.mxu0 0
      %2183 = vmatmul.mubr.bf16.gmra.mrb[0].mxu0 %v1675
      %v2184 = vpop.f32.mrb[0].mxu0
      %v2185 = vadd.f32 %v2024, %v2184
      %v2186 = vpop.f32.mrb[0].mxu0
      %v2187 = vpop.f32.mrb[0].mxu0
      %v2188 = vadd.f32 %v2027, %v2187
      %v2189 = vpop.f32.mrb[0].mxu0
      %2190 = vdwg.mxu0
      %v2239 = vunpack.c.l.b16 %v1625
      %v2240 = vunpack.c.l.b16 %v1626
      %v2241 = vunpack.c.l.b16 %v1627
      %v2242 = vunpack.c.l.b16 %v1628
      %v2243 = vunpack.c.l.b16 %v1629
      %v2244 = vunpack.c.l.b16 %v1630
      %v2245 = vunpack.c.l.b16 %v1631
      %v2246 = vunpack.c.l.b16 %v1632
      %v2247 = vunpack.c.l.b16 %v1633
      %v2248 = vunpack.c.l.b16 %v1634
      %v2249 = vunpack.c.l.b16 %v1635
      %v2250 = vunpack.c.l.b16 %v1636
      %v2251 = vunpack.c.l.b16 %v1637
      %v2252 = vunpack.c.l.b16 %v1638
      %v2253 = vunpack.c.l.b16 %v1639
      %v2254 = vunpack.c.l.b16 %v1640
      %v2255 = vunpack.c.l.b16 %v1641
      %v2256 = vunpack.c.l.b16 %v1642
      %v2257 = vunpack.c.l.b16 %v1643
      %v2258 = vunpack.c.l.b16 %v1644
      %v2259 = vunpack.c.l.b16 %v1645
      %v2260 = vunpack.c.l.b16 %v1646
      %v2261 = vunpack.c.l.b16 %v1647
      %v2262 = vunpack.c.l.b16 %v1648
      %v2263 = vunpack.c.l.b16 %v1649
      %v2264 = vunpack.c.l.b16 %v1650
      %v2265 = vunpack.c.l.b16 %v1651
      %v2266 = vunpack.c.l.b16 %v1652
      %v2267 = vunpack.c.l.b16 %v1653
      %v2268 = vunpack.c.l.b16 %v1654
      %v2269 = vunpack.c.l.b16 %v1655
      %v2270 = vunpack.c.l.b16 %v1656
      %v2271 = vunpack.c.l.b16 %v1657
      %v2272 = vunpack.c.l.b16 %v1658
      %v2273 = vunpack.c.l.b16 %v1659
      %v2274 = vunpack.c.l.b16 %v1660
      %v2275 = vunpack.c.l.b16 %v1661
      %v2276 = vunpack.c.l.b16 %v1662
      %v2277 = vunpack.c.l.b16 %v1663
      %v2278 = vunpack.c.l.b16 %v1664
      %v2279 = vunpack.c.l.b16 %v1665
      %v2280 = vunpack.c.l.b16 %v1666
      %v2281 = vunpack.c.l.b16 %v1667
      %v2282 = vunpack.c.l.b16 %v1668
      %v2283 = vunpack.c.l.b16 %v1669
      %v2284 = vunpack.c.l.b16 %v1670
      %v2285 = vunpack.c.l.b16 %v1671
      %v2286 = vunpack.c.l.b16 %v1672
      %v2287 = vpack.c.b16 %v2240, %v2239
      %v2288 = vpack.c.b16 %v2242, %v2241
      %v2289 = vpack.c.b16 %v2244, %v2243
      %v2290 = vpack.c.b16 %v2246, %v2245
      %v2291 = vpack.c.b16 %v2248, %v2247
      %v2292 = vpack.c.b16 %v2250, %v2249
      %v2293 = vpack.c.b16 %v2252, %v2251
      %v2294 = vpack.c.b16 %v2254, %v2253
      %v2295 = vpack.c.b16 %v2256, %v2255
      %v2296 = vpack.c.b16 %v2258, %v2257
      %v2297 = vpack.c.b16 %v2260, %v2259
      %v2298 = vpack.c.b16 %v2262, %v2261
      %v2299 = vpack.c.b16 %v2264, %v2263
      %v2300 = vpack.c.b16 %v2266, %v2265
      %v2301 = vpack.c.b16 %v2268, %v2267
      %v2302 = vpack.c.b16 %v2270, %v2269
      %v2303 = vpack.c.b16 %v2272, %v2271
      %v2304 = vpack.c.b16 %v2274, %v2273
      %v2305 = vpack.c.b16 %v2276, %v2275
      %v2306 = vpack.c.b16 %v2278, %v2277
      %v2307 = vpack.c.b16 %v2280, %v2279
      %v2308 = vpack.c.b16 %v2282, %v2281
      %v2309 = vpack.c.b16 %v2284, %v2283
      %v2310 = vpack.c.b16 %v2286, %v2285
      %2335 = vmatprep.subr.bf16.mxu0 0
      %2336 = vmatpush1.bf16.msra.mxu0 %v2287
      %2337 = vmatprep.subr.bf16.mxu0 0
      %2338 = vmatpush1.bf16.msra.mxu0 %v2288
      %2339 = vmatprep.subr.bf16.mxu0 0
      %2340 = vmatpush1.bf16.msra.mxu0 %v2289
      %2341 = vmatprep.subr.bf16.mxu0 0
      %2342 = vmatpush1.bf16.msra.mxu0 %v2290
      %2343 = vmatprep.subr.bf16.mxu0 0
      %2344 = vmatpush1.bf16.msra.mxu0 %v2291
      %2345 = vmatprep.subr.bf16.mxu0 0
      %2346 = vmatpush1.bf16.msra.mxu0 %v2292
      %2347 = vmatprep.subr.bf16.mxu0 0
      %2348 = vmatpush1.bf16.msra.mxu0 %v2293
      %2349 = vmatprep.subr.bf16.mxu0 0
      %2350 = vmatpush1.bf16.msra.mxu0 %v2294
      %2351 = vmatprep.subr.bf16.mxu0 0
      %2352 = vmatpush1.bf16.msra.mxu0 %v2295
      %2353 = vmatprep.subr.bf16.mxu0 0
      %2354 = vmatpush1.bf16.msra.mxu0 %v2296
      %2355 = vmatprep.subr.bf16.mxu0 0
      %2356 = vmatpush1.bf16.msra.mxu0 %v2297
      %2357 = vmatprep.subr.bf16.mxu0 0
      %2358 = vmatpush1.bf16.msra.mxu0 %v2298
      %2359 = vmatprep.subr.bf16.mxu0 0
      %2360 = vmatpush1.bf16.msra.mxu0 %v2299
      %2361 = vmatprep.subr.bf16.mxu0 0
      %2362 = vmatpush1.bf16.msra.mxu0 %v2300
      %2363 = vmatprep.subr.bf16.mxu0 0
      %2364 = vmatpush1.bf16.msra.mxu0 %v2301
      %2365 = vmatprep.subr.bf16.mxu0 0
      %2366 = vmatpush1.bf16.msra.mxu0 %v2302
      %2367 = vmatprep.mubr.bf16.mxu0 %v1578
      %2368 = vmatmul.mubr.bf16.gmra.mrb[0].mxu0 %v1577
      %v2369 = vpop.f32.mrb[0].mxu0
      %v2370 = vadd.f32 %v2065, %v2369
      %v2371 = vpop.f32.mrb[0].mxu0
      %v2372 = vpop.f32.mrb[0].mxu0
      %v2373 = vadd.f32 %v2068, %v2372
      %v2374 = vpop.f32.mrb[0].mxu0
      %2375 = vmatprep.mubr.bf16.mxu0 %v1581
      %2376 = vmatmul.mubr.bf16.gmra.mrb[0].mxu0 %v1580
      %v2377 = vpop.f32.mrb[0].mxu0
      %v2378 = vadd.f32 %v2073, %v2377
      %v2379 = vpop.f32.mrb[0].mxu0
      %v2380 = vpop.f32.mrb[0].mxu0
      %v2381 = vadd.f32 %v2076, %v2380
      %v2382 = vpop.f32.mrb[0].mxu0
      %2383 = vmatprep.mubr.bf16.mxu0 %v1584
      %2384 = vmatmul.mubr.bf16.gmra.mrb[0].mxu0 %v1583
      %v2385 = vpop.f32.mrb[0].mxu0
      %v2386 = vadd.f32 %v2081, %v2385
      %v2387 = vpop.f32.mrb[0].mxu0
      %v2388 = vpop.f32.mrb[0].mxu0
      %v2389 = vadd.f32 %v2084, %v2388
      %v2390 = vpop.f32.mrb[0].mxu0
      %2391 = vmatprep.mubr.bf16.mxu0 %v1587
      %2392 = vmatmul.mubr.bf16.gmra.mrb[0].mxu0 %v1586
      %v2393 = vpop.f32.mrb[0].mxu0
      %v2394 = vadd.f32 %v2089, %v2393
      %v2395 = vpop.f32.mrb[0].mxu0
      %v2396 = vpop.f32.mrb[0].mxu0
      %v2397 = vadd.f32 %v2092, %v2396
      %v2398 = vpop.f32.mrb[0].mxu0
      %2399 = vmatprep.mubr.bf16.mxu0 %v1590
      %2400 = vmatmul.mubr.bf16.gmra.mrb[0].mxu0 %v1589
      %v2401 = vpop.f32.mrb[0].mxu0
      %v2402 = vadd.f32 %v2097, %v2401
      %v2403 = vpop.f32.mrb[0].mxu0
      %v2404 = vpop.f32.mrb[0].mxu0
      %v2405 = vadd.f32 %v2100, %v2404
      %v2406 = vpop.f32.mrb[0].mxu0
      %2407 = vmatprep.mubr.bf16.mxu0 %v1593
      %2408 = vmatmul.mubr.bf16.gmra.mrb[0].mxu0 %v1592
      %v2409 = vpop.f32.mrb[0].mxu0
      %v2410 = vadd.f32 %v2105, %v2409
      %v2411 = vpop.f32.mrb[0].mxu0
      %v2412 = vpop.f32.mrb[0].mxu0
      %v2413 = vadd.f32 %v2108, %v2412
      %v2414 = vpop.f32.mrb[0].mxu0
      %2415 = vmatprep.mubr.bf16.mxu0 %v1596
      %2416 = vmatmul.mubr.bf16.gmra.mrb[0].mxu0 %v1595
      %v2417 = vpop.f32.mrb[0].mxu0
      %v2418 = vadd.f32 %v2113, %v2417
      %v2419 = vpop.f32.mrb[0].mxu0
      %v2420 = vpop.f32.mrb[0].mxu0
      %v2421 = vadd.f32 %v2116, %v2420
      %v2422 = vpop.f32.mrb[0].mxu0
      %2423 = vmatprep.mubr.bf16.mxu0 %v1599
      %2424 = vmatmul.mubr.bf16.gmra.mrb[0].mxu0 %v1598
      %v2425 = vpop.f32.mrb[0].mxu0
      %v2426 = vadd.f32 %v2121, %v2425
      %v2427 = vpop.f32.mrb[0].mxu0
      %v2428 = vpop.f32.mrb[0].mxu0
      %v2429 = vadd.f32 %v2124, %v2428
      %v2430 = vpop.f32.mrb[0].mxu0
      %2431 = vmatprep.mubr.bf16.mxu0 %v1602
      %2432 = vmatmul.mubr.bf16.gmra.mrb[0].mxu0 %v1601
      %v2433 = vpop.f32.mrb[0].mxu0
      %v2434 = vadd.f32 %v2129, %v2433
      %v2435 = vpop.f32.mrb[0].mxu0
      %v2436 = vpop.f32.mrb[0].mxu0
      %v2437 = vadd.f32 %v2132, %v2436
      %v2438 = vpop.f32.mrb[0].mxu0
      %2439 = vmatprep.mubr.bf16.mxu0 %v1605
      %2440 = vmatmul.mubr.bf16.gmra.mrb[0].mxu0 %v1604
      %v2441 = vpop.f32.mrb[0].mxu0
      %v2442 = vadd.f32 %v2137, %v2441
      %v2443 = vpop.f32.mrb[0].mxu0
      %v2444 = vpop.f32.mrb[0].mxu0
      %v2445 = vadd.f32 %v2140, %v2444
      %v2446 = vpop.f32.mrb[0].mxu0
      %2447 = vmatprep.mubr.bf16.mxu0 %v1608
      %2448 = vmatmul.mubr.bf16.gmra.mrb[0].mxu0 %v1607
      %v2449 = vpop.f32.mrb[0].mxu0
      %v2450 = vadd.f32 %v2145, %v2449
      %v2451 = vpop.f32.mrb[0].mxu0
      %v2452 = vpop.f32.mrb[0].mxu0
      %v2453 = vadd.f32 %v2148, %v2452
      %v2454 = vpop.f32.mrb[0].mxu0
      %2455 = vmatprep.mubr.bf16.mxu0 %v1611
      %2456 = vmatmul.mubr.bf16.gmra.mrb[0].mxu0 %v1610
      %v2457 = vpop.f32.mrb[0].mxu0
      %v2458 = vadd.f32 %v2153, %v2457
      %v2459 = vpop.f32.mrb[0].mxu0
      %v2460 = vpop.f32.mrb[0].mxu0
      %v2461 = vadd.f32 %v2156, %v2460
      %v2462 = vpop.f32.mrb[0].mxu0
      %2463 = vmatprep.mubr.bf16.mxu0 %v1614
      %2464 = vmatmul.mubr.bf16.gmra.mrb[0].mxu0 %v1613
      %v2465 = vpop.f32.mrb[0].mxu0
      %v2466 = vadd.f32 %v2161, %v2465
      %v2467 = vpop.f32.mrb[0].mxu0
      %v2468 = vpop.f32.mrb[0].mxu0
      %v2469 = vadd.f32 %v2164, %v2468
      %v2470 = vpop.f32.mrb[0].mxu0
      %2471 = vmatprep.mubr.bf16.mxu0 %v1617
      %2472 = vmatmul.mubr.bf16.gmra.mrb[0].mxu0 %v1616
      %v2473 = vpop.f32.mrb[0].mxu0
      %v2474 = vadd.f32 %v2169, %v2473
      %v2475 = vpop.f32.mrb[0].mxu0
      %v2476 = vpop.f32.mrb[0].mxu0
      %v2477 = vadd.f32 %v2172, %v2476
      %v2478 = vpop.f32.mrb[0].mxu0
      %2479 = vmatprep.mubr.bf16.mxu0 %v1620
      %2480 = vmatmul.mubr.bf16.gmra.mrb[0].mxu0 %v1619
      %v2481 = vpop.f32.mrb[0].mxu0
      %v2482 = vadd.f32 %v2177, %v2481
      %v2483 = vpop.f32.mrb[0].mxu0
      %v2484 = vpop.f32.mrb[0].mxu0
      %v2485 = vadd.f32 %v2180, %v2484
      %v2486 = vpop.f32.mrb[0].mxu0
      %2487 = vmatprep.mubr.bf16.mxu0 %v1623
      %2488 = vmatmul.mubr.bf16.gmra.mrb[0].mxu0 %v1622
      %v2489 = vpop.f32.mrb[0].mxu0
      %v2490 = vadd.f32 %v2185, %v2489
      %v2491 = vpop.f32.mrb[0].mxu0
      %v2492 = vpop.f32.mrb[0].mxu0
      %v2493 = vadd.f32 %v2188, %v2492
      %v2494 = vpop.f32.mrb[0].mxu0
      %2495 = vdwg.mxu0
      %2496 = vmatprep.subr.bf16.mxu0 0
      %2497 = vmatpush1.bf16.msra.mxu0 %v2303
      %2498 = vmatprep.subr.bf16.mxu0 0
      %2499 = vmatpush1.bf16.msra.mxu0 %v2304
      %2500 = vmatprep.subr.bf16.mxu0 0
      %2501 = vmatpush1.bf16.msra.mxu0 %v2305
      %2502 = vmatprep.subr.bf16.mxu0 0
      %2503 = vmatpush1.bf16.msra.mxu0 %v2306
      %2504 = vmatprep.subr.bf16.mxu0 0
      %2505 = vmatpush1.bf16.msra.mxu0 %v2307
      %2506 = vmatprep.subr.bf16.mxu0 0
      %2507 = vmatpush1.bf16.msra.mxu0 %v2308
      %2508 = vmatprep.subr.bf16.mxu0 0
      %2509 = vmatpush1.bf16.msra.mxu0 %v2309
      %2510 = vmatprep.subr.bf16.mxu0 0
      %2511 = vmatpush1.bf16.msra.mxu0 %v2310
      %2512 = vmatprep.subr.bf16.mxu0 0
      %2513 = vmatpush1.bf16.msra.mxu0 0
      %2514 = vmatprep.subr.bf16.mxu0 0
      %2515 = vmatpush1.bf16.msra.mxu0 0
      %2516 = vmatprep.subr.bf16.mxu0 0
      %2517 = vmatpush1.bf16.msra.mxu0 0
      %2518 = vmatprep.subr.bf16.mxu0 0
      %2519 = vmatpush1.bf16.msra.mxu0 0
      %2520 = vmatprep.subr.bf16.mxu0 0
      %2521 = vmatpush1.bf16.msra.mxu0 0
      %2522 = vmatprep.subr.bf16.mxu0 0
      %2523 = vmatpush1.bf16.msra.mxu0 0
      %2524 = vmatprep.subr.bf16.mxu0 0
      %2525 = vmatpush1.bf16.msra.mxu0 0
      %2526 = vmatprep.subr.bf16.mxu0 0
      %2527 = vmatpush1.bf16.msra.mxu0 0
      %2528 = vmatprep.mubr.bf16.mxu0 0
      %2529 = vmatmul.mubr.bf16.gmra.mrb[0].mxu0 %v1579
      %v2530 = vpop.f32.mrb[0].mxu0
      %v2531 = vadd.f32 %v2370, %v2530
      %v2532 = vpop.f32.mrb[0].mxu0
      %v2533 = vpop.f32.mrb[0].mxu0
      %v2534 = vadd.f32 %v2373, %v2533
      %v2535 = vpop.f32.mrb[0].mxu0
      %2536 = vmatprep.mubr.bf16.mxu0 0
      %2537 = vmatmul.mubr.bf16.gmra.mrb[0].mxu0 %v1582
      %v2538 = vpop.f32.mrb[0].mxu0
      %v2539 = vadd.f32 %v2378, %v2538
      %v2540 = vpop.f32.mrb[0].mxu0
      %v2541 = vpop.f32.mrb[0].mxu0
      %v2542 = vadd.f32 %v2381, %v2541
      %v2543 = vpop.f32.mrb[0].mxu0
      %2544 = vmatprep.mubr.bf16.mxu0 0
      %2545 = vmatmul.mubr.bf16.gmra.mrb[0].mxu0 %v1585
      %v2546 = vpop.f32.mrb[0].mxu0
      %v2547 = vadd.f32 %v2386, %v2546
      %v2548 = vpop.f32.mrb[0].mxu0
      %v2549 = vpop.f32.mrb[0].mxu0
      %v2550 = vadd.f32 %v2389, %v2549
      %v2551 = vpop.f32.mrb[0].mxu0
      %2552 = vmatprep.mubr.bf16.mxu0 0
      %2553 = vmatmul.mubr.bf16.gmra.mrb[0].mxu0 %v1588
      %v2554 = vpop.f32.mrb[0].mxu0
      %v2555 = vadd.f32 %v2394, %v2554
      %v2556 = vpop.f32.mrb[0].mxu0
      %v2557 = vpop.f32.mrb[0].mxu0
      %v2558 = vadd.f32 %v2397, %v2557
      %v2559 = vpop.f32.mrb[0].mxu0
      %2560 = vmatprep.mubr.bf16.mxu0 0
      %2561 = vmatmul.mubr.bf16.gmra.mrb[0].mxu0 %v1591
      %v2562 = vpop.f32.mrb[0].mxu0
      %v2563 = vadd.f32 %v2402, %v2562
      %v2564 = vpop.f32.mrb[0].mxu0
      %v2565 = vpop.f32.mrb[0].mxu0
      %v2566 = vadd.f32 %v2405, %v2565
      %v2567 = vpop.f32.mrb[0].mxu0
      %2568 = vmatprep.mubr.bf16.mxu0 0
      %2569 = vmatmul.mubr.bf16.gmra.mrb[0].mxu0 %v1594
      %v2570 = vpop.f32.mrb[0].mxu0
      %v2571 = vadd.f32 %v2410, %v2570
      %v2572 = vpop.f32.mrb[0].mxu0
      %v2573 = vpop.f32.mrb[0].mxu0
      %v2574 = vadd.f32 %v2413, %v2573
      %v2575 = vpop.f32.mrb[0].mxu0
      %2576 = vmatprep.mubr.bf16.mxu0 0
      %2577 = vmatmul.mubr.bf16.gmra.mrb[0].mxu0 %v1597
      %v2578 = vpop.f32.mrb[0].mxu0
      %v2579 = vadd.f32 %v2418, %v2578
      %v2580 = vpop.f32.mrb[0].mxu0
      %v2581 = vpop.f32.mrb[0].mxu0
      %v2582 = vadd.f32 %v2421, %v2581
      %v2583 = vpop.f32.mrb[0].mxu0
      %2584 = vmatprep.mubr.bf16.mxu0 0
      %2585 = vmatmul.mubr.bf16.gmra.mrb[0].mxu0 %v1600
      %v2586 = vpop.f32.mrb[0].mxu0
      %v2587 = vadd.f32 %v2426, %v2586
      %v2588 = vpop.f32.mrb[0].mxu0
      %v2589 = vpop.f32.mrb[0].mxu0
      %v2590 = vadd.f32 %v2429, %v2589
      %v2591 = vpop.f32.mrb[0].mxu0
      %2592 = vmatprep.mubr.bf16.mxu0 0
      %2593 = vmatmul.mubr.bf16.gmra.mrb[0].mxu0 %v1603
      %v2594 = vpop.f32.mrb[0].mxu0
      %v2595 = vadd.f32 %v2434, %v2594
      %v2596 = vpop.f32.mrb[0].mxu0
      %v2597 = vpop.f32.mrb[0].mxu0
      %v2598 = vadd.f32 %v2437, %v2597
      %v2599 = vpop.f32.mrb[0].mxu0
      %2600 = vmatprep.mubr.bf16.mxu0 0
      %2601 = vmatmul.mubr.bf16.gmra.mrb[0].mxu0 %v1606
      %v2602 = vpop.f32.mrb[0].mxu0
      %v2603 = vadd.f32 %v2442, %v2602
      %v2604 = vpop.f32.mrb[0].mxu0
      %v2605 = vpop.f32.mrb[0].mxu0
      %v2606 = vadd.f32 %v2445, %v2605
      %v2607 = vpop.f32.mrb[0].mxu0
      %2608 = vmatprep.mubr.bf16.mxu0 0
      %2609 = vmatmul.mubr.bf16.gmra.mrb[0].mxu0 %v1609
      %v2610 = vpop.f32.mrb[0].mxu0
      %v2611 = vadd.f32 %v2450, %v2610
      %v2612 = vpop.f32.mrb[0].mxu0
      %v2613 = vpop.f32.mrb[0].mxu0
      %v2614 = vadd.f32 %v2453, %v2613
      %v2615 = vpop.f32.mrb[0].mxu0
      %2616 = vmatprep.mubr.bf16.mxu0 0
      %2617 = vmatmul.mubr.bf16.gmra.mrb[0].mxu0 %v1612
      %v2618 = vpop.f32.mrb[0].mxu0
      %v2619 = vadd.f32 %v2458, %v2618
      %v2620 = vpop.f32.mrb[0].mxu0
      %v2621 = vpop.f32.mrb[0].mxu0
      %v2622 = vadd.f32 %v2461, %v2621
      %v2623 = vpop.f32.mrb[0].mxu0
      %2624 = vmatprep.mubr.bf16.mxu0 0
      %2625 = vmatmul.mubr.bf16.gmra.mrb[0].mxu0 %v1615
      %v2626 = vpop.f32.mrb[0].mxu0
      %v2627 = vadd.f32 %v2466, %v2626
      %v2628 = vpop.f32.mrb[0].mxu0
      %v2629 = vpop.f32.mrb[0].mxu0
      %v2630 = vadd.f32 %v2469, %v2629
      %v2631 = vpop.f32.mrb[0].mxu0
      %2632 = vmatprep.mubr.bf16.mxu0 0
      %2633 = vmatmul.mubr.bf16.gmra.mrb[0].mxu0 %v1618
      %v2634 = vpop.f32.mrb[0].mxu0
      %v2635 = vadd.f32 %v2474, %v2634
      %v2636 = vpop.f32.mrb[0].mxu0
      %v2637 = vpop.f32.mrb[0].mxu0
      %v2638 = vadd.f32 %v2477, %v2637
      %v2639 = vpop.f32.mrb[0].mxu0
      %2640 = vmatprep.mubr.bf16.mxu0 0
      %2641 = vmatmul.mubr.bf16.gmra.mrb[0].mxu0 %v1621
      %v2642 = vpop.f32.mrb[0].mxu0
      %v2643 = vadd.f32 %v2482, %v2642
      %v2644 = vpop.f32.mrb[0].mxu0
      %v2645 = vpop.f32.mrb[0].mxu0
      %v2646 = vadd.f32 %v2485, %v2645
      %v2647 = vpop.f32.mrb[0].mxu0
      %2648 = vmatprep.mubr.bf16.mxu0 0
      %2649 = vmatmul.mubr.bf16.gmra.mrb[0].mxu0 %v1624
      %v2650 = vpop.f32.mrb[0].mxu0
      %v2651 = vadd.f32 %v2490, %v2650
      %v2652 = vpop.f32.mrb[0].mxu0
      %v2653 = vpop.f32.mrb[0].mxu0
      %v2654 = vadd.f32 %v2493, %v2653
      %v2655 = vpop.f32.mrb[0].mxu0
      %2656 = vdwg.mxu0
      %v2657 = vld [vmem:[#allocation2 + $0x30] sm:$0xff]
      %v2658 = vld [vmem:[#allocation2 + $0x38] sm:$0xff]
      %v2659 = vld [vmem:[#allocation2 + $0x40] sm:$0xff]
      %v2660 = vld [vmem:[#allocation2 + $0x48] sm:$0xff]
      %v2661 = vld [vmem:[#allocation2 + $0x50] sm:$0xff]
      %v2662 = vld [vmem:[#allocation2 + $0x58] sm:$0xff]
      %v2663 = vld [vmem:[#allocation2 + $0x60] sm:$0xff]
      %v2664 = vld [vmem:[#allocation2 + $0x68] sm:$0xff]
      %v2665 = vld [vmem:[#allocation2 + $0x70] sm:$0xff]
      %v2666 = vld [vmem:[#allocation2 + $0x78] sm:$0xff]
      %v2667 = vld [vmem:[#allocation2 + $0x80] sm:$0xff]
      %v2668 = vld [vmem:[#allocation2 + $0x88] sm:$0xff]
      %v2669 = vld [vmem:[#allocation2 + $0x90] sm:$0xff]
      %v2670 = vld [vmem:[#allocation2 + $0x98] sm:$0xff]
      %v2671 = vld [vmem:[#allocation2 + $0xa0] sm:$0xff]
      %v2672 = vld [vmem:[#allocation2 + $0xa8] sm:$0xff]
      %v2673 = vld [vmem:[#allocation2 + $0xb0] sm:$0xff]
      %v2674 = vld [vmem:[#allocation2 + $0xb8] sm:$0xff]
      %v2675 = vld [vmem:[#allocation2 + $0xc0] sm:$0xff]
      %v2676 = vld [vmem:[#allocation2 + $0xc8] sm:$0xff]
      %v2677 = vld [vmem:[#allocation2 + $0xd0] sm:$0xff]
      %v2678 = vld [vmem:[#allocation2 + $0xd8] sm:$0xff]
      %v2679 = vld [vmem:[#allocation2 + $0xe0] sm:$0xff]
      %v2680 = vld [vmem:[#allocation2 + $0xe8] sm:$0xff]
      %v2681 = vld [vmem:[#allocation2 + $0xf0] sm:$0xff]
      %v2682 = vld [vmem:[#allocation2 + $0xf8] sm:$0xff]
      %v2683 = vld [vmem:[#allocation2 + $0x100] sm:$0xff]
      %v2684 = vld [vmem:[#allocation2 + $0x108] sm:$0xff]
      %v2685 = vld [vmem:[#allocation2 + $0x110] sm:$0xff]
      %v2686 = vld [vmem:[#allocation2 + $0x118] sm:$0xff]
      %v2687 = vld [vmem:[#allocation2 + $0x120] sm:$0xff]
      %v2688 = vld [vmem:[#allocation2 + $0x128] sm:$0xff]
      %v2689 = vld [vmem:[#allocation2 + $0x130] sm:$0xff]
      %v2690 = vld [vmem:[#allocation2 + $0x138] sm:$0xff]
      %v2691 = vld [vmem:[#allocation2 + $0x140] sm:$0xff]
      %v2692 = vld [vmem:[#allocation2 + $0x148] sm:$0xff]
      %v2693 = vld [vmem:[#allocation2 + $0x150] sm:$0xff]
      %v2694 = vld [vmem:[#allocation2 + $0x158] sm:$0xff]
      %v2695 = vld [vmem:[#allocation2 + $0x160] sm:$0xff]
      %v2696 = vld [vmem:[#allocation2 + $0x168] sm:$0xff]
      %v2697 = vld [vmem:[#allocation2 + $0x170] sm:$0xff]
      %v2698 = vld [vmem:[#allocation2 + $0x178] sm:$0xff]
      %v2699 = vld [vmem:[#allocation2 + $0x180] sm:$0xff]
      %v2700 = vld [vmem:[#allocation2 + $0x188] sm:$0xff]
      %v2701 = vld [vmem:[#allocation2 + $0x190] sm:$0xff]
      %v2702 = vld [vmem:[#allocation2 + $0x198] sm:$0xff]
      %v2703 = vld [vmem:[#allocation2 + $0x1a0] sm:$0xff]
      %v2704 = vld [vmem:[#allocation2 + $0x1a8] sm:$0xff]
      %s2705 = scalar_lea.vmem %s3, 384
      %v2706 = vld [vmem:[%s2705] sm:$0xf]
      %v2707 = vld [vmem:[%s2705 + $0x4] sm:$0xf]
      %v2708 = vld [vmem:[%s2705 + $0x8] sm:$0xf]
      %v2709 = vld [vmem:[%s2705 + $0xc] sm:$0xf]
      %v2710 = vld [vmem:[%s2705 + $0x10] sm:$0xf]
      %v2711 = vld [vmem:[%s2705 + $0x14] sm:$0xf]
      %v2712 = vld [vmem:[%s2705 + $0x18] sm:$0xf]
      %v2713 = vld [vmem:[%s2705 + $0x1c] sm:$0xf]
      %v2714 = vld [vmem:[%s2705 + $0x20] sm:$0xf]
      %v2715 = vld [vmem:[%s2705 + $0x24] sm:$0xf]
      %v2716 = vld [vmem:[%s2705 + $0x28] sm:$0xf]
      %v2717 = vld [vmem:[%s2705 + $0x2c] sm:$0xf]
      %v2718 = vld [vmem:[%s2705 + $0x30] sm:$0xf]
      %v2719 = vld [vmem:[%s2705 + $0x34] sm:$0xf]
      %v2720 = vld [vmem:[%s2705 + $0x38] sm:$0xf]
      %v2721 = vld [vmem:[%s2705 + $0x3c] sm:$0xf]
      %v2722 = vld [vmem:[%s2705 + $0x40] sm:$0xf]
      %v2723 = vld [vmem:[%s2705 + $0x44] sm:$0xf]
      %v2724 = vld [vmem:[%s2705 + $0x48] sm:$0xf]
      %v2725 = vld [vmem:[%s2705 + $0x4c] sm:$0xf]
      %v2726 = vld [vmem:[%s2705 + $0x50] sm:$0xf]
      %v2727 = vld [vmem:[%s2705 + $0x54] sm:$0xf]
      %v2728 = vld [vmem:[%s2705 + $0x58] sm:$0xf]
      %v2729 = vld [vmem:[%s2705 + $0x5c] sm:$0xf]
      %v2730 = vld [vmem:[%s2705 + $0x60] sm:$0xf]
      %v2731 = vld [vmem:[%s2705 + $0x64] sm:$0xf]
      %v2732 = vld [vmem:[%s2705 + $0x68] sm:$0xf]
      %v2733 = vld [vmem:[%s2705 + $0x6c] sm:$0xf]
      %v2734 = vld [vmem:[%s2705 + $0x70] sm:$0xf]
      %v2735 = vld [vmem:[%s2705 + $0x74] sm:$0xf]
      %v2736 = vld [vmem:[%s2705 + $0x78] sm:$0xf]
      %v2737 = vld [vmem:[%s2705 + $0x7c] sm:$0xf]
      %v2738 = vld [vmem:[%s2705 + $0x80] sm:$0xf]
      %v2739 = vld [vmem:[%s2705 + $0x84] sm:$0xf]
      %v2740 = vld [vmem:[%s2705 + $0x88] sm:$0xf]
      %v2741 = vld [vmem:[%s2705 + $0x8c] sm:$0xf]
      %v2742 = vld [vmem:[%s2705 + $0x90] sm:$0xf]
      %v2743 = vld [vmem:[%s2705 + $0x94] sm:$0xf]
      %v2744 = vld [vmem:[%s2705 + $0x98] sm:$0xf]
      %v2745 = vld [vmem:[%s2705 + $0x9c] sm:$0xf]
      %v2746 = vld [vmem:[%s2705 + $0xa0] sm:$0xf]
      %v2747 = vld [vmem:[%s2705 + $0xa4] sm:$0xf]
      %v2748 = vld [vmem:[%s2705 + $0xa8] sm:$0xf]
      %v2749 = vld [vmem:[%s2705 + $0xac] sm:$0xf]
      %v2750 = vld [vmem:[%s2705 + $0xb0] sm:$0xf]
      %v2751 = vld [vmem:[%s2705 + $0xb4] sm:$0xf]
      %v2752 = vld [vmem:[%s2705 + $0xb8] sm:$0xf]
      %v2753 = vld [vmem:[%s2705 + $0xbc] sm:$0xf]
      %v2802 = vunpack.c.l.b16 %v2706
      %v2803 = vunpack.c.l.b16 %v2707
      %v2804 = vunpack.c.l.b16 %v2708
      %v2805 = vunpack.c.l.b16 %v2709
      %v2806 = vunpack.c.l.b16 %v2710
      %v2807 = vunpack.c.l.b16 %v2711
      %v2808 = vunpack.c.l.b16 %v2712
      %v2809 = vunpack.c.l.b16 %v2713
      %v2810 = vunpack.c.l.b16 %v2714
      %v2811 = vunpack.c.l.b16 %v2715
      %v2812 = vunpack.c.l.b16 %v2716
      %v2813 = vunpack.c.l.b16 %v2717
      %v2814 = vunpack.c.l.b16 %v2718
      %v2815 = vunpack.c.l.b16 %v2719
      %v2816 = vunpack.c.l.b16 %v2720
      %v2817 = vunpack.c.l.b16 %v2721
      %v2818 = vunpack.c.l.b16 %v2722
      %v2819 = vunpack.c.l.b16 %v2723
      %v2820 = vunpack.c.l.b16 %v2724
      %v2821 = vunpack.c.l.b16 %v2725
      %v2822 = vunpack.c.l.b16 %v2726
      %v2823 = vunpack.c.l.b16 %v2727
      %v2824 = vunpack.c.l.b16 %v2728
      %v2825 = vunpack.c.l.b16 %v2729
      %v2826 = vunpack.c.l.b16 %v2730
      %v2827 = vunpack.c.l.b16 %v2731
      %v2828 = vunpack.c.l.b16 %v2732
      %v2829 = vunpack.c.l.b16 %v2733
      %v2830 = vunpack.c.l.b16 %v2734
      %v2831 = vunpack.c.l.b16 %v2735
      %v2832 = vunpack.c.l.b16 %v2736
      %v2833 = vunpack.c.l.b16 %v2737
      %v2834 = vunpack.c.l.b16 %v2738
      %v2835 = vunpack.c.l.b16 %v2739
      %v2836 = vunpack.c.l.b16 %v2740
      %v2837 = vunpack.c.l.b16 %v2741
      %v2838 = vunpack.c.l.b16 %v2742
      %v2839 = vunpack.c.l.b16 %v2743
      %v2840 = vunpack.c.l.b16 %v2744
      %v2841 = vunpack.c.l.b16 %v2745
      %v2842 = vunpack.c.l.b16 %v2746
      %v2843 = vunpack.c.l.b16 %v2747
      %v2844 = vunpack.c.l.b16 %v2748
      %v2845 = vunpack.c.l.b16 %v2749
      %v2846 = vunpack.c.l.b16 %v2750
      %v2847 = vunpack.c.l.b16 %v2751
      %v2848 = vunpack.c.l.b16 %v2752
      %v2849 = vunpack.c.l.b16 %v2753
      %v2850 = vpack.c.b16 %v2803, %v2802
      %v2851 = vpack.c.b16 %v2805, %v2804
      %v2852 = vpack.c.b16 %v2807, %v2806
      %v2853 = vpack.c.b16 %v2809, %v2808
      %v2854 = vpack.c.b16 %v2811, %v2810
      %v2855 = vpack.c.b16 %v2813, %v2812
      %v2856 = vpack.c.b16 %v2815, %v2814
      %v2857 = vpack.c.b16 %v2817, %v2816
      %v2858 = vpack.c.b16 %v2819, %v2818
      %v2859 = vpack.c.b16 %v2821, %v2820
      %v2860 = vpack.c.b16 %v2823, %v2822
      %v2861 = vpack.c.b16 %v2825, %v2824
      %v2862 = vpack.c.b16 %v2827, %v2826
      %v2863 = vpack.c.b16 %v2829, %v2828
      %v2864 = vpack.c.b16 %v2831, %v2830
      %v2865 = vpack.c.b16 %v2833, %v2832
      %v2866 = vpack.c.b16 %v2835, %v2834
      %v2867 = vpack.c.b16 %v2837, %v2836
      %v2868 = vpack.c.b16 %v2839, %v2838
      %v2869 = vpack.c.b16 %v2841, %v2840
      %v2870 = vpack.c.b16 %v2843, %v2842
      %v2871 = vpack.c.b16 %v2845, %v2844
      %v2872 = vpack.c.b16 %v2847, %v2846
      %v2873 = vpack.c.b16 %v2849, %v2848
      %2898 = vmatprep.subr.bf16.mxu0 0
      %2899 = vmatpush1.bf16.msra.mxu0 %v2850
      %2900 = vmatprep.subr.bf16.mxu0 0
      %2901 = vmatpush1.bf16.msra.mxu0 %v2851
      %2902 = vmatprep.subr.bf16.mxu0 0
      %2903 = vmatpush1.bf16.msra.mxu0 %v2852
      %2904 = vmatprep.subr.bf16.mxu0 0
      %2905 = vmatpush1.bf16.msra.mxu0 %v2853
      %2906 = vmatprep.subr.bf16.mxu0 0
      %2907 = vmatpush1.bf16.msra.mxu0 %v2854
      %2908 = vmatprep.subr.bf16.mxu0 0
      %2909 = vmatpush1.bf16.msra.mxu0 %v2855
      %2910 = vmatprep.subr.bf16.mxu0 0
      %2911 = vmatpush1.bf16.msra.mxu0 %v2856
      %2912 = vmatprep.subr.bf16.mxu0 0
      %2913 = vmatpush1.bf16.msra.mxu0 %v2857
      %2914 = vmatprep.subr.bf16.mxu0 0
      %2915 = vmatpush1.bf16.msra.mxu0 %v2858
      %2916 = vmatprep.subr.bf16.mxu0 0
      %2917 = vmatpush1.bf16.msra.mxu0 %v2859
      %2918 = vmatprep.subr.bf16.mxu0 0
      %2919 = vmatpush1.bf16.msra.mxu0 %v2860
      %2920 = vmatprep.subr.bf16.mxu0 0
      %2921 = vmatpush1.bf16.msra.mxu0 %v2861
      %2922 = vmatprep.subr.bf16.mxu0 0
      %2923 = vmatpush1.bf16.msra.mxu0 %v2862
      %2924 = vmatprep.subr.bf16.mxu0 0
      %2925 = vmatpush1.bf16.msra.mxu0 %v2863
      %2926 = vmatprep.subr.bf16.mxu0 0
      %2927 = vmatpush1.bf16.msra.mxu0 %v2864
      %2928 = vmatprep.subr.bf16.mxu0 0
      %2929 = vmatpush1.bf16.msra.mxu0 %v2865
      %2930 = vmatprep.mubr.bf16.mxu0 %v2658
      %2931 = vmatmul.mubr.bf16.gmra.mrb[0].mxu0 %v2657
      %v2932 = vpop.f32.mrb[0].mxu0
      %v2933 = vadd.f32 0.0, %v2932
      %v2934 = vpop.f32.mrb[0].mxu0
      %v2935 = vpop.f32.mrb[0].mxu0
      %v2936 = vadd.f32 0.0, %v2935
      %v2937 = vpop.f32.mrb[0].mxu0
      %2938 = vmatprep.mubr.bf16.mxu0 %v2661
      %2939 = vmatmul.mubr.bf16.gmra.mrb[0].mxu0 %v2660
      %v2940 = vpop.f32.mrb[0].mxu0
      %v2941 = vadd.f32 0.0, %v2940
      %v2942 = vpop.f32.mrb[0].mxu0
      %v2943 = vpop.f32.mrb[0].mxu0
      %v2944 = vadd.f32 0.0, %v2943
      %v2945 = vpop.f32.mrb[0].mxu0
      %2946 = vmatprep.mubr.bf16.mxu0 %v2664
      %2947 = vmatmul.mubr.bf16.gmra.mrb[0].mxu0 %v2663
      %v2948 = vpop.f32.mrb[0].mxu0
      %v2949 = vadd.f32 0.0, %v2948
      %v2950 = vpop.f32.mrb[0].mxu0
      %v2951 = vpop.f32.mrb[0].mxu0
      %v2952 = vadd.f32 0.0, %v2951
      %v2953 = vpop.f32.mrb[0].mxu0
      %2954 = vmatprep.mubr.bf16.mxu0 %v2667
      %2955 = vmatmul.mubr.bf16.gmra.mrb[0].mxu0 %v2666
      %v2956 = vpop.f32.mrb[0].mxu0
      %v2957 = vadd.f32 0.0, %v2956
      %v2958 = vpop.f32.mrb[0].mxu0
      %v2959 = vpop.f32.mrb[0].mxu0
      %v2960 = vadd.f32 0.0, %v2959
      %v2961 = vpop.f32.mrb[0].mxu0
      %2962 = vmatprep.mubr.bf16.mxu0 %v2670
      %2963 = vmatmul.mubr.bf16.gmra.mrb[0].mxu0 %v2669
      %v2964 = vpop.f32.mrb[0].mxu0
      %v2965 = vadd.f32 0.0, %v2964
      %v2966 = vpop.f32.mrb[0].mxu0
      %v2967 = vpop.f32.mrb[0].mxu0
      %v2968 = vadd.f32 0.0, %v2967
      %v2969 = vpop.f32.mrb[0].mxu0
      %2970 = vmatprep.mubr.bf16.mxu0 %v2673
      %2971 = vmatmul.mubr.bf16.gmra.mrb[0].mxu0 %v2672
      %v2972 = vpop.f32.mrb[0].mxu0
      %v2973 = vadd.f32 0.0, %v2972
      %v2974 = vpop.f32.mrb[0].mxu0
      %v2975 = vpop.f32.mrb[0].mxu0
      %v2976 = vadd.f32 0.0, %v2975
      %v2977 = vpop.f32.mrb[0].mxu0
      %2978 = vmatprep.mubr.bf16.mxu0 %v2676
      %2979 = vmatmul.mubr.bf16.gmra.mrb[0].mxu0 %v2675
      %v2980 = vpop.f32.mrb[0].mxu0
      %v2981 = vadd.f32 0.0, %v2980
      %v2982 = vpop.f32.mrb[0].mxu0
      %v2983 = vpop.f32.mrb[0].mxu0
      %v2984 = vadd.f32 0.0, %v2983
      %v2985 = vpop.f32.mrb[0].mxu0
      %2986 = vmatprep.mubr.bf16.mxu0 %v2679
      %2987 = vmatmul.mubr.bf16.gmra.mrb[0].mxu0 %v2678
      %v2988 = vpop.f32.mrb[0].mxu0
      %v2989 = vadd.f32 0.0, %v2988
      %v2990 = vpop.f32.mrb[0].mxu0
      %v2991 = vpop.f32.mrb[0].mxu0
      %v2992 = vadd.f32 0.0, %v2991
      %v2993 = vpop.f32.mrb[0].mxu0
      %2994 = vmatprep.mubr.bf16.mxu0 %v2682
      %2995 = vmatmul.mubr.bf16.gmra.mrb[0].mxu0 %v2681
      %v2996 = vpop.f32.mrb[0].mxu0
      %v2997 = vadd.f32 0.0, %v2996
      %v2998 = vpop.f32.mrb[0].mxu0
      %v2999 = vpop.f32.mrb[0].mxu0
      %v3000 = vadd.f32 0.0, %v2999
      %v3001 = vpop.f32.mrb[0].mxu0
      %3002 = vmatprep.mubr.bf16.mxu0 %v2685
      %3003 = vmatmul.mubr.bf16.gmra.mrb[0].mxu0 %v2684
      %v3004 = vpop.f32.mrb[0].mxu0
      %v3005 = vadd.f32 0.0, %v3004
      %v3006 = vpop.f32.mrb[0].mxu0
      %v3007 = vpop.f32.mrb[0].mxu0
      %v3008 = vadd.f32 0.0, %v3007
      %v3009 = vpop.f32.mrb[0].mxu0
      %3010 = vmatprep.mubr.bf16.mxu0 %v2688
      %3011 = vmatmul.mubr.bf16.gmra.mrb[0].mxu0 %v2687
      %v3012 = vpop.f32.mrb[0].mxu0
      %v3013 = vadd.f32 0.0, %v3012
      %v3014 = vpop.f32.mrb[0].mxu0
      %v3015 = vpop.f32.mrb[0].mxu0
      %v3016 = vadd.f32 0.0, %v3015
      %v3017 = vpop.f32.mrb[0].mxu0
      %3018 = vmatprep.mubr.bf16.mxu0 %v2691
      %3019 = vmatmul.mubr.bf16.gmra.mrb[0].mxu0 %v2690
      %v3020 = vpop.f32.mrb[0].mxu0
      %v3021 = vadd.f32 0.0, %v3020
      %v3022 = vpop.f32.mrb[0].mxu0
      %v3023 = vpop.f32.mrb[0].mxu0
      %v3024 = vadd.f32 0.0, %v3023
      %v3025 = vpop.f32.mrb[0].mxu0
      %3026 = vmatprep.mubr.bf16.mxu0 %v2694
      %3027 = vmatmul.mubr.bf16.gmra.mrb[0].mxu0 %v2693
      %v3028 = vpop.f32.mrb[0].mxu0
      %v3029 = vadd.f32 0.0, %v3028
      %v3030 = vpop.f32.mrb[0].mxu0
      %v3031 = vpop.f32.mrb[0].mxu0
      %v3032 = vadd.f32 0.0, %v3031
      %v3033 = vpop.f32.mrb[0].mxu0
      %3034 = vmatprep.mubr.bf16.mxu0 %v2697
      %3035 = vmatmul.mubr.bf16.gmra.mrb[0].mxu0 %v2696
      %v3036 = vpop.f32.mrb[0].mxu0
      %v3037 = vadd.f32 0.0, %v3036
      %v3038 = vpop.f32.mrb[0].mxu0
      %v3039 = vpop.f32.mrb[0].mxu0
      %v3040 = vadd.f32 0.0, %v3039
      %v3041 = vpop.f32.mrb[0].mxu0
      %3042 = vmatprep.mubr.bf16.mxu0 %v2700
      %3043 = vmatmul.mubr.bf16.gmra.mrb[0].mxu0 %v2699
      %v3044 = vpop.f32.mrb[0].mxu0
      %v3045 = vadd.f32 0.0, %v3044
      %v3046 = vpop.f32.mrb[0].mxu0
      %v3047 = vpop.f32.mrb[0].mxu0
      %v3048 = vadd.f32 0.0, %v3047
      %v3049 = vpop.f32.mrb[0].mxu0
      %3050 = vmatprep.mubr.bf16.mxu0 %v2703
      %3051 = vmatmul.mubr.bf16.gmra.mrb[0].mxu0 %v2702
      %v3052 = vpop.f32.mrb[0].mxu0
      %v3053 = vadd.f32 0.0, %v3052
      %v3054 = vpop.f32.mrb[0].mxu0
      %v3055 = vpop.f32.mrb[0].mxu0
      %v3056 = vadd.f32 0.0, %v3055
      %v3057 = vpop.f32.mrb[0].mxu0
      %3058 = vdwg.mxu0
      %3059 = vmatprep.subr.bf16.mxu0 0
      %3060 = vmatpush1.bf16.msra.mxu0 %v2866
      %3061 = vmatprep.subr.bf16.mxu0 0
      %3062 = vmatpush1.bf16.msra.mxu0 %v2867
      %3063 = vmatprep.subr.bf16.mxu0 0
      %3064 = vmatpush1.bf16.msra.mxu0 %v2868
      %3065 = vmatprep.subr.bf16.mxu0 0
      %3066 = vmatpush1.bf16.msra.mxu0 %v2869
      %3067 = vmatprep.subr.bf16.mxu0 0
      %3068 = vmatpush1.bf16.msra.mxu0 %v2870
      %3069 = vmatprep.subr.bf16.mxu0 0
      %3070 = vmatpush1.bf16.msra.mxu0 %v2871
      %3071 = vmatprep.subr.bf16.mxu0 0
      %3072 = vmatpush1.bf16.msra.mxu0 %v2872
      %3073 = vmatprep.subr.bf16.mxu0 0
      %3074 = vmatpush1.bf16.msra.mxu0 %v2873
      %3075 = vmatprep.subr.bf16.mxu0 0
      %3076 = vmatpush1.bf16.msra.mxu0 0
      %3077 = vmatprep.subr.bf16.mxu0 0
      %3078 = vmatpush1.bf16.msra.mxu0 0
      %3079 = vmatprep.subr.bf16.mxu0 0
      %3080 = vmatpush1.bf16.msra.mxu0 0
      %3081 = vmatprep.subr.bf16.mxu0 0
      %3082 = vmatpush1.bf16.msra.mxu0 0
      %3083 = vmatprep.subr.bf16.mxu0 0
      %3084 = vmatpush1.bf16.msra.mxu0 0
      %3085 = vmatprep.subr.bf16.mxu0 0
      %3086 = vmatpush1.bf16.msra.mxu0 0
      %3087 = vmatprep.subr.bf16.mxu0 0
      %3088 = vmatpush1.bf16.msra.mxu0 0
      %3089 = vmatprep.subr.bf16.mxu0 0
      %3090 = vmatpush1.bf16.msra.mxu0 0
      %3091 = vmatprep.mubr.bf16.mxu0 0
      %3092 = vmatmul.mubr.bf16.gmra.mrb[0].mxu0 %v2659
      %v3093 = vpop.f32.mrb[0].mxu0
      %v3094 = vadd.f32 %v2933, %v3093
      %v3095 = vpop.f32.mrb[0].mxu0
      %v3096 = vpop.f32.mrb[0].mxu0
      %v3097 = vadd.f32 %v2936, %v3096
      %v3098 = vpop.f32.mrb[0].mxu0
      %3099 = vmatprep.mubr.bf16.mxu0 0
      %3100 = vmatmul.mubr.bf16.gmra.mrb[0].mxu0 %v2662
      %v3101 = vpop.f32.mrb[0].mxu0
      %v3102 = vadd.f32 %v2941, %v3101
      %v3103 = vpop.f32.mrb[0].mxu0
      %v3104 = vpop.f32.mrb[0].mxu0
      %v3105 = vadd.f32 %v2944, %v3104
      %v3106 = vpop.f32.mrb[0].mxu0
      %3107 = vmatprep.mubr.bf16.mxu0 0
      %3108 = vmatmul.mubr.bf16.gmra.mrb[0].mxu0 %v2665
      %v3109 = vpop.f32.mrb[0].mxu0
      %v3110 = vadd.f32 %v2949, %v3109
      %v3111 = vpop.f32.mrb[0].mxu0
      %v3112 = vpop.f32.mrb[0].mxu0
      %v3113 = vadd.f32 %v2952, %v3112
      %v3114 = vpop.f32.mrb[0].mxu0
      %3115 = vmatprep.mubr.bf16.mxu0 0
      %3116 = vmatmul.mubr.bf16.gmra.mrb[0].mxu0 %v2668
      %v3117 = vpop.f32.mrb[0].mxu0
      %v3118 = vadd.f32 %v2957, %v3117
      %v3119 = vpop.f32.mrb[0].mxu0
      %v3120 = vpop.f32.mrb[0].mxu0
      %v3121 = vadd.f32 %v2960, %v3120
      %v3122 = vpop.f32.mrb[0].mxu0
      %3123 = vmatprep.mubr.bf16.mxu0 0
      %3124 = vmatmul.mubr.bf16.gmra.mrb[0].mxu0 %v2671
      %v3125 = vpop.f32.mrb[0].mxu0
      %v3126 = vadd.f32 %v2965, %v3125
      %v3127 = vpop.f32.mrb[0].mxu0
      %v3128 = vpop.f32.mrb[0].mxu0
      %v3129 = vadd.f32 %v2968, %v3128
      %v3130 = vpop.f32.mrb[0].mxu0
      %3131 = vmatprep.mubr.bf16.mxu0 0
      %3132 = vmatmul.mubr.bf16.gmra.mrb[0].mxu0 %v2674
      %v3133 = vpop.f32.mrb[0].mxu0
      %v3134 = vadd.f32 %v2973, %v3133
      %v3135 = vpop.f32.mrb[0].mxu0
      %v3136 = vpop.f32.mrb[0].mxu0
      %v3137 = vadd.f32 %v2976, %v3136
      %v3138 = vpop.f32.mrb[0].mxu0
      %3139 = vmatprep.mubr.bf16.mxu0 0
      %3140 = vmatmul.mubr.bf16.gmra.mrb[0].mxu0 %v2677
      %v3141 = vpop.f32.mrb[0].mxu0
      %v3142 = vadd.f32 %v2981, %v3141
      %v3143 = vpop.f32.mrb[0].mxu0
      %v3144 = vpop.f32.mrb[0].mxu0
      %v3145 = vadd.f32 %v2984, %v3144
      %v3146 = vpop.f32.mrb[0].mxu0
      %3147 = vmatprep.mubr.bf16.mxu0 0
      %3148 = vmatmul.mubr.bf16.gmra.mrb[0].mxu0 %v2680
      %v3149 = vpop.f32.mrb[0].mxu0
      %v3150 = vadd.f32 %v2989, %v3149
      %v3151 = vpop.f32.mrb[0].mxu0
      %v3152 = vpop.f32.mrb[0].mxu0
      %v3153 = vadd.f32 %v2992, %v3152
      %v3154 = vpop.f32.mrb[0].mxu0
      %3155 = vmatprep.mubr.bf16.mxu0 0
      %3156 = vmatmul.mubr.bf16.gmra.mrb[0].mxu0 %v2683
      %v3157 = vpop.f32.mrb[0].mxu0
      %v3158 = vadd.f32 %v2997, %v3157
      %v3159 = vpop.f32.mrb[0].mxu0
      %v3160 = vpop.f32.mrb[0].mxu0
      %v3161 = vadd.f32 %v3000, %v3160
      %v3162 = vpop.f32.mrb[0].mxu0
      %3163 = vmatprep.mubr.bf16.mxu0 0
      %3164 = vmatmul.mubr.bf16.gmra.mrb[0].mxu0 %v2686
      %v3165 = vpop.f32.mrb[0].mxu0
      %v3166 = vadd.f32 %v3005, %v3165
      %v3167 = vpop.f32.mrb[0].mxu0
      %v3168 = vpop.f32.mrb[0].mxu0
      %v3169 = vadd.f32 %v3008, %v3168
      %v3170 = vpop.f32.mrb[0].mxu0
      %3171 = vmatprep.mubr.bf16.mxu0 0
      %3172 = vmatmul.mubr.bf16.gmra.mrb[0].mxu0 %v2689
      %v3173 = vpop.f32.mrb[0].mxu0
      %v3174 = vadd.f32 %v3013, %v3173
      %v3175 = vpop.f32.mrb[0].mxu0
      %v3176 = vpop.f32.mrb[0].mxu0
      %v3177 = vadd.f32 %v3016, %v3176
      %v3178 = vpop.f32.mrb[0].mxu0
      %3179 = vmatprep.mubr.bf16.mxu0 0
      %3180 = vmatmul.mubr.bf16.gmra.mrb[0].mxu0 %v2692
      %v3181 = vpop.f32.mrb[0].mxu0
      %v3182 = vadd.f32 %v3021, %v3181
      %v3183 = vpop.f32.mrb[0].mxu0
      %v3184 = vpop.f32.mrb[0].mxu0
      %v3185 = vadd.f32 %v3024, %v3184
      %v3186 = vpop.f32.mrb[0].mxu0
      %3187 = vmatprep.mubr.bf16.mxu0 0
      %3188 = vmatmul.mubr.bf16.gmra.mrb[0].mxu0 %v2695
      %v3189 = vpop.f32.mrb[0].mxu0
      %v3190 = vadd.f32 %v3029, %v3189
      %v3191 = vpop.f32.mrb[0].mxu0
      %v3192 = vpop.f32.mrb[0].mxu0
      %v3193 = vadd.f32 %v3032, %v3192
      %v3194 = vpop.f32.mrb[0].mxu0
      %3195 = vmatprep.mubr.bf16.mxu0 0
      %3196 = vmatmul.mubr.bf16.gmra.mrb[0].mxu0 %v2698
      %v3197 = vpop.f32.mrb[0].mxu0
      %v3198 = vadd.f32 %v3037, %v3197
      %v3199 = vpop.f32.mrb[0].mxu0
      %v3200 = vpop.f32.mrb[0].mxu0
      %v3201 = vadd.f32 %v3040, %v3200
      %v3202 = vpop.f32.mrb[0].mxu0
      %3203 = vmatprep.mubr.bf16.mxu0 0
      %3204 = vmatmul.mubr.bf16.gmra.mrb[0].mxu0 %v2701
      %v3205 = vpop.f32.mrb[0].mxu0
      %v3206 = vadd.f32 %v3045, %v3205
      %v3207 = vpop.f32.mrb[0].mxu0
      %v3208 = vpop.f32.mrb[0].mxu0
      %v3209 = vadd.f32 %v3048, %v3208
      %v3210 = vpop.f32.mrb[0].mxu0
      %3211 = vmatprep.mubr.bf16.mxu0 0
      %3212 = vmatmul.mubr.bf16.gmra.mrb[0].mxu0 %v2704
      %v3213 = vpop.f32.mrb[0].mxu0
      %v3214 = vadd.f32 %v3053, %v3213
      %v3215 = vpop.f32.mrb[0].mxu0
      %v3216 = vpop.f32.mrb[0].mxu0
      %v3217 = vadd.f32 %v3056, %v3216
      %v3218 = vpop.f32.mrb[0].mxu0
      %3219 = vdwg.mxu0
      %v3220 = vadd.f32 %v2531, %v3094
      %v3221 = vadd.f32 %v2534, %v3097
      %v3222 = vadd.f32 %v2539, %v3102
      %v3223 = vadd.f32 %v2542, %v3105
      %v3224 = vadd.f32 %v2547, %v3110
      %v3225 = vadd.f32 %v2550, %v3113
      %v3226 = vadd.f32 %v2555, %v3118
      %v3227 = vadd.f32 %v2558, %v3121
      %v3228 = vadd.f32 %v2563, %v3126
      %v3229 = vadd.f32 %v2566, %v3129
      %v3230 = vadd.f32 %v2571, %v3134
      %v3231 = vadd.f32 %v2574, %v3137
      %v3232 = vadd.f32 %v2579, %v3142
      %v3233 = vadd.f32 %v2582, %v3145
      %v3234 = vadd.f32 %v2587, %v3150
      %v3235 = vadd.f32 %v2590, %v3153
      %v3236 = vadd.f32 %v2595, %v3158
      %v3237 = vadd.f32 %v2598, %v3161
      %v3238 = vadd.f32 %v2603, %v3166
      %v3239 = vadd.f32 %v2606, %v3169
      %v3240 = vadd.f32 %v2611, %v3174
      %v3241 = vadd.f32 %v2614, %v3177
      %v3242 = vadd.f32 %v2619, %v3182
      %v3243 = vadd.f32 %v2622, %v3185
      %v3244 = vadd.f32 %v2627, %v3190
      %v3245 = vadd.f32 %v2630, %v3193
      %v3246 = vadd.f32 %v2635, %v3198
      %v3247 = vadd.f32 %v2638, %v3201
      %v3248 = vadd.f32 %v2643, %v3206
      %v3249 = vadd.f32 %v2646, %v3209
      %v3250 = vadd.f32 %v2651, %v3214
      %v3251 = vadd.f32 %v2654, %v3217
      %v3252 = vld [vmem:[%s4] sm:$0x1]
      %v3254 = vlaneseq
      %v3255 = vshrl.u32 %v3254, 7
      %v3256 = vsub.s32 0, %v3255
      %v3257 = vrot.slane %v3252, %v3256
      %v3259 = vadd.f32 %v3220, %v3257
      %v3260 = vadd.f32 %v3221, %v3257
      %v3261 = vadd.f32 %v3222, %v3257
      %v3262 = vadd.f32 %v3223, %v3257
      %v3263 = vadd.f32 %v3224, %v3257
      %v3264 = vadd.f32 %v3225, %v3257
      %v3265 = vadd.f32 %v3226, %v3257
      %v3266 = vadd.f32 %v3227, %v3257
      %v3267 = vadd.f32 %v3228, %v3257
      %v3268 = vadd.f32 %v3229, %v3257
      %v3269 = vadd.f32 %v3230, %v3257
      %v3270 = vadd.f32 %v3231, %v3257
      %v3271 = vadd.f32 %v3232, %v3257
      %v3272 = vadd.f32 %v3233, %v3257
      %v3273 = vadd.f32 %v3234, %v3257
      %v3274 = vadd.f32 %v3235, %v3257
      %v3275 = vadd.f32 %v3236, %v3257
      %v3276 = vadd.f32 %v3237, %v3257
      %v3277 = vadd.f32 %v3238, %v3257
      %v3278 = vadd.f32 %v3239, %v3257
      %v3279 = vadd.f32 %v3240, %v3257
      %v3280 = vadd.f32 %v3241, %v3257
      %v3281 = vadd.f32 %v3242, %v3257
      %v3282 = vadd.f32 %v3243, %v3257
      %v3283 = vadd.f32 %v3244, %v3257
      %v3284 = vadd.f32 %v3245, %v3257
      %v3285 = vadd.f32 %v3246, %v3257
      %v3286 = vadd.f32 %v3247, %v3257
      %v3287 = vadd.f32 %v3248, %v3257
      %v3288 = vadd.f32 %v3249, %v3257
      %v3289 = vadd.f32 %v3250, %v3257
      %v3290 = vadd.f32 %v3251, %v3257
      %v3291 = vmax.f32 %v3259, 0.0
      %v3292 = vmax.f32 %v3260, 0.0
      %v3293 = vmax.f32 %v3261, 0.0
      %v3294 = vmax.f32 %v3262, 0.0
      %v3295 = vmax.f32 %v3263, 0.0
      %v3296 = vmax.f32 %v3264, 0.0
      %v3297 = vmax.f32 %v3265, 0.0
      %v3298 = vmax.f32 %v3266, 0.0
      %v3299 = vmax.f32 %v3267, 0.0
      %v3300 = vmax.f32 %v3268, 0.0
      %v3301 = vmax.f32 %v3269, 0.0
      %v3302 = vmax.f32 %v3270, 0.0
      %v3303 = vmax.f32 %v3271, 0.0
      %v3304 = vmax.f32 %v3272, 0.0
      %v3305 = vmax.f32 %v3273, 0.0
      %v3306 = vmax.f32 %v3274, 0.0
      %v3307 = vmax.f32 %v3275, 0.0
      %v3308 = vmax.f32 %v3276, 0.0
      %v3309 = vmax.f32 %v3277, 0.0
      %v3310 = vmax.f32 %v3278, 0.0
      %v3311 = vmax.f32 %v3279, 0.0
      %v3312 = vmax.f32 %v3280, 0.0
      %v3313 = vmax.f32 %v3281, 0.0
      %v3314 = vmax.f32 %v3282, 0.0
      %v3315 = vmax.f32 %v3283, 0.0
      %v3316 = vmax.f32 %v3284, 0.0
      %v3317 = vmax.f32 %v3285, 0.0
      %v3318 = vmax.f32 %v3286, 0.0
      %v3319 = vmax.f32 %v3287, 0.0
      %v3320 = vmax.f32 %v3288, 0.0
      %v3321 = vmax.f32 %v3289, 0.0
      %v3322 = vmax.f32 %v3290, 0.0
      %v3323 = vpack.c.bf16 %v3292, %v3291
      %v3324 = vpack.c.bf16 %v3294, %v3293
      %v3325 = vpack.c.bf16 %v3296, %v3295
      %v3326 = vpack.c.bf16 %v3298, %v3297
      %v3327 = vpack.c.bf16 %v3300, %v3299
      %v3328 = vpack.c.bf16 %v3302, %v3301
      %v3329 = vpack.c.bf16 %v3304, %v3303
      %v3330 = vpack.c.bf16 %v3306, %v3305
      %v3331 = vpack.c.bf16 %v3308, %v3307
      %v3332 = vpack.c.bf16 %v3310, %v3309
      %v3333 = vpack.c.bf16 %v3312, %v3311
      %v3334 = vpack.c.bf16 %v3314, %v3313
      %v3335 = vpack.c.bf16 %v3316, %v3315
      %v3336 = vpack.c.bf16 %v3318, %v3317
      %v3337 = vpack.c.bf16 %v3320, %v3319
      %v3338 = vpack.c.bf16 %v3322, %v3321
      %v3339 = vld [vmem:[%s5] sm:$0xf]
      %v3340 = vld [vmem:[%s5 + $0x4] sm:$0xf]
      %v3341 = vld [vmem:[%s5 + $0x8] sm:$0xf]
      %v3342 = vld [vmem:[%s5 + $0xc] sm:$0xf]
      %v3343 = vld [vmem:[%s5 + $0x10] sm:$0xf]
      %v3344 = vld [vmem:[%s5 + $0x14] sm:$0xf]
      %v3345 = vld [vmem:[%s5 + $0x18] sm:$0xf]
      %v3346 = vld [vmem:[%s5 + $0x1c] sm:$0xf]
      %v3347 = vld [vmem:[%s5 + $0x20] sm:$0xf]
      %v3348 = vld [vmem:[%s5 + $0x24] sm:$0xf]
      %v3349 = vld [vmem:[%s5 + $0x28] sm:$0xf]
      %v3350 = vld [vmem:[%s5 + $0x2c] sm:$0xf]
      %v3351 = vld [vmem:[%s5 + $0x30] sm:$0xf]
      %v3352 = vld [vmem:[%s5 + $0x34] sm:$0xf]
      %v3353 = vld [vmem:[%s5 + $0x38] sm:$0xf]
      %v3354 = vld [vmem:[%s5 + $0x3c] sm:$0xf]
      %v3355 = vld [vmem:[%s273] sm:$0xf]
      %v3356 = vld [vmem:[%s273 + $0x4] sm:$0xf]
      %v3357 = vld [vmem:[%s273 + $0x8] sm:$0xf]
      %v3358 = vld [vmem:[%s273 + $0xc] sm:$0xf]
      %v3359 = vld [vmem:[%s273 + $0x10] sm:$0xf]
      %v3360 = vld [vmem:[%s273 + $0x14] sm:$0xf]
      %v3361 = vld [vmem:[%s273 + $0x18] sm:$0xf]
      %v3362 = vld [vmem:[%s273 + $0x1c] sm:$0xf]
      %v3363 = vld [vmem:[%s273 + $0x20] sm:$0xf]
      %v3364 = vld [vmem:[%s273 + $0x24] sm:$0xf]
      %v3365 = vld [vmem:[%s273 + $0x28] sm:$0xf]
      %v3366 = vld [vmem:[%s273 + $0x2c] sm:$0xf]
      %v3367 = vld [vmem:[%s273 + $0x30] sm:$0xf]
      %v3368 = vld [vmem:[%s273 + $0x34] sm:$0xf]
      %v3369 = vld [vmem:[%s273 + $0x38] sm:$0xf]
      %v3370 = vld [vmem:[%s273 + $0x3c] sm:$0xf]
      %v3371 = vld [vmem:[%s273 + $0x40] sm:$0xf]
      %v3372 = vld [vmem:[%s273 + $0x44] sm:$0xf]
      %v3373 = vld [vmem:[%s273 + $0x48] sm:$0xf]
      %v3374 = vld [vmem:[%s273 + $0x4c] sm:$0xf]
      %v3375 = vld [vmem:[%s273 + $0x50] sm:$0xf]
      %v3376 = vld [vmem:[%s273 + $0x54] sm:$0xf]
      %v3377 = vld [vmem:[%s273 + $0x58] sm:$0xf]
      %v3378 = vld [vmem:[%s273 + $0x5c] sm:$0xf]
      %v3379 = vld [vmem:[%s273 + $0x60] sm:$0xf]
      %v3380 = vld [vmem:[%s273 + $0x64] sm:$0xf]
      %v3381 = vld [vmem:[%s273 + $0x68] sm:$0xf]
      %v3382 = vld [vmem:[%s273 + $0x6c] sm:$0xf]
      %v3383 = vld [vmem:[%s273 + $0x70] sm:$0xf]
      %v3384 = vld [vmem:[%s273 + $0x74] sm:$0xf]
      %v3385 = vld [vmem:[%s273 + $0x78] sm:$0xf]
      %v3386 = vld [vmem:[%s273 + $0x7c] sm:$0xf]
      %v3387 = vunpack.c.l.bf16 %v3355
      %v3388 = vunpack.c.l.bf16 %v3356
      %v3389 = vunpack.c.l.bf16 %v3357
      %v3390 = vunpack.c.l.bf16 %v3358
      %v3391 = vunpack.c.l.bf16 %v3359
      %v3392 = vunpack.c.l.bf16 %v3360
      %v3393 = vunpack.c.l.bf16 %v3361
      %v3394 = vunpack.c.l.bf16 %v3362
      %v3395 = vunpack.c.l.bf16 %v3363
      %v3396 = vunpack.c.l.bf16 %v3364
      %v3397 = vunpack.c.l.bf16 %v3365
      %v3398 = vunpack.c.l.bf16 %v3366
      %v3399 = vunpack.c.l.bf16 %v3367
      %v3400 = vunpack.c.l.bf16 %v3368
      %v3401 = vunpack.c.l.bf16 %v3369
      %v3402 = vunpack.c.l.bf16 %v3370
      %v3403 = vunpack.c.l.bf16 %v3371
      %v3404 = vunpack.c.l.bf16 %v3372
      %v3405 = vunpack.c.l.bf16 %v3373
      %v3406 = vunpack.c.l.bf16 %v3374
      %v3407 = vunpack.c.l.bf16 %v3375
      %v3408 = vunpack.c.l.bf16 %v3376
      %v3409 = vunpack.c.l.bf16 %v3377
      %v3410 = vunpack.c.l.bf16 %v3378
      %v3411 = vunpack.c.l.bf16 %v3379
      %v3412 = vunpack.c.l.bf16 %v3380
      %v3413 = vunpack.c.l.bf16 %v3381
      %v3414 = vunpack.c.l.bf16 %v3382
      %v3415 = vunpack.c.l.bf16 %v3383
      %v3416 = vunpack.c.l.bf16 %v3384
      %v3417 = vunpack.c.l.bf16 %v3385
      %v3418 = vunpack.c.l.bf16 %v3386
      %v3419 = vld [vmem:[%s6] sm:$0x1]
      %v3421 = vlaneseq
      %v3422 = vshrl.u32 %v3421, 7
      %v3423 = vsub.s32 0, %v3422
      %v3424 = vrot.slane %v3419, %v3423
      %v3442 = vunpack.c.l.b16 %v3339
      %v3443 = vunpack.c.l.b16 %v3340
      %v3444 = vunpack.c.l.b16 %v3341
      %v3445 = vunpack.c.l.b16 %v3342
      %v3446 = vunpack.c.l.b16 %v3343
      %v3447 = vunpack.c.l.b16 %v3344
      %v3448 = vunpack.c.l.b16 %v3345
      %v3449 = vunpack.c.l.b16 %v3346
      %v3450 = vunpack.c.l.b16 %v3347
      %v3451 = vunpack.c.l.b16 %v3348
      %v3452 = vunpack.c.l.b16 %v3349
      %v3453 = vunpack.c.l.b16 %v3350
      %v3454 = vunpack.c.l.b16 %v3351
      %v3455 = vunpack.c.l.b16 %v3352
      %v3456 = vunpack.c.l.b16 %v3353
      %v3457 = vunpack.c.l.b16 %v3354
      %v3458 = vpack.c.b16 %v3443, %v3442
      %v3459 = vpack.c.b16 %v3445, %v3444
      %v3460 = vpack.c.b16 %v3447, %v3446
      %v3461 = vpack.c.b16 %v3449, %v3448
      %v3462 = vpack.c.b16 %v3451, %v3450
      %v3463 = vpack.c.b16 %v3453, %v3452
      %v3464 = vpack.c.b16 %v3455, %v3454
      %v3465 = vpack.c.b16 %v3457, %v3456
      %3474 = vmatprep.subr.bf16.mxu0 0
      %3475 = vmatpush1.bf16.msra.mxu0 %v3458
      %3476 = vmatprep.subr.bf16.mxu0 0
      %3477 = vmatpush1.bf16.msra.mxu0 %v3459
      %3478 = vmatprep.subr.bf16.mxu0 0
      %3479 = vmatpush1.bf16.msra.mxu0 %v3460
      %3480 = vmatprep.subr.bf16.mxu0 0
      %3481 = vmatpush1.bf16.msra.mxu0 %v3461
      %3482 = vmatprep.subr.bf16.mxu0 0
      %3483 = vmatpush1.bf16.msra.mxu0 %v3462
      %3484 = vmatprep.subr.bf16.mxu0 0
      %3485 = vmatpush1.bf16.msra.mxu0 %v3463
      %3486 = vmatprep.subr.bf16.mxu0 0
      %3487 = vmatpush1.bf16.msra.mxu0 %v3464
      %3488 = vmatprep.subr.bf16.mxu0 0
      %3489 = vmatpush1.bf16.msra.mxu0 %v3465
      %3490 = vmatprep.subr.bf16.mxu0 0
      %3491 = vmatpush1.bf16.msra.mxu0 0
      %3492 = vmatprep.subr.bf16.mxu0 0
      %3493 = vmatpush1.bf16.msra.mxu0 0
      %3494 = vmatprep.subr.bf16.mxu0 0
      %3495 = vmatpush1.bf16.msra.mxu0 0
      %3496 = vmatprep.subr.bf16.mxu0 0
      %3497 = vmatpush1.bf16.msra.mxu0 0
      %3498 = vmatprep.subr.bf16.mxu0 0
      %3499 = vmatpush1.bf16.msra.mxu0 0
      %3500 = vmatprep.subr.bf16.mxu0 0
      %3501 = vmatpush1.bf16.msra.mxu0 0
      %3502 = vmatprep.subr.bf16.mxu0 0
      %3503 = vmatpush1.bf16.msra.mxu0 0
      %3504 = vmatprep.subr.bf16.mxu0 0
      %3505 = vmatpush1.bf16.msra.mxu0 0
      %3506 = vmatprep.mubr.bf16.mxu0 0
      %3507 = vmatmul.mubr.bf16.gmra.mrb[0].mxu0 %v3323
      %v3508 = vpop.f32.mrb[0].mxu0
      %v3509 = vadd.f32 %v3424, %v3508
      %v3510 = vpop.f32.mrb[0].mxu0
      %v3511 = vpop.f32.mrb[0].mxu0
      %v3512 = vadd.f32 %v3424, %v3511
      %v3513 = vpop.f32.mrb[0].mxu0
      %3514 = vmatprep.mubr.bf16.mxu0 0
      %3515 = vmatmul.mubr.bf16.gmra.mrb[0].mxu0 %v3324
      %v3516 = vpop.f32.mrb[0].mxu0
      %v3517 = vadd.f32 %v3424, %v3516
      %v3518 = vpop.f32.mrb[0].mxu0
      %v3519 = vpop.f32.mrb[0].mxu0
      %v3520 = vadd.f32 %v3424, %v3519
      %v3521 = vpop.f32.mrb[0].mxu0
      %3522 = vmatprep.mubr.bf16.mxu0 0
      %3523 = vmatmul.mubr.bf16.gmra.mrb[0].mxu0 %v3325
      %v3524 = vpop.f32.mrb[0].mxu0
      %v3525 = vadd.f32 %v3424, %v3524
      %v3526 = vpop.f32.mrb[0].mxu0
      %v3527 = vpop.f32.mrb[0].mxu0
      %v3528 = vadd.f32 %v3424, %v3527
      %v3529 = vpop.f32.mrb[0].mxu0
      %3530 = vmatprep.mubr.bf16.mxu0 0
      %3531 = vmatmul.mubr.bf16.gmra.mrb[0].mxu0 %v3326
      %v3532 = vpop.f32.mrb[0].mxu0
      %v3533 = vadd.f32 %v3424, %v3532
      %v3534 = vpop.f32.mrb[0].mxu0
      %v3535 = vpop.f32.mrb[0].mxu0
      %v3536 = vadd.f32 %v3424, %v3535
      %v3537 = vpop.f32.mrb[0].mxu0
      %3538 = vmatprep.mubr.bf16.mxu0 0
      %3539 = vmatmul.mubr.bf16.gmra.mrb[0].mxu0 %v3327
      %v3540 = vpop.f32.mrb[0].mxu0
      %v3541 = vadd.f32 %v3424, %v3540
      %v3542 = vpop.f32.mrb[0].mxu0
      %v3543 = vpop.f32.mrb[0].mxu0
      %v3544 = vadd.f32 %v3424, %v3543
      %v3545 = vpop.f32.mrb[0].mxu0
      %3546 = vmatprep.mubr.bf16.mxu0 0
      %3547 = vmatmul.mubr.bf16.gmra.mrb[0].mxu0 %v3328
      %v3548 = vpop.f32.mrb[0].mxu0
      %v3549 = vadd.f32 %v3424, %v3548
      %v3550 = vpop.f32.mrb[0].mxu0
      %v3551 = vpop.f32.mrb[0].mxu0
      %v3552 = vadd.f32 %v3424, %v3551
      %v3553 = vpop.f32.mrb[0].mxu0
      %3554 = vmatprep.mubr.bf16.mxu0 0
      %3555 = vmatmul.mubr.bf16.gmra.mrb[0].mxu0 %v3329
      %v3556 = vpop.f32.mrb[0].mxu0
      %v3557 = vadd.f32 %v3424, %v3556
      %v3558 = vpop.f32.mrb[0].mxu0
      %v3559 = vpop.f32.mrb[0].mxu0
      %v3560 = vadd.f32 %v3424, %v3559
      %v3561 = vpop.f32.mrb[0].mxu0
      %3562 = vmatprep.mubr.bf16.mxu0 0
      %3563 = vmatmul.mubr.bf16.gmra.mrb[0].mxu0 %v3330
      %v3564 = vpop.f32.mrb[0].mxu0
      %v3565 = vadd.f32 %v3424, %v3564
      %v3566 = vpop.f32.mrb[0].mxu0
      %v3567 = vpop.f32.mrb[0].mxu0
      %v3568 = vadd.f32 %v3424, %v3567
      %v3569 = vpop.f32.mrb[0].mxu0
      %3570 = vmatprep.mubr.bf16.mxu0 0
      %3571 = vmatmul.mubr.bf16.gmra.mrb[0].mxu0 %v3331
      %v3572 = vpop.f32.mrb[0].mxu0
      %v3573 = vadd.f32 %v3424, %v3572
      %v3574 = vpop.f32.mrb[0].mxu0
      %v3575 = vpop.f32.mrb[0].mxu0
      %v3576 = vadd.f32 %v3424, %v3575
      %v3577 = vpop.f32.mrb[0].mxu0
      %3578 = vmatprep.mubr.bf16.mxu0 0
      %3579 = vmatmul.mubr.bf16.gmra.mrb[0].mxu0 %v3332
      %v3580 = vpop.f32.mrb[0].mxu0
      %v3581 = vadd.f32 %v3424, %v3580
      %v3582 = vpop.f32.mrb[0].mxu0
      %v3583 = vpop.f32.mrb[0].mxu0
      %v3584 = vadd.f32 %v3424, %v3583
      %v3585 = vpop.f32.mrb[0].mxu0
      %3586 = vmatprep.mubr.bf16.mxu0 0
      %3587 = vmatmul.mubr.bf16.gmra.mrb[0].mxu0 %v3333
      %v3588 = vpop.f32.mrb[0].mxu0
      %v3589 = vadd.f32 %v3424, %v3588
      %v3590 = vpop.f32.mrb[0].mxu0
      %v3591 = vpop.f32.mrb[0].mxu0
      %v3592 = vadd.f32 %v3424, %v3591
      %v3593 = vpop.f32.mrb[0].mxu0
      %3594 = vmatprep.mubr.bf16.mxu0 0
      %3595 = vmatmul.mubr.bf16.gmra.mrb[0].mxu0 %v3334
      %v3596 = vpop.f32.mrb[0].mxu0
      %v3597 = vadd.f32 %v3424, %v3596
      %v3598 = vpop.f32.mrb[0].mxu0
      %v3599 = vpop.f32.mrb[0].mxu0
      %v3600 = vadd.f32 %v3424, %v3599
      %v3601 = vpop.f32.mrb[0].mxu0
      %3602 = vmatprep.mubr.bf16.mxu0 0
      %3603 = vmatmul.mubr.bf16.gmra.mrb[0].mxu0 %v3335
      %v3604 = vpop.f32.mrb[0].mxu0
      %v3605 = vadd.f32 %v3424, %v3604
      %v3606 = vpop.f32.mrb[0].mxu0
      %v3607 = vpop.f32.mrb[0].mxu0
      %v3608 = vadd.f32 %v3424, %v3607
      %v3609 = vpop.f32.mrb[0].mxu0
      %3610 = vmatprep.mubr.bf16.mxu0 0
      %3611 = vmatmul.mubr.bf16.gmra.mrb[0].mxu0 %v3336
      %v3612 = vpop.f32.mrb[0].mxu0
      %v3613 = vadd.f32 %v3424, %v3612
      %v3614 = vpop.f32.mrb[0].mxu0
      %v3615 = vpop.f32.mrb[0].mxu0
      %v3616 = vadd.f32 %v3424, %v3615
      %v3617 = vpop.f32.mrb[0].mxu0
      %3618 = vmatprep.mubr.bf16.mxu0 0
      %3619 = vmatmul.mubr.bf16.gmra.mrb[0].mxu0 %v3337
      %v3620 = vpop.f32.mrb[0].mxu0
      %v3621 = vadd.f32 %v3424, %v3620
      %v3622 = vpop.f32.mrb[0].mxu0
      %v3623 = vpop.f32.mrb[0].mxu0
      %v3624 = vadd.f32 %v3424, %v3623
      %v3625 = vpop.f32.mrb[0].mxu0
      %3626 = vmatprep.mubr.bf16.mxu0 0
      %3627 = vmatmul.mubr.bf16.gmra.mrb[0].mxu0 %v3338
      %v3628 = vpop.f32.mrb[0].mxu0
      %v3629 = vadd.f32 %v3424, %v3628
      %v3630 = vpop.f32.mrb[0].mxu0
      %v3631 = vpop.f32.mrb[0].mxu0
      %v3632 = vadd.f32 %v3424, %v3631
      %v3633 = vpop.f32.mrb[0].mxu0
      %3634 = vdwg.mxu0
      %v3635 = vadd.f32 %v3509, %v3387
      %v3636 = vadd.f32 %v3512, %v3388
      %v3637 = vadd.f32 %v3517, %v3389
      %v3638 = vadd.f32 %v3520, %v3390
      %v3639 = vadd.f32 %v3525, %v3391
      %v3640 = vadd.f32 %v3528, %v3392
      %v3641 = vadd.f32 %v3533, %v3393
      %v3642 = vadd.f32 %v3536, %v3394
      %v3643 = vadd.f32 %v3541, %v3395
      %v3644 = vadd.f32 %v3544, %v3396
      %v3645 = vadd.f32 %v3549, %v3397
      %v3646 = vadd.f32 %v3552, %v3398
      %v3647 = vadd.f32 %v3557, %v3399
      %v3648 = vadd.f32 %v3560, %v3400
      %v3649 = vadd.f32 %v3565, %v3401
      %v3650 = vadd.f32 %v3568, %v3402
      %v3651 = vadd.f32 %v3573, %v3403
      %v3652 = vadd.f32 %v3576, %v3404
      %v3653 = vadd.f32 %v3581, %v3405
      %v3654 = vadd.f32 %v3584, %v3406
      %v3655 = vadd.f32 %v3589, %v3407
      %v3656 = vadd.f32 %v3592, %v3408
      %v3657 = vadd.f32 %v3597, %v3409
      %v3658 = vadd.f32 %v3600, %v3410
      %v3659 = vadd.f32 %v3605, %v3411
      %v3660 = vadd.f32 %v3608, %v3412
      %v3661 = vadd.f32 %v3613, %v3413
      %v3662 = vadd.f32 %v3616, %v3414
      %v3663 = vadd.f32 %v3621, %v3415
      %v3664 = vadd.f32 %v3624, %v3416
      %v3665 = vadd.f32 %v3629, %v3417
      %v3666 = vadd.f32 %v3632, %v3418
      %v3667 = vmax.f32 %v3635, 0.0
      %v3668 = vmax.f32 %v3636, 0.0
      %v3669 = vmax.f32 %v3637, 0.0
      %v3670 = vmax.f32 %v3638, 0.0
      %v3671 = vmax.f32 %v3639, 0.0
      %v3672 = vmax.f32 %v3640, 0.0
      %v3673 = vmax.f32 %v3641, 0.0
      %v3674 = vmax.f32 %v3642, 0.0
      %v3675 = vmax.f32 %v3643, 0.0
      %v3676 = vmax.f32 %v3644, 0.0
      %v3677 = vmax.f32 %v3645, 0.0
      %v3678 = vmax.f32 %v3646, 0.0
      %v3679 = vmax.f32 %v3647, 0.0
      %v3680 = vmax.f32 %v3648, 0.0
      %v3681 = vmax.f32 %v3649, 0.0
      %v3682 = vmax.f32 %v3650, 0.0
      %v3683 = vmax.f32 %v3651, 0.0
      %v3684 = vmax.f32 %v3652, 0.0
      %v3685 = vmax.f32 %v3653, 0.0
      %v3686 = vmax.f32 %v3654, 0.0
      %v3687 = vmax.f32 %v3655, 0.0
      %v3688 = vmax.f32 %v3656, 0.0
      %v3689 = vmax.f32 %v3657, 0.0
      %v3690 = vmax.f32 %v3658, 0.0
      %v3691 = vmax.f32 %v3659, 0.0
      %v3692 = vmax.f32 %v3660, 0.0
      %v3693 = vmax.f32 %v3661, 0.0
      %v3694 = vmax.f32 %v3662, 0.0
      %v3695 = vmax.f32 %v3663, 0.0
      %v3696 = vmax.f32 %v3664, 0.0
      %v3697 = vmax.f32 %v3665, 0.0
      %v3698 = vmax.f32 %v3666, 0.0
      %3699 = vst [vmem:[%s278] sm:$0xff] %v3667
      %3700 = vst [vmem:[%s278 + $0x8] sm:$0xff] %v3668
      %3701 = vst [vmem:[%s278 + $0x10] sm:$0xff] %v3669
      %3702 = vst [vmem:[%s278 + $0x18] sm:$0xff] %v3670
      %3703 = vst [vmem:[%s278 + $0x20] sm:$0xff] %v3671
      %3704 = vst [vmem:[%s278 + $0x28] sm:$0xff] %v3672
      %3705 = vst [vmem:[%s278 + $0x30] sm:$0xff] %v3673
      %3706 = vst [vmem:[%s278 + $0x38] sm:$0xff] %v3674
      %3707 = vst [vmem:[%s278 + $0x40] sm:$0xff] %v3675
      %3708 = vst [vmem:[%s278 + $0x48] sm:$0xff] %v3676
      %3709 = vst [vmem:[%s278 + $0x50] sm:$0xff] %v3677
      %3710 = vst [vmem:[%s278 + $0x58] sm:$0xff] %v3678
      %3711 = vst [vmem:[%s278 + $0x60] sm:$0xff] %v3679
      %3712 = vst [vmem:[%s278 + $0x68] sm:$0xff] %v3680
      %3713 = vst [vmem:[%s278 + $0x70] sm:$0xff] %v3681
      %3714 = vst [vmem:[%s278 + $0x78] sm:$0xff] %v3682
      %3715 = vst [vmem:[%s278 + $0x80] sm:$0xff] %v3683
      %3716 = vst [vmem:[%s278 + $0x88] sm:$0xff] %v3684
      %3717 = vst [vmem:[%s278 + $0x90] sm:$0xff] %v3685
      %3718 = vst [vmem:[%s278 + $0x98] sm:$0xff] %v3686
      %3719 = vst [vmem:[%s278 + $0xa0] sm:$0xff] %v3687
      %3720 = vst [vmem:[%s278 + $0xa8] sm:$0xff] %v3688
      %3721 = vst [vmem:[%s278 + $0xb0] sm:$0xff] %v3689
      %3722 = vst [vmem:[%s278 + $0xb8] sm:$0xff] %v3690
      %3723 = vst [vmem:[%s278 + $0xc0] sm:$0xff] %v3691
      %3724 = vst [vmem:[%s278 + $0xc8] sm:$0xff] %v3692
      %3725 = vst [vmem:[%s278 + $0xd0] sm:$0xff] %v3693
      %3726 = vst [vmem:[%s278 + $0xd8] sm:$0xff] %v3694
      %3727 = vst [vmem:[%s278 + $0xe0] sm:$0xff] %v3695
      %3728 = vst [vmem:[%s278 + $0xe8] sm:$0xff] %v3696
      %3729 = vst [vmem:[%s278 + $0xf0] sm:$0xff] %v3697
      %3730 = vst [vmem:[%s278 + $0xf8] sm:$0xff] %v3698
      %p3731 = scmp.lt.s32.totalorder %s18, 1
      %s3732 = scalar_select %p3731, %s18, 1
      %s3733 = smul.addr %s3732, 32
      %s3734 = smul.addr %s3733, 8
      %s3735 = scalar_lea.vmem %s7, %s3734
      // Predicated region
      $region49: #{bottleneck_v1b_forward.1} parent=47 // pred_check
        %p3736 = pneg %p188
      $region50: #{bottleneck_v1b_forward.1} parent=47 // pred_check_branch
        %3738 = sbr.rel (%p3736) target = $region52
      $region51: #{bottleneck_v1b_forward.1} parent=47 // pred_region
        _
      $region52: #{bottleneck_v1b_forward.1} parent=47 // pred_fallthru
        _
    $region48: #{bottleneck_v1b_forward.1} parent=5 // pred_fallthru
      _
    %p3739 = scmp.le.s32.totalorder 2, %s13
    // Predicated region
    $region53: #{bottleneck_v1b_forward.1} parent=5 // pred_check
      %p3740 = pneg %p3739
    $region54: #{bottleneck_v1b_forward.1} parent=5 // pred_check_branch
      %3742 = sbr.rel (%p3740) target = $region56
    $region55: #{bottleneck_v1b_forward.1} parent=5 // pred_region
      %s3743 = ssub.s32 %s13, 2
      // Predicated region
      $region57: #{bottleneck_v1b_forward.1} parent=55 // pred_check
        %p3744 = pneg %p194
      $region58: #{bottleneck_v1b_forward.1} parent=55 // pred_check_branch
        %3746 = sbr.rel (%p3744) target = $region60
      $region59: #{bottleneck_v1b_forward.1} parent=55 // pred_region
        %p3747 = scmp.lt.s32.totalorder %s19, 1
        %s3748 = scalar_select %p3747, %s19, 1
        %s3749 = smul.addr %s3748, 32
        %s3750 = smul.addr %s3749, 8
        %s3751 = scalar_lea.vmem %s7, %s3750
      $region60: #{bottleneck_v1b_forward.1} parent=55 // pred_fallthru
        _
    $region56: #{bottleneck_v1b_forward.1} parent=5 // pred_fallthru
      _
  $region6: #{bottleneck_v1b_forward.1} parent=0 // loop_footer
    %s17 = sadd.s32 1, %s13
  $region7: #{bottleneck_v1b_forward.1} parent=0 // loop_footer_branch
    %12 = sbr.rel target = $region3
  $region8: #{bottleneck_v1b_forward.1} parent=0 // loop_exit
    _

// kernel: bottleneck_v1b_forward.1
$region0: #{bottleneck_v1b_forward.1}
  #allocation0 [shape = 'u32[]', space=smem, size = 0x4, offset = 0x4, fixed_abs, tag = 'smem constant byte address 0x4 - core index']
  #allocation1 [shape = 'u32[144,128]{1,0:T(1,128)}', space=vmem, size = 0x12000, scoped, tag = 'internal scratch']
  #allocation2 [shape = 'bf16[288,384]{1,0:T(16,128)(2,1)}', space=vmem, size = 0x36000, scoped, tag = 'scratch operand']
  %s0 = inlined_call_operand.vmem [shape: bf16[2,256,128], index: 0, kind: input, shape index: {}]
  %s1 = inlined_call_operand.vmem [shape: bf16[128,128], index: 1, kind: input, shape index: {}]
  %s2 = inlined_call_operand.vmem [shape: f32[1,128], index: 2, kind: input, shape index: {}]
  %s3 = inlined_call_operand.vmem [shape: bf16[3,384,128], index: 3, kind: input, shape index: {}]
  %s4 = inlined_call_operand.vmem [shape: f32[1,128], index: 4, kind: input, shape index: {}]
  %s5 = inlined_call_operand.vmem [shape: bf16[128,128], index: 5, kind: input, shape index: {}]
  %s6 = inlined_call_operand.vmem [shape: f32[1,128], index: 6, kind: input, shape index: {}]
  %s7 = inlined_call_operand.vmem [shape: f32[2,256,128], index: 7, kind: output, shape index: {}]
  %s8 = sld [smem:[#allocation0]]
  $region61: #{bottleneck_v1b_forward.1} parent=0
    _
  %s10 = ssub.s32 1, %s8
  %s11 = scalar_select 0, %s10, %s8
  loop: start=0, step=1, limit=4
  $region2: #{bottleneck_v1b_forward.1} parent=0 // loop_pre_header
    _
  $region3: #{bottleneck_v1b_forward.1} parent=0 // loop_header
    %s13 = sphi 0, %s17
    %p14 = scmp.ge.s32.totalorder %s13, 4
    %s23 = sphi 0, %s25
    %s26 = sphi 0, %s23
    %s27 = sphi 0, %s26
    %s43 = sphi 0, %s27
    %s47 = sphi 0, %s47
    %s49 = sphi 0, %s47
    %s50 = sphi 0, %s49
    %s64 = sphi 0, %s50
    %s68 = sphi 0, %s68
    %s70 = sphi 0, %s68
    %s71 = sphi 0, %s70
    %s85 = sphi 0, %s71
    %s89 = sphi 0, %s89
    %s91 = sphi 0, %s89
    %s92 = sphi 0, %s91
    %s106 = sphi 0, %s92
    %s110 = sphi 0, %s110
    %s112 = sphi 0, %s110
    %s113 = sphi 0, %s112
    %s127 = sphi 0, %s113
    %s131 = sphi 0, %s131
    %s133 = sphi 0, %s131
    %s134 = sphi 0, %s133
    %s148 = sphi 0, %s134
    %s152 = sphi 0, %s152
    %s154 = sphi 0, %s152
    %s155 = sphi 0, %s154
    %s169 = sphi 0, %s155
    %s175 = sphi 0, %s177
    %s178 = sphi 0, %s175
    %s179 = sphi 0, %s178
    %s195 = sphi 0, %s179
  $region4: #{bottleneck_v1b_forward.1} parent=0 // loop_header_branch
    %16 = sbr.rel (%p14) target = $region8
  $region5: #{bottleneck_v1b_forward.1} parent=0 // loop_body
    %s18 = ssub.s32 %s13, 1
    %s19 = ssub.s32 %s13, 2
    %s20 = sadd.s32 %s13, 1
    %s21 = ssub.s32 %s13, %s20
    %p22 = scmp.eq.s32.totalorder %s21, 0
    %s24 = sadd.s32 %s23, 1
    %s25 = scalar_select %p22, %s23, %s24
    %p28 = pneg %p22
    %p29 = scmp.eq.s32.totalorder %s13, 1
    %p30 = por %p28, %p29
    %p31 = scmp.ne.s32.totalorder %s23, %s26
    %p32 = scmp.eq.s32.totalorder %s13, 0
    %p33 = por %p31, %p32
    %p34 = scmp.ne.s32.totalorder %s23, %s26
    %p35 = scmp.eq.s32.totalorder %s18, 1
    %p36 = por %p34, %p35
    %p37 = scmp.ne.s32.totalorder %s26, %s27
    %p38 = scmp.eq.s32.totalorder %s18, 0
    %p39 = por %p37, %p38
    %p40 = scmp.ne.s32.totalorder %s26, %s27
    %p41 = scmp.eq.s32.totalorder %s19, 1
    %p42 = por %p40, %p41
    %p44 = scmp.ne.s32.totalorder %s27, %s43
    %p45 = scmp.eq.s32.totalorder %s19, 0
    %p46 = por %p44, %p45
    %s48 = sadd.s32 %s47, 1
    %p51 = scmp.eq.s32.totalorder %s13, 1
    %p52 = scmp.ne.s32.totalorder %s47, %s49
    %p53 = scmp.eq.s32.totalorder %s13, 0
    %p54 = por %p52, %p53
    %p55 = scmp.ne.s32.totalorder %s47, %s49
    %p56 = scmp.eq.s32.totalorder %s18, 1
    %p57 = por %p55, %p56
    %p58 = scmp.ne.s32.totalorder %s49, %s50
    %p59 = scmp.eq.s32.totalorder %s18, 0
    %p60 = por %p58, %p59
    %p61 = scmp.ne.s32.totalorder %s49, %s50
    %p62 = scmp.eq.s32.totalorder %s19, 1
    %p63 = por %p61, %p62
    %p65 = scmp.ne.s32.totalorder %s50, %s64
    %p66 = scmp.eq.s32.totalorder %s19, 0
    %p67 = por %p65, %p66
    %s69 = sadd.s32 %s68, 1
    %p72 = scmp.eq.s32.totalorder %s13, 1
    %p73 = scmp.ne.s32.totalorder %s68, %s70
    %p74 = scmp.eq.s32.totalorder %s13, 0
    %p75 = por %p73, %p74
    %p76 = scmp.ne.s32.totalorder %s68, %s70
    %p77 = scmp.eq.s32.totalorder %s18, 1
    %p78 = por %p76, %p77
    %p79 = scmp.ne.s32.totalorder %s70, %s71
    %p80 = scmp.eq.s32.totalorder %s18, 0
    %p81 = por %p79, %p80
    %p82 = scmp.ne.s32.totalorder %s70, %s71
    %p83 = scmp.eq.s32.totalorder %s19, 1
    %p84 = por %p82, %p83
    %p86 = scmp.ne.s32.totalorder %s71, %s85
    %p87 = scmp.eq.s32.totalorder %s19, 0
    %p88 = por %p86, %p87
    %s90 = sadd.s32 %s89, 1
    %p93 = scmp.eq.s32.totalorder %s13, 1
    %p94 = scmp.ne.s32.totalorder %s89, %s91
    %p95 = scmp.eq.s32.totalorder %s13, 0
    %p96 = por %p94, %p95
    %p97 = scmp.ne.s32.totalorder %s89, %s91
    %p98 = scmp.eq.s32.totalorder %s18, 1
    %p99 = por %p97, %p98
    %p100 = scmp.ne.s32.totalorder %s91, %s92
    %p101 = scmp.eq.s32.totalorder %s18, 0
    %p102 = por %p100, %p101
    %p103 = scmp.ne.s32.totalorder %s91, %s92
    %p104 = scmp.eq.s32.totalorder %s19, 1
    %p105 = por %p103, %p104
    %p107 = scmp.ne.s32.totalorder %s92, %s106
    %p108 = scmp.eq.s32.totalorder %s19, 0
    %p109 = por %p107, %p108
    %s111 = sadd.s32 %s110, 1
    %p114 = scmp.eq.s32.totalorder %s13, 1
    %p115 = scmp.ne.s32.totalorder %s110, %s112
    %p116 = scmp.eq.s32.totalorder %s13, 0
    %p117 = por %p115, %p116
    %p118 = scmp.ne.s32.totalorder %s110, %s112
    %p119 = scmp.eq.s32.totalorder %s18, 1
    %p120 = por %p118, %p119
    %p121 = scmp.ne.s32.totalorder %s112, %s113
    %p122 = scmp.eq.s32.totalorder %s18, 0
    %p123 = por %p121, %p122
    %p124 = scmp.ne.s32.totalorder %s112, %s113
    %p125 = scmp.eq.s32.totalorder %s19, 1
    %p126 = por %p124, %p125
    %p128 = scmp.ne.s32.totalorder %s113, %s127
    %p129 = scmp.eq.s32.totalorder %s19, 0
    %p130 = por %p128, %p129
    %s132 = sadd.s32 %s131, 1
    %p135 = scmp.eq.s32.totalorder %s13, 1
    %p136 = scmp.ne.s32.totalorder %s131, %s133
    %p137 = scmp.eq.s32.totalorder %s13, 0
    %p138 = por %p136, %p137
    %p139 = scmp.ne.s32.totalorder %s131, %s133
    %p140 = scmp.eq.s32.totalorder %s18, 1
    %p141 = por %p139, %p140
    %p142 = scmp.ne.s32.totalorder %s133, %s134
    %p143 = scmp.eq.s32.totalorder %s18, 0
    %p144 = por %p142, %p143
    %p145 = scmp.ne.s32.totalorder %s133, %s134
    %p146 = scmp.eq.s32.totalorder %s19, 1
    %p147 = por %p145, %p146
    %p149 = scmp.ne.s32.totalorder %s134, %s148
    %p150 = scmp.eq.s32.totalorder %s19, 0
    %p151 = por %p149, %p150
    %s153 = sadd.s32 %s152, 1
    %p156 = scmp.eq.s32.totalorder %s13, 1
    %p157 = scmp.ne.s32.totalorder %s152, %s154
    %p158 = scmp.eq.s32.totalorder %s13, 0
    %p159 = por %p157, %p158
    %p160 = scmp.ne.s32.totalorder %s152, %s154
    %p161 = scmp.eq.s32.totalorder %s18, 1
    %p162 = por %p160, %p161
    %p163 = scmp.ne.s32.totalorder %s154, %s155
    %p164 = scmp.eq.s32.totalorder %s18, 0
    %p165 = por %p163, %p164
    %p166 = scmp.ne.s32.totalorder %s154, %s155
    %p167 = scmp.eq.s32.totalorder %s19, 1
    %p168 = por %p166, %p167
    %p170 = scmp.ne.s32.totalorder %s155, %s169
    %p171 = scmp.eq.s32.totalorder %s19, 0
    %p172 = por %p170, %p171
    %s173 = ssub.s32 %s13, %s20
    %p174 = scmp.eq.s32.totalorder %s173, 0
    %s176 = sadd.s32 %s175, 1
    %s177 = scalar_select %p174, %s175, %s176
    %p180 = pneg %p174
    %p181 = scmp.eq.s32.totalorder %s13, 1
    %p182 = por %p180, %p181
    %p183 = scmp.ne.s32.totalorder %s175, %s178
    %p184 = scmp.eq.s32.totalorder %s13, 0
    %p185 = por %p183, %p184
    %p186 = scmp.ne.s32.totalorder %s175, %s178
    %p187 = scmp.eq.s32.totalorder %s18, 1
    %p188 = por %p186, %p187
    %p189 = scmp.ne.s32.totalorder %s178, %s179
    %p190 = scmp.eq.s32.totalorder %s18, 0
    %p191 = por %p189, %p190
    %p192 = scmp.ne.s32.totalorder %s178, %s179
    %p193 = scmp.eq.s32.totalorder %s19, 1
    %p194 = por %p192, %p193
    %p196 = scmp.ne.s32.totalorder %s179, %s195
    %p197 = scmp.eq.s32.totalorder %s19, 0
    %p198 = por %p196, %p197
    %p199 = scmp.le.s32.totalorder 1, %s13
    %p200 = scmp.lt.s32.totalorder %s13, 3
    %p201 = pnand %p199, %p200
    %p202 = pneg %p201
    // Predicated region
    $region9: #{bottleneck_v1b_forward.1} parent=5 // pred_check
      _
    $region10: #{bottleneck_v1b_forward.1} parent=5 // pred_check_branch
      %204 = sbr.rel (%p201) target = $region12
    $region11: #{bottleneck_v1b_forward.1} parent=5 // pred_region
      %s205 = ssub.s32 %s13, 1
      // Predicated region
      $region13: #{bottleneck_v1b_forward.1} parent=11 // pred_check
        %p206 = pneg %p60
      $region14: #{bottleneck_v1b_forward.1} parent=11 // pred_check_branch
        %208 = sbr.rel (%p206) target = $region16
      $region15: #{bottleneck_v1b_forward.1} parent=11 // pred_region
        _
      $region16: #{bottleneck_v1b_forward.1} parent=11 // pred_fallthru
        _
      // Predicated region
      $region17: #{bottleneck_v1b_forward.1} parent=11 // pred_check
        %p209 = pneg %p81
      $region18: #{bottleneck_v1b_forward.1} parent=11 // pred_check_branch
        %211 = sbr.rel (%p209) target = $region20
      $region19: #{bottleneck_v1b_forward.1} parent=11 // pred_region
        _
      $region20: #{bottleneck_v1b_forward.1} parent=11 // pred_fallthru
        _
      // Predicated region
      $region21: #{bottleneck_v1b_forward.1} parent=11 // pred_check
        %p212 = pneg %p102
      $region22: #{bottleneck_v1b_forward.1} parent=11 // pred_check_branch
        %214 = sbr.rel (%p212) target = $region24
      $region23: #{bottleneck_v1b_forward.1} parent=11 // pred_region
        _
      $region24: #{bottleneck_v1b_forward.1} parent=11 // pred_fallthru
        _
      // Predicated region
      $region25: #{bottleneck_v1b_forward.1} parent=11 // pred_check
        %p215 = pneg %p123
      $region26: #{bottleneck_v1b_forward.1} parent=11 // pred_check_branch
        %217 = sbr.rel (%p215) target = $region28
      $region27: #{bottleneck_v1b_forward.1} parent=11 // pred_region
        _
      $region28: #{bottleneck_v1b_forward.1} parent=11 // pred_fallthru
        _
      // Predicated region
      $region29: #{bottleneck_v1b_forward.1} parent=11 // pred_check
        %p218 = pneg %p144
      $region30: #{bottleneck_v1b_forward.1} parent=11 // pred_check_branch
        %220 = sbr.rel (%p218) target = $region32
      $region31: #{bottleneck_v1b_forward.1} parent=11 // pred_region
        _
      $region32: #{bottleneck_v1b_forward.1} parent=11 // pred_fallthru
        _
      // Predicated region
      $region33: #{bottleneck_v1b_forward.1} parent=11 // pred_check
        %p221 = pneg %p165
      $region34: #{bottleneck_v1b_forward.1} parent=11 // pred_check_branch
        %223 = sbr.rel (%p221) target = $region36
      $region35: #{bottleneck_v1b_forward.1} parent=11 // pred_region
        _
      $region36: #{bottleneck_v1b_forward.1} parent=11 // pred_fallthru
        _
    $region12: #{bottleneck_v1b_forward.1} parent=5 // pred_fallthru
      _
    %p224 = scmp.lt.s32.totalorder %s13, 2
    // Predicated region
    $region37: #{bottleneck_v1b_forward.1} parent=5 // pred_check
      %p225 = pneg %p224
    $region38: #{bottleneck_v1b_forward.1} parent=5 // pred_check_branch
      %227 = sbr.rel (%p225) target = $region40
    $region39: #{bottleneck_v1b_forward.1} parent=5 // pred_region
      // Predicated region
      $region41: #{bottleneck_v1b_forward.1} parent=39 // pred_check
        %p228 = pneg %p33
      $region42: #{bottleneck_v1b_forward.1} parent=39 // pred_check_branch
        %230 = sbr.rel (%p228) target = $region44
      $region43: #{bottleneck_v1b_forward.1} parent=39 // pred_region
        %p231 = scmp.lt.s32.totalorder %s13, 1
        %s232 = scalar_select %p231, %s13, 1
        %s233 = smul.addr %s232, 32
        %s234 = smul.addr %s233, 4
        %s235 = scalar_lea.vmem %s0, %s234
      $region44: #{bottleneck_v1b_forward.1} parent=39 // pred_fallthru
        _
    $region40: #{bottleneck_v1b_forward.1} parent=5 // pred_fallthru
      _
    %p236 = scmp.le.s32.totalorder 1, %s13
    %p237 = scmp.lt.s32.totalorder %s13, 3
    %p238 = pnand %p236, %p237
    %p239 = pneg %p238
    // Predicated region
    $region45: #{bottleneck_v1b_forward.1} parent=5 // pred_check
      _
    $region46: #{bottleneck_v1b_forward.1} parent=5 // pred_check_branch
      %241 = sbr.rel (%p238) target = $region48
    $region47: #{bottleneck_v1b_forward.1} parent=5 // pred_region
      %s242 = ssub.s32 %s13, 1
      %p243 = scmp.lt.s32.totalorder %s18, 1
      %s244 = scalar_select %p243, %s18, 1
      %s245 = smul.addr %s244, 32
      %s246 = smul.addr %s245, 4
      %s247 = scalar_lea.vmem %s0, %s246
      %p248 = pneg %p39
      %p249 = pneg %p36
      %p250 = pneg %p60
      %p251 = pneg %p57
      %p252 = pneg %p81
      %p253 = pneg %p78
      %p254 = pneg %p102
      %p255 = pneg %p99
      %p256 = pneg %p123
      %p257 = pneg %p120
      %p258 = pneg %p144
      %p259 = pneg %p141
      %p260 = pneg %p165
      %p261 = pneg %p162
      %p262 = pneg %p191
      %p263 = pneg %p188
      %p264 = scmp.lt.s32.totalorder %s18, 1
      %s265 = scalar_select %p264, %s18, 1
      %s266 = smul.addr %s265, 32
      %s267 = smul.addr %s266, 8
      %s268 = scalar_lea.vmem %s7, %s267
      %p269 = scmp.lt.s32.totalorder %s18, 1
      %s270 = scalar_select %p269, %s18, 1
      %s271 = smul.addr %s270, 32
      %s272 = smul.addr %s271, 4
      %s273 = scalar_lea.vmem %s0, %s272
      %p274 = scmp.lt.s32.totalorder %s18, 1
      %s275 = scalar_select %p274, %s18, 1
      %s276 = smul.addr %s275, 32
      %s277 = smul.addr %s276, 8
      %s278 = scalar_lea.vmem %s7, %s277
      %v280 = vld [vmem:[%s273] sm:$0xf]
      %v281 = vld [vmem:[%s273 + $0x4] sm:$0xf]
      %v282 = vld [vmem:[%s273 + $0x8] sm:$0xf]
      %v283 = vld [vmem:[%s273 + $0xc] sm:$0xf]
      %v284 = vld [vmem:[%s273 + $0x10] sm:$0xf]
      %v285 = vld [vmem:[%s273 + $0x14] sm:$0xf]
      %v286 = vld [vmem:[%s273 + $0x18] sm:$0xf]
      %v287 = vld [vmem:[%s273 + $0x1c] sm:$0xf]
      %v288 = vld [vmem:[%s273 + $0x20] sm:$0xf]
      %v289 = vld [vmem:[%s273 + $0x24] sm:$0xf]
      %v290 = vld [vmem:[%s273 + $0x28] sm:$0xf]
      %v291 = vld [vmem:[%s273 + $0x2c] sm:$0xf]
      %v292 = vld [vmem:[%s273 + $0x30] sm:$0xf]
      %v293 = vld [vmem:[%s273 + $0x34] sm:$0xf]
      %v294 = vld [vmem:[%s273 + $0x38] sm:$0xf]
      %v295 = vld [vmem:[%s273 + $0x3c] sm:$0xf]
      %v296 = vld [vmem:[%s273 + $0x40] sm:$0xf]
      %v297 = vld [vmem:[%s273 + $0x44] sm:$0xf]
      %v298 = vld [vmem:[%s273 + $0x48] sm:$0xf]
      %v299 = vld [vmem:[%s273 + $0x4c] sm:$0xf]
      %v300 = vld [vmem:[%s273 + $0x50] sm:$0xf]
      %v301 = vld [vmem:[%s273 + $0x54] sm:$0xf]
      %v302 = vld [vmem:[%s273 + $0x58] sm:$0xf]
      %v303 = vld [vmem:[%s273 + $0x5c] sm:$0xf]
      %v304 = vld [vmem:[%s273 + $0x60] sm:$0xf]
      %v305 = vld [vmem:[%s273 + $0x64] sm:$0xf]
      %v306 = vld [vmem:[%s273 + $0x68] sm:$0xf]
      %v307 = vld [vmem:[%s273 + $0x6c] sm:$0xf]
      %v308 = vld [vmem:[%s273 + $0x70] sm:$0xf]
      %v309 = vld [vmem:[%s273 + $0x74] sm:$0xf]
      %v310 = vld [vmem:[%s273 + $0x78] sm:$0xf]
      %v311 = vld [vmem:[%s273 + $0x7c] sm:$0xf]
      %v312 = vld [vmem:[%s1] sm:$0xf]
      %v313 = vld [vmem:[%s1 + $0x4] sm:$0xf]
      %v314 = vld [vmem:[%s1 + $0x8] sm:$0xf]
      %v315 = vld [vmem:[%s1 + $0xc] sm:$0xf]
      %v316 = vld [vmem:[%s1 + $0x10] sm:$0xf]
      %v317 = vld [vmem:[%s1 + $0x14] sm:$0xf]
      %v318 = vld [vmem:[%s1 + $0x18] sm:$0xf]
      %v319 = vld [vmem:[%s1 + $0x1c] sm:$0xf]
      %v320 = vld [vmem:[%s1 + $0x20] sm:$0xf]
      %v321 = vld [vmem:[%s1 + $0x24] sm:$0xf]
      %v322 = vld [vmem:[%s1 + $0x28] sm:$0xf]
      %v323 = vld [vmem:[%s1 + $0x2c] sm:$0xf]
      %v324 = vld [vmem:[%s1 + $0x30] sm:$0xf]
      %v325 = vld [vmem:[%s1 + $0x34] sm:$0xf]
      %v326 = vld [vmem:[%s1 + $0x38] sm:$0xf]
      %v327 = vld [vmem:[%s1 + $0x3c] sm:$0xf]
      %v328 = vld [vmem:[%s2] sm:$0x1]
      %v330 = vlaneseq
      %v331 = vshrl.u32 %v330, 7
      %v332 = vsub.s32 0, %v331
      %v333 = vrot.slane %v328, %v332
      %v367 = vunpack.c.l.b16 %v280
      %v368 = vunpack.c.l.b16 %v281
      %v369 = vunpack.c.l.b16 %v282
      %v370 = vunpack.c.l.b16 %v283
      %v371 = vunpack.c.l.b16 %v284
      %v372 = vunpack.c.l.b16 %v285
      %v373 = vunpack.c.l.b16 %v286
      %v374 = vunpack.c.l.b16 %v287
      %v375 = vunpack.c.l.b16 %v288
      %v376 = vunpack.c.l.b16 %v289
      %v377 = vunpack.c.l.b16 %v290
      %v378 = vunpack.c.l.b16 %v291
      %v379 = vunpack.c.l.b16 %v292
      %v380 = vunpack.c.l.b16 %v293
      %v381 = vunpack.c.l.b16 %v294
      %v382 = vunpack.c.l.b16 %v295
      %v383 = vunpack.c.l.b16 %v296
      %v384 = vunpack.c.l.b16 %v297
      %v385 = vunpack.c.l.b16 %v298
      %v386 = vunpack.c.l.b16 %v299
      %v387 = vunpack.c.l.b16 %v300
      %v388 = vunpack.c.l.b16 %v301
      %v389 = vunpack.c.l.b16 %v302
      %v390 = vunpack.c.l.b16 %v303
      %v391 = vunpack.c.l.b16 %v304
      %v392 = vunpack.c.l.b16 %v305
      %v393 = vunpack.c.l.b16 %v306
      %v394 = vunpack.c.l.b16 %v307
      %v395 = vunpack.c.l.b16 %v308
      %v396 = vunpack.c.l.b16 %v309
      %v397 = vunpack.c.l.b16 %v310
      %v398 = vunpack.c.l.b16 %v311
      %v399 = vpack.c.b16 %v368, %v367
      %v400 = vpack.c.b16 %v370, %v369
      %v401 = vpack.c.b16 %v372, %v371
      %v402 = vpack.c.b16 %v374, %v373
      %v403 = vpack.c.b16 %v376, %v375
      %v404 = vpack.c.b16 %v378, %v377
      %v405 = vpack.c.b16 %v380, %v379
      %v406 = vpack.c.b16 %v382, %v381
      %v407 = vpack.c.b16 %v384, %v383
      %v408 = vpack.c.b16 %v386, %v385
      %v409 = vpack.c.b16 %v388, %v387
      %v410 = vpack.c.b16 %v390, %v389
      %v411 = vpack.c.b16 %v392, %v391
      %v412 = vpack.c.b16 %v394, %v393
      %v413 = vpack.c.b16 %v396, %v395
      %v414 = vpack.c.b16 %v398, %v397
      %v447 = vunpack.c.l.b16 %v312
      %v448 = vunpack.c.l.b16 %v313
      %v449 = vunpack.c.l.b16 %v314
      %v450 = vunpack.c.l.b16 %v315
      %v451 = vunpack.c.l.b16 %v316
      %v452 = vunpack.c.l.b16 %v317
      %v453 = vunpack.c.l.b16 %v318
      %v454 = vunpack.c.l.b16 %v319
      %v455 = vunpack.c.l.b16 %v320
      %v456 = vunpack.c.l.b16 %v321
      %v457 = vunpack.c.l.b16 %v322
      %v458 = vunpack.c.l.b16 %v323
      %v459 = vunpack.c.l.b16 %v324
      %v460 = vunpack.c.l.b16 %v325
      %v461 = vunpack.c.l.b16 %v326
      %v462 = vunpack.c.l.b16 %v327
      %v463 = vpack.c.b16 %v448, %v447
      %v464 = vpack.c.b16 %v450, %v449
      %v465 = vpack.c.b16 %v452, %v451
      %v466 = vpack.c.b16 %v454, %v453
      %v467 = vpack.c.b16 %v456, %v455
      %v468 = vpack.c.b16 %v458, %v457
      %v469 = vpack.c.b16 %v460, %v459
      %v470 = vpack.c.b16 %v462, %v461
      %479 = vmatprep.subr.bf16.mxu0 0
      %480 = vmatpush1.bf16.msra.mxu0 %v463
      %481 = vmatprep.subr.bf16.mxu0 0
      %482 = vmatpush1.bf16.msra.mxu0 %v464
      %483 = vmatprep.subr.bf16.mxu0 0
      %484 = vmatpush1.bf16.msra.mxu0 %v465
      %485 = vmatprep.subr.bf16.mxu0 0
      %486 = vmatpush1.bf16.msra.mxu0 %v466
      %487 = vmatprep.subr.bf16.mxu0 0
      %488 = vmatpush1.bf16.msra.mxu0 %v467
      %489 = vmatprep.subr.bf16.mxu0 0
      %490 = vmatpush1.bf16.msra.mxu0 %v468
      %491 = vmatprep.subr.bf16.mxu0 0
      %492 = vmatpush1.bf16.msra.mxu0 %v469
      %493 = vmatprep.subr.bf16.mxu0 0
      %494 = vmatpush1.bf16.msra.mxu0 %v470
      %495 = vmatprep.subr.bf16.mxu0 0
      %496 = vmatpush1.bf16.msra.mxu0 0
      %497 = vmatprep.subr.bf16.mxu0 0
      %498 = vmatpush1.bf16.msra.mxu0 0
      %499 = vmatprep.subr.bf16.mxu0 0
      %500 = vmatpush1.bf16.msra.mxu0 0
      %501 = vmatprep.subr.bf16.mxu0 0
      %502 = vmatpush1.bf16.msra.mxu0 0
      %503 = vmatprep.subr.bf16.mxu0 0
      %504 = vmatpush1.bf16.msra.mxu0 0
      %505 = vmatprep.subr.bf16.mxu0 0
      %506 = vmatpush1.bf16.msra.mxu0 0
      %507 = vmatprep.subr.bf16.mxu0 0
      %508 = vmatpush1.bf16.msra.mxu0 0
      %509 = vmatprep.subr.bf16.mxu0 0
      %510 = vmatpush1.bf16.msra.mxu0 0
      %511 = vmatprep.mubr.bf16.mxu0 0
      %512 = vmatmul.mubr.bf16.gmra.mrb[0].mxu0 %v399
      %v513 = vpop.f32.mrb[0].mxu0
      %v514 = vadd.f32 %v333, %v513
      %v515 = vpop.f32.mrb[0].mxu0
      %v516 = vpop.f32.mrb[0].mxu0
      %v517 = vadd.f32 %v333, %v516
      %v518 = vpop.f32.mrb[0].mxu0
      %519 = vmatprep.mubr.bf16.mxu0 0
      %520 = vmatmul.mubr.bf16.gmra.mrb[0].mxu0 %v400
      %v521 = vpop.f32.mrb[0].mxu0
      %v522 = vadd.f32 %v333, %v521
      %v523 = vpop.f32.mrb[0].mxu0
      %v524 = vpop.f32.mrb[0].mxu0
      %v525 = vadd.f32 %v333, %v524
      %v526 = vpop.f32.mrb[0].mxu0
      %527 = vmatprep.mubr.bf16.mxu0 0
      %528 = vmatmul.mubr.bf16.gmra.mrb[0].mxu0 %v401
      %v529 = vpop.f32.mrb[0].mxu0
      %v530 = vadd.f32 %v333, %v529
      %v531 = vpop.f32.mrb[0].mxu0
      %v532 = vpop.f32.mrb[0].mxu0
      %v533 = vadd.f32 %v333, %v532
      %v534 = vpop.f32.mrb[0].mxu0
      %535 = vmatprep.mubr.bf16.mxu0 0
      %536 = vmatmul.mubr.bf16.gmra.mrb[0].mxu0 %v402
      %v537 = vpop.f32.mrb[0].mxu0
      %v538 = vadd.f32 %v333, %v537
      %v539 = vpop.f32.mrb[0].mxu0
      %v540 = vpop.f32.mrb[0].mxu0
      %v541 = vadd.f32 %v333, %v540
      %v542 = vpop.f32.mrb[0].mxu0
      %543 = vmatprep.mubr.bf16.mxu0 0
      %544 = vmatmul.mubr.bf16.gmra.mrb[0].mxu0 %v403
      %v545 = vpop.f32.mrb[0].mxu0
      %v546 = vadd.f32 %v333, %v545
      %v547 = vpop.f32.mrb[0].mxu0
      %v548 = vpop.f32.mrb[0].mxu0
      %v549 = vadd.f32 %v333, %v548
      %v550 = vpop.f32.mrb[0].mxu0
      %551 = vmatprep.mubr.bf16.mxu0 0
      %552 = vmatmul.mubr.bf16.gmra.mrb[0].mxu0 %v404
      %v553 = vpop.f32.mrb[0].mxu0
      %v554 = vadd.f32 %v333, %v553
      %v555 = vpop.f32.mrb[0].mxu0
      %v556 = vpop.f32.mrb[0].mxu0
      %v557 = vadd.f32 %v333, %v556
      %v558 = vpop.f32.mrb[0].mxu0
      %559 = vmatprep.mubr.bf16.mxu0 0
      %560 = vmatmul.mubr.bf16.gmra.mrb[0].mxu0 %v405
      %v561 = vpop.f32.mrb[0].mxu0
      %v562 = vadd.f32 %v333, %v561
      %v563 = vpop.f32.mrb[0].mxu0
      %v564 = vpop.f32.mrb[0].mxu0
      %v565 = vadd.f32 %v333, %v564
      %v566 = vpop.f32.mrb[0].mxu0
      %567 = vmatprep.mubr.bf16.mxu0 0
      %568 = vmatmul.mubr.bf16.gmra.mrb[0].mxu0 %v406
      %v569 = vpop.f32.mrb[0].mxu0
      %v570 = vadd.f32 %v333, %v569
      %v571 = vpop.f32.mrb[0].mxu0
      %v572 = vpop.f32.mrb[0].mxu0
      %v573 = vadd.f32 %v333, %v572
      %v574 = vpop.f32.mrb[0].mxu0
      %575 = vmatprep.mubr.bf16.mxu0 0
      %576 = vmatmul.mubr.bf16.gmra.mrb[0].mxu0 %v407
      %v577 = vpop.f32.mrb[0].mxu0
      %v578 = vadd.f32 %v333, %v577
      %v579 = vpop.f32.mrb[0].mxu0
      %v580 = vpop.f32.mrb[0].mxu0
      %v581 = vadd.f32 %v333, %v580
      %v582 = vpop.f32.mrb[0].mxu0
      %583 = vmatprep.mubr.bf16.mxu0 0
      %584 = vmatmul.mubr.bf16.gmra.mrb[0].mxu0 %v408
      %v585 = vpop.f32.mrb[0].mxu0
      %v586 = vadd.f32 %v333, %v585
      %v587 = vpop.f32.mrb[0].mxu0
      %v588 = vpop.f32.mrb[0].mxu0
      %v589 = vadd.f32 %v333, %v588
      %v590 = vpop.f32.mrb[0].mxu0
      %591 = vmatprep.mubr.bf16.mxu0 0
      %592 = vmatmul.mubr.bf16.gmra.mrb[0].mxu0 %v409
      %v593 = vpop.f32.mrb[0].mxu0
      %v594 = vadd.f32 %v333, %v593
      %v595 = vpop.f32.mrb[0].mxu0
      %v596 = vpop.f32.mrb[0].mxu0
      %v597 = vadd.f32 %v333, %v596
      %v598 = vpop.f32.mrb[0].mxu0
      %599 = vmatprep.mubr.bf16.mxu0 0
      %600 = vmatmul.mubr.bf16.gmra.mrb[0].mxu0 %v410
      %v601 = vpop.f32.mrb[0].mxu0
      %v602 = vadd.f32 %v333, %v601
      %v603 = vpop.f32.mrb[0].mxu0
      %v604 = vpop.f32.mrb[0].mxu0
      %v605 = vadd.f32 %v333, %v604
      %v606 = vpop.f32.mrb[0].mxu0
      %607 = vmatprep.mubr.bf16.mxu0 0
      %608 = vmatmul.mubr.bf16.gmra.mrb[0].mxu0 %v411
      %v609 = vpop.f32.mrb[0].mxu0
      %v610 = vadd.f32 %v333, %v609
      %v611 = vpop.f32.mrb[0].mxu0
      %v612 = vpop.f32.mrb[0].mxu0
      %v613 = vadd.f32 %v333, %v612
      %v614 = vpop.f32.mrb[0].mxu0
      %615 = vmatprep.mubr.bf16.mxu0 0
      %616 = vmatmul.mubr.bf16.gmra.mrb[0].mxu0 %v412
      %v617 = vpop.f32.mrb[0].mxu0
      %v618 = vadd.f32 %v333, %v617
      %v619 = vpop.f32.mrb[0].mxu0
      %v620 = vpop.f32.mrb[0].mxu0
      %v621 = vadd.f32 %v333, %v620
      %v622 = vpop.f32.mrb[0].mxu0
      %623 = vmatprep.mubr.bf16.mxu0 0
      %624 = vmatmul.mubr.bf16.gmra.mrb[0].mxu0 %v413
      %v625 = vpop.f32.mrb[0].mxu0
      %v626 = vadd.f32 %v333, %v625
      %v627 = vpop.f32.mrb[0].mxu0
      %v628 = vpop.f32.mrb[0].mxu0
      %v629 = vadd.f32 %v333, %v628
      %v630 = vpop.f32.mrb[0].mxu0
      %631 = vmatprep.mubr.bf16.mxu0 0
      %632 = vmatmul.mubr.bf16.gmra.mrb[0].mxu0 %v414
      %v633 = vpop.f32.mrb[0].mxu0
      %v634 = vadd.f32 %v333, %v633
      %v635 = vpop.f32.mrb[0].mxu0
      %v636 = vpop.f32.mrb[0].mxu0
      %v637 = vadd.f32 %v333, %v636
      %v638 = vpop.f32.mrb[0].mxu0
      %639 = vdwg.mxu0
      %v640 = vmax.f32 %v514, 0.0
      %v641 = vmax.f32 %v517, 0.0
      %v642 = vmax.f32 %v522, 0.0
      %v643 = vmax.f32 %v525, 0.0
      %v644 = vmax.f32 %v530, 0.0
      %v645 = vmax.f32 %v533, 0.0
      %v646 = vmax.f32 %v538, 0.0
      %v647 = vmax.f32 %v541, 0.0
      %v648 = vmax.f32 %v546, 0.0
      %v649 = vmax.f32 %v549, 0.0
      %v650 = vmax.f32 %v554, 0.0
      %v651 = vmax.f32 %v557, 0.0
      %v652 = vmax.f32 %v562, 0.0
      %v653 = vmax.f32 %v565, 0.0
      %v654 = vmax.f32 %v570, 0.0
      %v655 = vmax.f32 %v573, 0.0
      %v656 = vmax.f32 %v578, 0.0
      %v657 = vmax.f32 %v581, 0.0
      %v658 = vmax.f32 %v586, 0.0
      %v659 = vmax.f32 %v589, 0.0
      %v660 = vmax.f32 %v594, 0.0
      %v661 = vmax.f32 %v597, 0.0
      %v662 = vmax.f32 %v602, 0.0
      %v663 = vmax.f32 %v605, 0.0
      %v664 = vmax.f32 %v610, 0.0
      %v665 = vmax.f32 %v613, 0.0
      %v666 = vmax.f32 %v618, 0.0
      %v667 = vmax.f32 %v621, 0.0
      %v668 = vmax.f32 %v626, 0.0
      %v669 = vmax.f32 %v629, 0.0
      %v670 = vmax.f32 %v634, 0.0
      %v671 = vmax.f32 %v637, 0.0
      %v672 = vpack.c.bf16 %v641, %v640
      %v673 = vpack.c.bf16 %v643, %v642
      %v674 = vpack.c.bf16 %v645, %v644
      %v675 = vpack.c.bf16 %v647, %v646
      %v676 = vpack.c.bf16 %v649, %v648
      %v677 = vpack.c.bf16 %v651, %v650
      %v678 = vpack.c.bf16 %v653, %v652
      %v679 = vpack.c.bf16 %v655, %v654
      %v680 = vpack.c.bf16 %v657, %v656
      %v681 = vpack.c.bf16 %v659, %v658
      %v682 = vpack.c.bf16 %v661, %v660
      %v683 = vpack.c.bf16 %v663, %v662
      %v684 = vpack.c.bf16 %v665, %v664
      %v685 = vpack.c.bf16 %v667, %v666
      %v686 = vpack.c.bf16 %v669, %v668
      %v687 = vpack.c.bf16 %v671, %v670
      %v688 = vlaneseq
      %v689 = vshrl.u32 %v688, 7
      %v690 = vadd.s32 %v689, 8
      %v691 = vadd.s32 %v689, 16
      %v692 = vadd.s32 %v689, 24
      %v693 = vadd.s32 %v689, 32
      %v694 = vadd.s32 %v689, 40
      %v695 = vadd.s32 %v689, 48
      %v696 = vadd.s32 %v689, 56
      %v697 = vadd.s32 %v689, 64
      %v698 = vadd.s32 %v689, 72
      %v699 = vadd.s32 %v689, 80
      %v700 = vadd.s32 %v689, 88
      %v701 = vadd.s32 %v689, 96
      %v702 = vadd.s32 %v689, 104
      %v703 = vadd.s32 %v689, 112
      %v704 = vadd.s32 %v689, 120
      %v705 = vadd.s32 %v689, 128
      %v706 = vadd.s32 %v689, 136
      %v707 = vadd.s32 %v689, 144
      %v708 = vadd.s32 %v689, 152
      %v709 = vadd.s32 %v689, 160
      %v710 = vadd.s32 %v689, 168
      %v711 = vadd.s32 %v689, 176
      %v712 = vadd.s32 %v689, 184
      %v713 = vadd.s32 %v689, 192
      %v714 = vadd.s32 %v689, 200
      %v715 = vadd.s32 %v689, 208
      %v716 = vadd.s32 %v689, 216
      %v717 = vadd.s32 %v689, 224
      %v718 = vadd.s32 %v689, 232
      %v719 = vadd.s32 %v689, 240
      %v720 = vadd.s32 %v689, 248
      %vm721 = vcmp.lt.s32.totalorder %v689, 0
      %v722 = vsub.s32 0, %v689
      %v723 = vsel %vm721, %v722, %v689
      %v724 = vshrl.u32 %v723, 4
      %v725 = vand.u32 %v723, 15
      %v726 = vsub.s32 0, %v725
      %v727 = vsel %vm721, %v726, %v725
      %vm728 = vcmp.lt.s32.totalorder %v690, 0
      %v729 = vsub.s32 0, %v690
      %v730 = vsel %vm728, %v729, %v690
      %v731 = vshrl.u32 %v730, 4
      %v732 = vand.u32 %v730, 15
      %v733 = vsub.s32 0, %v732
      %v734 = vsel %vm728, %v733, %v732
      %vm735 = vcmp.lt.s32.totalorder %v691, 0
      %v736 = vsub.s32 0, %v691
      %v737 = vsel %vm735, %v736, %v691
      %v738 = vshrl.u32 %v737, 4
      %v739 = vand.u32 %v737, 15
      %v740 = vsub.s32 0, %v739
      %v741 = vsel %vm735, %v740, %v739
      %vm742 = vcmp.lt.s32.totalorder %v692, 0
      %v743 = vsub.s32 0, %v692
      %v744 = vsel %vm742, %v743, %v692
      %v745 = vshrl.u32 %v744, 4
      %v746 = vand.u32 %v744, 15
      %v747 = vsub.s32 0, %v746
      %v748 = vsel %vm742, %v747, %v746
      %vm749 = vcmp.lt.s32.totalorder %v693, 0
      %v750 = vsub.s32 0, %v693
      %v751 = vsel %vm749, %v750, %v693
      %v752 = vshrl.u32 %v751, 4
      %v753 = vand.u32 %v751, 15
      %v754 = vsub.s32 0, %v753
      %v755 = vsel %vm749, %v754, %v753
      %vm756 = vcmp.lt.s32.totalorder %v694, 0
      %v757 = vsub.s32 0, %v694
      %v758 = vsel %vm756, %v757, %v694
      %v759 = vshrl.u32 %v758, 4
      %v760 = vand.u32 %v758, 15
      %v761 = vsub.s32 0, %v760
      %v762 = vsel %vm756, %v761, %v760
      %vm763 = vcmp.lt.s32.totalorder %v695, 0
      %v764 = vsub.s32 0, %v695
      %v765 = vsel %vm763, %v764, %v695
      %v766 = vshrl.u32 %v765, 4
      %v767 = vand.u32 %v765, 15
      %v768 = vsub.s32 0, %v767
      %v769 = vsel %vm763, %v768, %v767
      %vm770 = vcmp.lt.s32.totalorder %v696, 0
      %v771 = vsub.s32 0, %v696
      %v772 = vsel %vm770, %v771, %v696
      %v773 = vshrl.u32 %v772, 4
      %v774 = vand.u32 %v772, 15
      %v775 = vsub.s32 0, %v774
      %v776 = vsel %vm770, %v775, %v774
      %vm777 = vcmp.lt.s32.totalorder %v697, 0
      %v778 = vsub.s32 0, %v697
      %v779 = vsel %vm777, %v778, %v697
      %v780 = vshrl.u32 %v779, 4
      %v781 = vand.u32 %v779, 15
      %v782 = vsub.s32 0, %v781
      %v783 = vsel %vm777, %v782, %v781
      %vm784 = vcmp.lt.s32.totalorder %v698, 0
      %v785 = vsub.s32 0, %v698
      %v786 = vsel %vm784, %v785, %v698
      %v787 = vshrl.u32 %v786, 4
      %v788 = vand.u32 %v786, 15
      %v789 = vsub.s32 0, %v788
      %v790 = vsel %vm784, %v789, %v788
      %vm791 = vcmp.lt.s32.totalorder %v699, 0
      %v792 = vsub.s32 0, %v699
      %v793 = vsel %vm791, %v792, %v699
      %v794 = vshrl.u32 %v793, 4
      %v795 = vand.u32 %v793, 15
      %v796 = vsub.s32 0, %v795
      %v797 = vsel %vm791, %v796, %v795
      %vm798 = vcmp.lt.s32.totalorder %v700, 0
      %v799 = vsub.s32 0, %v700
      %v800 = vsel %vm798, %v799, %v700
      %v801 = vshrl.u32 %v800, 4
      %v802 = vand.u32 %v800, 15
      %v803 = vsub.s32 0, %v802
      %v804 = vsel %vm798, %v803, %v802
      %vm805 = vcmp.lt.s32.totalorder %v701, 0
      %v806 = vsub.s32 0, %v701
      %v807 = vsel %vm805, %v806, %v701
      %v808 = vshrl.u32 %v807, 4
      %v809 = vand.u32 %v807, 15
      %v810 = vsub.s32 0, %v809
      %v811 = vsel %vm805, %v810, %v809
      %vm812 = vcmp.lt.s32.totalorder %v702, 0
      %v813 = vsub.s32 0, %v702
      %v814 = vsel %vm812, %v813, %v702
      %v815 = vshrl.u32 %v814, 4
      %v816 = vand.u32 %v814, 15
      %v817 = vsub.s32 0, %v816
      %v818 = vsel %vm812, %v817, %v816
      %vm819 = vcmp.lt.s32.totalorder %v703, 0
      %v820 = vsub.s32 0, %v703
      %v821 = vsel %vm819, %v820, %v703
      %v822 = vshrl.u32 %v821, 4
      %v823 = vand.u32 %v821, 15
      %v824 = vsub.s32 0, %v823
      %v825 = vsel %vm819, %v824, %v823
      %vm826 = vcmp.lt.s32.totalorder %v704, 0
      %v827 = vsub.s32 0, %v704
      %v828 = vsel %vm826, %v827, %v704
      %v829 = vshrl.u32 %v828, 4
      %v830 = vand.u32 %v828, 15
      %v831 = vsub.s32 0, %v830
      %v832 = vsel %vm826, %v831, %v830
      %vm833 = vcmp.lt.s32.totalorder %v705, 0
      %v834 = vsub.s32 0, %v705
      %v835 = vsel %vm833, %v834, %v705
      %v836 = vshrl.u32 %v835, 4
      %v837 = vand.u32 %v835, 15
      %v838 = vsub.s32 0, %v837
      %v839 = vsel %vm833, %v838, %v837
      %vm840 = vcmp.lt.s32.totalorder %v706, 0
      %v841 = vsub.s32 0, %v706
      %v842 = vsel %vm840, %v841, %v706
      %v843 = vshrl.u32 %v842, 4
      %v844 = vand.u32 %v842, 15
      %v845 = vsub.s32 0, %v844
      %v846 = vsel %vm840, %v845, %v844
      %vm847 = vcmp.lt.s32.totalorder %v707, 0
      %v848 = vsub.s32 0, %v707
      %v849 = vsel %vm847, %v848, %v707
      %v850 = vshrl.u32 %v849, 4
      %v851 = vand.u32 %v849, 15
      %v852 = vsub.s32 0, %v851
      %v853 = vsel %vm847, %v852, %v851
      %vm854 = vcmp.lt.s32.totalorder %v708, 0
      %v855 = vsub.s32 0, %v708
      %v856 = vsel %vm854, %v855, %v708
      %v857 = vshrl.u32 %v856, 4
      %v858 = vand.u32 %v856, 15
      %v859 = vsub.s32 0, %v858
      %v860 = vsel %vm854, %v859, %v858
      %vm861 = vcmp.lt.s32.totalorder %v709, 0
      %v862 = vsub.s32 0, %v709
      %v863 = vsel %vm861, %v862, %v709
      %v864 = vshrl.u32 %v863, 4
      %v865 = vand.u32 %v863, 15
      %v866 = vsub.s32 0, %v865
      %v867 = vsel %vm861, %v866, %v865
      %vm868 = vcmp.lt.s32.totalorder %v710, 0
      %v869 = vsub.s32 0, %v710
      %v870 = vsel %vm868, %v869, %v710
      %v871 = vshrl.u32 %v870, 4
      %v872 = vand.u32 %v870, 15
      %v873 = vsub.s32 0, %v872
      %v874 = vsel %vm868, %v873, %v872
      %vm875 = vcmp.lt.s32.totalorder %v711, 0
      %v876 = vsub.s32 0, %v711
      %v877 = vsel %vm875, %v876, %v711
      %v878 = vshrl.u32 %v877, 4
      %v879 = vand.u32 %v877, 15
      %v880 = vsub.s32 0, %v879
      %v881 = vsel %vm875, %v880, %v879
      %vm882 = vcmp.lt.s32.totalorder %v712, 0
      %v883 = vsub.s32 0, %v712
      %v884 = vsel %vm882, %v883, %v712
      %v885 = vshrl.u32 %v884, 4
      %v886 = vand.u32 %v884, 15
      %v887 = vsub.s32 0, %v886
      %v888 = vsel %vm882, %v887, %v886
      %vm889 = vcmp.lt.s32.totalorder %v713, 0
      %v890 = vsub.s32 0, %v713
      %v891 = vsel %vm889, %v890, %v713
      %v892 = vshrl.u32 %v891, 4
      %v893 = vand.u32 %v891, 15
      %v894 = vsub.s32 0, %v893
      %v895 = vsel %vm889, %v894, %v893
      %vm896 = vcmp.lt.s32.totalorder %v714, 0
      %v897 = vsub.s32 0, %v714
      %v898 = vsel %vm896, %v897, %v714
      %v899 = vshrl.u32 %v898, 4
      %v900 = vand.u32 %v898, 15
      %v901 = vsub.s32 0, %v900
      %v902 = vsel %vm896, %v901, %v900
      %vm903 = vcmp.lt.s32.totalorder %v715, 0
      %v904 = vsub.s32 0, %v715
      %v905 = vsel %vm903, %v904, %v715
      %v906 = vshrl.u32 %v905, 4
      %v907 = vand.u32 %v905, 15
      %v908 = vsub.s32 0, %v907
      %v909 = vsel %vm903, %v908, %v907
      %vm910 = vcmp.lt.s32.totalorder %v716, 0
      %v911 = vsub.s32 0, %v716
      %v912 = vsel %vm910, %v911, %v716
      %v913 = vshrl.u32 %v912, 4
      %v914 = vand.u32 %v912, 15
      %v915 = vsub.s32 0, %v914
      %v916 = vsel %vm910, %v915, %v914
      %vm917 = vcmp.lt.s32.totalorder %v717, 0
      %v918 = vsub.s32 0, %v717
      %v919 = vsel %vm917, %v918, %v717
      %v920 = vshrl.u32 %v919, 4
      %v921 = vand.u32 %v919, 15
      %v922 = vsub.s32 0, %v921
      %v923 = vsel %vm917, %v922, %v921
      %vm924 = vcmp.lt.s32.totalorder %v718, 0
      %v925 = vsub.s32 0, %v718
      %v926 = vsel %vm924, %v925, %v718
      %v927 = vshrl.u32 %v926, 4
      %v928 = vand.u32 %v926, 15
      %v929 = vsub.s32 0, %v928
      %v930 = vsel %vm924, %v929, %v928
      %vm931 = vcmp.lt.s32.totalorder %v719, 0
      %v932 = vsub.s32 0, %v719
      %v933 = vsel %vm931, %v932, %v719
      %v934 = vshrl.u32 %v933, 4
      %v935 = vand.u32 %v933, 15
      %v936 = vsub.s32 0, %v935
      %v937 = vsel %vm931, %v936, %v935
      %vm938 = vcmp.lt.s32.totalorder %v720, 0
      %v939 = vsub.s32 0, %v720
      %v940 = vsel %vm938, %v939, %v720
      %v941 = vshrl.u32 %v940, 4
      %v942 = vand.u32 %v940, 15
      %v943 = vsub.s32 0, %v942
      %v944 = vsel %vm938, %v943, %v942
      %vm945 = vcmp.ne.s32.totalorder %v727, 0
      %vm946 = vcmp.ne.s32.totalorder %v734, 0
      %vm947 = vcmp.ne.s32.totalorder %v741, 0
      %vm948 = vcmp.ne.s32.totalorder %v748, 0
      %vm949 = vcmp.ne.s32.totalorder %v755, 0
      %vm950 = vcmp.ne.s32.totalorder %v762, 0
      %vm951 = vcmp.ne.s32.totalorder %v769, 0
      %vm952 = vcmp.ne.s32.totalorder %v776, 0
      %vm953 = vcmp.ne.s32.totalorder %v783, 0
      %vm954 = vcmp.ne.s32.totalorder %v790, 0
      %vm955 = vcmp.ne.s32.totalorder %v797, 0
      %vm956 = vcmp.ne.s32.totalorder %v804, 0
      %vm957 = vcmp.ne.s32.totalorder %v811, 0
      %vm958 = vcmp.ne.s32.totalorder %v818, 0
      %vm959 = vcmp.ne.s32.totalorder %v825, 0
      %vm960 = vcmp.ne.s32.totalorder %v832, 0
      %vm961 = vcmp.ne.s32.totalorder %v839, 0
      %vm962 = vcmp.ne.s32.totalorder %v846, 0
      %vm963 = vcmp.ne.s32.totalorder %v853, 0
      %vm964 = vcmp.ne.s32.totalorder %v860, 0
      %vm965 = vcmp.ne.s32.totalorder %v867, 0
      %vm966 = vcmp.ne.s32.totalorder %v874, 0
      %vm967 = vcmp.ne.s32.totalorder %v881, 0
      %vm968 = vcmp.ne.s32.totalorder %v888, 0
      %vm969 = vcmp.ne.s32.totalorder %v895, 0
      %vm970 = vcmp.ne.s32.totalorder %v902, 0
      %vm971 = vcmp.ne.s32.totalorder %v909, 0
      %vm972 = vcmp.ne.s32.totalorder %v916, 0
      %vm973 = vcmp.ne.s32.totalorder %v923, 0
      %vm974 = vcmp.ne.s32.totalorder %v930, 0
      %vm975 = vcmp.ne.s32.totalorder %v937, 0
      %vm976 = vcmp.ne.s32.totalorder %v944, 0
      %vm977 = vcmp.lt.s32.totalorder %v727, 0
      %vm978 = vcmp.lt.s32.totalorder %v734, 0
      %vm979 = vcmp.lt.s32.totalorder %v741, 0
      %vm980 = vcmp.lt.s32.totalorder %v748, 0
      %vm981 = vcmp.lt.s32.totalorder %v755, 0
      %vm982 = vcmp.lt.s32.totalorder %v762, 0
      %vm983 = vcmp.lt.s32.totalorder %v769, 0
      %vm984 = vcmp.lt.s32.totalorder %v776, 0
      %vm985 = vcmp.lt.s32.totalorder %v783, 0
      %vm986 = vcmp.lt.s32.totalorder %v790, 0
      %vm987 = vcmp.lt.s32.totalorder %v797, 0
      %vm988 = vcmp.lt.s32.totalorder %v804, 0
      %vm989 = vcmp.lt.s32.totalorder %v811, 0
      %vm990 = vcmp.lt.s32.totalorder %v818, 0
      %vm991 = vcmp.lt.s32.totalorder %v825, 0
      %vm992 = vcmp.lt.s32.totalorder %v832, 0
      %vm993 = vcmp.lt.s32.totalorder %v839, 0
      %vm994 = vcmp.lt.s32.totalorder %v846, 0
      %vm995 = vcmp.lt.s32.totalorder %v853, 0
      %vm996 = vcmp.lt.s32.totalorder %v860, 0
      %vm997 = vcmp.lt.s32.totalorder %v867, 0
      %vm998 = vcmp.lt.s32.totalorder %v874, 0
      %vm999 = vcmp.lt.s32.totalorder %v881, 0
      %vm1000 = vcmp.lt.s32.totalorder %v888, 0
      %vm1001 = vcmp.lt.s32.totalorder %v895, 0
      %vm1002 = vcmp.lt.s32.totalorder %v902, 0
      %vm1003 = vcmp.lt.s32.totalorder %v909, 0
      %vm1004 = vcmp.lt.s32.totalorder %v916, 0
      %vm1005 = vcmp.lt.s32.totalorder %v923, 0
      %vm1006 = vcmp.lt.s32.totalorder %v930, 0
      %vm1007 = vcmp.lt.s32.totalorder %v937, 0
      %vm1008 = vcmp.lt.s32.totalorder %v944, 0
      %vm1009 = vmand %vm977, %vm945
      %vm1010 = vmand %vm978, %vm946
      %vm1011 = vmand %vm979, %vm947
      %vm1012 = vmand %vm980, %vm948
      %vm1013 = vmand %vm981, %vm949
      %vm1014 = vmand %vm982, %vm950
      %vm1015 = vmand %vm983, %vm951
      %vm1016 = vmand %vm984, %vm952
      %vm1017 = vmand %vm985, %vm953
      %vm1018 = vmand %vm986, %vm954
      %vm1019 = vmand %vm987, %vm955
      %vm1020 = vmand %vm988, %vm956
      %vm1021 = vmand %vm989, %vm957
      %vm1022 = vmand %vm990, %vm958
      %vm1023 = vmand %vm991, %vm959
      %vm1024 = vmand %vm992, %vm960
      %vm1025 = vmand %vm993, %vm961
      %vm1026 = vmand %vm994, %vm962
      %vm1027 = vmand %vm995, %vm963
      %vm1028 = vmand %vm996, %vm964
      %vm1029 = vmand %vm997, %vm965
      %vm1030 = vmand %vm998, %vm966
      %vm1031 = vmand %vm999, %vm967
      %vm1032 = vmand %vm1000, %vm968
      %vm1033 = vmand %vm1001, %vm969
      %vm1034 = vmand %vm1002, %vm970
      %vm1035 = vmand %vm1003, %vm971
      %vm1036 = vmand %vm1004, %vm972
      %vm1037 = vmand %vm1005, %vm973
      %vm1038 = vmand %vm1006, %vm974
      %vm1039 = vmand %vm1007, %vm975
      %vm1040 = vmand %vm1008, %vm976
      %v1041 = vadd.s32 %v727, 16
      %v1042 = vadd.s32 %v734, 16
      %v1043 = vadd.s32 %v741, 16
      %v1044 = vadd.s32 %v748, 16
      %v1045 = vadd.s32 %v755, 16
      %v1046 = vadd.s32 %v762, 16
      %v1047 = vadd.s32 %v769, 16
      %v1048 = vadd.s32 %v776, 16
      %v1049 = vadd.s32 %v783, 16
      %v1050 = vadd.s32 %v790, 16
      %v1051 = vadd.s32 %v797, 16
      %v1052 = vadd.s32 %v804, 16
      %v1053 = vadd.s32 %v811, 16
      %v1054 = vadd.s32 %v818, 16
      %v1055 = vadd.s32 %v825, 16
      %v1056 = vadd.s32 %v832, 16
      %v1057 = vadd.s32 %v839, 16
      %v1058 = vadd.s32 %v846, 16
      %v1059 = vadd.s32 %v853, 16
      %v1060 = vadd.s32 %v860, 16
      %v1061 = vadd.s32 %v867, 16
      %v1062 = vadd.s32 %v874, 16
      %v1063 = vadd.s32 %v881, 16
      %v1064 = vadd.s32 %v888, 16
      %v1065 = vadd.s32 %v895, 16
      %v1066 = vadd.s32 %v902, 16
      %v1067 = vadd.s32 %v909, 16
      %v1068 = vadd.s32 %v916, 16
      %v1069 = vadd.s32 %v923, 16
      %v1070 = vadd.s32 %v930, 16
      %v1071 = vadd.s32 %v937, 16
      %v1072 = vadd.s32 %v944, 16
      %v1073 = vsel %vm1009, %v1041, %v727
      %v1074 = vsel %vm1010, %v1042, %v734
      %v1075 = vsel %vm1011, %v1043, %v741
      %v1076 = vsel %vm1012, %v1044, %v748
      %v1077 = vsel %vm1013, %v1045, %v755
      %v1078 = vsel %vm1014, %v1046, %v762
      %v1079 = vsel %vm1015, %v1047, %v769
      %v1080 = vsel %vm1016, %v1048, %v776
      %v1081 = vsel %vm1017, %v1049, %v783
      %v1082 = vsel %vm1018, %v1050, %v790
      %v1083 = vsel %vm1019, %v1051, %v797
      %v1084 = vsel %vm1020, %v1052, %v804
      %v1085 = vsel %vm1021, %v1053, %v811
      %v1086 = vsel %vm1022, %v1054, %v818
      %v1087 = vsel %vm1023, %v1055, %v825
      %v1088 = vsel %vm1024, %v1056, %v832
      %v1089 = vsel %vm1025, %v1057, %v839
      %v1090 = vsel %vm1026, %v1058, %v846
      %v1091 = vsel %vm1027, %v1059, %v853
      %v1092 = vsel %vm1028, %v1060, %v860
      %v1093 = vsel %vm1029, %v1061, %v867
      %v1094 = vsel %vm1030, %v1062, %v874
      %v1095 = vsel %vm1031, %v1063, %v881
      %v1096 = vsel %vm1032, %v1064, %v888
      %v1097 = vsel %vm1033, %v1065, %v895
      %v1098 = vsel %vm1034, %v1066, %v902
      %v1099 = vsel %vm1035, %v1067, %v909
      %v1100 = vsel %vm1036, %v1068, %v916
      %v1101 = vsel %vm1037, %v1069, %v923
      %v1102 = vsel %vm1038, %v1070, %v930
      %v1103 = vsel %vm1039, %v1071, %v937
      %v1104 = vsel %vm1040, %v1072, %v944
      %vm1105 = vcmp.ge.s32.totalorder %v1073, 1
      %vm1106 = vcmp.ge.s32.totalorder %v1074, 1
      %vm1107 = vcmp.ge.s32.totalorder %v1075, 1
      %vm1108 = vcmp.ge.s32.totalorder %v1076, 1
      %vm1109 = vcmp.ge.s32.totalorder %v1077, 1
      %vm1110 = vcmp.ge.s32.totalorder %v1078, 1
      %vm1111 = vcmp.ge.s32.totalorder %v1079, 1
      %vm1112 = vcmp.ge.s32.totalorder %v1080, 1
      %vm1113 = vcmp.ge.s32.totalorder %v1081, 1
      %vm1114 = vcmp.ge.s32.totalorder %v1082, 1
      %vm1115 = vcmp.ge.s32.totalorder %v1083, 1
      %vm1116 = vcmp.ge.s32.totalorder %v1084, 1
      %vm1117 = vcmp.ge.s32.totalorder %v1085, 1
      %vm1118 = vcmp.ge.s32.totalorder %v1086, 1
      %vm1119 = vcmp.ge.s32.totalorder %v1087, 1
      %vm1120 = vcmp.ge.s32.totalorder %v1088, 1
      %vm1121 = vcmp.ge.s32.totalorder %v1089, 1
      %vm1122 = vcmp.ge.s32.totalorder %v1090, 1
      %vm1123 = vcmp.ge.s32.totalorder %v1091, 1
      %vm1124 = vcmp.ge.s32.totalorder %v1092, 1
      %vm1125 = vcmp.ge.s32.totalorder %v1093, 1
      %vm1126 = vcmp.ge.s32.totalorder %v1094, 1
      %vm1127 = vcmp.ge.s32.totalorder %v1095, 1
      %vm1128 = vcmp.ge.s32.totalorder %v1096, 1
      %vm1129 = vcmp.ge.s32.totalorder %v1097, 1
      %vm1130 = vcmp.ge.s32.totalorder %v1098, 1
      %vm1131 = vcmp.ge.s32.totalorder %v1099, 1
      %vm1132 = vcmp.ge.s32.totalorder %v1100, 1
      %vm1133 = vcmp.ge.s32.totalorder %v1101, 1
      %vm1134 = vcmp.ge.s32.totalorder %v1102, 1
      %vm1135 = vcmp.ge.s32.totalorder %v1103, 1
      %vm1136 = vcmp.ge.s32.totalorder %v1104, 1
      %v1137 = vrot.slane %v640, 7
      %v1138 = vrot.slane %v641, 7
      %v1139 = vrot.slane %v642, 7
      %v1140 = vrot.slane %v643, 7
      %v1141 = vrot.slane %v644, 7
      %v1142 = vrot.slane %v645, 7
      %v1143 = vrot.slane %v646, 7
      %v1144 = vrot.slane %v647, 7
      %v1145 = vrot.slane %v648, 7
      %v1146 = vrot.slane %v649, 7
      %v1147 = vrot.slane %v650, 7
      %v1148 = vrot.slane %v651, 7
      %v1149 = vrot.slane %v652, 7
      %v1150 = vrot.slane %v653, 7
      %v1151 = vrot.slane %v654, 7
      %v1152 = vrot.slane %v655, 7
      %v1153 = vrot.slane %v656, 7
      %v1154 = vrot.slane %v657, 7
      %v1155 = vrot.slane %v658, 7
      %v1156 = vrot.slane %v659, 7
      %v1157 = vrot.slane %v660, 7
      %v1158 = vrot.slane %v661, 7
      %v1159 = vrot.slane %v662, 7
      %v1160 = vrot.slane %v663, 7
      %v1161 = vrot.slane %v664, 7
      %v1162 = vrot.slane %v665, 7
      %v1163 = vrot.slane %v666, 7
      %v1164 = vrot.slane %v667, 7
      %v1165 = vrot.slane %v668, 7
      %v1166 = vrot.slane %v669, 7
      %v1167 = vrot.slane %v670, 7
      %v1168 = vrot.slane %v671, 7
      %vm1169 = vcmp.lt.s32.totalorder %v689, 1
      %v1170 = vsel %vm1169, %v1167, %v1168
      %v1171 = vsel %vm1169, %v1166, %v1167
      %v1172 = vsel %vm1169, %v1165, %v1166
      %v1173 = vsel %vm1169, %v1164, %v1165
      %v1174 = vsel %vm1169, %v1163, %v1164
      %v1175 = vsel %vm1169, %v1162, %v1163
      %v1176 = vsel %vm1169, %v1161, %v1162
      %v1177 = vsel %vm1169, %v1160, %v1161
      %v1178 = vsel %vm1169, %v1159, %v1160
      %v1179 = vsel %vm1169, %v1158, %v1159
      %v1180 = vsel %vm1169, %v1157, %v1158
      %v1181 = vsel %vm1169, %v1156, %v1157
      %v1182 = vsel %vm1169, %v1155, %v1156
      %v1183 = vsel %vm1169, %v1154, %v1155
      %v1184 = vsel %vm1169, %v1153, %v1154
      %v1185 = vsel %vm1169, %v1152, %v1153
      %v1186 = vsel %vm1169, %v1151, %v1152
      %v1187 = vsel %vm1169, %v1150, %v1151
      %v1188 = vsel %vm1169, %v1149, %v1150
      %v1189 = vsel %vm1169, %v1148, %v1149
      %v1190 = vsel %vm1169, %v1147, %v1148
      %v1191 = vsel %vm1169, %v1146, %v1147
      %v1192 = vsel %vm1169, %v1145, %v1146
      %v1193 = vsel %vm1169, %v1144, %v1145
      %v1194 = vsel %vm1169, %v1143, %v1144
      %v1195 = vsel %vm1169, %v1142, %v1143
      %v1196 = vsel %vm1169, %v1141, %v1142
      %v1197 = vsel %vm1169, %v1140, %v1141
      %v1198 = vsel %vm1169, %v1139, %v1140
      %v1199 = vsel %vm1169, %v1138, %v1139
      %v1200 = vsel %vm1169, %v1137, %v1138
      %v1201 = vsel %vm1169, %v1168, %v1137
      %v1202 = vsel %vm1105, 1, 0
      %v1203 = vsel %vm1106, 1, 0
      %v1204 = vsel %vm1107, 1, 0
      %v1205 = vsel %vm1108, 1, 0
      %v1206 = vsel %vm1109, 1, 0
      %v1207 = vsel %vm1110, 1, 0
      %v1208 = vsel %vm1111, 1, 0
      %v1209 = vsel %vm1112, 1, 0
      %v1210 = vsel %vm1113, 1, 0
      %v1211 = vsel %vm1114, 1, 0
      %v1212 = vsel %vm1115, 1, 0
      %v1213 = vsel %vm1116, 1, 0
      %v1214 = vsel %vm1117, 1, 0
      %v1215 = vsel %vm1118, 1, 0
      %v1216 = vsel %vm1119, 1, 0
      %v1217 = vsel %vm1120, 1, 0
      %v1218 = vsel %vm1121, 1, 0
      %v1219 = vsel %vm1122, 1, 0
      %v1220 = vsel %vm1123, 1, 0
      %v1221 = vsel %vm1124, 1, 0
      %v1222 = vsel %vm1125, 1, 0
      %v1223 = vsel %vm1126, 1, 0
      %v1224 = vsel %vm1127, 1, 0
      %v1225 = vsel %vm1128, 1, 0
      %v1226 = vsel %vm1129, 1, 0
      %v1227 = vsel %vm1130, 1, 0
      %v1228 = vsel %vm1131, 1, 0
      %v1229 = vsel %vm1132, 1, 0
      %v1230 = vsel %vm1133, 1, 0
      %v1231 = vsel %vm1134, 1, 0
      %v1232 = vsel %vm1135, 1, 0
      %v1233 = vsel %vm1136, 1, 0
      %vm1234 = vcmp.eq.s32.totalorder %v1202, 1
      %vm1235 = vcmp.eq.s32.totalorder %v1203, 1
      %vm1236 = vcmp.eq.s32.totalorder %v1204, 1
      %vm1237 = vcmp.eq.s32.totalorder %v1205, 1
      %vm1238 = vcmp.eq.s32.totalorder %v1206, 1
      %vm1239 = vcmp.eq.s32.totalorder %v1207, 1
      %vm1240 = vcmp.eq.s32.totalorder %v1208, 1
      %vm1241 = vcmp.eq.s32.totalorder %v1209, 1
      %vm1242 = vcmp.eq.s32.totalorder %v1210, 1
      %vm1243 = vcmp.eq.s32.totalorder %v1211, 1
      %vm1244 = vcmp.eq.s32.totalorder %v1212, 1
      %vm1245 = vcmp.eq.s32.totalorder %v1213, 1
      %vm1246 = vcmp.eq.s32.totalorder %v1214, 1
      %vm1247 = vcmp.eq.s32.totalorder %v1215, 1
      %vm1248 = vcmp.eq.s32.totalorder %v1216, 1
      %vm1249 = vcmp.eq.s32.totalorder %v1217, 1
      %vm1250 = vcmp.eq.s32.totalorder %v1218, 1
      %vm1251 = vcmp.eq.s32.totalorder %v1219, 1
      %vm1252 = vcmp.eq.s32.totalorder %v1220, 1
      %vm1253 = vcmp.eq.s32.totalorder %v1221, 1
      %vm1254 = vcmp.eq.s32.totalorder %v1222, 1
      %vm1255 = vcmp.eq.s32.totalorder %v1223, 1
      %vm1256 = vcmp.eq.s32.totalorder %v1224, 1
      %vm1257 = vcmp.eq.s32.totalorder %v1225, 1
      %vm1258 = vcmp.eq.s32.totalorder %v1226, 1
      %vm1259 = vcmp.eq.s32.totalorder %v1227, 1
      %vm1260 = vcmp.eq.s32.totalorder %v1228, 1
      %vm1261 = vcmp.eq.s32.totalorder %v1229, 1
      %vm1262 = vcmp.eq.s32.totalorder %v1230, 1
      %vm1263 = vcmp.eq.s32.totalorder %v1231, 1
      %vm1264 = vcmp.eq.s32.totalorder %v1232, 1
      %vm1265 = vcmp.eq.s32.totalorder %v1233, 1
      %v1266 = vsel %vm1234, %v1201, 0.0
      %v1267 = vsel %vm1235, %v1200, 0.0
      %v1268 = vsel %vm1236, %v1199, 0.0
      %v1269 = vsel %vm1237, %v1198, 0.0
      %v1270 = vsel %vm1238, %v1197, 0.0
      %v1271 = vsel %vm1239, %v1196, 0.0
      %v1272 = vsel %vm1240, %v1195, 0.0
      %v1273 = vsel %vm1241, %v1194, 0.0
      %v1274 = vsel %vm1242, %v1193, 0.0
      %v1275 = vsel %vm1243, %v1192, 0.0
      %v1276 = vsel %vm1244, %v1191, 0.0
      %v1277 = vsel %vm1245, %v1190, 0.0
      %v1278 = vsel %vm1246, %v1189, 0.0
      %v1279 = vsel %vm1247, %v1188, 0.0
      %v1280 = vsel %vm1248, %v1187, 0.0
      %v1281 = vsel %vm1249, %v1186, 0.0
      %v1282 = vsel %vm1250, %v1185, 0.0
      %v1283 = vsel %vm1251, %v1184, 0.0
      %v1284 = vsel %vm1252, %v1183, 0.0
      %v1285 = vsel %vm1253, %v1182, 0.0
      %v1286 = vsel %vm1254, %v1181, 0.0
      %v1287 = vsel %vm1255, %v1180, 0.0
      %v1288 = vsel %vm1256, %v1179, 0.0
      %v1289 = vsel %vm1257, %v1178, 0.0
      %v1290 = vsel %vm1258, %v1177, 0.0
      %v1291 = vsel %vm1259, %v1176, 0.0
      %v1292 = vsel %vm1260, %v1175, 0.0
      %v1293 = vsel %vm1261, %v1174, 0.0
      %v1294 = vsel %vm1262, %v1173, 0.0
      %v1295 = vsel %vm1263, %v1172, 0.0
      %v1296 = vsel %vm1264, %v1171, 0.0
      %v1297 = vsel %vm1265, %v1170, 0.0
      %v1298 = vpack.c.bf16 %v1267, %v1266
      %v1299 = vpack.c.bf16 %v1269, %v1268
      %v1300 = vpack.c.bf16 %v1271, %v1270
      %v1301 = vpack.c.bf16 %v1273, %v1272
      %v1302 = vpack.c.bf16 %v1275, %v1274
      %v1303 = vpack.c.bf16 %v1277, %v1276
      %v1304 = vpack.c.bf16 %v1279, %v1278
      %v1305 = vpack.c.bf16 %v1281, %v1280
      %v1306 = vpack.c.bf16 %v1283, %v1282
      %v1307 = vpack.c.bf16 %v1285, %v1284
      %v1308 = vpack.c.bf16 %v1287, %v1286
      %v1309 = vpack.c.bf16 %v1289, %v1288
      %v1310 = vpack.c.bf16 %v1291, %v1290
      %v1311 = vpack.c.bf16 %v1293, %v1292
      %v1312 = vpack.c.bf16 %v1295, %v1294
      %v1313 = vpack.c.bf16 %v1297, %v1296
      %vm1314 = vcmp.lt.s32.totalorder %v1073, 15
      %vm1315 = vcmp.lt.s32.totalorder %v1074, 15
      %vm1316 = vcmp.lt.s32.totalorder %v1075, 15
      %vm1317 = vcmp.lt.s32.totalorder %v1076, 15
      %vm1318 = vcmp.lt.s32.totalorder %v1077, 15
      %vm1319 = vcmp.lt.s32.totalorder %v1078, 15
      %vm1320 = vcmp.lt.s32.totalorder %v1079, 15
      %vm1321 = vcmp.lt.s32.totalorder %v1080, 15
      %vm1322 = vcmp.lt.s32.totalorder %v1081, 15
      %vm1323 = vcmp.lt.s32.totalorder %v1082, 15
      %vm1324 = vcmp.lt.s32.totalorder %v1083, 15
      %vm1325 = vcmp.lt.s32.totalorder %v1084, 15
      %vm1326 = vcmp.lt.s32.totalorder %v1085, 15
      %vm1327 = vcmp.lt.s32.totalorder %v1086, 15
      %vm1328 = vcmp.lt.s32.totalorder %v1087, 15
      %vm1329 = vcmp.lt.s32.totalorder %v1088, 15
      %vm1330 = vcmp.lt.s32.totalorder %v1089, 15
      %vm1331 = vcmp.lt.s32.totalorder %v1090, 15
      %vm1332 = vcmp.lt.s32.totalorder %v1091, 15
      %vm1333 = vcmp.lt.s32.totalorder %v1092, 15
      %vm1334 = vcmp.lt.s32.totalorder %v1093, 15
      %vm1335 = vcmp.lt.s32.totalorder %v1094, 15
      %vm1336 = vcmp.lt.s32.totalorder %v1095, 15
      %vm1337 = vcmp.lt.s32.totalorder %v1096, 15
      %vm1338 = vcmp.lt.s32.totalorder %v1097, 15
      %vm1339 = vcmp.lt.s32.totalorder %v1098, 15
      %vm1340 = vcmp.lt.s32.totalorder %v1099, 15
      %vm1341 = vcmp.lt.s32.totalorder %v1100, 15
      %vm1342 = vcmp.lt.s32.totalorder %v1101, 15
      %vm1343 = vcmp.lt.s32.totalorder %v1102, 15
      %vm1344 = vcmp.lt.s32.totalorder %v1103, 15
      %vm1345 = vcmp.lt.s32.totalorder %v1104, 15
      %v1346 = vrot.slane %v640, 1
      %v1347 = vrot.slane %v641, 1
      %v1348 = vrot.slane %v642, 1
      %v1349 = vrot.slane %v643, 1
      %v1350 = vrot.slane %v644, 1
      %v1351 = vrot.slane %v645, 1
      %v1352 = vrot.slane %v646, 1
      %v1353 = vrot.slane %v647, 1
      %v1354 = vrot.slane %v648, 1
      %v1355 = vrot.slane %v649, 1
      %v1356 = vrot.slane %v650, 1
      %v1357 = vrot.slane %v651, 1
      %v1358 = vrot.slane %v652, 1
      %v1359 = vrot.slane %v653, 1
      %v1360 = vrot.slane %v654, 1
      %v1361 = vrot.slane %v655, 1
      %v1362 = vrot.slane %v656, 1
      %v1363 = vrot.slane %v657, 1
      %v1364 = vrot.slane %v658, 1
      %v1365 = vrot.slane %v659, 1
      %v1366 = vrot.slane %v660, 1
      %v1367 = vrot.slane %v661, 1
      %v1368 = vrot.slane %v662, 1
      %v1369 = vrot.slane %v663, 1
      %v1370 = vrot.slane %v664, 1
      %v1371 = vrot.slane %v665, 1
      %v1372 = vrot.slane %v666, 1
      %v1373 = vrot.slane %v667, 1
      %v1374 = vrot.slane %v668, 1
      %v1375 = vrot.slane %v669, 1
      %v1376 = vrot.slane %v670, 1
      %v1377 = vrot.slane %v671, 1
      %vm1378 = vcmp.lt.s32.totalorder %v689, 7
      %v1379 = vsel %vm1378, %v1376, %v1377
      %v1380 = vsel %vm1378, %v1375, %v1376
      %v1381 = vsel %vm1378, %v1374, %v1375
      %v1382 = vsel %vm1378, %v1373, %v1374
      %v1383 = vsel %vm1378, %v1372, %v1373
      %v1384 = vsel %vm1378, %v1371, %v1372
      %v1385 = vsel %vm1378, %v1370, %v1371
      %v1386 = vsel %vm1378, %v1369, %v1370
      %v1387 = vsel %vm1378, %v1368, %v1369
      %v1388 = vsel %vm1378, %v1367, %v1368
      %v1389 = vsel %vm1378, %v1366, %v1367
      %v1390 = vsel %vm1378, %v1365, %v1366
      %v1391 = vsel %vm1378, %v1364, %v1365
      %v1392 = vsel %vm1378, %v1363, %v1364
      %v1393 = vsel %vm1378, %v1362, %v1363
      %v1394 = vsel %vm1378, %v1361, %v1362
      %v1395 = vsel %vm1378, %v1360, %v1361
      %v1396 = vsel %vm1378, %v1359, %v1360
      %v1397 = vsel %vm1378, %v1358, %v1359
      %v1398 = vsel %vm1378, %v1357, %v1358
      %v1399 = vsel %vm1378, %v1356, %v1357
      %v1400 = vsel %vm1378, %v1355, %v1356
      %v1401 = vsel %vm1378, %v1354, %v1355
      %v1402 = vsel %vm1378, %v1353, %v1354
      %v1403 = vsel %vm1378, %v1352, %v1353
      %v1404 = vsel %vm1378, %v1351, %v1352
      %v1405 = vsel %vm1378, %v1350, %v1351
      %v1406 = vsel %vm1378, %v1349, %v1350
      %v1407 = vsel %vm1378, %v1348, %v1349
      %v1408 = vsel %vm1378, %v1347, %v1348
      %v1409 = vsel %vm1378, %v1346, %v1347
      %v1410 = vsel %vm1378, %v1377, %v1346
      %v1411 = vsel %vm1314, 1, 0
      %v1412 = vsel %vm1315, 1, 0
      %v1413 = vsel %vm1316, 1, 0
      %v1414 = vsel %vm1317, 1, 0
      %v1415 = vsel %vm1318, 1, 0
      %v1416 = vsel %vm1319, 1, 0
      %v1417 = vsel %vm1320, 1, 0
      %v1418 = vsel %vm1321, 1, 0
      %v1419 = vsel %vm1322, 1, 0
      %v1420 = vsel %vm1323, 1, 0
      %v1421 = vsel %vm1324, 1, 0
      %v1422 = vsel %vm1325, 1, 0
      %v1423 = vsel %vm1326, 1, 0
      %v1424 = vsel %vm1327, 1, 0
      %v1425 = vsel %vm1328, 1, 0
      %v1426 = vsel %vm1329, 1, 0
      %v1427 = vsel %vm1330, 1, 0
      %v1428 = vsel %vm1331, 1, 0
      %v1429 = vsel %vm1332, 1, 0
      %v1430 = vsel %vm1333, 1, 0
      %v1431 = vsel %vm1334, 1, 0
      %v1432 = vsel %vm1335, 1, 0
      %v1433 = vsel %vm1336, 1, 0
      %v1434 = vsel %vm1337, 1, 0
      %v1435 = vsel %vm1338, 1, 0
      %v1436 = vsel %vm1339, 1, 0
      %v1437 = vsel %vm1340, 1, 0
      %v1438 = vsel %vm1341, 1, 0
      %v1439 = vsel %vm1342, 1, 0
      %v1440 = vsel %vm1343, 1, 0
      %v1441 = vsel %vm1344, 1, 0
      %v1442 = vsel %vm1345, 1, 0
      %vm1443 = vcmp.eq.s32.totalorder %v1411, 1
      %vm1444 = vcmp.eq.s32.totalorder %v1412, 1
      %vm1445 = vcmp.eq.s32.totalorder %v1413, 1
      %vm1446 = vcmp.eq.s32.totalorder %v1414, 1
      %vm1447 = vcmp.eq.s32.totalorder %v1415, 1
      %vm1448 = vcmp.eq.s32.totalorder %v1416, 1
      %vm1449 = vcmp.eq.s32.totalorder %v1417, 1
      %vm1450 = vcmp.eq.s32.totalorder %v1418, 1
      %vm1451 = vcmp.eq.s32.totalorder %v1419, 1
      %vm1452 = vcmp.eq.s32.totalorder %v1420, 1
      %vm1453 = vcmp.eq.s32.totalorder %v1421, 1
      %vm1454 = vcmp.eq.s32.totalorder %v1422, 1
      %vm1455 = vcmp.eq.s32.totalorder %v1423, 1
      %vm1456 = vcmp.eq.s32.totalorder %v1424, 1
      %vm1457 = vcmp.eq.s32.totalorder %v1425, 1
      %vm1458 = vcmp.eq.s32.totalorder %v1426, 1
      %vm1459 = vcmp.eq.s32.totalorder %v1427, 1
      %vm1460 = vcmp.eq.s32.totalorder %v1428, 1
      %vm1461 = vcmp.eq.s32.totalorder %v1429, 1
      %vm1462 = vcmp.eq.s32.totalorder %v1430, 1
      %vm1463 = vcmp.eq.s32.totalorder %v1431, 1
      %vm1464 = vcmp.eq.s32.totalorder %v1432, 1
      %vm1465 = vcmp.eq.s32.totalorder %v1433, 1
      %vm1466 = vcmp.eq.s32.totalorder %v1434, 1
      %vm1467 = vcmp.eq.s32.totalorder %v1435, 1
      %vm1468 = vcmp.eq.s32.totalorder %v1436, 1
      %vm1469 = vcmp.eq.s32.totalorder %v1437, 1
      %vm1470 = vcmp.eq.s32.totalorder %v1438, 1
      %vm1471 = vcmp.eq.s32.totalorder %v1439, 1
      %vm1472 = vcmp.eq.s32.totalorder %v1440, 1
      %vm1473 = vcmp.eq.s32.totalorder %v1441, 1
      %vm1474 = vcmp.eq.s32.totalorder %v1442, 1
      %v1475 = vsel %vm1443, %v1409, 0.0
      %v1476 = vsel %vm1444, %v1408, 0.0
      %v1477 = vsel %vm1445, %v1407, 0.0
      %v1478 = vsel %vm1446, %v1406, 0.0
      %v1479 = vsel %vm1447, %v1405, 0.0
      %v1480 = vsel %vm1448, %v1404, 0.0
      %v1481 = vsel %vm1449, %v1403, 0.0
      %v1482 = vsel %vm1450, %v1402, 0.0
      %v1483 = vsel %vm1451, %v1401, 0.0
      %v1484 = vsel %vm1452, %v1400, 0.0
      %v1485 = vsel %vm1453, %v1399, 0.0
      %v1486 = vsel %vm1454, %v1398, 0.0
      %v1487 = vsel %vm1455, %v1397, 0.0
      %v1488 = vsel %vm1456, %v1396, 0.0
      %v1489 = vsel %vm1457, %v1395, 0.0
      %v1490 = vsel %vm1458, %v1394, 0.0
      %v1491 = vsel %vm1459, %v1393, 0.0
      %v1492 = vsel %vm1460, %v1392, 0.0
      %v1493 = vsel %vm1461, %v1391, 0.0
      %v1494 = vsel %vm1462, %v1390, 0.0
      %v1495 = vsel %vm1463, %v1389, 0.0
      %v1496 = vsel %vm1464, %v1388, 0.0
      %v1497 = vsel %vm1465, %v1387, 0.0
      %v1498 = vsel %vm1466, %v1386, 0.0
      %v1499 = vsel %vm1467, %v1385, 0.0
      %v1500 = vsel %vm1468, %v1384, 0.0
      %v1501 = vsel %vm1469, %v1383, 0.0
      %v1502 = vsel %vm1470, %v1382, 0.0
      %v1503 = vsel %vm1471, %v1381, 0.0
      %v1504 = vsel %vm1472, %v1380, 0.0
      %v1505 = vsel %vm1473, %v1379, 0.0
      %v1506 = vsel %vm1474, %v1410, 0.0
      %v1507 = vpack.c.bf16 %v1476, %v1475
      %v1508 = vpack.c.bf16 %v1478, %v1477
      %v1509 = vpack.c.bf16 %v1480, %v1479
      %v1510 = vpack.c.bf16 %v1482, %v1481
      %v1511 = vpack.c.bf16 %v1484, %v1483
      %v1512 = vpack.c.bf16 %v1486, %v1485
      %v1513 = vpack.c.bf16 %v1488, %v1487
      %v1514 = vpack.c.bf16 %v1490, %v1489
      %v1515 = vpack.c.bf16 %v1492, %v1491
      %v1516 = vpack.c.bf16 %v1494, %v1493
      %v1517 = vpack.c.bf16 %v1496, %v1495
      %v1518 = vpack.c.bf16 %v1498, %v1497
      %v1519 = vpack.c.bf16 %v1500, %v1499
      %v1520 = vpack.c.bf16 %v1502, %v1501
      %v1521 = vpack.c.bf16 %v1504, %v1503
      %v1522 = vpack.c.bf16 %v1506, %v1505
      %1523 = vst [vmem:[#allocation2] sm:$0xff] 0
      %1524 = vst [vmem:[#allocation2 + $0x8] sm:$0xff] 0
      %1525 = vst [vmem:[#allocation2 + $0x10] sm:$0xff] 0
      %1526 = vst [vmem:[#allocation2 + $0x198] sm:$0xff] 0
      %1527 = vst [vmem:[#allocation2 + $0x1a0] sm:$0xff] 0
      %1528 = vst [vmem:[#allocation2 + $0x1a8] sm:$0xff] 0
      %1529 = vst [vmem:[#allocation2 + $0x18] sm:$0xff] %v1298
      %1530 = vst [vmem:[#allocation2 + $0x30] sm:$0xff] %v1299
      %1531 = vst [vmem:[#allocation2 + $0x48] sm:$0xff] %v1300
      %1532 = vst [vmem:[#allocation2 + $0x60] sm:$0xff] %v1301
      %1533 = vst [vmem:[#allocation2 + $0x78] sm:$0xff] %v1302
      %1534 = vst [vmem:[#allocation2 + $0x90] sm:$0xff] %v1303
      %1535 = vst [vmem:[#allocation2 + $0xa8] sm:$0xff] %v1304
      %1536 = vst [vmem:[#allocation2 + $0xc0] sm:$0xff] %v1305
      %1537 = vst [vmem:[#allocation2 + $0xd8] sm:$0xff] %v1306
      %1538 = vst [vmem:[#allocation2 + $0xf0] sm:$0xff] %v1307
      %1539 = vst [vmem:[#allocation2 + $0x108] sm:$0xff] %v1308
      %1540 = vst [vmem:[#allocation2 + $0x120] sm:$0xff] %v1309
      %1541 = vst [vmem:[#allocation2 + $0x138] sm:$0xff] %v1310
      %1542 = vst [vmem:[#allocation2 + $0x150] sm:$0xff] %v1311
      %1543 = vst [vmem:[#allocation2 + $0x168] sm:$0xff] %v1312
      %1544 = vst [vmem:[#allocation2 + $0x180] sm:$0xff] %v1313
      %1545 = vst [vmem:[#allocation2 + $0x20] sm:$0xff] %v672
      %1546 = vst [vmem:[#allocation2 + $0x38] sm:$0xff] %v673
      %1547 = vst [vmem:[#allocation2 + $0x50] sm:$0xff] %v674
      %1548 = vst [vmem:[#allocation2 + $0x68] sm:$0xff] %v675
      %1549 = vst [vmem:[#allocation2 + $0x80] sm:$0xff] %v676
      %1550 = vst [vmem:[#allocation2 + $0x98] sm:$0xff] %v677
      %1551 = vst [vmem:[#allocation2 + $0xb0] sm:$0xff] %v678
      %1552 = vst [vmem:[#allocation2 + $0xc8] sm:$0xff] %v679
      %1553 = vst [vmem:[#allocation2 + $0xe0] sm:$0xff] %v680
      %1554 = vst [vmem:[#allocation2 + $0xf8] sm:$0xff] %v681
      %1555 = vst [vmem:[#allocation2 + $0x110] sm:$0xff] %v682
      %1556 = vst [vmem:[#allocation2 + $0x128] sm:$0xff] %v683
      %1557 = vst [vmem:[#allocation2 + $0x140] sm:$0xff] %v684
      %1558 = vst [vmem:[#allocation2 + $0x158] sm:$0xff] %v685
      %1559 = vst [vmem:[#allocation2 + $0x170] sm:$0xff] %v686
      %1560 = vst [vmem:[#allocation2 + $0x188] sm:$0xff] %v687
      %1561 = vst [vmem:[#allocation2 + $0x28] sm:$0xff] %v1507
      %1562 = vst [vmem:[#allocation2 + $0x40] sm:$0xff] %v1508
      %1563 = vst [vmem:[#allocation2 + $0x58] sm:$0xff] %v1509
      %1564 = vst [vmem:[#allocation2 + $0x70] sm:$0xff] %v1510
      %1565 = vst [vmem:[#allocation2 + $0x88] sm:$0xff] %v1511
      %1566 = vst [vmem:[#allocation2 + $0xa0] sm:$0xff] %v1512
      %1567 = vst [vmem:[#allocation2 + $0xb8] sm:$0xff] %v1513
      %1568 = vst [vmem:[#allocation2 + $0xd0] sm:$0xff] %v1514
      %1569 = vst [vmem:[#allocation2 + $0xe8] sm:$0xff] %v1515
      %1570 = vst [vmem:[#allocation2 + $0x100] sm:$0xff] %v1516
      %1571 = vst [vmem:[#allocation2 + $0x118] sm:$0xff] %v1517
      %1572 = vst [vmem:[#allocation2 + $0x130] sm:$0xff] %v1518
      %1573 = vst [vmem:[#allocation2 + $0x148] sm:$0xff] %v1519
      %1574 = vst [vmem:[#allocation2 + $0x160] sm:$0xff] %v1520
      %1575 = vst [vmem:[#allocation2 + $0x178] sm:$0xff] %v1521
      %1576 = vst [vmem:[#allocation2 + $0x190] sm:$0xff] %v1522
      %v1577 = vld [vmem:[#allocation2] sm:$0xff]
      %v1578 = vld [vmem:[#allocation2 + $0x8] sm:$0xff]
      %v1579 = vld [vmem:[#allocation2 + $0x10] sm:$0xff]
      %v1580 = vld [vmem:[#allocation2 + $0x18] sm:$0xff]
      %v1581 = vld [vmem:[#allocation2 + $0x20] sm:$0xff]
      %v1582 = vld [vmem:[#allocation2 + $0x28] sm:$0xff]
      %v1583 = vld [vmem:[#allocation2 + $0x30] sm:$0xff]
      %v1584 = vld [vmem:[#allocation2 + $0x38] sm:$0xff]
      %v1585 = vld [vmem:[#allocation2 + $0x40] sm:$0xff]
      %v1586 = vld [vmem:[#allocation2 + $0x48] sm:$0xff]
      %v1587 = vld [vmem:[#allocation2 + $0x50] sm:$0xff]
      %v1588 = vld [vmem:[#allocation2 + $0x58] sm:$0xff]
      %v1589 = vld [vmem:[#allocation2 + $0x60] sm:$0xff]
      %v1590 = vld [vmem:[#allocation2 + $0x68] sm:$0xff]
      %v1591 = vld [vmem:[#allocation2 + $0x70] sm:$0xff]
      %v1592 = vld [vmem:[#allocation2 + $0x78] sm:$0xff]
      %v1593 = vld [vmem:[#allocation2 + $0x80] sm:$0xff]
      %v1594 = vld [vmem:[#allocation2 + $0x88] sm:$0xff]
      %v1595 = vld [vmem:[#allocation2 + $0x90] sm:$0xff]
      %v1596 = vld [vmem:[#allocation2 + $0x98] sm:$0xff]
      %v1597 = vld [vmem:[#allocation2 + $0xa0] sm:$0xff]
      %v1598 = vld [vmem:[#allocation2 + $0xa8] sm:$0xff]
      %v1599 = vld [vmem:[#allocation2 + $0xb0] sm:$0xff]
      %v1600 = vld [vmem:[#allocation2 + $0xb8] sm:$0xff]
      %v1601 = vld [vmem:[#allocation2 + $0xc0] sm:$0xff]
      %v1602 = vld [vmem:[#allocation2 + $0xc8] sm:$0xff]
      %v1603 = vld [vmem:[#allocation2 + $0xd0] sm:$0xff]
      %v1604 = vld [vmem:[#allocation2 + $0xd8] sm:$0xff]
      %v1605 = vld [vmem:[#allocation2 + $0xe0] sm:$0xff]
      %v1606 = vld [vmem:[#allocation2 + $0xe8] sm:$0xff]
      %v1607 = vld [vmem:[#allocation2 + $0xf0] sm:$0xff]
      %v1608 = vld [vmem:[#allocation2 + $0xf8] sm:$0xff]
      %v1609 = vld [vmem:[#allocation2 + $0x100] sm:$0xff]
      %v1610 = vld [vmem:[#allocation2 + $0x108] sm:$0xff]
      %v1611 = vld [vmem:[#allocation2 + $0x110] sm:$0xff]
      %v1612 = vld [vmem:[#allocation2 + $0x118] sm:$0xff]
      %v1613 = vld [vmem:[#allocation2 + $0x120] sm:$0xff]
      %v1614 = vld [vmem:[#allocation2 + $0x128] sm:$0xff]
      %v1615 = vld [vmem:[#allocation2 + $0x130] sm:$0xff]
      %v1616 = vld [vmem:[#allocation2 + $0x138] sm:$0xff]
      %v1617 = vld [vmem:[#allocation2 + $0x140] sm:$0xff]
      %v1618 = vld [vmem:[#allocation2 + $0x148] sm:$0xff]
      %v1619 = vld [vmem:[#allocation2 + $0x150] sm:$0xff]
      %v1620 = vld [vmem:[#allocation2 + $0x158] sm:$0xff]
      %v1621 = vld [vmem:[#allocation2 + $0x160] sm:$0xff]
      %v1622 = vld [vmem:[#allocation2 + $0x168] sm:$0xff]
      %v1623 = vld [vmem:[#allocation2 + $0x170] sm:$0xff]
      %v1624 = vld [vmem:[#allocation2 + $0x178] sm:$0xff]
      %v1625 = vld [vmem:[%s3] sm:$0xf]
      %v1626 = vld [vmem:[%s3 + $0x4] sm:$0xf]
      %v1627 = vld [vmem:[%s3 + $0x8] sm:$0xf]
      %v1628 = vld [vmem:[%s3 + $0xc] sm:$0xf]
      %v1629 = vld [vmem:[%s3 + $0x10] sm:$0xf]
      %v1630 = vld [vmem:[%s3 + $0x14] sm:$0xf]
      %v1631 = vld [vmem:[%s3 + $0x18] sm:$0xf]
      %v1632 = vld [vmem:[%s3 + $0x1c] sm:$0xf]
      %v1633 = vld [vmem:[%s3 + $0x20] sm:$0xf]
      %v1634 = vld [vmem:[%s3 + $0x24] sm:$0xf]
      %v1635 = vld [vmem:[%s3 + $0x28] sm:$0xf]
      %v1636 = vld [vmem:[%s3 + $0x2c] sm:$0xf]
      %v1637 = vld [vmem:[%s3 + $0x30] sm:$0xf]
      %v1638 = vld [vmem:[%s3 + $0x34] sm:$0xf]
      %v1639 = vld [vmem:[%s3 + $0x38] sm:$0xf]
      %v1640 = vld [vmem:[%s3 + $0x3c] sm:$0xf]
      %v1641 = vld [vmem:[%s3 + $0x40] sm:$0xf]
      %v1642 = vld [vmem:[%s3 + $0x44] sm:$0xf]
      %v1643 = vld [vmem:[%s3 + $0x48] sm:$0xf]
      %v1644 = vld [vmem:[%s3 + $0x4c] sm:$0xf]
      %v1645 = vld [vmem:[%s3 + $0x50] sm:$0xf]
      %v1646 = vld [vmem:[%s3 + $0x54] sm:$0xf]
      %v1647 = vld [vmem:[%s3 + $0x58] sm:$0xf]
      %v1648 = vld [vmem:[%s3 + $0x5c] sm:$0xf]
      %v1649 = vld [vmem:[%s3 + $0x60] sm:$0xf]
      %v1650 = vld [vmem:[%s3 + $0x64] sm:$0xf]
      %v1651 = vld [vmem:[%s3 + $0x68] sm:$0xf]
      %v1652 = vld [vmem:[%s3 + $0x6c] sm:$0xf]
      %v1653 = vld [vmem:[%s3 + $0x70] sm:$0xf]
      %v1654 = vld [vmem:[%s3 + $0x74] sm:$0xf]
      %v1655 = vld [vmem:[%s3 + $0x78] sm:$0xf]
      %v1656 = vld [vmem:[%s3 + $0x7c] sm:$0xf]
      %v1657 = vld [vmem:[%s3 + $0x80] sm:$0xf]
      %v1658 = vld [vmem:[%s3 + $0x84] sm:$0xf]
      %v1659 = vld [vmem:[%s3 + $0x88] sm:$0xf]
      %v1660 = vld [vmem:[%s3 + $0x8c] sm:$0xf]
      %v1661 = vld [vmem:[%s3 + $0x90] sm:$0xf]
      %v1662 = vld [vmem:[%s3 + $0x94] sm:$0xf]
      %v1663 = vld [vmem:[%s3 + $0x98] sm:$0xf]
      %v1664 = vld [vmem:[%s3 + $0x9c] sm:$0xf]
      %v1665 = vld [vmem:[%s3 + $0xa0] sm:$0xf]
      %v1666 = vld [vmem:[%s3 + $0xa4] sm:$0xf]
      %v1667 = vld [vmem:[%s3 + $0xa8] sm:$0xf]
      %v1668 = vld [vmem:[%s3 + $0xac] sm:$0xf]
      %v1669 = vld [vmem:[%s3 + $0xb0] sm:$0xf]
      %v1670 = vld [vmem:[%s3 + $0xb4] sm:$0xf]
      %v1671 = vld [vmem:[%s3 + $0xb8] sm:$0xf]
      %v1672 = vld [vmem:[%s3 + $0xbc] sm:$0xf]
      %v1673 = vld [vmem:[#allocation2 + $0x180] sm:$0xff]
      %v1674 = vld [vmem:[#allocation2 + $0x188] sm:$0xff]
      %v1675 = vld [vmem:[#allocation2 + $0x190] sm:$0xff]
      %s1676 = scalar_lea.vmem %s3, 192
      %v1677 = vld [vmem:[%s1676] sm:$0xf]
      %v1678 = vld [vmem:[%s1676 + $0x4] sm:$0xf]
      %v1679 = vld [vmem:[%s1676 + $0x8] sm:$0xf]
      %v1680 = vld [vmem:[%s1676 + $0xc] sm:$0xf]
      %v1681 = vld [vmem:[%s1676 + $0x10] sm:$0xf]
      %v1682 = vld [vmem:[%s1676 + $0x14] sm:$0xf]
      %v1683 = vld [vmem:[%s1676 + $0x18] sm:$0xf]
      %v1684 = vld [vmem:[%s1676 + $0x1c] sm:$0xf]
      %v1685 = vld [vmem:[%s1676 + $0x20] sm:$0xf]
      %v1686 = vld [vmem:[%s1676 + $0x24] sm:$0xf]
      %v1687 = vld [vmem:[%s1676 + $0x28] sm:$0xf]
      %v1688 = vld [vmem:[%s1676 + $0x2c] sm:$0xf]
      %v1689 = vld [vmem:[%s1676 + $0x30] sm:$0xf]
      %v1690 = vld [vmem:[%s1676 + $0x34] sm:$0xf]
      %v1691 = vld [vmem:[%s1676 + $0x38] sm:$0xf]
      %v1692 = vld [vmem:[%s1676 + $0x3c] sm:$0xf]
      %v1693 = vld [vmem:[%s1676 + $0x40] sm:$0xf]
      %v1694 = vld [vmem:[%s1676 + $0x44] sm:$0xf]
      %v1695 = vld [vmem:[%s1676 + $0x48] sm:$0xf]
      %v1696 = vld [vmem:[%s1676 + $0x4c] sm:$0xf]
      %v1697 = vld [vmem:[%s1676 + $0x50] sm:$0xf]
      %v1698 = vld [vmem:[%s1676 + $0x54] sm:$0xf]
      %v1699 = vld [vmem:[%s1676 + $0x58] sm:$0xf]
      %v1700 = vld [vmem:[%s1676 + $0x5c] sm:$0xf]
      %v1701 = vld [vmem:[%s1676 + $0x60] sm:$0xf]
      %v1702 = vld [vmem:[%s1676 + $0x64] sm:$0xf]
      %v1703 = vld [vmem:[%s1676 + $0x68] sm:$0xf]
      %v1704 = vld [vmem:[%s1676 + $0x6c] sm:$0xf]
      %v1705 = vld [vmem:[%s1676 + $0x70] sm:$0xf]
      %v1706 = vld [vmem:[%s1676 + $0x74] sm:$0xf]
      %v1707 = vld [vmem:[%s1676 + $0x78] sm:$0xf]
      %v1708 = vld [vmem:[%s1676 + $0x7c] sm:$0xf]
      %v1709 = vld [vmem:[%s1676 + $0x80] sm:$0xf]
      %v1710 = vld [vmem:[%s1676 + $0x84] sm:$0xf]
      %v1711 = vld [vmem:[%s1676 + $0x88] sm:$0xf]
      %v1712 = vld [vmem:[%s1676 + $0x8c] sm:$0xf]
      %v1713 = vld [vmem:[%s1676 + $0x90] sm:$0xf]
      %v1714 = vld [vmem:[%s1676 + $0x94] sm:$0xf]
      %v1715 = vld [vmem:[%s1676 + $0x98] sm:$0xf]
      %v1716 = vld [vmem:[%s1676 + $0x9c] sm:$0xf]
      %v1717 = vld [vmem:[%s1676 + $0xa0] sm:$0xf]
      %v1718 = vld [vmem:[%s1676 + $0xa4] sm:$0xf]
      %v1719 = vld [vmem:[%s1676 + $0xa8] sm:$0xf]
      %v1720 = vld [vmem:[%s1676 + $0xac] sm:$0xf]
      %v1721 = vld [vmem:[%s1676 + $0xb0] sm:$0xf]
      %v1722 = vld [vmem:[%s1676 + $0xb4] sm:$0xf]
      %v1723 = vld [vmem:[%s1676 + $0xb8] sm:$0xf]
      %v1724 = vld [vmem:[%s1676 + $0xbc] sm:$0xf]
      %v1773 = vunpack.c.l.b16 %v1677
      %v1774 = vunpack.c.l.b16 %v1678
      %v1775 = vunpack.c.l.b16 %v1679
      %v1776 = vunpack.c.l.b16 %v1680
      %v1777 = vunpack.c.l.b16 %v1681
      %v1778 = vunpack.c.l.b16 %v1682
      %v1779 = vunpack.c.l.b16 %v1683
      %v1780 = vunpack.c.l.b16 %v1684
      %v1781 = vunpack.c.l.b16 %v1685
      %v1782 = vunpack.c.l.b16 %v1686
      %v1783 = vunpack.c.l.b16 %v1687
      %v1784 = vunpack.c.l.b16 %v1688
      %v1785 = vunpack.c.l.b16 %v1689
      %v1786 = vunpack.c.l.b16 %v1690
      %v1787 = vunpack.c.l.b16 %v1691
      %v1788 = vunpack.c.l.b16 %v1692
      %v1789 = vunpack.c.l.b16 %v1693
      %v1790 = vunpack.c.l.b16 %v1694
      %v1791 = vunpack.c.l.b16 %v1695
      %v1792 = vunpack.c.l.b16 %v1696
      %v1793 = vunpack.c.l.b16 %v1697
      %v1794 = vunpack.c.l.b16 %v1698
      %v1795 = vunpack.c.l.b16 %v1699
      %v1796 = vunpack.c.l.b16 %v1700
      %v1797 = vunpack.c.l.b16 %v1701
      %v1798 = vunpack.c.l.b16 %v1702
      %v1799 = vunpack.c.l.b16 %v1703
      %v1800 = vunpack.c.l.b16 %v1704
      %v1801 = vunpack.c.l.b16 %v1705
      %v1802 = vunpack.c.l.b16 %v1706
      %v1803 = vunpack.c.l.b16 %v1707
      %v1804 = vunpack.c.l.b16 %v1708
      %v1805 = vunpack.c.l.b16 %v1709
      %v1806 = vunpack.c.l.b16 %v1710
      %v1807 = vunpack.c.l.b16 %v1711
      %v1808 = vunpack.c.l.b16 %v1712
      %v1809 = vunpack.c.l.b16 %v1713
      %v1810 = vunpack.c.l.b16 %v1714
      %v1811 = vunpack.c.l.b16 %v1715
      %v1812 = vunpack.c.l.b16 %v1716
      %v1813 = vunpack.c.l.b16 %v1717
      %v1814 = vunpack.c.l.b16 %v1718
      %v1815 = vunpack.c.l.b16 %v1719
      %v1816 = vunpack.c.l.b16 %v1720
      %v1817 = vunpack.c.l.b16 %v1721
      %v1818 = vunpack.c.l.b16 %v1722
      %v1819 = vunpack.c.l.b16 %v1723
      %v1820 = vunpack.c.l.b16 %v1724
      %v1821 = vpack.c.b16 %v1774, %v1773
      %v1822 = vpack.c.b16 %v1776, %v1775
      %v1823 = vpack.c.b16 %v1778, %v1777
      %v1824 = vpack.c.b16 %v1780, %v1779
      %v1825 = vpack.c.b16 %v1782, %v1781
      %v1826 = vpack.c.b16 %v1784, %v1783
      %v1827 = vpack.c.b16 %v1786, %v1785
      %v1828 = vpack.c.b16 %v1788, %v1787
      %v1829 = vpack.c.b16 %v1790, %v1789
      %v1830 = vpack.c.b16 %v1792, %v1791
      %v1831 = vpack.c.b16 %v1794, %v1793
      %v1832 = vpack.c.b16 %v1796, %v1795
      %v1833 = vpack.c.b16 %v1798, %v1797
      %v1834 = vpack.c.b16 %v1800, %v1799
      %v1835 = vpack.c.b16 %v1802, %v1801
      %v1836 = vpack.c.b16 %v1804, %v1803
      %v1837 = vpack.c.b16 %v1806, %v1805
      %v1838 = vpack.c.b16 %v1808, %v1807
      %v1839 = vpack.c.b16 %v1810, %v1809
      %v1840 = vpack.c.b16 %v1812, %v1811
      %v1841 = vpack.c.b16 %v1814, %v1813
      %v1842 = vpack.c.b16 %v1816, %v1815
      %v1843 = vpack.c.b16 %v1818, %v1817
      %v1844 = vpack.c.b16 %v1820, %v1819
      %1869 = vmatprep.subr.bf16.mxu0 0
      %1870 = vmatpush1.bf16.msra.mxu0 %v1821
      %1871 = vmatprep.subr.bf16.mxu0 0
      %1872 = vmatpush1.bf16.msra.mxu0 %v1822
      %1873 = vmatprep.subr.bf16.mxu0 0
      %1874 = vmatpush1.bf16.msra.mxu0 %v1823
      %1875 = vmatprep.subr.bf16.mxu0 0
      %1876 = vmatpush1.bf16.msra.mxu0 %v1824
      %1877 = vmatprep.subr.bf16.mxu0 0
      %1878 = vmatpush1.bf16.msra.mxu0 %v1825
      %1879 = vmatprep.subr.bf16.mxu0 0
      %1880 = vmatpush1.bf16.msra.mxu0 %v1826
      %1881 = vmatprep.subr.bf16.mxu0 0
      %1882 = vmatpush1.bf16.msra.mxu0 %v1827
      %1883 = vmatprep.subr.bf16.mxu0 0
      %1884 = vmatpush1.bf16.msra.mxu0 %v1828
      %1885 = vmatprep.subr.bf16.mxu0 0
      %1886 = vmatpush1.bf16.msra.mxu0 %v1829
      %1887 = vmatprep.subr.bf16.mxu0 0
      %1888 = vmatpush1.bf16.msra.mxu0 %v1830
      %1889 = vmatprep.subr.bf16.mxu0 0
      %1890 = vmatpush1.bf16.msra.mxu0 %v1831
      %1891 = vmatprep.subr.bf16.mxu0 0
      %1892 = vmatpush1.bf16.msra.mxu0 %v1832
      %1893 = vmatprep.subr.bf16.mxu0 0
      %1894 = vmatpush1.bf16.msra.mxu0 %v1833
      %1895 = vmatprep.subr.bf16.mxu0 0
      %1896 = vmatpush1.bf16.msra.mxu0 %v1834
      %1897 = vmatprep.subr.bf16.mxu0 0
      %1898 = vmatpush1.bf16.msra.mxu0 %v1835
      %1899 = vmatprep.subr.bf16.mxu0 0
      %1900 = vmatpush1.bf16.msra.mxu0 %v1836
      %1901 = vmatprep.mubr.bf16.mxu0 %v1581
      %1902 = vmatmul.mubr.bf16.gmra.mrb[0].mxu0 %v1580
      %v1903 = vpop.f32.mrb[0].mxu0
      %v1904 = vadd.f32 0.0, %v1903
      %v1905 = vpop.f32.mrb[0].mxu0
      %v1906 = vpop.f32.mrb[0].mxu0
      %v1907 = vadd.f32 0.0, %v1906
      %v1908 = vpop.f32.mrb[0].mxu0
      %1909 = vmatprep.mubr.bf16.mxu0 %v1584
      %1910 = vmatmul.mubr.bf16.gmra.mrb[0].mxu0 %v1583
      %v1911 = vpop.f32.mrb[0].mxu0
      %v1912 = vadd.f32 0.0, %v1911
      %v1913 = vpop.f32.mrb[0].mxu0
      %v1914 = vpop.f32.mrb[0].mxu0
      %v1915 = vadd.f32 0.0, %v1914
      %v1916 = vpop.f32.mrb[0].mxu0
      %1917 = vmatprep.mubr.bf16.mxu0 %v1587
      %1918 = vmatmul.mubr.bf16.gmra.mrb[0].mxu0 %v1586
      %v1919 = vpop.f32.mrb[0].mxu0
      %v1920 = vadd.f32 0.0, %v1919
      %v1921 = vpop.f32.mrb[0].mxu0
      %v1922 = vpop.f32.mrb[0].mxu0
      %v1923 = vadd.f32 0.0, %v1922
      %v1924 = vpop.f32.mrb[0].mxu0
      %1925 = vmatprep.mubr.bf16.mxu0 %v1590
      %1926 = vmatmul.mubr.bf16.gmra.mrb[0].mxu0 %v1589
      %v1927 = vpop.f32.mrb[0].mxu0
      %v1928 = vadd.f32 0.0, %v1927
      %v1929 = vpop.f32.mrb[0].mxu0
      %v1930 = vpop.f32.mrb[0].mxu0
      %v1931 = vadd.f32 0.0, %v1930
      %v1932 = vpop.f32.mrb[0].mxu0
      %1933 = vmatprep.mubr.bf16.mxu0 %v1593
      %1934 = vmatmul.mubr.bf16.gmra.mrb[0].mxu0 %v1592
      %v1935 = vpop.f32.mrb[0].mxu0
      %v1936 = vadd.f32 0.0, %v1935
      %v1937 = vpop.f32.mrb[0].mxu0
      %v1938 = vpop.f32.mrb[0].mxu0
      %v1939 = vadd.f32 0.0, %v1938
      %v1940 = vpop.f32.mrb[0].mxu0
      %1941 = vmatprep.mubr.bf16.mxu0 %v1596
      %1942 = vmatmul.mubr.bf16.gmra.mrb[0].mxu0 %v1595
      %v1943 = vpop.f32.mrb[0].mxu0
      %v1944 = vadd.f32 0.0, %v1943
      %v1945 = vpop.f32.mrb[0].mxu0
      %v1946 = vpop.f32.mrb[0].mxu0
      %v1947 = vadd.f32 0.0, %v1946
      %v1948 = vpop.f32.mrb[0].mxu0
      %1949 = vmatprep.mubr.bf16.mxu0 %v1599
      %1950 = vmatmul.mubr.bf16.gmra.mrb[0].mxu0 %v1598
      %v1951 = vpop.f32.mrb[0].mxu0
      %v1952 = vadd.f32 0.0, %v1951
      %v1953 = vpop.f32.mrb[0].mxu0
      %v1954 = vpop.f32.mrb[0].mxu0
      %v1955 = vadd.f32 0.0, %v1954
      %v1956 = vpop.f32.mrb[0].mxu0
      %1957 = vmatprep.mubr.bf16.mxu0 %v1602
      %1958 = vmatmul.mubr.bf16.gmra.mrb[0].mxu0 %v1601
      %v1959 = vpop.f32.mrb[0].mxu0
      %v1960 = vadd.f32 0.0, %v1959
      %v1961 = vpop.f32.mrb[0].mxu0
      %v1962 = vpop.f32.mrb[0].mxu0
      %v1963 = vadd.f32 0.0, %v1962
      %v1964 = vpop.f32.mrb[0].mxu0
      %1965 = vmatprep.mubr.bf16.mxu0 %v1605
      %1966 = vmatmul.mubr.bf16.gmra.mrb[0].mxu0 %v1604
      %v1967 = vpop.f32.mrb[0].mxu0
      %v1968 = vadd.f32 0.0, %v1967
      %v1969 = vpop.f32.mrb[0].mxu0
      %v1970 = vpop.f32.mrb[0].mxu0
      %v1971 = vadd.f32 0.0, %v1970
      %v1972 = vpop.f32.mrb[0].mxu0
      %1973 = vmatprep.mubr.bf16.mxu0 %v1608
      %1974 = vmatmul.mubr.bf16.gmra.mrb[0].mxu0 %v1607
      %v1975 = vpop.f32.mrb[0].mxu0
      %v1976 = vadd.f32 0.0, %v1975
      %v1977 = vpop.f32.mrb[0].mxu0
      %v1978 = vpop.f32.mrb[0].mxu0
      %v1979 = vadd.f32 0.0, %v1978
      %v1980 = vpop.f32.mrb[0].mxu0
      %1981 = vmatprep.mubr.bf16.mxu0 %v1611
      %1982 = vmatmul.mubr.bf16.gmra.mrb[0].mxu0 %v1610
      %v1983 = vpop.f32.mrb[0].mxu0
      %v1984 = vadd.f32 0.0, %v1983
      %v1985 = vpop.f32.mrb[0].mxu0
      %v1986 = vpop.f32.mrb[0].mxu0
      %v1987 = vadd.f32 0.0, %v1986
      %v1988 = vpop.f32.mrb[0].mxu0
      %1989 = vmatprep.mubr.bf16.mxu0 %v1614
      %1990 = vmatmul.mubr.bf16.gmra.mrb[0].mxu0 %v1613
      %v1991 = vpop.f32.mrb[0].mxu0
      %v1992 = vadd.f32 0.0, %v1991
      %v1993 = vpop.f32.mrb[0].mxu0
      %v1994 = vpop.f32.mrb[0].mxu0
      %v1995 = vadd.f32 0.0, %v1994
      %v1996 = vpop.f32.mrb[0].mxu0
      %1997 = vmatprep.mubr.bf16.mxu0 %v1617
      %1998 = vmatmul.mubr.bf16.gmra.mrb[0].mxu0 %v1616
      %v1999 = vpop.f32.mrb[0].mxu0
      %v2000 = vadd.f32 0.0, %v1999
      %v2001 = vpop.f32.mrb[0].mxu0
      %v2002 = vpop.f32.mrb[0].mxu0
      %v2003 = vadd.f32 0.0, %v2002
      %v2004 = vpop.f32.mrb[0].mxu0
      %2005 = vmatprep.mubr.bf16.mxu0 %v1620
      %2006 = vmatmul.mubr.bf16.gmra.mrb[0].mxu0 %v1619
      %v2007 = vpop.f32.mrb[0].mxu0
      %v2008 = vadd.f32 0.0, %v2007
      %v2009 = vpop.f32.mrb[0].mxu0
      %v2010 = vpop.f32.mrb[0].mxu0
      %v2011 = vadd.f32 0.0, %v2010
      %v2012 = vpop.f32.mrb[0].mxu0
      %2013 = vmatprep.mubr.bf16.mxu0 %v1623
      %2014 = vmatmul.mubr.bf16.gmra.mrb[0].mxu0 %v1622
      %v2015 = vpop.f32.mrb[0].mxu0
      %v2016 = vadd.f32 0.0, %v2015
      %v2017 = vpop.f32.mrb[0].mxu0
      %v2018 = vpop.f32.mrb[0].mxu0
      %v2019 = vadd.f32 0.0, %v2018
      %v2020 = vpop.f32.mrb[0].mxu0
      %2021 = vmatprep.mubr.bf16.mxu0 %v1674
      %2022 = vmatmul.mubr.bf16.gmra.mrb[0].mxu0 %v1673
      %v2023 = vpop.f32.mrb[0].mxu0
      %v2024 = vadd.f32 0.0, %v2023
      %v2025 = vpop.f32.mrb[0].mxu0
      %v2026 = vpop.f32.mrb[0].mxu0
      %v2027 = vadd.f32 0.0, %v2026
      %v2028 = vpop.f32.mrb[0].mxu0
      %2029 = vdwg.mxu0
      %2030 = vmatprep.subr.bf16.mxu0 0
      %2031 = vmatpush1.bf16.msra.mxu0 %v1837
      %2032 = vmatprep.subr.bf16.mxu0 0
      %2033 = vmatpush1.bf16.msra.mxu0 %v1838
      %2034 = vmatprep.subr.bf16.mxu0 0
      %2035 = vmatpush1.bf16.msra.mxu0 %v1839
      %2036 = vmatprep.subr.bf16.mxu0 0
      %2037 = vmatpush1.bf16.msra.mxu0 %v1840
      %2038 = vmatprep.subr.bf16.mxu0 0
      %2039 = vmatpush1.bf16.msra.mxu0 %v1841
      %2040 = vmatprep.subr.bf16.mxu0 0
      %2041 = vmatpush1.bf16.msra.mxu0 %v1842
      %2042 = vmatprep.subr.bf16.mxu0 0
      %2043 = vmatpush1.bf16.msra.mxu0 %v1843
      %2044 = vmatprep.subr.bf16.mxu0 0
      %2045 = vmatpush1.bf16.msra.mxu0 %v1844
      %2046 = vmatprep.subr.bf16.mxu0 0
      %2047 = vmatpush1.bf16.msra.mxu0 0
      %2048 = vmatprep.subr.bf16.mxu0 0
      %2049 = vmatpush1.bf16.msra.mxu0 0
      %2050 = vmatprep.subr.bf16.mxu0 0
      %2051 = vmatpush1.bf16.msra.mxu0 0
      %2052 = vmatprep.subr.bf16.mxu0 0
      %2053 = vmatpush1.bf16.msra.mxu0 0
      %2054 = vmatprep.subr.bf16.mxu0 0
      %2055 = vmatpush1.bf16.msra.mxu0 0
      %2056 = vmatprep.subr.bf16.mxu0 0
      %2057 = vmatpush1.bf16.msra.mxu0 0
      %2058 = vmatprep.subr.bf16.mxu0 0
      %2059 = vmatpush1.bf16.msra.mxu0 0
      %2060 = vmatprep.subr.bf16.mxu0 0
      %2061 = vmatpush1.bf16.msra.mxu0 0
      %2062 = vmatprep.mubr.bf16.mxu0 0
      %2063 = vmatmul.mubr.bf16.gmra.mrb[0].mxu0 %v1582
      %v2064 = vpop.f32.mrb[0].mxu0
      %v2065 = vadd.f32 %v1904, %v2064
      %v2066 = vpop.f32.mrb[0].mxu0
      %v2067 = vpop.f32.mrb[0].mxu0
      %v2068 = vadd.f32 %v1907, %v2067
      %v2069 = vpop.f32.mrb[0].mxu0
      %2070 = vmatprep.mubr.bf16.mxu0 0
      %2071 = vmatmul.mubr.bf16.gmra.mrb[0].mxu0 %v1585
      %v2072 = vpop.f32.mrb[0].mxu0
      %v2073 = vadd.f32 %v1912, %v2072
      %v2074 = vpop.f32.mrb[0].mxu0
      %v2075 = vpop.f32.mrb[0].mxu0
      %v2076 = vadd.f32 %v1915, %v2075
      %v2077 = vpop.f32.mrb[0].mxu0
      %2078 = vmatprep.mubr.bf16.mxu0 0
      %2079 = vmatmul.mubr.bf16.gmra.mrb[0].mxu0 %v1588
      %v2080 = vpop.f32.mrb[0].mxu0
      %v2081 = vadd.f32 %v1920, %v2080
      %v2082 = vpop.f32.mrb[0].mxu0
      %v2083 = vpop.f32.mrb[0].mxu0
      %v2084 = vadd.f32 %v1923, %v2083
      %v2085 = vpop.f32.mrb[0].mxu0
      %2086 = vmatprep.mubr.bf16.mxu0 0
      %2087 = vmatmul.mubr.bf16.gmra.mrb[0].mxu0 %v1591
      %v2088 = vpop.f32.mrb[0].mxu0
      %v2089 = vadd.f32 %v1928, %v2088
      %v2090 = vpop.f32.mrb[0].mxu0
      %v2091 = vpop.f32.mrb[0].mxu0
      %v2092 = vadd.f32 %v1931, %v2091
      %v2093 = vpop.f32.mrb[0].mxu0
      %2094 = vmatprep.mubr.bf16.mxu0 0
      %2095 = vmatmul.mubr.bf16.gmra.mrb[0].mxu0 %v1594
      %v2096 = vpop.f32.mrb[0].mxu0
      %v2097 = vadd.f32 %v1936, %v2096
      %v2098 = vpop.f32.mrb[0].mxu0
      %v2099 = vpop.f32.mrb[0].mxu0
      %v2100 = vadd.f32 %v1939, %v2099
      %v2101 = vpop.f32.mrb[0].mxu0
      %2102 = vmatprep.mubr.bf16.mxu0 0
      %2103 = vmatmul.mubr.bf16.gmra.mrb[0].mxu0 %v1597
      %v2104 = vpop.f32.mrb[0].mxu0
      %v2105 = vadd.f32 %v1944, %v2104
      %v2106 = vpop.f32.mrb[0].mxu0
      %v2107 = vpop.f32.mrb[0].mxu0
      %v2108 = vadd.f32 %v1947, %v2107
      %v2109 = vpop.f32.mrb[0].mxu0
      %2110 = vmatprep.mubr.bf16.mxu0 0
      %2111 = vmatmul.mubr.bf16.gmra.mrb[0].mxu0 %v1600
      %v2112 = vpop.f32.mrb[0].mxu0
      %v2113 = vadd.f32 %v1952, %v2112
      %v2114 = vpop.f32.mrb[0].mxu0
      %v2115 = vpop.f32.mrb[0].mxu0
      %v2116 = vadd.f32 %v1955, %v2115
      %v2117 = vpop.f32.mrb[0].mxu0
      %2118 = vmatprep.mubr.bf16.mxu0 0
      %2119 = vmatmul.mubr.bf16.gmra.mrb[0].mxu0 %v1603
      %v2120 = vpop.f32.mrb[0].mxu0
      %v2121 = vadd.f32 %v1960, %v2120
      %v2122 = vpop.f32.mrb[0].mxu0
      %v2123 = vpop.f32.mrb[0].mxu0
      %v2124 = vadd.f32 %v1963, %v2123
      %v2125 = vpop.f32.mrb[0].mxu0
      %2126 = vmatprep.mubr.bf16.mxu0 0
      %2127 = vmatmul.mubr.bf16.gmra.mrb[0].mxu0 %v1606
      %v2128 = vpop.f32.mrb[0].mxu0
      %v2129 = vadd.f32 %v1968, %v2128
      %v2130 = vpop.f32.mrb[0].mxu0
      %v2131 = vpop.f32.mrb[0].mxu0
      %v2132 = vadd.f32 %v1971, %v2131
      %v2133 = vpop.f32.mrb[0].mxu0
      %2134 = vmatprep.mubr.bf16.mxu0 0
      %2135 = vmatmul.mubr.bf16.gmra.mrb[0].mxu0 %v1609
      %v2136 = vpop.f32.mrb[0].mxu0
      %v2137 = vadd.f32 %v1976, %v2136
      %v2138 = vpop.f32.mrb[0].mxu0
      %v2139 = vpop.f32.mrb[0].mxu0
      %v2140 = vadd.f32 %v1979, %v2139
      %v2141 = vpop.f32.mrb[0].mxu0
      %2142 = vmatprep.mubr.bf16.mxu0 0
      %2143 = vmatmul.mubr.bf16.gmra.mrb[0].mxu0 %v1612
      %v2144 = vpop.f32.mrb[0].mxu0
      %v2145 = vadd.f32 %v1984, %v2144
      %v2146 = vpop.f32.mrb[0].mxu0
      %v2147 = vpop.f32.mrb[0].mxu0
      %v2148 = vadd.f32 %v1987, %v2147
      %v2149 = vpop.f32.mrb[0].mxu0
      %2150 = vmatprep.mubr.bf16.mxu0 0
      %2151 = vmatmul.mubr.bf16.gmra.mrb[0].mxu0 %v1615
      %v2152 = vpop.f32.mrb[0].mxu0
      %v2153 = vadd.f32 %v1992, %v2152
      %v2154 = vpop.f32.mrb[0].mxu0
      %v2155 = vpop.f32.mrb[0].mxu0
      %v2156 = vadd.f32 %v1995, %v2155
      %v2157 = vpop.f32.mrb[0].mxu0
      %2158 = vmatprep.mubr.bf16.mxu0 0
      %2159 = vmatmul.mubr.bf16.gmra.mrb[0].mxu0 %v1618
      %v2160 = vpop.f32.mrb[0].mxu0
      %v2161 = vadd.f32 %v2000, %v2160
      %v2162 = vpop.f32.mrb[0].mxu0
      %v2163 = vpop.f32.mrb[0].mxu0
      %v2164 = vadd.f32 %v2003, %v2163
      %v2165 = vpop.f32.mrb[0].mxu0
      %2166 = vmatprep.mubr.bf16.mxu0 0
      %2167 = vmatmul.mubr.bf16.gmra.mrb[0].mxu0 %v1621
      %v2168 = vpop.f32.mrb[0].mxu0
      %v2169 = vadd.f32 %v2008, %v2168
      %v2170 = vpop.f32.mrb[0].mxu0
      %v2171 = vpop.f32.mrb[0].mxu0
      %v2172 = vadd.f32 %v2011, %v2171
      %v2173 = vpop.f32.mrb[0].mxu0
      %2174 = vmatprep.mubr.bf16.mxu0 0
      %2175 = vmatmul.mubr.bf16.gmra.mrb[0].mxu0 %v1624
      %v2176 = vpop.f32.mrb[0].mxu0
      %v2177 = vadd.f32 %v2016, %v2176
      %v2178 = vpop.f32.mrb[0].mxu0
      %v2179 = vpop.f32.mrb[0].mxu0
      %v2180 = vadd.f32 %v2019, %v2179
      %v2181 = vpop.f32.mrb[0].mxu0
      %2182 = vmatprep.mubr.bf16.mxu0 0
      %2183 = vmatmul.mubr.bf16.gmra.mrb[0].mxu0 %v1675
      %v2184 = vpop.f32.mrb[0].mxu0
      %v2185 = vadd.f32 %v2024, %v2184
      %v2186 = vpop.f32.mrb[0].mxu0
      %v2187 = vpop.f32.mrb[0].mxu0
      %v2188 = vadd.f32 %v2027, %v2187
      %v2189 = vpop.f32.mrb[0].mxu0
      %2190 = vdwg.mxu0
      %v2239 = vunpack.c.l.b16 %v1625
      %v2240 = vunpack.c.l.b16 %v1626
      %v2241 = vunpack.c.l.b16 %v1627
      %v2242 = vunpack.c.l.b16 %v1628
      %v2243 = vunpack.c.l.b16 %v1629
      %v2244 = vunpack.c.l.b16 %v1630
      %v2245 = vunpack.c.l.b16 %v1631
      %v2246 = vunpack.c.l.b16 %v1632
      %v2247 = vunpack.c.l.b16 %v1633
      %v2248 = vunpack.c.l.b16 %v1634
      %v2249 = vunpack.c.l.b16 %v1635
      %v2250 = vunpack.c.l.b16 %v1636
      %v2251 = vunpack.c.l.b16 %v1637
      %v2252 = vunpack.c.l.b16 %v1638
      %v2253 = vunpack.c.l.b16 %v1639
      %v2254 = vunpack.c.l.b16 %v1640
      %v2255 = vunpack.c.l.b16 %v1641
      %v2256 = vunpack.c.l.b16 %v1642
      %v2257 = vunpack.c.l.b16 %v1643
      %v2258 = vunpack.c.l.b16 %v1644
      %v2259 = vunpack.c.l.b16 %v1645
      %v2260 = vunpack.c.l.b16 %v1646
      %v2261 = vunpack.c.l.b16 %v1647
      %v2262 = vunpack.c.l.b16 %v1648
      %v2263 = vunpack.c.l.b16 %v1649
      %v2264 = vunpack.c.l.b16 %v1650
      %v2265 = vunpack.c.l.b16 %v1651
      %v2266 = vunpack.c.l.b16 %v1652
      %v2267 = vunpack.c.l.b16 %v1653
      %v2268 = vunpack.c.l.b16 %v1654
      %v2269 = vunpack.c.l.b16 %v1655
      %v2270 = vunpack.c.l.b16 %v1656
      %v2271 = vunpack.c.l.b16 %v1657
      %v2272 = vunpack.c.l.b16 %v1658
      %v2273 = vunpack.c.l.b16 %v1659
      %v2274 = vunpack.c.l.b16 %v1660
      %v2275 = vunpack.c.l.b16 %v1661
      %v2276 = vunpack.c.l.b16 %v1662
      %v2277 = vunpack.c.l.b16 %v1663
      %v2278 = vunpack.c.l.b16 %v1664
      %v2279 = vunpack.c.l.b16 %v1665
      %v2280 = vunpack.c.l.b16 %v1666
      %v2281 = vunpack.c.l.b16 %v1667
      %v2282 = vunpack.c.l.b16 %v1668
      %v2283 = vunpack.c.l.b16 %v1669
      %v2284 = vunpack.c.l.b16 %v1670
      %v2285 = vunpack.c.l.b16 %v1671
      %v2286 = vunpack.c.l.b16 %v1672
      %v2287 = vpack.c.b16 %v2240, %v2239
      %v2288 = vpack.c.b16 %v2242, %v2241
      %v2289 = vpack.c.b16 %v2244, %v2243
      %v2290 = vpack.c.b16 %v2246, %v2245
      %v2291 = vpack.c.b16 %v2248, %v2247
      %v2292 = vpack.c.b16 %v2250, %v2249
      %v2293 = vpack.c.b16 %v2252, %v2251
      %v2294 = vpack.c.b16 %v2254, %v2253
      %v2295 = vpack.c.b16 %v2256, %v2255
      %v2296 = vpack.c.b16 %v2258, %v2257
      %v2297 = vpack.c.b16 %v2260, %v2259
      %v2298 = vpack.c.b16 %v2262, %v2261
      %v2299 = vpack.c.b16 %v2264, %v2263
      %v2300 = vpack.c.b16 %v2266, %v2265
      %v2301 = vpack.c.b16 %v2268, %v2267
      %v2302 = vpack.c.b16 %v2270, %v2269
      %v2303 = vpack.c.b16 %v2272, %v2271
      %v2304 = vpack.c.b16 %v2274, %v2273
      %v2305 = vpack.c.b16 %v2276, %v2275
      %v2306 = vpack.c.b16 %v2278, %v2277
      %v2307 = vpack.c.b16 %v2280, %v2279
      %v2308 = vpack.c.b16 %v2282, %v2281
      %v2309 = vpack.c.b16 %v2284, %v2283
      %v2310 = vpack.c.b16 %v2286, %v2285
      %2335 = vmatprep.subr.bf16.mxu0 0
      %2336 = vmatpush1.bf16.msra.mxu0 %v2287
      %2337 = vmatprep.subr.bf16.mxu0 0
      %2338 = vmatpush1.bf16.msra.mxu0 %v2288
      %2339 = vmatprep.subr.bf16.mxu0 0
      %2340 = vmatpush1.bf16.msra.mxu0 %v2289
      %2341 = vmatprep.subr.bf16.mxu0 0
      %2342 = vmatpush1.bf16.msra.mxu0 %v2290
      %2343 = vmatprep.subr.bf16.mxu0 0
      %2344 = vmatpush1.bf16.msra.mxu0 %v2291
      %2345 = vmatprep.subr.bf16.mxu0 0
      %2346 = vmatpush1.bf16.msra.mxu0 %v2292
      %2347 = vmatprep.subr.bf16.mxu0 0
      %2348 = vmatpush1.bf16.msra.mxu0 %v2293
      %2349 = vmatprep.subr.bf16.mxu0 0
      %2350 = vmatpush1.bf16.msra.mxu0 %v2294
      %2351 = vmatprep.subr.bf16.mxu0 0
      %2352 = vmatpush1.bf16.msra.mxu0 %v2295
      %2353 = vmatprep.subr.bf16.mxu0 0
      %2354 = vmatpush1.bf16.msra.mxu0 %v2296
      %2355 = vmatprep.subr.bf16.mxu0 0
      %2356 = vmatpush1.bf16.msra.mxu0 %v2297
      %2357 = vmatprep.subr.bf16.mxu0 0
      %2358 = vmatpush1.bf16.msra.mxu0 %v2298
      %2359 = vmatprep.subr.bf16.mxu0 0
      %2360 = vmatpush1.bf16.msra.mxu0 %v2299
      %2361 = vmatprep.subr.bf16.mxu0 0
      %2362 = vmatpush1.bf16.msra.mxu0 %v2300
      %2363 = vmatprep.subr.bf16.mxu0 0
      %2364 = vmatpush1.bf16.msra.mxu0 %v2301
      %2365 = vmatprep.subr.bf16.mxu0 0
      %2366 = vmatpush1.bf16.msra.mxu0 %v2302
      %2367 = vmatprep.mubr.bf16.mxu0 %v1578
      %2368 = vmatmul.mubr.bf16.gmra.mrb[0].mxu0 %v1577
      %v2369 = vpop.f32.mrb[0].mxu0
      %v2370 = vadd.f32 %v2065, %v2369
      %v2371 = vpop.f32.mrb[0].mxu0
      %v2372 = vpop.f32.mrb[0].mxu0
      %v2373 = vadd.f32 %v2068, %v2372
      %v2374 = vpop.f32.mrb[0].mxu0
      %2375 = vmatprep.mubr.bf16.mxu0 %v1581
      %2376 = vmatmul.mubr.bf16.gmra.mrb[0].mxu0 %v1580
      %v2377 = vpop.f32.mrb[0].mxu0
      %v2378 = vadd.f32 %v2073, %v2377
      %v2379 = vpop.f32.mrb[0].mxu0
      %v2380 = vpop.f32.mrb[0].mxu0
      %v2381 = vadd.f32 %v2076, %v2380
      %v2382 = vpop.f32.mrb[0].mxu0
      %2383 = vmatprep.mubr.bf16.mxu0 %v1584
      %2384 = vmatmul.mubr.bf16.gmra.mrb[0].mxu0 %v1583
      %v2385 = vpop.f32.mrb[0].mxu0
      %v2386 = vadd.f32 %v2081, %v2385
      %v2387 = vpop.f32.mrb[0].mxu0
      %v2388 = vpop.f32.mrb[0].mxu0
      %v2389 = vadd.f32 %v2084, %v2388
      %v2390 = vpop.f32.mrb[0].mxu0
      %2391 = vmatprep.mubr.bf16.mxu0 %v1587
      %2392 = vmatmul.mubr.bf16.gmra.mrb[0].mxu0 %v1586
      %v2393 = vpop.f32.mrb[0].mxu0
      %v2394 = vadd.f32 %v2089, %v2393
      %v2395 = vpop.f32.mrb[0].mxu0
      %v2396 = vpop.f32.mrb[0].mxu0
      %v2397 = vadd.f32 %v2092, %v2396
      %v2398 = vpop.f32.mrb[0].mxu0
      %2399 = vmatprep.mubr.bf16.mxu0 %v1590
      %2400 = vmatmul.mubr.bf16.gmra.mrb[0].mxu0 %v1589
      %v2401 = vpop.f32.mrb[0].mxu0
      %v2402 = vadd.f32 %v2097, %v2401
      %v2403 = vpop.f32.mrb[0].mxu0
      %v2404 = vpop.f32.mrb[0].mxu0
      %v2405 = vadd.f32 %v2100, %v2404
      %v2406 = vpop.f32.mrb[0].mxu0
      %2407 = vmatprep.mubr.bf16.mxu0 %v1593
      %2408 = vmatmul.mubr.bf16.gmra.mrb[0].mxu0 %v1592
      %v2409 = vpop.f32.mrb[0].mxu0
      %v2410 = vadd.f32 %v2105, %v2409
      %v2411 = vpop.f32.mrb[0].mxu0
      %v2412 = vpop.f32.mrb[0].mxu0
      %v2413 = vadd.f32 %v2108, %v2412
      %v2414 = vpop.f32.mrb[0].mxu0
      %2415 = vmatprep.mubr.bf16.mxu0 %v1596
      %2416 = vmatmul.mubr.bf16.gmra.mrb[0].mxu0 %v1595
      %v2417 = vpop.f32.mrb[0].mxu0
      %v2418 = vadd.f32 %v2113, %v2417
      %v2419 = vpop.f32.mrb[0].mxu0
      %v2420 = vpop.f32.mrb[0].mxu0
      %v2421 = vadd.f32 %v2116, %v2420
      %v2422 = vpop.f32.mrb[0].mxu0
      %2423 = vmatprep.mubr.bf16.mxu0 %v1599
      %2424 = vmatmul.mubr.bf16.gmra.mrb[0].mxu0 %v1598
      %v2425 = vpop.f32.mrb[0].mxu0
      %v2426 = vadd.f32 %v2121, %v2425
      %v2427 = vpop.f32.mrb[0].mxu0
      %v2428 = vpop.f32.mrb[0].mxu0
      %v2429 = vadd.f32 %v2124, %v2428
      %v2430 = vpop.f32.mrb[0].mxu0
      %2431 = vmatprep.mubr.bf16.mxu0 %v1602
      %2432 = vmatmul.mubr.bf16.gmra.mrb[0].mxu0 %v1601
      %v2433 = vpop.f32.mrb[0].mxu0
      %v2434 = vadd.f32 %v2129, %v2433
      %v2435 = vpop.f32.mrb[0].mxu0
      %v2436 = vpop.f32.mrb[0].mxu0
      %v2437 = vadd.f32 %v2132, %v2436
      %v2438 = vpop.f32.mrb[0].mxu0
      %2439 = vmatprep.mubr.bf16.mxu0 %v1605
      %2440 = vmatmul.mubr.bf16.gmra.mrb[0].mxu0 %v1604
      %v2441 = vpop.f32.mrb[0].mxu0
      %v2442 = vadd.f32 %v2137, %v2441
      %v2443 = vpop.f32.mrb[0].mxu0
      %v2444 = vpop.f32.mrb[0].mxu0
      %v2445 = vadd.f32 %v2140, %v2444
      %v2446 = vpop.f32.mrb[0].mxu0
      %2447 = vmatprep.mubr.bf16.mxu0 %v1608
      %2448 = vmatmul.mubr.bf16.gmra.mrb[0].mxu0 %v1607
      %v2449 = vpop.f32.mrb[0].mxu0
      %v2450 = vadd.f32 %v2145, %v2449
      %v2451 = vpop.f32.mrb[0].mxu0
      %v2452 = vpop.f32.mrb[0].mxu0
      %v2453 = vadd.f32 %v2148, %v2452
      %v2454 = vpop.f32.mrb[0].mxu0
      %2455 = vmatprep.mubr.bf16.mxu0 %v1611
      %2456 = vmatmul.mubr.bf16.gmra.mrb[0].mxu0 %v1610
      %v2457 = vpop.f32.mrb[0].mxu0
      %v2458 = vadd.f32 %v2153, %v2457
      %v2459 = vpop.f32.mrb[0].mxu0
      %v2460 = vpop.f32.mrb[0].mxu0
      %v2461 = vadd.f32 %v2156, %v2460
      %v2462 = vpop.f32.mrb[0].mxu0
      %2463 = vmatprep.mubr.bf16.mxu0 %v1614
      %2464 = vmatmul.mubr.bf16.gmra.mrb[0].mxu0 %v1613
      %v2465 = vpop.f32.mrb[0].mxu0
      %v2466 = vadd.f32 %v2161, %v2465
      %v2467 = vpop.f32.mrb[0].mxu0
      %v2468 = vpop.f32.mrb[0].mxu0
      %v2469 = vadd.f32 %v2164, %v2468
      %v2470 = vpop.f32.mrb[0].mxu0
      %2471 = vmatprep.mubr.bf16.mxu0 %v1617
      %2472 = vmatmul.mubr.bf16.gmra.mrb[0].mxu0 %v1616
      %v2473 = vpop.f32.mrb[0].mxu0
      %v2474 = vadd.f32 %v2169, %v2473
      %v2475 = vpop.f32.mrb[0].mxu0
      %v2476 = vpop.f32.mrb[0].mxu0
      %v2477 = vadd.f32 %v2172, %v2476
      %v2478 = vpop.f32.mrb[0].mxu0
      %2479 = vmatprep.mubr.bf16.mxu0 %v1620
      %2480 = vmatmul.mubr.bf16.gmra.mrb[0].mxu0 %v1619
      %v2481 = vpop.f32.mrb[0].mxu0
      %v2482 = vadd.f32 %v2177, %v2481
      %v2483 = vpop.f32.mrb[0].mxu0
      %v2484 = vpop.f32.mrb[0].mxu0
      %v2485 = vadd.f32 %v2180, %v2484
      %v2486 = vpop.f32.mrb[0].mxu0
      %2487 = vmatprep.mubr.bf16.mxu0 %v1623
      %2488 = vmatmul.mubr.bf16.gmra.mrb[0].mxu0 %v1622
      %v2489 = vpop.f32.mrb[0].mxu0
      %v2490 = vadd.f32 %v2185, %v2489
      %v2491 = vpop.f32.mrb[0].mxu0
      %v2492 = vpop.f32.mrb[0].mxu0
      %v2493 = vadd.f32 %v2188, %v2492
      %v2494 = vpop.f32.mrb[0].mxu0
      %2495 = vdwg.mxu0
      %2496 = vmatprep.subr.bf16.mxu0 0
      %2497 = vmatpush1.bf16.msra.mxu0 %v2303
      %2498 = vmatprep.subr.bf16.mxu0 0
      %2499 = vmatpush1.bf16.msra.mxu0 %v2304
      %2500 = vmatprep.subr.bf16.mxu0 0
      %2501 = vmatpush1.bf16.msra.mxu0 %v2305
      %2502 = vmatprep.subr.bf16.mxu0 0
      %2503 = vmatpush1.bf16.msra.mxu0 %v2306
      %2504 = vmatprep.subr.bf16.mxu0 0
      %2505 = vmatpush1.bf16.msra.mxu0 %v2307
      %2506 = vmatprep.subr.bf16.mxu0 0
      %2507 = vmatpush1.bf16.msra.mxu0 %v2308
      %2508 = vmatprep.subr.bf16.mxu0 0
      %2509 = vmatpush1.bf16.msra.mxu0 %v2309
      %2510 = vmatprep.subr.bf16.mxu0 0
      %2511 = vmatpush1.bf16.msra.mxu0 %v2310
      %2512 = vmatprep.subr.bf16.mxu0 0
      %2513 = vmatpush1.bf16.msra.mxu0 0
      %2514 = vmatprep.subr.bf16.mxu0 0
      %2515 = vmatpush1.bf16.msra.mxu0 0
      %2516 = vmatprep.subr.bf16.mxu0 0
      %2517 = vmatpush1.bf16.msra.mxu0 0
      %2518 = vmatprep.subr.bf16.mxu0 0
      %2519 = vmatpush1.bf16.msra.mxu0 0
      %2520 = vmatprep.subr.bf16.mxu0 0
      %2521 = vmatpush1.bf16.msra.mxu0 0
      %2522 = vmatprep.subr.bf16.mxu0 0
      %2523 = vmatpush1.bf16.msra.mxu0 0
      %2524 = vmatprep.subr.bf16.mxu0 0
      %2525 = vmatpush1.bf16.msra.mxu0 0
      %2526 = vmatprep.subr.bf16.mxu0 0
      %2527 = vmatpush1.bf16.msra.mxu0 0
      %2528 = vmatprep.mubr.bf16.mxu0 0
      %2529 = vmatmul.mubr.bf16.gmra.mrb[0].mxu0 %v1579
      %v2530 = vpop.f32.mrb[0].mxu0
      %v2531 = vadd.f32 %v2370, %v2530
      %v2532 = vpop.f32.mrb[0].mxu0
      %v2533 = vpop.f32.mrb[0].mxu0
      %v2534 = vadd.f32 %v2373, %v2533
      %v2535 = vpop.f32.mrb[0].mxu0
      %2536 = vmatprep.mubr.bf16.mxu0 0
      %2537 = vmatmul.mubr.bf16.gmra.mrb[0].mxu0 %v1582
      %v2538 = vpop.f32.mrb[0].mxu0
      %v2539 = vadd.f32 %v2378, %v2538
      %v2540 = vpop.f32.mrb[0].mxu0
      %v2541 = vpop.f32.mrb[0].mxu0
      %v2542 = vadd.f32 %v2381, %v2541
      %v2543 = vpop.f32.mrb[0].mxu0
      %2544 = vmatprep.mubr.bf16.mxu0 0
      %2545 = vmatmul.mubr.bf16.gmra.mrb[0].mxu0 %v1585
      %v2546 = vpop.f32.mrb[0].mxu0
      %v2547 = vadd.f32 %v2386, %v2546
      %v2548 = vpop.f32.mrb[0].mxu0
      %v2549 = vpop.f32.mrb[0].mxu0
      %v2550 = vadd.f32 %v2389, %v2549
      %v2551 = vpop.f32.mrb[0].mxu0
      %2552 = vmatprep.mubr.bf16.mxu0 0
      %2553 = vmatmul.mubr.bf16.gmra.mrb[0].mxu0 %v1588
      %v2554 = vpop.f32.mrb[0].mxu0
      %v2555 = vadd.f32 %v2394, %v2554
      %v2556 = vpop.f32.mrb[0].mxu0
      %v2557 = vpop.f32.mrb[0].mxu0
      %v2558 = vadd.f32 %v2397, %v2557
      %v2559 = vpop.f32.mrb[0].mxu0
      %2560 = vmatprep.mubr.bf16.mxu0 0
      %2561 = vmatmul.mubr.bf16.gmra.mrb[0].mxu0 %v1591
      %v2562 = vpop.f32.mrb[0].mxu0
      %v2563 = vadd.f32 %v2402, %v2562
      %v2564 = vpop.f32.mrb[0].mxu0
      %v2565 = vpop.f32.mrb[0].mxu0
      %v2566 = vadd.f32 %v2405, %v2565
      %v2567 = vpop.f32.mrb[0].mxu0
      %2568 = vmatprep.mubr.bf16.mxu0 0
      %2569 = vmatmul.mubr.bf16.gmra.mrb[0].mxu0 %v1594
      %v2570 = vpop.f32.mrb[0].mxu0
      %v2571 = vadd.f32 %v2410, %v2570
      %v2572 = vpop.f32.mrb[0].mxu0
      %v2573 = vpop.f32.mrb[0].mxu0
      %v2574 = vadd.f32 %v2413, %v2573
      %v2575 = vpop.f32.mrb[0].mxu0
      %2576 = vmatprep.mubr.bf16.mxu0 0
      %2577 = vmatmul.mubr.bf16.gmra.mrb[0].mxu0 %v1597
      %v2578 = vpop.f32.mrb[0].mxu0
      %v2579 = vadd.f32 %v2418, %v2578
      %v2580 = vpop.f32.mrb[0].mxu0
      %v2581 = vpop.f32.mrb[0].mxu0
      %v2582 = vadd.f32 %v2421, %v2581
      %v2583 = vpop.f32.mrb[0].mxu0
      %2584 = vmatprep.mubr.bf16.mxu0 0
      %2585 = vmatmul.mubr.bf16.gmra.mrb[0].mxu0 %v1600
      %v2586 = vpop.f32.mrb[0].mxu0
      %v2587 = vadd.f32 %v2426, %v2586
      %v2588 = vpop.f32.mrb[0].mxu0
      %v2589 = vpop.f32.mrb[0].mxu0
      %v2590 = vadd.f32 %v2429, %v2589
      %v2591 = vpop.f32.mrb[0].mxu0
      %2592 = vmatprep.mubr.bf16.mxu0 0
      %2593 = vmatmul.mubr.bf16.gmra.mrb[0].mxu0 %v1603
      %v2594 = vpop.f32.mrb[0].mxu0
      %v2595 = vadd.f32 %v2434, %v2594
      %v2596 = vpop.f32.mrb[0].mxu0
      %v2597 = vpop.f32.mrb[0].mxu0
      %v2598 = vadd.f32 %v2437, %v2597
      %v2599 = vpop.f32.mrb[0].mxu0
      %2600 = vmatprep.mubr.bf16.mxu0 0
      %2601 = vmatmul.mubr.bf16.gmra.mrb[0].mxu0 %v1606
      %v2602 = vpop.f32.mrb[0].mxu0
      %v2603 = vadd.f32 %v2442, %v2602
      %v2604 = vpop.f32.mrb[0].mxu0
      %v2605 = vpop.f32.mrb[0].mxu0
      %v2606 = vadd.f32 %v2445, %v2605
      %v2607 = vpop.f32.mrb[0].mxu0
      %2608 = vmatprep.mubr.bf16.mxu0 0
      %2609 = vmatmul.mubr.bf16.gmra.mrb[0].mxu0 %v1609
      %v2610 = vpop.f32.mrb[0].mxu0
      %v2611 = vadd.f32 %v2450, %v2610
      %v2612 = vpop.f32.mrb[0].mxu0
      %v2613 = vpop.f32.mrb[0].mxu0
      %v2614 = vadd.f32 %v2453, %v2613
      %v2615 = vpop.f32.mrb[0].mxu0
      %2616 = vmatprep.mubr.bf16.mxu0 0
      %2617 = vmatmul.mubr.bf16.gmra.mrb[0].mxu0 %v1612
      %v2618 = vpop.f32.mrb[0].mxu0
      %v2619 = vadd.f32 %v2458, %v2618
      %v2620 = vpop.f32.mrb[0].mxu0
      %v2621 = vpop.f32.mrb[0].mxu0
      %v2622 = vadd.f32 %v2461, %v2621
      %v2623 = vpop.f32.mrb[0].mxu0
      %2624 = vmatprep.mubr.bf16.mxu0 0
      %2625 = vmatmul.mubr.bf16.gmra.mrb[0].mxu0 %v1615
      %v2626 = vpop.f32.mrb[0].mxu0
      %v2627 = vadd.f32 %v2466, %v2626
      %v2628 = vpop.f32.mrb[0].mxu0
      %v2629 = vpop.f32.mrb[0].mxu0
      %v2630 = vadd.f32 %v2469, %v2629
      %v2631 = vpop.f32.mrb[0].mxu0
      %2632 = vmatprep.mubr.bf16.mxu0 0
      %2633 = vmatmul.mubr.bf16.gmra.mrb[0].mxu0 %v1618
      %v2634 = vpop.f32.mrb[0].mxu0
      %v2635 = vadd.f32 %v2474, %v2634
      %v2636 = vpop.f32.mrb[0].mxu0
      %v2637 = vpop.f32.mrb[0].mxu0
      %v2638 = vadd.f32 %v2477, %v2637
      %v2639 = vpop.f32.mrb[0].mxu0
      %2640 = vmatprep.mubr.bf16.mxu0 0
      %2641 = vmatmul.mubr.bf16.gmra.mrb[0].mxu0 %v1621
      %v2642 = vpop.f32.mrb[0].mxu0
      %v2643 = vadd.f32 %v2482, %v2642
      %v2644 = vpop.f32.mrb[0].mxu0
      %v2645 = vpop.f32.mrb[0].mxu0
      %v2646 = vadd.f32 %v2485, %v2645
      %v2647 = vpop.f32.mrb[0].mxu0
      %2648 = vmatprep.mubr.bf16.mxu0 0
      %2649 = vmatmul.mubr.bf16.gmra.mrb[0].mxu0 %v1624
      %v2650 = vpop.f32.mrb[0].mxu0
      %v2651 = vadd.f32 %v2490, %v2650
      %v2652 = vpop.f32.mrb[0].mxu0
      %v2653 = vpop.f32.mrb[0].mxu0
      %v2654 = vadd.f32 %v2493, %v2653
      %v2655 = vpop.f32.mrb[0].mxu0
      %2656 = vdwg.mxu0
      %v2657 = vld [vmem:[#allocation2 + $0x30] sm:$0xff]
      %v2658 = vld [vmem:[#allocation2 + $0x38] sm:$0xff]
      %v2659 = vld [vmem:[#allocation2 + $0x40] sm:$0xff]
      %v2660 = vld [vmem:[#allocation2 + $0x48] sm:$0xff]
      %v2661 = vld [vmem:[#allocation2 + $0x50] sm:$0xff]
      %v2662 = vld [vmem:[#allocation2 + $0x58] sm:$0xff]
      %v2663 = vld [vmem:[#allocation2 + $0x60] sm:$0xff]
      %v2664 = vld [vmem:[#allocation2 + $0x68] sm:$0xff]
      %v2665 = vld [vmem:[#allocation2 + $0x70] sm:$0xff]
      %v2666 = vld [vmem:[#allocation2 + $0x78] sm:$0xff]
      %v2667 = vld [vmem:[#allocation2 + $0x80] sm:$0xff]
      %v2668 = vld [vmem:[#allocation2 + $0x88] sm:$0xff]
      %v2669 = vld [vmem:[#allocation2 + $0x90] sm:$0xff]
      %v2670 = vld [vmem:[#allocation2 + $0x98] sm:$0xff]
      %v2671 = vld [vmem:[#allocation2 + $0xa0] sm:$0xff]
      %v2672 = vld [vmem:[#allocation2 + $0xa8] sm:$0xff]
      %v2673 = vld [vmem:[#allocation2 + $0xb0] sm:$0xff]
      %v2674 = vld [vmem:[#allocation2 + $0xb8] sm:$0xff]
      %v2675 = vld [vmem:[#allocation2 + $0xc0] sm:$0xff]
      %v2676 = vld [vmem:[#allocation2 + $0xc8] sm:$0xff]
      %v2677 = vld [vmem:[#allocation2 + $0xd0] sm:$0xff]
      %v2678 = vld [vmem:[#allocation2 + $0xd8] sm:$0xff]
      %v2679 = vld [vmem:[#allocation2 + $0xe0] sm:$0xff]
      %v2680 = vld [vmem:[#allocation2 + $0xe8] sm:$0xff]
      %v2681 = vld [vmem:[#allocation2 + $0xf0] sm:$0xff]
      %v2682 = vld [vmem:[#allocation2 + $0xf8] sm:$0xff]
      %v2683 = vld [vmem:[#allocation2 + $0x100] sm:$0xff]
      %v2684 = vld [vmem:[#allocation2 + $0x108] sm:$0xff]
      %v2685 = vld [vmem:[#allocation2 + $0x110] sm:$0xff]
      %v2686 = vld [vmem:[#allocation2 + $0x118] sm:$0xff]
      %v2687 = vld [vmem:[#allocation2 + $0x120] sm:$0xff]
      %v2688 = vld [vmem:[#allocation2 + $0x128] sm:$0xff]
      %v2689 = vld [vmem:[#allocation2 + $0x130] sm:$0xff]
      %v2690 = vld [vmem:[#allocation2 + $0x138] sm:$0xff]
      %v2691 = vld [vmem:[#allocation2 + $0x140] sm:$0xff]
      %v2692 = vld [vmem:[#allocation2 + $0x148] sm:$0xff]
      %v2693 = vld [vmem:[#allocation2 + $0x150] sm:$0xff]
      %v2694 = vld [vmem:[#allocation2 + $0x158] sm:$0xff]
      %v2695 = vld [vmem:[#allocation2 + $0x160] sm:$0xff]
      %v2696 = vld [vmem:[#allocation2 + $0x168] sm:$0xff]
      %v2697 = vld [vmem:[#allocation2 + $0x170] sm:$0xff]
      %v2698 = vld [vmem:[#allocation2 + $0x178] sm:$0xff]
      %v2699 = vld [vmem:[#allocation2 + $0x180] sm:$0xff]
      %v2700 = vld [vmem:[#allocation2 + $0x188] sm:$0xff]
      %v2701 = vld [vmem:[#allocation2 + $0x190] sm:$0xff]
      %v2702 = vld [vmem:[#allocation2 + $0x198] sm:$0xff]
      %v2703 = vld [vmem:[#allocation2 + $0x1a0] sm:$0xff]
      %v2704 = vld [vmem:[#allocation2 + $0x1a8] sm:$0xff]
      %s2705 = scalar_lea.vmem %s3, 384
      %v2706 = vld [vmem:[%s2705] sm:$0xf]
      %v2707 = vld [vmem:[%s2705 + $0x4] sm:$0xf]
      %v2708 = vld [vmem:[%s2705 + $0x8] sm:$0xf]
      %v2709 = vld [vmem:[%s2705 + $0xc] sm:$0xf]
      %v2710 = vld [vmem:[%s2705 + $0x10] sm:$0xf]
      %v2711 = vld [vmem:[%s2705 + $0x14] sm:$0xf]
      %v2712 = vld [vmem:[%s2705 + $0x18] sm:$0xf]
      %v2713 = vld [vmem:[%s2705 + $0x1c] sm:$0xf]
      %v2714 = vld [vmem:[%s2705 + $0x20] sm:$0xf]
      %v2715 = vld [vmem:[%s2705 + $0x24] sm:$0xf]
      %v2716 = vld [vmem:[%s2705 + $0x28] sm:$0xf]
      %v2717 = vld [vmem:[%s2705 + $0x2c] sm:$0xf]
      %v2718 = vld [vmem:[%s2705 + $0x30] sm:$0xf]
      %v2719 = vld [vmem:[%s2705 + $0x34] sm:$0xf]
      %v2720 = vld [vmem:[%s2705 + $0x38] sm:$0xf]
      %v2721 = vld [vmem:[%s2705 + $0x3c] sm:$0xf]
      %v2722 = vld [vmem:[%s2705 + $0x40] sm:$0xf]
      %v2723 = vld [vmem:[%s2705 + $0x44] sm:$0xf]
      %v2724 = vld [vmem:[%s2705 + $0x48] sm:$0xf]
      %v2725 = vld [vmem:[%s2705 + $0x4c] sm:$0xf]
      %v2726 = vld [vmem:[%s2705 + $0x50] sm:$0xf]
      %v2727 = vld [vmem:[%s2705 + $0x54] sm:$0xf]
      %v2728 = vld [vmem:[%s2705 + $0x58] sm:$0xf]
      %v2729 = vld [vmem:[%s2705 + $0x5c] sm:$0xf]
      %v2730 = vld [vmem:[%s2705 + $0x60] sm:$0xf]
      %v2731 = vld [vmem:[%s2705 + $0x64] sm:$0xf]
      %v2732 = vld [vmem:[%s2705 + $0x68] sm:$0xf]
      %v2733 = vld [vmem:[%s2705 + $0x6c] sm:$0xf]
      %v2734 = vld [vmem:[%s2705 + $0x70] sm:$0xf]
      %v2735 = vld [vmem:[%s2705 + $0x74] sm:$0xf]
      %v2736 = vld [vmem:[%s2705 + $0x78] sm:$0xf]
      %v2737 = vld [vmem:[%s2705 + $0x7c] sm:$0xf]
      %v2738 = vld [vmem:[%s2705 + $0x80] sm:$0xf]
      %v2739 = vld [vmem:[%s2705 + $0x84] sm:$0xf]
      %v2740 = vld [vmem:[%s2705 + $0x88] sm:$0xf]
      %v2741 = vld [vmem:[%s2705 + $0x8c] sm:$0xf]
      %v2742 = vld [vmem:[%s2705 + $0x90] sm:$0xf]
      %v2743 = vld [vmem:[%s2705 + $0x94] sm:$0xf]
      %v2744 = vld [vmem:[%s2705 + $0x98] sm:$0xf]
      %v2745 = vld [vmem:[%s2705 + $0x9c] sm:$0xf]
      %v2746 = vld [vmem:[%s2705 + $0xa0] sm:$0xf]
      %v2747 = vld [vmem:[%s2705 + $0xa4] sm:$0xf]
      %v2748 = vld [vmem:[%s2705 + $0xa8] sm:$0xf]
      %v2749 = vld [vmem:[%s2705 + $0xac] sm:$0xf]
      %v2750 = vld [vmem:[%s2705 + $0xb0] sm:$0xf]
      %v2751 = vld [vmem:[%s2705 + $0xb4] sm:$0xf]
      %v2752 = vld [vmem:[%s2705 + $0xb8] sm:$0xf]
      %v2753 = vld [vmem:[%s2705 + $0xbc] sm:$0xf]
      %v2802 = vunpack.c.l.b16 %v2706
      %v2803 = vunpack.c.l.b16 %v2707
      %v2804 = vunpack.c.l.b16 %v2708
      %v2805 = vunpack.c.l.b16 %v2709
      %v2806 = vunpack.c.l.b16 %v2710
      %v2807 = vunpack.c.l.b16 %v2711
      %v2808 = vunpack.c.l.b16 %v2712
      %v2809 = vunpack.c.l.b16 %v2713
      %v2810 = vunpack.c.l.b16 %v2714
      %v2811 = vunpack.c.l.b16 %v2715
      %v2812 = vunpack.c.l.b16 %v2716
      %v2813 = vunpack.c.l.b16 %v2717
      %v2814 = vunpack.c.l.b16 %v2718
      %v2815 = vunpack.c.l.b16 %v2719
      %v2816 = vunpack.c.l.b16 %v2720
      %v2817 = vunpack.c.l.b16 %v2721
      %v2818 = vunpack.c.l.b16 %v2722
      %v2819 = vunpack.c.l.b16 %v2723
      %v2820 = vunpack.c.l.b16 %v2724
      %v2821 = vunpack.c.l.b16 %v2725
      %v2822 = vunpack.c.l.b16 %v2726
      %v2823 = vunpack.c.l.b16 %v2727
      %v2824 = vunpack.c.l.b16 %v2728
      %v2825 = vunpack.c.l.b16 %v2729
      %v2826 = vunpack.c.l.b16 %v2730
      %v2827 = vunpack.c.l.b16 %v2731
      %v2828 = vunpack.c.l.b16 %v2732
      %v2829 = vunpack.c.l.b16 %v2733
      %v2830 = vunpack.c.l.b16 %v2734
      %v2831 = vunpack.c.l.b16 %v2735
      %v2832 = vunpack.c.l.b16 %v2736
      %v2833 = vunpack.c.l.b16 %v2737
      %v2834 = vunpack.c.l.b16 %v2738
      %v2835 = vunpack.c.l.b16 %v2739
      %v2836 = vunpack.c.l.b16 %v2740
      %v2837 = vunpack.c.l.b16 %v2741
      %v2838 = vunpack.c.l.b16 %v2742
      %v2839 = vunpack.c.l.b16 %v2743
      %v2840 = vunpack.c.l.b16 %v2744
      %v2841 = vunpack.c.l.b16 %v2745
      %v2842 = vunpack.c.l.b16 %v2746
      %v2843 = vunpack.c.l.b16 %v2747
      %v2844 = vunpack.c.l.b16 %v2748
      %v2845 = vunpack.c.l.b16 %v2749
      %v2846 = vunpack.c.l.b16 %v2750
      %v2847 = vunpack.c.l.b16 %v2751
      %v2848 = vunpack.c.l.b16 %v2752
      %v2849 = vunpack.c.l.b16 %v2753
      %v2850 = vpack.c.b16 %v2803, %v2802
      %v2851 = vpack.c.b16 %v2805, %v2804
      %v2852 = vpack.c.b16 %v2807, %v2806
      %v2853 = vpack.c.b16 %v2809, %v2808
      %v2854 = vpack.c.b16 %v2811, %v2810
      %v2855 = vpack.c.b16 %v2813, %v2812
      %v2856 = vpack.c.b16 %v2815, %v2814
      %v2857 = vpack.c.b16 %v2817, %v2816
      %v2858 = vpack.c.b16 %v2819, %v2818
      %v2859 = vpack.c.b16 %v2821, %v2820
      %v2860 = vpack.c.b16 %v2823, %v2822
      %v2861 = vpack.c.b16 %v2825, %v2824
      %v2862 = vpack.c.b16 %v2827, %v2826
      %v2863 = vpack.c.b16 %v2829, %v2828
      %v2864 = vpack.c.b16 %v2831, %v2830
      %v2865 = vpack.c.b16 %v2833, %v2832
      %v2866 = vpack.c.b16 %v2835, %v2834
      %v2867 = vpack.c.b16 %v2837, %v2836
      %v2868 = vpack.c.b16 %v2839, %v2838
      %v2869 = vpack.c.b16 %v2841, %v2840
      %v2870 = vpack.c.b16 %v2843, %v2842
      %v2871 = vpack.c.b16 %v2845, %v2844
      %v2872 = vpack.c.b16 %v2847, %v2846
      %v2873 = vpack.c.b16 %v2849, %v2848
      %2898 = vmatprep.subr.bf16.mxu0 0
      %2899 = vmatpush1.bf16.msra.mxu0 %v2850
      %2900 = vmatprep.subr.bf16.mxu0 0
      %2901 = vmatpush1.bf16.msra.mxu0 %v2851
      %2902 = vmatprep.subr.bf16.mxu0 0
      %2903 = vmatpush1.bf16.msra.mxu0 %v2852
      %2904 = vmatprep.subr.bf16.mxu0 0
      %2905 = vmatpush1.bf16.msra.mxu0 %v2853
      %2906 = vmatprep.subr.bf16.mxu0 0
      %2907 = vmatpush1.bf16.msra.mxu0 %v2854
      %2908 = vmatprep.subr.bf16.mxu0 0
      %2909 = vmatpush1.bf16.msra.mxu0 %v2855
      %2910 = vmatprep.subr.bf16.mxu0 0
      %2911 = vmatpush1.bf16.msra.mxu0 %v2856
      %2912 = vmatprep.subr.bf16.mxu0 0
      %2913 = vmatpush1.bf16.msra.mxu0 %v2857
      %2914 = vmatprep.subr.bf16.mxu0 0
      %2915 = vmatpush1.bf16.msra.mxu0 %v2858
      %2916 = vmatprep.subr.bf16.mxu0 0
      %2917 = vmatpush1.bf16.msra.mxu0 %v2859
      %2918 = vmatprep.subr.bf16.mxu0 0
      %2919 = vmatpush1.bf16.msra.mxu0 %v2860
      %2920 = vmatprep.subr.bf16.mxu0 0
      %2921 = vmatpush1.bf16.msra.mxu0 %v2861
      %2922 = vmatprep.subr.bf16.mxu0 0
      %2923 = vmatpush1.bf16.msra.mxu0 %v2862
      %2924 = vmatprep.subr.bf16.mxu0 0
      %2925 = vmatpush1.bf16.msra.mxu0 %v2863
      %2926 = vmatprep.subr.bf16.mxu0 0
      %2927 = vmatpush1.bf16.msra.mxu0 %v2864
      %2928 = vmatprep.subr.bf16.mxu0 0
      %2929 = vmatpush1.bf16.msra.mxu0 %v2865
      %2930 = vmatprep.mubr.bf16.mxu0 %v2658
      %2931 = vmatmul.mubr.bf16.gmra.mrb[0].mxu0 %v2657
      %v2932 = vpop.f32.mrb[0].mxu0
      %v2933 = vadd.f32 0.0, %v2932
      %v2934 = vpop.f32.mrb[0].mxu0
      %v2935 = vpop.f32.mrb[0].mxu0
      %v2936 = vadd.f32 0.0, %v2935
      %v2937 = vpop.f32.mrb[0].mxu0
      %2938 = vmatprep.mubr.bf16.mxu0 %v2661
      %2939 = vmatmul.mubr.bf16.gmra.mrb[0].mxu0 %v2660
      %v2940 = vpop.f32.mrb[0].mxu0
      %v2941 = vadd.f32 0.0, %v2940
      %v2942 = vpop.f32.mrb[0].mxu0
      %v2943 = vpop.f32.mrb[0].mxu0
      %v2944 = vadd.f32 0.0, %v2943
      %v2945 = vpop.f32.mrb[0].mxu0
      %2946 = vmatprep.mubr.bf16.mxu0 %v2664
      %2947 = vmatmul.mubr.bf16.gmra.mrb[0].mxu0 %v2663
      %v2948 = vpop.f32.mrb[0].mxu0
      %v2949 = vadd.f32 0.0, %v2948
      %v2950 = vpop.f32.mrb[0].mxu0
      %v2951 = vpop.f32.mrb[0].mxu0
      %v2952 = vadd.f32 0.0, %v2951
      %v2953 = vpop.f32.mrb[0].mxu0
      %2954 = vmatprep.mubr.bf16.mxu0 %v2667
      %2955 = vmatmul.mubr.bf16.gmra.mrb[0].mxu0 %v2666
      %v2956 = vpop.f32.mrb[0].mxu0
      %v2957 = vadd.f32 0.0, %v2956
      %v2958 = vpop.f32.mrb[0].mxu0
      %v2959 = vpop.f32.mrb[0].mxu0
      %v2960 = vadd.f32 0.0, %v2959
      %v2961 = vpop.f32.mrb[0].mxu0
      %2962 = vmatprep.mubr.bf16.mxu0 %v2670
      %2963 = vmatmul.mubr.bf16.gmra.mrb[0].mxu0 %v2669
      %v2964 = vpop.f32.mrb[0].mxu0
      %v2965 = vadd.f32 0.0, %v2964
      %v2966 = vpop.f32.mrb[0].mxu0
      %v2967 = vpop.f32.mrb[0].mxu0
      %v2968 = vadd.f32 0.0, %v2967
      %v2969 = vpop.f32.mrb[0].mxu0
      %2970 = vmatprep.mubr.bf16.mxu0 %v2673
      %2971 = vmatmul.mubr.bf16.gmra.mrb[0].mxu0 %v2672
      %v2972 = vpop.f32.mrb[0].mxu0
      %v2973 = vadd.f32 0.0, %v2972
      %v2974 = vpop.f32.mrb[0].mxu0
      %v2975 = vpop.f32.mrb[0].mxu0
      %v2976 = vadd.f32 0.0, %v2975
      %v2977 = vpop.f32.mrb[0].mxu0
      %2978 = vmatprep.mubr.bf16.mxu0 %v2676
      %2979 = vmatmul.mubr.bf16.gmra.mrb[0].mxu0 %v2675
      %v2980 = vpop.f32.mrb[0].mxu0
      %v2981 = vadd.f32 0.0, %v2980
      %v2982 = vpop.f32.mrb[0].mxu0
      %v2983 = vpop.f32.mrb[0].mxu0
      %v2984 = vadd.f32 0.0, %v2983
      %v2985 = vpop.f32.mrb[0].mxu0
      %2986 = vmatprep.mubr.bf16.mxu0 %v2679
      %2987 = vmatmul.mubr.bf16.gmra.mrb[0].mxu0 %v2678
      %v2988 = vpop.f32.mrb[0].mxu0
      %v2989 = vadd.f32 0.0, %v2988
      %v2990 = vpop.f32.mrb[0].mxu0
      %v2991 = vpop.f32.mrb[0].mxu0
      %v2992 = vadd.f32 0.0, %v2991
      %v2993 = vpop.f32.mrb[0].mxu0
      %2994 = vmatprep.mubr.bf16.mxu0 %v2682
      %2995 = vmatmul.mubr.bf16.gmra.mrb[0].mxu0 %v2681
      %v2996 = vpop.f32.mrb[0].mxu0
      %v2997 = vadd.f32 0.0, %v2996
      %v2998 = vpop.f32.mrb[0].mxu0
      %v2999 = vpop.f32.mrb[0].mxu0
      %v3000 = vadd.f32 0.0, %v2999
      %v3001 = vpop.f32.mrb[0].mxu0
      %3002 = vmatprep.mubr.bf16.mxu0 %v2685
      %3003 = vmatmul.mubr.bf16.gmra.mrb[0].mxu0 %v2684
      %v3004 = vpop.f32.mrb[0].mxu0
      %v3005 = vadd.f32 0.0, %v3004
      %v3006 = vpop.f32.mrb[0].mxu0
      %v3007 = vpop.f32.mrb[0].mxu0
      %v3008 = vadd.f32 0.0, %v3007
      %v3009 = vpop.f32.mrb[0].mxu0
      %3010 = vmatprep.mubr.bf16.mxu0 %v2688
      %3011 = vmatmul.mubr.bf16.gmra.mrb[0].mxu0 %v2687
      %v3012 = vpop.f32.mrb[0].mxu0
      %v3013 = vadd.f32 0.0, %v3012
      %v3014 = vpop.f32.mrb[0].mxu0
      %v3015 = vpop.f32.mrb[0].mxu0
      %v3016 = vadd.f32 0.0, %v3015
      %v3017 = vpop.f32.mrb[0].mxu0
      %3018 = vmatprep.mubr.bf16.mxu0 %v2691
      %3019 = vmatmul.mubr.bf16.gmra.mrb[0].mxu0 %v2690
      %v3020 = vpop.f32.mrb[0].mxu0
      %v3021 = vadd.f32 0.0, %v3020
      %v3022 = vpop.f32.mrb[0].mxu0
      %v3023 = vpop.f32.mrb[0].mxu0
      %v3024 = vadd.f32 0.0, %v3023
      %v3025 = vpop.f32.mrb[0].mxu0
      %3026 = vmatprep.mubr.bf16.mxu0 %v2694
      %3027 = vmatmul.mubr.bf16.gmra.mrb[0].mxu0 %v2693
      %v3028 = vpop.f32.mrb[0].mxu0
      %v3029 = vadd.f32 0.0, %v3028
      %v3030 = vpop.f32.mrb[0].mxu0
      %v3031 = vpop.f32.mrb[0].mxu0
      %v3032 = vadd.f32 0.0, %v3031
      %v3033 = vpop.f32.mrb[0].mxu0
      %3034 = vmatprep.mubr.bf16.mxu0 %v2697
      %3035 = vmatmul.mubr.bf16.gmra.mrb[0].mxu0 %v2696
      %v3036 = vpop.f32.mrb[0].mxu0
      %v3037 = vadd.f32 0.0, %v3036
      %v3038 = vpop.f32.mrb[0].mxu0
      %v3039 = vpop.f32.mrb[0].mxu0
      %v3040 = vadd.f32 0.0, %v3039
      %v3041 = vpop.f32.mrb[0].mxu0
      %3042 = vmatprep.mubr.bf16.mxu0 %v2700
      %3043 = vmatmul.mubr.bf16.gmra.mrb[0].mxu0 %v2699
      %v3044 = vpop.f32.mrb[0].mxu0
      %v3045 = vadd.f32 0.0, %v3044
      %v3046 = vpop.f32.mrb[0].mxu0
      %v3047 = vpop.f32.mrb[0].mxu0
      %v3048 = vadd.f32 0.0, %v3047
      %v3049 = vpop.f32.mrb[0].mxu0
      %3050 = vmatprep.mubr.bf16.mxu0 %v2703
      %3051 = vmatmul.mubr.bf16.gmra.mrb[0].mxu0 %v2702
      %v3052 = vpop.f32.mrb[0].mxu0
      %v3053 = vadd.f32 0.0, %v3052
      %v3054 = vpop.f32.mrb[0].mxu0
      %v3055 = vpop.f32.mrb[0].mxu0
      %v3056 = vadd.f32 0.0, %v3055
      %v3057 = vpop.f32.mrb[0].mxu0
      %3058 = vdwg.mxu0
      %3059 = vmatprep.subr.bf16.mxu0 0
      %3060 = vmatpush1.bf16.msra.mxu0 %v2866
      %3061 = vmatprep.subr.bf16.mxu0 0
      %3062 = vmatpush1.bf16.msra.mxu0 %v2867
      %3063 = vmatprep.subr.bf16.mxu0 0
      %3064 = vmatpush1.bf16.msra.mxu0 %v2868
      %3065 = vmatprep.subr.bf16.mxu0 0
      %3066 = vmatpush1.bf16.msra.mxu0 %v2869
      %3067 = vmatprep.subr.bf16.mxu0 0
      %3068 = vmatpush1.bf16.msra.mxu0 %v2870
      %3069 = vmatprep.subr.bf16.mxu0 0
      %3070 = vmatpush1.bf16.msra.mxu0 %v2871
      %3071 = vmatprep.subr.bf16.mxu0 0
      %3072 = vmatpush1.bf16.msra.mxu0 %v2872
      %3073 = vmatprep.subr.bf16.mxu0 0
      %3074 = vmatpush1.bf16.msra.mxu0 %v2873
      %3075 = vmatprep.subr.bf16.mxu0 0
      %3076 = vmatpush1.bf16.msra.mxu0 0
      %3077 = vmatprep.subr.bf16.mxu0 0
      %3078 = vmatpush1.bf16.msra.mxu0 0
      %3079 = vmatprep.subr.bf16.mxu0 0
      %3080 = vmatpush1.bf16.msra.mxu0 0
      %3081 = vmatprep.subr.bf16.mxu0 0
      %3082 = vmatpush1.bf16.msra.mxu0 0
      %3083 = vmatprep.subr.bf16.mxu0 0
      %3084 = vmatpush1.bf16.msra.mxu0 0
      %3085 = vmatprep.subr.bf16.mxu0 0
      %3086 = vmatpush1.bf16.msra.mxu0 0
      %3087 = vmatprep.subr.bf16.mxu0 0
      %3088 = vmatpush1.bf16.msra.mxu0 0
      %3089 = vmatprep.subr.bf16.mxu0 0
      %3090 = vmatpush1.bf16.msra.mxu0 0
      %3091 = vmatprep.mubr.bf16.mxu0 0
      %3092 = vmatmul.mubr.bf16.gmra.mrb[0].mxu0 %v2659
      %v3093 = vpop.f32.mrb[0].mxu0
      %v3094 = vadd.f32 %v2933, %v3093
      %v3095 = vpop.f32.mrb[0].mxu0
      %v3096 = vpop.f32.mrb[0].mxu0
      %v3097 = vadd.f32 %v2936, %v3096
      %v3098 = vpop.f32.mrb[0].mxu0
      %3099 = vmatprep.mubr.bf16.mxu0 0
      %3100 = vmatmul.mubr.bf16.gmra.mrb[0].mxu0 %v2662
      %v3101 = vpop.f32.mrb[0].mxu0
      %v3102 = vadd.f32 %v2941, %v3101
      %v3103 = vpop.f32.mrb[0].mxu0
      %v3104 = vpop.f32.mrb[0].mxu0
      %v3105 = vadd.f32 %v2944, %v3104
      %v3106 = vpop.f32.mrb[0].mxu0
      %3107 = vmatprep.mubr.bf16.mxu0 0
      %3108 = vmatmul.mubr.bf16.gmra.mrb[0].mxu0 %v2665
      %v3109 = vpop.f32.mrb[0].mxu0
      %v3110 = vadd.f32 %v2949, %v3109
      %v3111 = vpop.f32.mrb[0].mxu0
      %v3112 = vpop.f32.mrb[0].mxu0
      %v3113 = vadd.f32 %v2952, %v3112
      %v3114 = vpop.f32.mrb[0].mxu0
      %3115 = vmatprep.mubr.bf16.mxu0 0
      %3116 = vmatmul.mubr.bf16.gmra.mrb[0].mxu0 %v2668
      %v3117 = vpop.f32.mrb[0].mxu0
      %v3118 = vadd.f32 %v2957, %v3117
      %v3119 = vpop.f32.mrb[0].mxu0
      %v3120 = vpop.f32.mrb[0].mxu0
      %v3121 = vadd.f32 %v2960, %v3120
      %v3122 = vpop.f32.mrb[0].mxu0
      %3123 = vmatprep.mubr.bf16.mxu0 0
      %3124 = vmatmul.mubr.bf16.gmra.mrb[0].mxu0 %v2671
      %v3125 = vpop.f32.mrb[0].mxu0
      %v3126 = vadd.f32 %v2965, %v3125
      %v3127 = vpop.f32.mrb[0].mxu0
      %v3128 = vpop.f32.mrb[0].mxu0
      %v3129 = vadd.f32 %v2968, %v3128
      %v3130 = vpop.f32.mrb[0].mxu0
      %3131 = vmatprep.mubr.bf16.mxu0 0
      %3132 = vmatmul.mubr.bf16.gmra.mrb[0].mxu0 %v2674
      %v3133 = vpop.f32.mrb[0].mxu0
      %v3134 = vadd.f32 %v2973, %v3133
      %v3135 = vpop.f32.mrb[0].mxu0
      %v3136 = vpop.f32.mrb[0].mxu0
      %v3137 = vadd.f32 %v2976, %v3136
      %v3138 = vpop.f32.mrb[0].mxu0
      %3139 = vmatprep.mubr.bf16.mxu0 0
      %3140 = vmatmul.mubr.bf16.gmra.mrb[0].mxu0 %v2677
      %v3141 = vpop.f32.mrb[0].mxu0
      %v3142 = vadd.f32 %v2981, %v3141
      %v3143 = vpop.f32.mrb[0].mxu0
      %v3144 = vpop.f32.mrb[0].mxu0
      %v3145 = vadd.f32 %v2984, %v3144
      %v3146 = vpop.f32.mrb[0].mxu0
      %3147 = vmatprep.mubr.bf16.mxu0 0
      %3148 = vmatmul.mubr.bf16.gmra.mrb[0].mxu0 %v2680
      %v3149 = vpop.f32.mrb[0].mxu0
      %v3150 = vadd.f32 %v2989, %v3149
      %v3151 = vpop.f32.mrb[0].mxu0
      %v3152 = vpop.f32.mrb[0].mxu0
      %v3153 = vadd.f32 %v2992, %v3152
      %v3154 = vpop.f32.mrb[0].mxu0
      %3155 = vmatprep.mubr.bf16.mxu0 0
      %3156 = vmatmul.mubr.bf16.gmra.mrb[0].mxu0 %v2683
      %v3157 = vpop.f32.mrb[0].mxu0
      %v3158 = vadd.f32 %v2997, %v3157
      %v3159 = vpop.f32.mrb[0].mxu0
      %v3160 = vpop.f32.mrb[0].mxu0
      %v3161 = vadd.f32 %v3000, %v3160
      %v3162 = vpop.f32.mrb[0].mxu0
      %3163 = vmatprep.mubr.bf16.mxu0 0
      %3164 = vmatmul.mubr.bf16.gmra.mrb[0].mxu0 %v2686
      %v3165 = vpop.f32.mrb[0].mxu0
      %v3166 = vadd.f32 %v3005, %v3165
      %v3167 = vpop.f32.mrb[0].mxu0
      %v3168 = vpop.f32.mrb[0].mxu0
      %v3169 = vadd.f32 %v3008, %v3168
      %v3170 = vpop.f32.mrb[0].mxu0
      %3171 = vmatprep.mubr.bf16.mxu0 0
      %3172 = vmatmul.mubr.bf16.gmra.mrb[0].mxu0 %v2689
      %v3173 = vpop.f32.mrb[0].mxu0
      %v3174 = vadd.f32 %v3013, %v3173
      %v3175 = vpop.f32.mrb[0].mxu0
      %v3176 = vpop.f32.mrb[0].mxu0
      %v3177 = vadd.f32 %v3016, %v3176
      %v3178 = vpop.f32.mrb[0].mxu0
      %3179 = vmatprep.mubr.bf16.mxu0 0
      %3180 = vmatmul.mubr.bf16.gmra.mrb[0].mxu0 %v2692
      %v3181 = vpop.f32.mrb[0].mxu0
      %v3182 = vadd.f32 %v3021, %v3181
      %v3183 = vpop.f32.mrb[0].mxu0
      %v3184 = vpop.f32.mrb[0].mxu0
      %v3185 = vadd.f32 %v3024, %v3184
      %v3186 = vpop.f32.mrb[0].mxu0
      %3187 = vmatprep.mubr.bf16.mxu0 0
      %3188 = vmatmul.mubr.bf16.gmra.mrb[0].mxu0 %v2695
      %v3189 = vpop.f32.mrb[0].mxu0
      %v3190 = vadd.f32 %v3029, %v3189
      %v3191 = vpop.f32.mrb[0].mxu0
      %v3192 = vpop.f32.mrb[0].mxu0
      %v3193 = vadd.f32 %v3032, %v3192
      %v3194 = vpop.f32.mrb[0].mxu0
      %3195 = vmatprep.mubr.bf16.mxu0 0
      %3196 = vmatmul.mubr.bf16.gmra.mrb[0].mxu0 %v2698
      %v3197 = vpop.f32.mrb[0].mxu0
      %v3198 = vadd.f32 %v3037, %v3197
      %v3199 = vpop.f32.mrb[0].mxu0
      %v3200 = vpop.f32.mrb[0].mxu0
      %v3201 = vadd.f32 %v3040, %v3200
      %v3202 = vpop.f32.mrb[0].mxu0
      %3203 = vmatprep.mubr.bf16.mxu0 0
      %3204 = vmatmul.mubr.bf16.gmra.mrb[0].mxu0 %v2701
      %v3205 = vpop.f32.mrb[0].mxu0
      %v3206 = vadd.f32 %v3045, %v3205
      %v3207 = vpop.f32.mrb[0].mxu0
      %v3208 = vpop.f32.mrb[0].mxu0
      %v3209 = vadd.f32 %v3048, %v3208
      %v3210 = vpop.f32.mrb[0].mxu0
      %3211 = vmatprep.mubr.bf16.mxu0 0
      %3212 = vmatmul.mubr.bf16.gmra.mrb[0].mxu0 %v2704
      %v3213 = vpop.f32.mrb[0].mxu0
      %v3214 = vadd.f32 %v3053, %v3213
      %v3215 = vpop.f32.mrb[0].mxu0
      %v3216 = vpop.f32.mrb[0].mxu0
      %v3217 = vadd.f32 %v3056, %v3216
      %v3218 = vpop.f32.mrb[0].mxu0
      %3219 = vdwg.mxu0
      %v3220 = vadd.f32 %v2531, %v3094
      %v3221 = vadd.f32 %v2534, %v3097
      %v3222 = vadd.f32 %v2539, %v3102
      %v3223 = vadd.f32 %v2542, %v3105
      %v3224 = vadd.f32 %v2547, %v3110
      %v3225 = vadd.f32 %v2550, %v3113
      %v3226 = vadd.f32 %v2555, %v3118
      %v3227 = vadd.f32 %v2558, %v3121
      %v3228 = vadd.f32 %v2563, %v3126
      %v3229 = vadd.f32 %v2566, %v3129
      %v3230 = vadd.f32 %v2571, %v3134
      %v3231 = vadd.f32 %v2574, %v3137
      %v3232 = vadd.f32 %v2579, %v3142
      %v3233 = vadd.f32 %v2582, %v3145
      %v3234 = vadd.f32 %v2587, %v3150
      %v3235 = vadd.f32 %v2590, %v3153
      %v3236 = vadd.f32 %v2595, %v3158
      %v3237 = vadd.f32 %v2598, %v3161
      %v3238 = vadd.f32 %v2603, %v3166
      %v3239 = vadd.f32 %v2606, %v3169
      %v3240 = vadd.f32 %v2611, %v3174
      %v3241 = vadd.f32 %v2614, %v3177
      %v3242 = vadd.f32 %v2619, %v3182
      %v3243 = vadd.f32 %v2622, %v3185
      %v3244 = vadd.f32 %v2627, %v3190
      %v3245 = vadd.f32 %v2630, %v3193
      %v3246 = vadd.f32 %v2635, %v3198
      %v3247 = vadd.f32 %v2638, %v3201
      %v3248 = vadd.f32 %v2643, %v3206
      %v3249 = vadd.f32 %v2646, %v3209
      %v3250 = vadd.f32 %v2651, %v3214
      %v3251 = vadd.f32 %v2654, %v3217
      %v3252 = vld [vmem:[%s4] sm:$0x1]
      %v3254 = vlaneseq
      %v3255 = vshrl.u32 %v3254, 7
      %v3256 = vsub.s32 0, %v3255
      %v3257 = vrot.slane %v3252, %v3256
      %v3259 = vadd.f32 %v3220, %v3257
      %v3260 = vadd.f32 %v3221, %v3257
      %v3261 = vadd.f32 %v3222, %v3257
      %v3262 = vadd.f32 %v3223, %v3257
      %v3263 = vadd.f32 %v3224, %v3257
      %v3264 = vadd.f32 %v3225, %v3257
      %v3265 = vadd.f32 %v3226, %v3257
      %v3266 = vadd.f32 %v3227, %v3257
      %v3267 = vadd.f32 %v3228, %v3257
      %v3268 = vadd.f32 %v3229, %v3257
      %v3269 = vadd.f32 %v3230, %v3257
      %v3270 = vadd.f32 %v3231, %v3257
      %v3271 = vadd.f32 %v3232, %v3257
      %v3272 = vadd.f32 %v3233, %v3257
      %v3273 = vadd.f32 %v3234, %v3257
      %v3274 = vadd.f32 %v3235, %v3257
      %v3275 = vadd.f32 %v3236, %v3257
      %v3276 = vadd.f32 %v3237, %v3257
      %v3277 = vadd.f32 %v3238, %v3257
      %v3278 = vadd.f32 %v3239, %v3257
      %v3279 = vadd.f32 %v3240, %v3257
      %v3280 = vadd.f32 %v3241, %v3257
      %v3281 = vadd.f32 %v3242, %v3257
      %v3282 = vadd.f32 %v3243, %v3257
      %v3283 = vadd.f32 %v3244, %v3257
      %v3284 = vadd.f32 %v3245, %v3257
      %v3285 = vadd.f32 %v3246, %v3257
      %v3286 = vadd.f32 %v3247, %v3257
      %v3287 = vadd.f32 %v3248, %v3257
      %v3288 = vadd.f32 %v3249, %v3257
      %v3289 = vadd.f32 %v3250, %v3257
      %v3290 = vadd.f32 %v3251, %v3257
      %v3291 = vmax.f32 %v3259, 0.0
      %v3292 = vmax.f32 %v3260, 0.0
      %v3293 = vmax.f32 %v3261, 0.0
      %v3294 = vmax.f32 %v3262, 0.0
      %v3295 = vmax.f32 %v3263, 0.0
      %v3296 = vmax.f32 %v3264, 0.0
      %v3297 = vmax.f32 %v3265, 0.0
      %v3298 = vmax.f32 %v3266, 0.0
      %v3299 = vmax.f32 %v3267, 0.0
      %v3300 = vmax.f32 %v3268, 0.0
      %v3301 = vmax.f32 %v3269, 0.0
      %v3302 = vmax.f32 %v3270, 0.0
      %v3303 = vmax.f32 %v3271, 0.0
      %v3304 = vmax.f32 %v3272, 0.0
      %v3305 = vmax.f32 %v3273, 0.0
      %v3306 = vmax.f32 %v3274, 0.0
      %v3307 = vmax.f32 %v3275, 0.0
      %v3308 = vmax.f32 %v3276, 0.0
      %v3309 = vmax.f32 %v3277, 0.0
      %v3310 = vmax.f32 %v3278, 0.0
      %v3311 = vmax.f32 %v3279, 0.0
      %v3312 = vmax.f32 %v3280, 0.0
      %v3313 = vmax.f32 %v3281, 0.0
      %v3314 = vmax.f32 %v3282, 0.0
      %v3315 = vmax.f32 %v3283, 0.0
      %v3316 = vmax.f32 %v3284, 0.0
      %v3317 = vmax.f32 %v3285, 0.0
      %v3318 = vmax.f32 %v3286, 0.0
      %v3319 = vmax.f32 %v3287, 0.0
      %v3320 = vmax.f32 %v3288, 0.0
      %v3321 = vmax.f32 %v3289, 0.0
      %v3322 = vmax.f32 %v3290, 0.0
      %v3323 = vpack.c.bf16 %v3292, %v3291
      %v3324 = vpack.c.bf16 %v3294, %v3293
      %v3325 = vpack.c.bf16 %v3296, %v3295
      %v3326 = vpack.c.bf16 %v3298, %v3297
      %v3327 = vpack.c.bf16 %v3300, %v3299
      %v3328 = vpack.c.bf16 %v3302, %v3301
      %v3329 = vpack.c.bf16 %v3304, %v3303
      %v3330 = vpack.c.bf16 %v3306, %v3305
      %v3331 = vpack.c.bf16 %v3308, %v3307
      %v3332 = vpack.c.bf16 %v3310, %v3309
      %v3333 = vpack.c.bf16 %v3312, %v3311
      %v3334 = vpack.c.bf16 %v3314, %v3313
      %v3335 = vpack.c.bf16 %v3316, %v3315
      %v3336 = vpack.c.bf16 %v3318, %v3317
      %v3337 = vpack.c.bf16 %v3320, %v3319
      %v3338 = vpack.c.bf16 %v3322, %v3321
      %v3339 = vld [vmem:[%s5] sm:$0xf]
      %v3340 = vld [vmem:[%s5 + $0x4] sm:$0xf]
      %v3341 = vld [vmem:[%s5 + $0x8] sm:$0xf]
      %v3342 = vld [vmem:[%s5 + $0xc] sm:$0xf]
      %v3343 = vld [vmem:[%s5 + $0x10] sm:$0xf]
      %v3344 = vld [vmem:[%s5 + $0x14] sm:$0xf]
      %v3345 = vld [vmem:[%s5 + $0x18] sm:$0xf]
      %v3346 = vld [vmem:[%s5 + $0x1c] sm:$0xf]
      %v3347 = vld [vmem:[%s5 + $0x20] sm:$0xf]
      %v3348 = vld [vmem:[%s5 + $0x24] sm:$0xf]
      %v3349 = vld [vmem:[%s5 + $0x28] sm:$0xf]
      %v3350 = vld [vmem:[%s5 + $0x2c] sm:$0xf]
      %v3351 = vld [vmem:[%s5 + $0x30] sm:$0xf]
      %v3352 = vld [vmem:[%s5 + $0x34] sm:$0xf]
      %v3353 = vld [vmem:[%s5 + $0x38] sm:$0xf]
      %v3354 = vld [vmem:[%s5 + $0x3c] sm:$0xf]
      %v3355 = vld [vmem:[%s273] sm:$0xf]
      %v3356 = vld [vmem:[%s273 + $0x4] sm:$0xf]
      %v3357 = vld [vmem:[%s273 + $0x8] sm:$0xf]
      %v3358 = vld [vmem:[%s273 + $0xc] sm:$0xf]
      %v3359 = vld [vmem:[%s273 + $0x10] sm:$0xf]
      %v3360 = vld [vmem:[%s273 + $0x14] sm:$0xf]
      %v3361 = vld [vmem:[%s273 + $0x18] sm:$0xf]
      %v3362 = vld [vmem:[%s273 + $0x1c] sm:$0xf]
      %v3363 = vld [vmem:[%s273 + $0x20] sm:$0xf]
      %v3364 = vld [vmem:[%s273 + $0x24] sm:$0xf]
      %v3365 = vld [vmem:[%s273 + $0x28] sm:$0xf]
      %v3366 = vld [vmem:[%s273 + $0x2c] sm:$0xf]
      %v3367 = vld [vmem:[%s273 + $0x30] sm:$0xf]
      %v3368 = vld [vmem:[%s273 + $0x34] sm:$0xf]
      %v3369 = vld [vmem:[%s273 + $0x38] sm:$0xf]
      %v3370 = vld [vmem:[%s273 + $0x3c] sm:$0xf]
      %v3371 = vld [vmem:[%s273 + $0x40] sm:$0xf]
      %v3372 = vld [vmem:[%s273 + $0x44] sm:$0xf]
      %v3373 = vld [vmem:[%s273 + $0x48] sm:$0xf]
      %v3374 = vld [vmem:[%s273 + $0x4c] sm:$0xf]
      %v3375 = vld [vmem:[%s273 + $0x50] sm:$0xf]
      %v3376 = vld [vmem:[%s273 + $0x54] sm:$0xf]
      %v3377 = vld [vmem:[%s273 + $0x58] sm:$0xf]
      %v3378 = vld [vmem:[%s273 + $0x5c] sm:$0xf]
      %v3379 = vld [vmem:[%s273 + $0x60] sm:$0xf]
      %v3380 = vld [vmem:[%s273 + $0x64] sm:$0xf]
      %v3381 = vld [vmem:[%s273 + $0x68] sm:$0xf]
      %v3382 = vld [vmem:[%s273 + $0x6c] sm:$0xf]
      %v3383 = vld [vmem:[%s273 + $0x70] sm:$0xf]
      %v3384 = vld [vmem:[%s273 + $0x74] sm:$0xf]
      %v3385 = vld [vmem:[%s273 + $0x78] sm:$0xf]
      %v3386 = vld [vmem:[%s273 + $0x7c] sm:$0xf]
      %v3387 = vunpack.c.l.bf16 %v3355
      %v3388 = vunpack.c.l.bf16 %v3356
      %v3389 = vunpack.c.l.bf16 %v3357
      %v3390 = vunpack.c.l.bf16 %v3358
      %v3391 = vunpack.c.l.bf16 %v3359
      %v3392 = vunpack.c.l.bf16 %v3360
      %v3393 = vunpack.c.l.bf16 %v3361
      %v3394 = vunpack.c.l.bf16 %v3362
      %v3395 = vunpack.c.l.bf16 %v3363
      %v3396 = vunpack.c.l.bf16 %v3364
      %v3397 = vunpack.c.l.bf16 %v3365
      %v3398 = vunpack.c.l.bf16 %v3366
      %v3399 = vunpack.c.l.bf16 %v3367
      %v3400 = vunpack.c.l.bf16 %v3368
      %v3401 = vunpack.c.l.bf16 %v3369
      %v3402 = vunpack.c.l.bf16 %v3370
      %v3403 = vunpack.c.l.bf16 %v3371
      %v3404 = vunpack.c.l.bf16 %v3372
      %v3405 = vunpack.c.l.bf16 %v3373
      %v3406 = vunpack.c.l.bf16 %v3374
      %v3407 = vunpack.c.l.bf16 %v3375
      %v3408 = vunpack.c.l.bf16 %v3376
      %v3409 = vunpack.c.l.bf16 %v3377
      %v3410 = vunpack.c.l.bf16 %v3378
      %v3411 = vunpack.c.l.bf16 %v3379
      %v3412 = vunpack.c.l.bf16 %v3380
      %v3413 = vunpack.c.l.bf16 %v3381
      %v3414 = vunpack.c.l.bf16 %v3382
      %v3415 = vunpack.c.l.bf16 %v3383
      %v3416 = vunpack.c.l.bf16 %v3384
      %v3417 = vunpack.c.l.bf16 %v3385
      %v3418 = vunpack.c.l.bf16 %v3386
      %v3419 = vld [vmem:[%s6] sm:$0x1]
      %v3421 = vlaneseq
      %v3422 = vshrl.u32 %v3421, 7
      %v3423 = vsub.s32 0, %v3422
      %v3424 = vrot.slane %v3419, %v3423
      %v3442 = vunpack.c.l.b16 %v3339
      %v3443 = vunpack.c.l.b16 %v3340
      %v3444 = vunpack.c.l.b16 %v3341
      %v3445 = vunpack.c.l.b16 %v3342
      %v3446 = vunpack.c.l.b16 %v3343
      %v3447 = vunpack.c.l.b16 %v3344
      %v3448 = vunpack.c.l.b16 %v3345
      %v3449 = vunpack.c.l.b16 %v3346
      %v3450 = vunpack.c.l.b16 %v3347
      %v3451 = vunpack.c.l.b16 %v3348
      %v3452 = vunpack.c.l.b16 %v3349
      %v3453 = vunpack.c.l.b16 %v3350
      %v3454 = vunpack.c.l.b16 %v3351
      %v3455 = vunpack.c.l.b16 %v3352
      %v3456 = vunpack.c.l.b16 %v3353
      %v3457 = vunpack.c.l.b16 %v3354
      %v3458 = vpack.c.b16 %v3443, %v3442
      %v3459 = vpack.c.b16 %v3445, %v3444
      %v3460 = vpack.c.b16 %v3447, %v3446
      %v3461 = vpack.c.b16 %v3449, %v3448
      %v3462 = vpack.c.b16 %v3451, %v3450
      %v3463 = vpack.c.b16 %v3453, %v3452
      %v3464 = vpack.c.b16 %v3455, %v3454
      %v3465 = vpack.c.b16 %v3457, %v3456
      %3474 = vmatprep.subr.bf16.mxu0 0
      %3475 = vmatpush1.bf16.msra.mxu0 %v3458
      %3476 = vmatprep.subr.bf16.mxu0 0
      %3477 = vmatpush1.bf16.msra.mxu0 %v3459
      %3478 = vmatprep.subr.bf16.mxu0 0
      %3479 = vmatpush1.bf16.msra.mxu0 %v3460
      %3480 = vmatprep.subr.bf16.mxu0 0
      %3481 = vmatpush1.bf16.msra.mxu0 %v3461
      %3482 = vmatprep.subr.bf16.mxu0 0
      %3483 = vmatpush1.bf16.msra.mxu0 %v3462
      %3484 = vmatprep.subr.bf16.mxu0 0
      %3485 = vmatpush1.bf16.msra.mxu0 %v3463
      %3486 = vmatprep.subr.bf16.mxu0 0
      %3487 = vmatpush1.bf16.msra.mxu0 %v3464
      %3488 = vmatprep.subr.bf16.mxu0 0
      %3489 = vmatpush1.bf16.msra.mxu0 %v3465
      %3490 = vmatprep.subr.bf16.mxu0 0
      %3491 = vmatpush1.bf16.msra.mxu0 0
      %3492 = vmatprep.subr.bf16.mxu0 0
      %3493 = vmatpush1.bf16.msra.mxu0 0
      %3494 = vmatprep.subr.bf16.mxu0 0
      %3495 = vmatpush1.bf16.msra.mxu0 0
      %3496 = vmatprep.subr.bf16.mxu0 0
      %3497 = vmatpush1.bf16.msra.mxu0 0
      %3498 = vmatprep.subr.bf16.mxu0 0
      %3499 = vmatpush1.bf16.msra.mxu0 0
      %3500 = vmatprep.subr.bf16.mxu0 0
      %3501 = vmatpush1.bf16.msra.mxu0 0
      %3502 = vmatprep.subr.bf16.mxu0 0
      %3503 = vmatpush1.bf16.msra.mxu0 0
      %3504 = vmatprep.subr.bf16.mxu0 0
      %3505 = vmatpush1.bf16.msra.mxu0 0
      %3506 = vmatprep.mubr.bf16.mxu0 0
      %3507 = vmatmul.mubr.bf16.gmra.mrb[0].mxu0 %v3323
      %v3508 = vpop.f32.mrb[0].mxu0
      %v3509 = vadd.f32 %v3424, %v3508
      %v3510 = vpop.f32.mrb[0].mxu0
      %v3511 = vpop.f32.mrb[0].mxu0
      %v3512 = vadd.f32 %v3424, %v3511
      %v3513 = vpop.f32.mrb[0].mxu0
      %3514 = vmatprep.mubr.bf16.mxu0 0
      %3515 = vmatmul.mubr.bf16.gmra.mrb[0].mxu0 %v3324
      %v3516 = vpop.f32.mrb[0].mxu0
      %v3517 = vadd.f32 %v3424, %v3516
      %v3518 = vpop.f32.mrb[0].mxu0
      %v3519 = vpop.f32.mrb[0].mxu0
      %v3520 = vadd.f32 %v3424, %v3519
      %v3521 = vpop.f32.mrb[0].mxu0
      %3522 = vmatprep.mubr.bf16.mxu0 0
      %3523 = vmatmul.mubr.bf16.gmra.mrb[0].mxu0 %v3325
      %v3524 = vpop.f32.mrb[0].mxu0
      %v3525 = vadd.f32 %v3424, %v3524
      %v3526 = vpop.f32.mrb[0].mxu0
      %v3527 = vpop.f32.mrb[0].mxu0
      %v3528 = vadd.f32 %v3424, %v3527
      %v3529 = vpop.f32.mrb[0].mxu0
      %3530 = vmatprep.mubr.bf16.mxu0 0
      %3531 = vmatmul.mubr.bf16.gmra.mrb[0].mxu0 %v3326
      %v3532 = vpop.f32.mrb[0].mxu0
      %v3533 = vadd.f32 %v3424, %v3532
      %v3534 = vpop.f32.mrb[0].mxu0
      %v3535 = vpop.f32.mrb[0].mxu0
      %v3536 = vadd.f32 %v3424, %v3535
      %v3537 = vpop.f32.mrb[0].mxu0
      %3538 = vmatprep.mubr.bf16.mxu0 0
      %3539 = vmatmul.mubr.bf16.gmra.mrb[0].mxu0 %v3327
      %v3540 = vpop.f32.mrb[0].mxu0
      %v3541 = vadd.f32 %v3424, %v3540
      %v3542 = vpop.f32.mrb[0].mxu0
      %v3543 = vpop.f32.mrb[0].mxu0
      %v3544 = vadd.f32 %v3424, %v3543
      %v3545 = vpop.f32.mrb[0].mxu0
      %3546 = vmatprep.mubr.bf16.mxu0 0
      %3547 = vmatmul.mubr.bf16.gmra.mrb[0].mxu0 %v3328
      %v3548 = vpop.f32.mrb[0].mxu0
      %v3549 = vadd.f32 %v3424, %v3548
      %v3550 = vpop.f32.mrb[0].mxu0
      %v3551 = vpop.f32.mrb[0].mxu0
      %v3552 = vadd.f32 %v3424, %v3551
      %v3553 = vpop.f32.mrb[0].mxu0
      %3554 = vmatprep.mubr.bf16.mxu0 0
      %3555 = vmatmul.mubr.bf16.gmra.mrb[0].mxu0 %v3329
      %v3556 = vpop.f32.mrb[0].mxu0
      %v3557 = vadd.f32 %v3424, %v3556
      %v3558 = vpop.f32.mrb[0].mxu0
      %v3559 = vpop.f32.mrb[0].mxu0
      %v3560 = vadd.f32 %v3424, %v3559
      %v3561 = vpop.f32.mrb[0].mxu0
      %3562 = vmatprep.mubr.bf16.mxu0 0
      %3563 = vmatmul.mubr.bf16.gmra.mrb[0].mxu0 %v3330
      %v3564 = vpop.f32.mrb[0].mxu0
      %v3565 = vadd.f32 %v3424, %v3564
      %v3566 = vpop.f32.mrb[0].mxu0
      %v3567 = vpop.f32.mrb[0].mxu0
      %v3568 = vadd.f32 %v3424, %v3567
      %v3569 = vpop.f32.mrb[0].mxu0
      %3570 = vmatprep.mubr.bf16.mxu0 0
      %3571 = vmatmul.mubr.bf16.gmra.mrb[0].mxu0 %v3331
      %v3572 = vpop.f32.mrb[0].mxu0
      %v3573 = vadd.f32 %v3424, %v3572
      %v3574 = vpop.f32.mrb[0].mxu0
      %v3575 = vpop.f32.mrb[0].mxu0
      %v3576 = vadd.f32 %v3424, %v3575
      %v3577 = vpop.f32.mrb[0].mxu0
      %3578 = vmatprep.mubr.bf16.mxu0 0
      %3579 = vmatmul.mubr.bf16.gmra.mrb[0].mxu0 %v3332
      %v3580 = vpop.f32.mrb[0].mxu0
      %v3581 = vadd.f32 %v3424, %v3580
      %v3582 = vpop.f32.mrb[0].mxu0
      %v3583 = vpop.f32.mrb[0].mxu0
      %v3584 = vadd.f32 %v3424, %v3583
      %v3585 = vpop.f32.mrb[0].mxu0
      %3586 = vmatprep.mubr.bf16.mxu0 0
      %3587 = vmatmul.mubr.bf16.gmra.mrb[0].mxu0 %v3333
      %v3588 = vpop.f32.mrb[0].mxu0
      %v3589 = vadd.f32 %v3424, %v3588
      %v3590 = vpop.f32.mrb[0].mxu0
      %v3591 = vpop.f32.mrb[0].mxu0
      %v3592 = vadd.f32 %v3424, %v3591
      %v3593 = vpop.f32.mrb[0].mxu0
      %3594 = vmatprep.mubr.bf16.mxu0 0
      %3595 = vmatmul.mubr.bf16.gmra.mrb[0].mxu0 %v3334
      %v3596 = vpop.f32.mrb[0].mxu0
      %v3597 = vadd.f32 %v3424, %v3596
      %v3598 = vpop.f32.mrb[0].mxu0
      %v3599 = vpop.f32.mrb[0].mxu0
      %v3600 = vadd.f32 %v3424, %v3599
      %v3601 = vpop.f32.mrb[0].mxu0
      %3602 = vmatprep.mubr.bf16.mxu0 0
      %3603 = vmatmul.mubr.bf16.gmra.mrb[0].mxu0 %v3335
      %v3604 = vpop.f32.mrb[0].mxu0
      %v3605 = vadd.f32 %v3424, %v3604
      %v3606 = vpop.f32.mrb[0].mxu0
      %v3607 = vpop.f32.mrb[0].mxu0
      %v3608 = vadd.f32 %v3424, %v3607
      %v3609 = vpop.f32.mrb[0].mxu0
      %3610 = vmatprep.mubr.bf16.mxu0 0
      %3611 = vmatmul.mubr.bf16.gmra.mrb[0].mxu0 %v3336
      %v3612 = vpop.f32.mrb[0].mxu0
      %v3613 = vadd.f32 %v3424, %v3612
      %v3614 = vpop.f32.mrb[0].mxu0
      %v3615 = vpop.f32.mrb[0].mxu0
      %v3616 = vadd.f32 %v3424, %v3615
      %v3617 = vpop.f32.mrb[0].mxu0
      %3618 = vmatprep.mubr.bf16.mxu0 0
      %3619 = vmatmul.mubr.bf16.gmra.mrb[0].mxu0 %v3337
      %v3620 = vpop.f32.mrb[0].mxu0
      %v3621 = vadd.f32 %v3424, %v3620
      %v3622 = vpop.f32.mrb[0].mxu0
      %v3623 = vpop.f32.mrb[0].mxu0
      %v3624 = vadd.f32 %v3424, %v3623
      %v3625 = vpop.f32.mrb[0].mxu0
      %3626 = vmatprep.mubr.bf16.mxu0 0
      %3627 = vmatmul.mubr.bf16.gmra.mrb[0].mxu0 %v3338
      %v3628 = vpop.f32.mrb[0].mxu0
      %v3629 = vadd.f32 %v3424, %v3628
      %v3630 = vpop.f32.mrb[0].mxu0
      %v3631 = vpop.f32.mrb[0].mxu0
      %v3632 = vadd.f32 %v3424, %v3631
      %v3633 = vpop.f32.mrb[0].mxu0
      %3634 = vdwg.mxu0
      %v3635 = vadd.f32 %v3509, %v3387
      %v3636 = vadd.f32 %v3512, %v3388
      %v3637 = vadd.f32 %v3517, %v3389
      %v3638 = vadd.f32 %v3520, %v3390
      %v3639 = vadd.f32 %v3525, %v3391
      %v3640 = vadd.f32 %v3528, %v3392
      %v3641 = vadd.f32 %v3533, %v3393
      %v3642 = vadd.f32 %v3536, %v3394
      %v3643 = vadd.f32 %v3541, %v3395
      %v3644 = vadd.f32 %v3544, %v3396
      %v3645 = vadd.f32 %v3549, %v3397
      %v3646 = vadd.f32 %v3552, %v3398
      %v3647 = vadd.f32 %v3557, %v3399
      %v3648 = vadd.f32 %v3560, %v3400
      %v3649 = vadd.f32 %v3565, %v3401
      %v3650 = vadd.f32 %v3568, %v3402
      %v3651 = vadd.f32 %v3573, %v3403
      %v3652 = vadd.f32 %v3576, %v3404
      %v3653 = vadd.f32 %v3581, %v3405
      %v3654 = vadd.f32 %v3584, %v3406
      %v3655 = vadd.f32 %v3589, %v3407
      %v3656 = vadd.f32 %v3592, %v3408
      %v3657 = vadd.f32 %v3597, %v3409
      %v3658 = vadd.f32 %v3600, %v3410
      %v3659 = vadd.f32 %v3605, %v3411
      %v3660 = vadd.f32 %v3608, %v3412
      %v3661 = vadd.f32 %v3613, %v3413
      %v3662 = vadd.f32 %v3616, %v3414
      %v3663 = vadd.f32 %v3621, %v3415
      %v3664 = vadd.f32 %v3624, %v3416
      %v3665 = vadd.f32 %v3629, %v3417
      %v3666 = vadd.f32 %v3632, %v3418
      %v3667 = vmax.f32 %v3635, 0.0
      %v3668 = vmax.f32 %v3636, 0.0
      %v3669 = vmax.f32 %v3637, 0.0
      %v3670 = vmax.f32 %v3638, 0.0
      %v3671 = vmax.f32 %v3639, 0.0
      %v3672 = vmax.f32 %v3640, 0.0
      %v3673 = vmax.f32 %v3641, 0.0
      %v3674 = vmax.f32 %v3642, 0.0
      %v3675 = vmax.f32 %v3643, 0.0
      %v3676 = vmax.f32 %v3644, 0.0
      %v3677 = vmax.f32 %v3645, 0.0
      %v3678 = vmax.f32 %v3646, 0.0
      %v3679 = vmax.f32 %v3647, 0.0
      %v3680 = vmax.f32 %v3648, 0.0
      %v3681 = vmax.f32 %v3649, 0.0
      %v3682 = vmax.f32 %v3650, 0.0
      %v3683 = vmax.f32 %v3651, 0.0
      %v3684 = vmax.f32 %v3652, 0.0
      %v3685 = vmax.f32 %v3653, 0.0
      %v3686 = vmax.f32 %v3654, 0.0
      %v3687 = vmax.f32 %v3655, 0.0
      %v3688 = vmax.f32 %v3656, 0.0
      %v3689 = vmax.f32 %v3657, 0.0
      %v3690 = vmax.f32 %v3658, 0.0
      %v3691 = vmax.f32 %v3659, 0.0
      %v3692 = vmax.f32 %v3660, 0.0
      %v3693 = vmax.f32 %v3661, 0.0
      %v3694 = vmax.f32 %v3662, 0.0
      %v3695 = vmax.f32 %v3663, 0.0
      %v3696 = vmax.f32 %v3664, 0.0
      %v3697 = vmax.f32 %v3665, 0.0
      %v3698 = vmax.f32 %v3666, 0.0
      %3699 = vst [vmem:[%s278] sm:$0xff] %v3667
      %3700 = vst [vmem:[%s278 + $0x8] sm:$0xff] %v3668
      %3701 = vst [vmem:[%s278 + $0x10] sm:$0xff] %v3669
      %3702 = vst [vmem:[%s278 + $0x18] sm:$0xff] %v3670
      %3703 = vst [vmem:[%s278 + $0x20] sm:$0xff] %v3671
      %3704 = vst [vmem:[%s278 + $0x28] sm:$0xff] %v3672
      %3705 = vst [vmem:[%s278 + $0x30] sm:$0xff] %v3673
      %3706 = vst [vmem:[%s278 + $0x38] sm:$0xff] %v3674
      %3707 = vst [vmem:[%s278 + $0x40] sm:$0xff] %v3675
      %3708 = vst [vmem:[%s278 + $0x48] sm:$0xff] %v3676
      %3709 = vst [vmem:[%s278 + $0x50] sm:$0xff] %v3677
      %3710 = vst [vmem:[%s278 + $0x58] sm:$0xff] %v3678
      %3711 = vst [vmem:[%s278 + $0x60] sm:$0xff] %v3679
      %3712 = vst [vmem:[%s278 + $0x68] sm:$0xff] %v3680
      %3713 = vst [vmem:[%s278 + $0x70] sm:$0xff] %v3681
      %3714 = vst [vmem:[%s278 + $0x78] sm:$0xff] %v3682
      %3715 = vst [vmem:[%s278 + $0x80] sm:$0xff] %v3683
      %3716 = vst [vmem:[%s278 + $0x88] sm:$0xff] %v3684
      %3717 = vst [vmem:[%s278 + $0x90] sm:$0xff] %v3685
      %3718 = vst [vmem:[%s278 + $0x98] sm:$0xff] %v3686
      %3719 = vst [vmem:[%s278 + $0xa0] sm:$0xff] %v3687
      %3720 = vst [vmem:[%s278 + $0xa8] sm:$0xff] %v3688
      %3721 = vst [vmem:[%s278 + $0xb0] sm:$0xff] %v3689
      %3722 = vst [vmem:[%s278 + $0xb8] sm:$0xff] %v3690
      %3723 = vst [vmem:[%s278 + $0xc0] sm:$0xff] %v3691
      %3724 = vst [vmem:[%s278 + $0xc8] sm:$0xff] %v3692
      %3725 = vst [vmem:[%s278 + $0xd0] sm:$0xff] %v3693
      %3726 = vst [vmem:[%s278 + $0xd8] sm:$0xff] %v3694
      %3727 = vst [vmem:[%s278 + $0xe0] sm:$0xff] %v3695
      %3728 = vst [vmem:[%s278 + $0xe8] sm:$0xff] %v3696
      %3729 = vst [vmem:[%s278 + $0xf0] sm:$0xff] %v3697
      %3730 = vst [vmem:[%s278 + $0xf8] sm:$0xff] %v3698
      %p3731 = scmp.lt.s32.totalorder %s18, 1
      %s3732 = scalar_select %p3731, %s18, 1
      %s3733 = smul.addr %s3732, 32
      %s3734 = smul.addr %s3733, 8
      %s3735 = scalar_lea.vmem %s7, %s3734
      // Predicated region
      $region49: #{bottleneck_v1b_forward.1} parent=47 // pred_check
        %p3736 = pneg %p188
      $region50: #{bottleneck_v1b_forward.1} parent=47 // pred_check_branch
        %3738 = sbr.rel (%p3736) target = $region52
      $region51: #{bottleneck_v1b_forward.1} parent=47 // pred_region
        _
      $region52: #{bottleneck_v1b_forward.1} parent=47 // pred_fallthru
        _
    $region48: #{bottleneck_v1b_forward.1} parent=5 // pred_fallthru
      _
    %p3739 = scmp.le.s32.totalorder 2, %s13
    // Predicated region
    $region53: #{bottleneck_v1b_forward.1} parent=5 // pred_check
      %p3740 = pneg %p3739
    $region54: #{bottleneck_v1b_forward.1} parent=5 // pred_check_branch
      %3742 = sbr.rel (%p3740) target = $region56
    $region55: #{bottleneck_v1b_forward.1} parent=5 // pred_region
      %s3743 = ssub.s32 %s13, 2
      // Predicated region
      $region57: #{bottleneck_v1b_forward.1} parent=55 // pred_check
        %p3744 = pneg %p194
      $region58: #{bottleneck_v1b_forward.1} parent=55 // pred_check_branch
        %3746 = sbr.rel (%p3744) target = $region60
      $region59: #{bottleneck_v1b_forward.1} parent=55 // pred_region
        %p3747 = scmp.lt.s32.totalorder %s19, 1
        %s3748 = scalar_select %p3747, %s19, 1
        %s3749 = smul.addr %s3748, 32
        %s3750 = smul.addr %s3749, 8
        %s3751 = scalar_lea.vmem %s7, %s3750
      $region60: #{bottleneck_v1b_forward.1} parent=55 // pred_fallthru
        _
    $region56: #{bottleneck_v1b_forward.1} parent=5 // pred_fallthru
      _
  $region6: #{bottleneck_v1b_forward.1} parent=0 // loop_footer
    %s17 = sadd.s32 1, %s13
  $region7: #{bottleneck_v1b_forward.1} parent=0 // loop_footer_branch
    %12 = sbr.rel target = $region3
  $region8: #{bottleneck_v1b_forward.1} parent=0 // loop_exit
    _

</llo_original>
